<compile_context>
chip_gen: v6e
topology: v6e:2x2x1
jax: 0.10.0
libtpu: 0.0.40
codegen_flags: <defaults>
</compile_context>

<pallas_src>
import numpy as np
import jax
import jax.numpy as jnp
from jax.experimental import pallas as pl
from jax.experimental.pallas import tpu as pltpu

# ------------------------- small config (consistent with the module) -------------------
B = 2            # batch
T = 8            # phone sequence length (frames)
EMB = 24         # emb_channels
INTER = 32       # inter_channels
GIN = 16         # gin_channels
NLAYERS = 2      # n_layers
NFFT = 16
HOP = 4
SPK = 4          # spk_embed_dim
R = 12           # LoRA rank (r_out=12)
KW = 5           # WaveBlock kernel size ([5]*3)
DILS = (1, 2, 4) # WaveBlock dilations
EXTEND = 3       # WaveBlock expansion ratio
PK = 9           # SnakeFilter kernel size
PC = 8           # SnakeFilter inner channels
PLAYERS = 2      # SnakeFilter layers
EPS = 1e-5

HALF = NFFT // 2 + 1                  # 9  rfft bins
NBRANCH = NLAYERS * len(DILS)         # 6  (layer, dilation) pairs
NCOND = 1 + NBRANCH                   # 7  g_out_linear + per-branch cond convs
PADMAX = DILS[-1] * (KW - 1) // 2     # 8  max dilated-conv halo
LOUT = HOP * (T - 1)                  # 28 audio samples after centre trim
PPAD = (PK - 1) // 2                  # 4  SnakeFilter 'same' pad
LPAD = LOUT + 2 * PPAD                # 36 padded audio length

BI = B * INTER                        # 64  lane-packed channel width
BE = B * EMB                          # 48
BH = B * HALF                         # 18
BL = B * LPAD                         # 72
BPC = B * PC                          # 16
BEXT = B * INTER * EXTEND             # 192
AUGK = ((B * GIN + 1 + 7) // 8) * 8   # 40  g rows + bias row, padded to sublane multiple


# ------------------------- static packed-parameter layout ------------------------------
def _layout(items):
    """items: [(name, nrows)] -> ({name: row_offset}, total_rows); rows padded to 8."""
    offs, r = {}, 0
    for name, nrows in items:
        offs[name] = r
        r += ((nrows + 7) // 8) * 8
    return offs, r


_PB_ITEMS = [("pw1_%d" % j, BI + 1) for j in range(NBRANCH)]          # weights + bias row
PB_OFFS, PB_ROWS = _layout(_PB_ITEMS)

_PLO_ITEMS = (
    [("pw2_%d" % j, BEXT + 1) for j in range(NBRANCH)]
    + [("dw", NBRANCH * KW), ("head", BI + 1)]
    + [("ola_%d" % t, 2 * BH) for t in range(T)]
    + [("snk", PLAYERS * PK * BPC)]
    + [("post_%d" % k, B) for k in range(PK)]
    + [("pre_w", PK * BPC), ("pre_b", BPC),
       ("alpha", PLAYERS * BPC), ("snk_b", PLAYERS * BPC), ("post_b", B)]
)
PLO_OFFS, PLO_ROWS = _layout(_PLO_ITEMS)


# ------------------------- precomputed ISTFT constants (numpy) -------------------------
def make_istft_mats():
    """Real-iDFT matrices (match jnp.fft.irfft) and window/normalizer/trim OLA tensors."""
    n = np.arange(NFFT)
    k = np.arange(HALF)
    theta = 2.0 * np.pi * np.outer(k, n) / NFFT                       # (HALF, NFFT)
    wk = np.where((k == 0) | (k == NFFT // 2), 1.0, 2.0)[:, None]
    dft_re = wk * np.cos(theta) / NFFT
    dft_im = -wk * np.sin(theta) / NFFT

    win = 0.5 * (1.0 - np.cos(2.0 * np.pi * n / NFFT))                # hann (periodic)
    lfull = NFFT + HOP * (T - 1)
    wsum = np.zeros(lfull)
    for t in range(T):
        wsum[t * HOP:t * HOP + NFFT] += win ** 2
    wsum = np.maximum(wsum, 1e-11)

    ola = np.zeros((T, NFFT, LPAD))
    for t in range(T):
        for j in range(NFFT):
            pos = t * HOP + j
            l = pos - NFFT // 2                                       # centre trim
            if 0 <= l < LOUT:
                ola[t, j, l + PPAD] = win[j] / wsum[pos]              # placed at snake pad
    return dft_re.astype(np.float32), dft_im.astype(np.float32), ola.astype(np.float32)


# ------------------------------- parameters --------------------------------------------
def init_params(key):
    ks = iter(jax.random.split(key, 64))

    def w(shape, scale=0.05):
        return (scale * jax.random.normal(next(ks), shape)).astype(jnp.float32)

    def z(shape):
        return jnp.zeros(shape, jnp.float32)

    p = {}
    p["emb_g"] = w((SPK, GIN), 0.1)                                   # nn.Embedding
    # LoRALinear1d(emb -> inter, cond gin, r_out=12)
    p["init_w"], p["init_b"] = w((EMB, INTER)), z((1, INTER))
    p["ad_in_w"], p["ad_in_b"] = w((GIN, EMB * R), 0.01), z((EMB * R,))
    p["ad_out_w"], p["ad_out_b"] = w((GIN, INTER * R), 0.001), z((INTER * R,))
    # g-conditioned 1x1 convs: [0]=g_out_linear, [1+j]=WaveBlock cond for branch j
    p["cond_w"], p["cond_b"] = w((NCOND, GIN, INTER)), z((NCOND, 1, INTER))
    # WaveBlock depthwise + pointwise convs, stacked over (layer, dilation)
    p["dw_w"], p["dw_b"] = w((NBRANCH, KW, INTER)), z((NBRANCH, 1, INTER))
    p["pw1_w"], p["pw1_b"] = w((NBRANCH, INTER, INTER * EXTEND)), z((NBRANCH, 1, INTER * EXTEND))
    p["pw2_w"], p["pw2_b"] = w((NBRANCH, INTER * EXTEND, INTER)), z((NBRANCH, 1, INTER))
    # ISTFTHead projection (inter -> n_fft+2), split into magnitude / phase halves
    p["head_w_mag"], p["head_b_mag"] = w((INTER, HALF)), z((1, HALF))
    p["head_w_ph"], p["head_b_ph"] = w((INTER, HALF)), z((1, HALF))
    # SnakeFilter(4, 8, 9, 2), matmul-ready (Cout, Cin) per-tap layout
    p["pre_w"], p["pre_b"] = w((PK, PC, 1)), z((PC, 1))               # 1 -> PC
    p["snk_w"], p["snk_b"] = w((PLAYERS, PK, PC, PC)), z((PLAYERS, PC, 1))
    p["alpha"] = jnp.ones((PLAYERS, PC, 1), jnp.float32)
    p["post_w"], p["post_b"] = w((PK, 1, PC)), z((1, 1))              # PC -> 1
    return p


def prepare_params(p):
    """Fold biases / iDFT / OLA and pack every small parameter into three lane-dense,
    statically-offset buffers (block-diagonal over batch where needed)."""
    f = lambda a: np.asarray(a, np.float32)

    # -- pa: all cond 1x1 convs stacked + bias row (init_b / dw_b folded in) ------------
    cond_w, cond_b = f(p["cond_w"]), f(p["cond_b"])
    init_b, dw_b = f(p["init_b"]), f(p["dw_b"])
    pa = np.zeros((AUGK, NCOND * BI), np.float32)
    for j in range(NCOND):
        bias = cond_b[j, 0] + (init_b[0] if j == 0 else dw_b[j - 1, 0])
        for b in range(B):
            pa[b * GIN:(b + 1) * GIN, j * BI + b * INTER:j * BI + (b + 1) * INTER] = cond_w[j]
            pa[B * GIN, j * BI + b * INTER:j * BI + (b + 1) * INTER] = bias

    # -- pb: WaveBlock pw1 (block-diag over batch) + bias rows ---------------------------
    pw1_w, pw1_b = f(p["pw1_w"]), f(p["pw1_b"])
    pb = np.zeros((PB_ROWS, BEXT), np.float32)
    for j in range(NBRANCH):
        o = PB_OFFS["pw1_%d" % j]
        for b in range(B):
            pb[o + b * INTER:o + (b + 1) * INTER,
               b * INTER * EXTEND:(b + 1) * INTER * EXTEND] = pw1_w[j]
            pb[o + BI, b * INTER * EXTEND:(b + 1) * INTER * EXTEND] = pw1_b[j, 0]

    # -- plo: everything else (width 72) -------------------------------------------------
    plo = np.zeros((PLO_ROWS, 2 * LPAD), np.float32)

    pw2_w, pw2_b = f(p["pw2_w"]), f(p["pw2_b"])
    for j in range(NBRANCH):
        o = PLO_OFFS["pw2_%d" % j]
        for b in range(B):
            plo[o + b * INTER * EXTEND:o + (b + 1) * INTER * EXTEND,
                b * INTER:(b + 1) * INTER] = pw2_w[j]
            plo[o + BEXT, b * INTER:(b + 1) * INTER] = pw2_b[j, 0]

    dw_w = f(p["dw_w"])
    o = PLO_OFFS["dw"]
    for j in range(NBRANCH):
        for k in range(KW):
            for b in range(B):
                plo[o + j * KW + k, b * INTER:(b + 1) * INTER] = dw_w[j, k]

    hwm, hwp = f(p["head_w_mag"]), f(p["head_w_ph"])
    hbm, hbp = f(p["head_b_mag"]), f(p["head_b_ph"])
    o = PLO_OFFS["head"]
    for b in range(B):
        plo[o + b * INTER:o + (b + 1) * INTER, b * HALF:(b + 1) * HALF] = hwm
        plo[o + b * INTER:o + (b + 1) * INTER, BH + b * HALF:BH + (b + 1) * HALF] = hwp
        plo[o + BI, b * HALF:(b + 1) * HALF] = hbm[0]
        plo[o + BI, BH + b * HALF:BH + (b + 1) * HALF] = hbp[0]

    # iRFFT x window/normalize/trim folded into per-frame (2*BH, BL) block-diag matrices
    dft_re, dft_im, ola = make_istft_mats()
    for t in range(T):
        cre = dft_re @ ola[t]                                         # (HALF, LPAD)
        cim = dft_im @ ola[t]
        o = PLO_OFFS["ola_%d" % t]
        for b in range(B):
            plo[o + b * HALF:o + (b + 1) * HALF, b * LPAD:(b + 1) * LPAD] = cre
            plo[o + BH + b * HALF:o + BH + (b + 1) * HALF, b * LPAD:(b + 1) * LPAD] = cim

    snk_w = f(p["snk_w"])
    o = PLO_OFFS["snk"]
    for l in range(PLAYERS):
        for k in range(PK):
            for b in range(B):
                r = o + (l * PK + k) * BPC + b * PC
                plo[r:r + PC, b * PC:(b + 1) * PC] = snk_w[l, k]

    post_w = f(p["post_w"])
    for k in range(PK):
        o = PLO_OFFS["post_%d" % k]
        for b in range(B):
            plo[o + b, b * PC:(b + 1) * PC] = post_w[k, 0]

    pre_w = f(p["pre_w"])
    o = PLO_OFFS["pre_w"]
    for k in range(PK):
        for b in range(B):
            plo[o + k * BPC + b * PC:o + k * BPC + (b + 1) * PC, 0] = pre_w[k, :, 0]
    o = PLO_OFFS["pre_b"]
    for b in range(B):
        plo[o + b * PC:o + (b + 1) * PC, 0] = f(p["pre_b"])[:, 0]

    alpha, snk_b = f(p["alpha"]), f(p["snk_b"])
    oa, ob_ = PLO_OFFS["alpha"], PLO_OFFS["snk_b"]
    for l in range(PLAYERS):
        for b in range(B):
            plo[oa + l * BPC + b * PC:oa + l * BPC + (b + 1) * PC, 0] = alpha[l, :, 0]
            plo[ob_ + l * BPC + b * PC:ob_ + l * BPC + (b + 1) * PC, 0] = snk_b[l, :, 0]
    o = PLO_OFFS["post_b"]
    plo[o:o + B, 0] = f(p["post_b"])[0, 0]

    return {
        "emb_g": jnp.asarray(f(p["emb_g"])),
        "init_w": jnp.asarray(f(p["init_w"])),
        "ad_in_w": jnp.asarray(f(p["ad_in_w"])), "ad_in_b": jnp.asarray(f(p["ad_in_b"])),
        "ad_out_w": jnp.asarray(f(p["ad_out_w"])), "ad_out_b": jnp.asarray(f(p["ad_out_b"])),
        "pa": jnp.asarray(pa), "pb": jnp.asarray(pb), "plo": jnp.asarray(plo),
    }


# ------------------------------- the fused kernel --------------------------------------
def _generator_kernel(phone_ref, gaug_ref, winit_ref, pa_ref, pb_ref, plo_ref,
                      o_ref,
                      xpad_ref, cond_ref, proj_ref, reim_ref, apad_ref, spad_ref):
    f32 = jnp.float32
    # zero the dilated-conv halo buffer once; only its centre rows are written per branch
    xpad_ref[...] = jnp.zeros_like(xpad_ref)

    # (1) every g-conditioned 1x1 conv (g_out_linear + all WaveBlock conds) + folded
    #     biases as ONE lane-dense matmul; parked in SMALL VMEM scratch, sliced per branch
    cond_ref[...] = jnp.dot(gaug_ref[...], pa_ref[...], preferred_element_type=f32)

    # (2) init LoRA 1x1 conv (LoRA folded into the block-diag weights host-side) +
    #     g_out_linear.  The running activation x stays lane-packed (T, B*INTER).
    x = (jnp.dot(phone_ref[...], winit_ref[...], preferred_element_type=f32)
         + cond_ref[0:1, 0:BI])

    # (3) WaveBlock stack, both batches processed together
    for layer in range(NLAYERS):
        for di, d in enumerate(DILS):
            idx = layer * len(DILS) + di
            pad = d * (KW - 1) // 2
            xpad_ref[PADMAX:PADMAX + T, :] = x
            acc = jnp.zeros((T, BI), f32) + cond_ref[0:1, (1 + idx) * BI:(2 + idx) * BI]
            dwo = PLO_OFFS["dw"] + idx * KW
            for k in range(KW):
                s0 = PADMAX - pad + k * d
                acc = acc + xpad_ref[s0:s0 + T, :] * plo_ref[dwo + k:dwo + k + 1, 0:BI]
            o1 = PB_OFFS["pw1_%d" % idx]
            h = (jnp.dot(acc, pb_ref[o1:o1 + BI, :], preferred_element_type=f32)
                 + pb_ref[o1 + BI:o1 + BI + 1, :])
            h = h * jax.nn.sigmoid(h)                                 # SiLU
            o2 = PLO_OFFS["pw2_%d" % idx]
            h = (jnp.dot(h, plo_ref[o2:o2 + BEXT, 0:BI], preferred_element_type=f32)
                 + plo_ref[o2 + BEXT:o2 + BEXT + 1, 0:BI])
            x = x + h

    # (4) ISTFTHead projection (block-diag over batch) -> [magnitude | phase]
    oh = PLO_OFFS["head"]
    proj_ref[...] = (jnp.dot(x, plo_ref[oh:oh + BI, 0:2 * BH], preferred_element_type=f32)
                     + plo_ref[oh + BI:oh + BI + 1, 0:2 * BH])
    mag = jnp.minimum(jnp.exp(proj_ref[:, 0:BH]), 100.0)             # clamp AFTER exp
    ph = proj_ref[:, BH:2 * BH]
    reim_ref[:, 0:BH] = mag * jnp.cos(ph)
    reim_ref[:, BH:2 * BH] = mag * jnp.sin(ph)

    # (5) iRFFT + hann window + 1/wsum + centre trim + SnakeFilter pad, all folded into
    #     per-frame (36, 72) matrices -> padded audio, lane-packed over batch
    aud = jnp.zeros((1, BL), f32)
    for t in range(T):
        ot = PLO_OFFS["ola_%d" % t]
        aud = aud + jnp.dot(reim_ref[t:t + 1, :], plo_ref[ot:ot + 2 * BH, 0:BL],
                            preferred_element_type=f32)
    apad_ref[...] = aud

    # (6) SnakeFilter with both batches stacked on sublanes (block-diag conv weights);
    #     spad halo columns inherit the zeros already present in the padded audio.
    for b in range(B):
        spad_ref[b * PC:(b + 1) * PC, :] = jnp.broadcast_to(
            apad_ref[0:1, b * LPAD:(b + 1) * LPAD], (PC, LPAD))
    opw, opb = PLO_OFFS["pre_w"], PLO_OFFS["pre_b"]
    y = jnp.zeros((BPC, LOUT), f32) + plo_ref[opb:opb + BPC, 0:1]
    for k in range(PK):
        y = y + plo_ref[opw + k * BPC:opw + (k + 1) * BPC, 0:1] * spad_ref[:, k:k + LOUT]

    oal, osb, osw = PLO_OFFS["alpha"], PLO_OFFS["snk_b"], PLO_OFFS["snk"]
    for l in range(PLAYERS):
        a = plo_ref[oal + l * BPC:oal + (l + 1) * BPC, 0:1]
        s = y + jnp.sin(a * y) ** 2 / (a + EPS)
        spad_ref[:, PPAD:PPAD + LOUT] = s
        conv = jnp.zeros((BPC, LOUT), f32) + plo_ref[osb + l * BPC:osb + (l + 1) * BPC, 0:1]
        for k in range(PK):
            w = plo_ref[osw + (l * PK + k) * BPC:osw + (l * PK + k + 1) * BPC, 0:BPC]
            conv = conv + jnp.dot(w, spad_ref[:, k:k + LOUT], preferred_element_type=f32)
        y = y + conv

    # post conv (PC -> 1) + final GeneratorVoras tanh (fused)
    spad_ref[:, PPAD:PPAD + LOUT] = y
    opob = PLO_OFFS["post_b"]
    out = jnp.zeros((B, LOUT), f32) + plo_ref[opob:opob + B, 0:1]
    for k in range(PK):
        ok = PLO_OFFS["post_%d" % k]
        out = out + jnp.dot(plo_ref[ok:ok + B, 0:BPC], spad_ref[:, k:k + LOUT],
                            preferred_element_type=f32)
    o_ref[...] = jnp.tanh(out)


# ------------------------------- wrappers ----------------------------------------------
def generator_forward(prep, phone, g):
    """phone: (B, T, EMB), g: (B, GIN) -> audio (B, LOUT). One fused pallas_call."""
    assert phone.shape == (B, T, EMB)
    # LoRA adapters built from g, then folded into per-batch effective init weights
    a_in = (g @ prep["ad_in_w"] + prep["ad_in_b"]).reshape(B, EMB, R)
    a_out = (g @ prep["ad_out_w"] + prep["ad_out_b"]).reshape(B, R, INTER)
    w_eff = prep["init_w"][None, :, :] + jnp.einsum("ber,brc->bec", a_in, a_out)
    w_init_bd = jnp.zeros((BE, BI), jnp.float32)
    for b in range(B):
        w_init_bd = w_init_bd.at[b * EMB:(b + 1) * EMB, b * INTER:(b + 1) * INTER].set(w_eff[b])

    phone_lp = jnp.transpose(phone, (1, 0, 2)).reshape(T, BE).astype(jnp.float32)
    g_aug = jnp.zeros((1, AUGK), jnp.float32)
    g_aug = g_aug.at[0, :B * GIN].set(g.reshape(-1))
    g_aug = g_aug.at[0, B * GIN].set(1.0)

    inputs = (phone_lp, g_aug, w_init_bd, prep["pa"], prep["pb"], prep["plo"])

    def full_spec(a):
        zeros = (0,) * a.ndim
        return pl.BlockSpec(a.shape, lambda i, _z=zeros: _z)

    audio = pl.pallas_call(
        _generator_kernel,
        out_shape=jax.ShapeDtypeStruct((B, LOUT), jnp.float32),
        grid=(1,),
        in_specs=[full_spec(a) for a in inputs],
        out_specs=pl.BlockSpec((B, LOUT), lambda i: (0, 0)),
        scratch_shapes=[
            pltpu.VMEM((T + 2 * PADMAX, BI), jnp.float32),   # dilated-conv halo buffer
            pltpu.VMEM((1, NCOND * BI), jnp.float32),        # hoisted conds (all branches)
            pltpu.VMEM((T, 2 * BH), jnp.float32),            # head projection [mag|phase]
            pltpu.VMEM((T, 2 * BH), jnp.float32),            # [re | im]
            pltpu.VMEM((1, BL), jnp.float32),                # padded audio, lane-packed
            pltpu.VMEM((BPC, LPAD), jnp.float32),            # snake buffer (both batches)
        ],
        compiler_params=pltpu.CompilerParams(dimension_semantics=("arbitrary",)),
    )(*inputs)
    return audio


def synthesizer_forward(prep, phone, ds):
    """Mirrors Synthesizer.forward: g_out = emb_g(ds); o = dec(phone^T, g_out).
    Returns (o, None, g_out) with o:(B,1,hop*(T-1)), g_out:(B,gin,1)."""
    g = prep["emb_g"][ds]                                            # nn.Embedding lookup
    audio = generator_forward(prep, phone, g)                        # single fused kernel
    return audio[:, None, :], None, g[:, :, None]


# ------------------------------- run ----------------------------------------------------
if __name__ == "__main__":
    key = jax.random.PRNGKey(0)
    kp, kx = jax.random.split(key)
    params = init_params(kp)
    prep = prepare_params(params)                # host-side packing / folding (runs once)

    phone = jax.random.normal(kx, (B, T, EMB), dtype=jnp.float32)
    ds = jnp.array([1, 3], dtype=jnp.int32)

    fwd = jax.jit(synthesizer_forward)
    o, _, g_out = fwd(prep, phone, ds)
    o = jax.block_until_ready(o)
    g_out = jax.block_until_ready(g_out)

    assert o.shape == (B, 1, HOP * (T - 1)), o.shape
    assert g_out.shape == (B, GIN, 1), g_out.shape
    assert bool(jnp.all(jnp.isfinite(o)))
    print("KERNEL_OK")
</pallas_src>

<mosaic_0001>
module attributes {stable_mosaic.version = 11 : i64} {
  func.func @_generator_kernel(%arg0: i32, %arg1: memref<8x48xf32, #tpu.memory_space<vmem>>, %arg2: memref<1x40xf32, #tpu.memory_space<vmem>>, %arg3: memref<48x64xf32, #tpu.memory_space<vmem>>, %arg4: memref<40x448xf32, #tpu.memory_space<vmem>>, %arg5: memref<432x192xf32, #tpu.memory_space<vmem>>, %arg6: memref<2216x72xf32, #tpu.memory_space<vmem>>, %arg7: memref<2x28xf32, #tpu.memory_space<vmem>>, %arg8: memref<24x64xf32, #tpu.memory_space<vmem>>, %arg9: memref<1x448xf32, #tpu.memory_space<vmem>>, %arg10: memref<8x36xf32, #tpu.memory_space<vmem>>, %arg11: memref<8x36xf32, #tpu.memory_space<vmem>>, %arg12: memref<1x72xf32, #tpu.memory_space<vmem>>, %arg13: memref<16x36xf32, #tpu.memory_space<vmem>>) attributes {dimension_semantics = [#tpu.dimension_semantics<arbitrary>], iteration_bounds = array<i64: 1>, scalar_prefetch = 0 : i64, scratch_operands = 6 : i64, tpu.core_type = #tpu.core_type<tc>, window_params = [{pipeline_mode = #tpu.pipeline_mode<synchronous>, transform_indices = @transform_0, window_bounds = array<i64: 8, 48>}, {pipeline_mode = #tpu.pipeline_mode<synchronous>, transform_indices = @transform_1, window_bounds = array<i64: 1, 40>}, {pipeline_mode = #tpu.pipeline_mode<synchronous>, transform_indices = @transform_2, window_bounds = array<i64: 48, 64>}, {pipeline_mode = #tpu.pipeline_mode<synchronous>, transform_indices = @transform_3, window_bounds = array<i64: 40, 448>}, {pipeline_mode = #tpu.pipeline_mode<synchronous>, transform_indices = @transform_4, window_bounds = array<i64: 432, 192>}, {pipeline_mode = #tpu.pipeline_mode<synchronous>, transform_indices = @transform_5, window_bounds = array<i64: 2216, 72>}, {pipeline_mode = #tpu.pipeline_mode<synchronous>, transform_indices = @transform_6, window_bounds = array<i64: 2, 28>}]} {
    %cst = arith.constant 0.000000e+00 : f32
    %0 = vector.broadcast %cst : f32 to vector<24x64xf32>
    %c0 = arith.constant 0 : index
    %c0_0 = arith.constant 0 : index
    %1 = vector.load %arg8[%c0, %c0_0] : memref<24x64xf32, #tpu.memory_space<vmem>>, vector<24x64xf32>
    tpu.vector_store %arg8[%c0, %c0_0], %0 {strides = array<i32>} : memref<24x64xf32, #tpu.memory_space<vmem>>, vector<24x64xf32>,
    %c0_1 = arith.constant 0 : index
    %c0_2 = arith.constant 0 : index
    %2 = vector.load %arg2[%c0_1, %c0_2] : memref<1x40xf32, #tpu.memory_space<vmem>>, vector<1x40xf32>
    %c0_3 = arith.constant 0 : index
    %c0_4 = arith.constant 0 : index
    %3 = vector.load %arg4[%c0_3, %c0_4] : memref<40x448xf32, #tpu.memory_space<vmem>>, vector<40x448xf32>
    %cst_5 = arith.constant dense<0.000000e+00> : vector<1x448xf32>
    %4 = tpu.matmul %2, %3, %cst_5 {dimension_numbers = #tpu.dot_dimension_numbers<[1], [0], [0], [1], [0, 0, 1, 1], [], []>} : vector<1x40xf32>, vector<40x448xf32>, vector<1x448xf32> -> vector<1x448xf32>
    %c0_6 = arith.constant 0 : index
    %c0_7 = arith.constant 0 : index
    %5 = vector.load %arg9[%c0_6, %c0_7] : memref<1x448xf32, #tpu.memory_space<vmem>>, vector<1x448xf32>
    tpu.vector_store %arg9[%c0_6, %c0_7], %4 {strides = array<i32>} : memref<1x448xf32, #tpu.memory_space<vmem>>, vector<1x448xf32>,
    %c0_8 = arith.constant 0 : index
    %c0_9 = arith.constant 0 : index
    %6 = vector.load %arg1[%c0_8, %c0_9] : memref<8x48xf32, #tpu.memory_space<vmem>>, vector<8x48xf32>
    %c0_10 = arith.constant 0 : index
    %c0_11 = arith.constant 0 : index
    %7 = vector.load %arg3[%c0_10, %c0_11] : memref<48x64xf32, #tpu.memory_space<vmem>>, vector<48x64xf32>
    %cst_12 = arith.constant dense<0.000000e+00> : vector<8x64xf32>
    %8 = tpu.matmul %6, %7, %cst_12 {dimension_numbers = #tpu.dot_dimension_numbers<[1], [0], [0], [1], [0, 0, 1, 1], [], []>} : vector<8x48xf32>, vector<48x64xf32>, vector<8x64xf32> -> vector<8x64xf32>
    %c0_13 = arith.constant 0 : index
    %c0_14 = arith.constant 0 : index
    %9 = vector.load %arg9[%c0_13, %c0_14] : memref<1x448xf32, #tpu.memory_space<vmem>>, vector<1x64xf32>
    %10 = vector.broadcast %9 : vector<1x64xf32> to vector<8x64xf32>
    %11 = arith.addf %8, %10 : vector<8x64xf32>
    %c8 = arith.constant 8 : index
    %c0_15 = arith.constant 0 : index
    %12 = vector.load %arg8[%c8, %c0_15] : memref<24x64xf32, #tpu.memory_space<vmem>>, vector<8x64xf32>
    tpu.vector_store %arg8[%c8, %c0_15], %11 {strides = array<i32>} : memref<24x64xf32, #tpu.memory_space<vmem>>, vector<8x64xf32>,
    %cst_16 = arith.constant 0.000000e+00 : f32
    %13 = vector.broadcast %cst_16 : f32 to vector<8x64xf32>
    %c0_17 = arith.constant 0 : index
    %c64 = arith.constant 64 : index
    %14 = vector.load %arg9[%c0_17, %c64] : memref<1x448xf32, #tpu.memory_space<vmem>>, vector<1x64xf32>
    %15 = vector.broadcast %14 : vector<1x64xf32> to vector<8x64xf32>
    %16 = arith.addf %13, %15 : vector<8x64xf32>
    %c6 = arith.constant 6 : index
    %c0_18 = arith.constant 0 : index
    %17 = vector.load %arg8[%c6, %c0_18] : memref<24x64xf32, #tpu.memory_space<vmem>>, vector<8x64xf32>
    %c1200 = arith.constant 1200 : index
    %c0_19 = arith.constant 0 : index
    %18 = vector.load %arg6[%c1200, %c0_19] : memref<2216x72xf32, #tpu.memory_space<vmem>>, vector<1x64xf32>
    %19 = vector.broadcast %18 : vector<1x64xf32> to vector<8x64xf32>
    %20 = arith.mulf %17, %19 : vector<8x64xf32>
    %21 = arith.addf %16, %20 : vector<8x64xf32>
    %c7 = arith.constant 7 : index
    %c0_20 = arith.constant 0 : index
    %22 = vector.load %arg8[%c7, %c0_20] : memref<24x64xf32, #tpu.memory_space<vmem>>, vector<8x64xf32>
    %c1201 = arith.constant 1201 : index
    %c0_21 = arith.constant 0 : index
    %23 = vector.load %arg6[%c1201, %c0_21] : memref<2216x72xf32, #tpu.memory_space<vmem>>, vector<1x64xf32>
    %24 = vector.broadcast %23 : vector<1x64xf32> to vector<8x64xf32>
    %25 = arith.mulf %22, %24 : vector<8x64xf32>
    %26 = arith.addf %21, %25 : vector<8x64xf32>
    %c8_22 = arith.constant 8 : index
    %c0_23 = arith.constant 0 : index
    %27 = vector.load %arg8[%c8_22, %c0_23] : memref<24x64xf32, #tpu.memory_space<vmem>>, vector<8x64xf32>
    %c1202 = arith.constant 1202 : index
    %c0_24 = arith.constant 0 : index
    %28 = vector.load %arg6[%c1202, %c0_24] : memref<2216x72xf32, #tpu.memory_space<vmem>>, vector<1x64xf32>
    %29 = vector.broadcast %28 : vector<1x64xf32> to vector<8x64xf32>
    %30 = arith.mulf %27, %29 : vector<8x64xf32>
    %31 = arith.addf %26, %30 : vector<8x64xf32>
    %c9 = arith.constant 9 : index
    %c0_25 = arith.constant 0 : index
    %32 = vector.load %arg8[%c9, %c0_25] : memref<24x64xf32, #tpu.memory_space<vmem>>, vector<8x64xf32>
    %c1203 = arith.constant 1203 : index
    %c0_26 = arith.constant 0 : index
    %33 = vector.load %arg6[%c1203, %c0_26] : memref<2216x72xf32, #tpu.memory_space<vmem>>, vector<1x64xf32>
    %34 = vector.broadcast %33 : vector<1x64xf32> to vector<8x64xf32>
    %35 = arith.mulf %32, %34 : vector<8x64xf32>
    %36 = arith.addf %31, %35 : vector<8x64xf32>
    %c10 = arith.constant 10 : index
    %c0_27 = arith.constant 0 : index
    %37 = vector.load %arg8[%c10, %c0_27] : memref<24x64xf32, #tpu.memory_space<vmem>>, vector<8x64xf32>
    %c1204 = arith.constant 1204 : index
    %c0_28 = arith.constant 0 : index
    %38 = vector.load %arg6[%c1204, %c0_28] : memref<2216x72xf32, #tpu.memory_space<vmem>>, vector<1x64xf32>
    %39 = vector.broadcast %38 : vector<1x64xf32> to vector<8x64xf32>
    %40 = arith.mulf %37, %39 : vector<8x64xf32>
    %41 = arith.addf %36, %40 : vector<8x64xf32>
    %c0_29 = arith.constant 0 : index
    %c0_30 = arith.constant 0 : index
    %42 = vector.load %arg5[%c0_29, %c0_30] : memref<432x192xf32, #tpu.memory_space<vmem>>, vector<64x192xf32>
    %cst_31 = arith.constant dense<0.000000e+00> : vector<8x192xf32>
    %43 = tpu.matmul %41, %42, %cst_31 {dimension_numbers = #tpu.dot_dimension_numbers<[1], [0], [0], [1], [0, 0, 1, 1], [], []>} : vector<8x64xf32>, vector<64x192xf32>, vector<8x192xf32> -> vector<8x192xf32>
    %c64_32 = arith.constant 64 : index
    %c0_33 = arith.constant 0 : index
    %44 = vector.load %arg5[%c64_32, %c0_33] : memref<432x192xf32, #tpu.memory_space<vmem>>, vector<1x192xf32>
    %45 = vector.broadcast %44 : vector<1x192xf32> to vector<8x192xf32>
    %46 = arith.addf %43, %45 : vector<8x192xf32>
    %47 = arith.negf %46 : vector<8x192xf32>
    %48 = math.exp %47 : vector<8x192xf32>
    %cst_34 = arith.constant 1.000000e+00 : f32
    %49 = vector.broadcast %cst_34 : f32 to vector<8x192xf32>
    %50 = arith.addf %49, %48 : vector<8x192xf32>
    %51 = arith.divf %49, %50 : vector<8x192xf32>
    %52 = arith.mulf %46, %51 : vector<8x192xf32>
    %c0_35 = arith.constant 0 : index
    %c0_36 = arith.constant 0 : index
    %53 = vector.load %arg6[%c0_35, %c0_36] : memref<2216x72xf32, #tpu.memory_space<vmem>>, vector<192x64xf32>
    %cst_37 = arith.constant dense<0.000000e+00> : vector<8x64xf32>
    %54 = tpu.matmul %52, %53, %cst_37 {dimension_numbers = #tpu.dot_dimension_numbers<[1], [0], [0], [1], [0, 0, 1, 1], [], []>} : vector<8x192xf32>, vector<192x64xf32>, vector<8x64xf32> -> vector<8x64xf32>
    %c192 = arith.constant 192 : index
    %c0_38 = arith.constant 0 : index
    %55 = vector.load %arg6[%c192, %c0_38] : memref<2216x72xf32, #tpu.memory_space<vmem>>, vector<1x64xf32>
    %56 = vector.broadcast %55 : vector<1x64xf32> to vector<8x64xf32>
    %57 = arith.addf %54, %56 : vector<8x64xf32>
    %58 = arith.addf %11, %57 : vector<8x64xf32>
    %c8_39 = arith.constant 8 : index
    %c0_40 = arith.constant 0 : index
    %59 = vector.load %arg8[%c8_39, %c0_40] : memref<24x64xf32, #tpu.memory_space<vmem>>, vector<8x64xf32>
    tpu.vector_store %arg8[%c8_39, %c0_40], %58 {strides = array<i32>} : memref<24x64xf32, #tpu.memory_space<vmem>>, vector<8x64xf32>,
    %cst_41 = arith.constant 0.000000e+00 : f32
    %60 = vector.broadcast %cst_41 : f32 to vector<8x64xf32>
    %c0_42 = arith.constant 0 : index
    %c128 = arith.constant 128 : index
    %61 = vector.load %arg9[%c0_42, %c128] : memref<1x448xf32, #tpu.memory_space<vmem>>, vector<1x64xf32>
    %62 = vector.broadcast %61 : vector<1x64xf32> to vector<8x64xf32>
    %63 = arith.addf %60, %62 : vector<8x64xf32>
    %c4 = arith.constant 4 : index
    %c0_43 = arith.constant 0 : index
    %64 = vector.load %arg8[%c4, %c0_43] : memref<24x64xf32, #tpu.memory_space<vmem>>, vector<8x64xf32>
    %c1205 = arith.constant 1205 : index
    %c0_44 = arith.constant 0 : index
    %65 = vector.load %arg6[%c1205, %c0_44] : memref<2216x72xf32, #tpu.memory_space<vmem>>, vector<1x64xf32>
    %66 = vector.broadcast %65 : vector<1x64xf32> to vector<8x64xf32>
    %67 = arith.mulf %64, %66 : vector<8x64xf32>
    %68 = arith.addf %63, %67 : vector<8x64xf32>
    %c6_45 = arith.constant 6 : index
    %c0_46 = arith.constant 0 : index
    %69 = vector.load %arg8[%c6_45, %c0_46] : memref<24x64xf32, #tpu.memory_space<vmem>>, vector<8x64xf32>
    %c1206 = arith.constant 1206 : index
    %c0_47 = arith.constant 0 : index
    %70 = vector.load %arg6[%c1206, %c0_47] : memref<2216x72xf32, #tpu.memory_space<vmem>>, vector<1x64xf32>
    %71 = vector.broadcast %70 : vector<1x64xf32> to vector<8x64xf32>
    %72 = arith.mulf %69, %71 : vector<8x64xf32>
    %73 = arith.addf %68, %72 : vector<8x64xf32>
    %c8_48 = arith.constant 8 : index
    %c0_49 = arith.constant 0 : index
    %74 = vector.load %arg8[%c8_48, %c0_49] : memref<24x64xf32, #tpu.memory_space<vmem>>, vector<8x64xf32>
    %c1207 = arith.constant 1207 : index
    %c0_50 = arith.constant 0 : index
    %75 = vector.load %arg6[%c1207, %c0_50] : memref<2216x72xf32, #tpu.memory_space<vmem>>, vector<1x64xf32>
    %76 = vector.broadcast %75 : vector<1x64xf32> to vector<8x64xf32>
    %77 = arith.mulf %74, %76 : vector<8x64xf32>
    %78 = arith.addf %73, %77 : vector<8x64xf32>
    %c10_51 = arith.constant 10 : index
    %c0_52 = arith.constant 0 : index
    %79 = vector.load %arg8[%c10_51, %c0_52] : memref<24x64xf32, #tpu.memory_space<vmem>>, vector<8x64xf32>
    %c1208 = arith.constant 1208 : index
    %c0_53 = arith.constant 0 : index
    %80 = vector.load %arg6[%c1208, %c0_53] : memref<2216x72xf32, #tpu.memory_space<vmem>>, vector<1x64xf32>
    %81 = vector.broadcast %80 : vector<1x64xf32> to vector<8x64xf32>
    %82 = arith.mulf %79, %81 : vector<8x64xf32>
    %83 = arith.addf %78, %82 : vector<8x64xf32>
    %c12 = arith.constant 12 : index
    %c0_54 = arith.constant 0 : index
    %84 = vector.load %arg8[%c12, %c0_54] : memref<24x64xf32, #tpu.memory_space<vmem>>, vector<8x64xf32>
    %c1209 = arith.constant 1209 : index
    %c0_55 = arith.constant 0 : index
    %85 = vector.load %arg6[%c1209, %c0_55] : memref<2216x72xf32, #tpu.memory_space<vmem>>, vector<1x64xf32>
    %86 = vector.broadcast %85 : vector<1x64xf32> to vector<8x64xf32>
    %87 = arith.mulf %84, %86 : vector<8x64xf32>
    %88 = arith.addf %83, %87 : vector<8x64xf32>
    %c72 = arith.constant 72 : index
    %c0_56 = arith.constant 0 : index
    %89 = vector.load %arg5[%c72, %c0_56] : memref<432x192xf32, #tpu.memory_space<vmem>>, vector<64x192xf32>
    %cst_57 = arith.constant dense<0.000000e+00> : vector<8x192xf32>
    %90 = tpu.matmul %88, %89, %cst_57 {dimension_numbers = #tpu.dot_dimension_numbers<[1], [0], [0], [1], [0, 0, 1, 1], [], []>} : vector<8x64xf32>, vector<64x192xf32>, vector<8x192xf32> -> vector<8x192xf32>
    %c136 = arith.constant 136 : index
    %c0_58 = arith.constant 0 : index
    %91 = vector.load %arg5[%c136, %c0_58] : memref<432x192xf32, #tpu.memory_space<vmem>>, vector<1x192xf32>
    %92 = vector.broadcast %91 : vector<1x192xf32> to vector<8x192xf32>
    %93 = arith.addf %90, %92 : vector<8x192xf32>
    %94 = arith.negf %93 : vector<8x192xf32>
    %95 = math.exp %94 : vector<8x192xf32>
    %cst_59 = arith.constant 1.000000e+00 : f32
    %96 = vector.broadcast %cst_59 : f32 to vector<8x192xf32>
    %97 = arith.addf %96, %95 : vector<8x192xf32>
    %98 = arith.divf %96, %97 : vector<8x192xf32>
    %99 = arith.mulf %93, %98 : vector<8x192xf32>
    %c200 = arith.constant 200 : index
    %c0_60 = arith.constant 0 : index
    %100 = vector.load %arg6[%c200, %c0_60] : memref<2216x72xf32, #tpu.memory_space<vmem>>, vector<192x64xf32>
    %cst_61 = arith.constant dense<0.000000e+00> : vector<8x64xf32>
    %101 = tpu.matmul %99, %100, %cst_61 {dimension_numbers = #tpu.dot_dimension_numbers<[1], [0], [0], [1], [0, 0, 1, 1], [], []>} : vector<8x192xf32>, vector<192x64xf32>, vector<8x64xf32> -> vector<8x64xf32>
    %c392 = arith.constant 392 : index
    %c0_62 = arith.constant 0 : index
    %102 = vector.load %arg6[%c392, %c0_62] : memref<2216x72xf32, #tpu.memory_space<vmem>>, vector<1x64xf32>
    %103 = vector.broadcast %102 : vector<1x64xf32> to vector<8x64xf32>
    %104 = arith.addf %101, %103 : vector<8x64xf32>
    %105 = arith.addf %58, %104 : vector<8x64xf32>
    %c8_63 = arith.constant 8 : index
    %c0_64 = arith.constant 0 : index
    %106 = vector.load %arg8[%c8_63, %c0_64] : memref<24x64xf32, #tpu.memory_space<vmem>>, vector<8x64xf32>
    tpu.vector_store %arg8[%c8_63, %c0_64], %105 {strides = array<i32>} : memref<24x64xf32, #tpu.memory_space<vmem>>, vector<8x64xf32>,
    %cst_65 = arith.constant 0.000000e+00 : f32
    %107 = vector.broadcast %cst_65 : f32 to vector<8x64xf32>
    %c0_66 = arith.constant 0 : index
    %c192_67 = arith.constant 192 : index
    %108 = vector.load %arg9[%c0_66, %c192_67] : memref<1x448xf32, #tpu.memory_space<vmem>>, vector<1x64xf32>
    %109 = vector.broadcast %108 : vector<1x64xf32> to vector<8x64xf32>
    %110 = arith.addf %107, %109 : vector<8x64xf32>
    %c0_68 = arith.constant 0 : index
    %c0_69 = arith.constant 0 : index
    %111 = vector.load %arg8[%c0_68, %c0_69] : memref<24x64xf32, #tpu.memory_space<vmem>>, vector<8x64xf32>
    %c1210 = arith.constant 1210 : index
    %c0_70 = arith.constant 0 : index
    %112 = vector.load %arg6[%c1210, %c0_70] : memref<2216x72xf32, #tpu.memory_space<vmem>>, vector<1x64xf32>
    %113 = vector.broadcast %112 : vector<1x64xf32> to vector<8x64xf32>
    %114 = arith.mulf %111, %113 : vector<8x64xf32>
    %115 = arith.addf %110, %114 : vector<8x64xf32>
    %c4_71 = arith.constant 4 : index
    %c0_72 = arith.constant 0 : index
    %116 = vector.load %arg8[%c4_71, %c0_72] : memref<24x64xf32, #tpu.memory_space<vmem>>, vector<8x64xf32>
    %c1211 = arith.constant 1211 : index
    %c0_73 = arith.constant 0 : index
    %117 = vector.load %arg6[%c1211, %c0_73] : memref<2216x72xf32, #tpu.memory_space<vmem>>, vector<1x64xf32>
    %118 = vector.broadcast %117 : vector<1x64xf32> to vector<8x64xf32>
    %119 = arith.mulf %116, %118 : vector<8x64xf32>
    %120 = arith.addf %115, %119 : vector<8x64xf32>
    %c8_74 = arith.constant 8 : index
    %c0_75 = arith.constant 0 : index
    %121 = vector.load %arg8[%c8_74, %c0_75] : memref<24x64xf32, #tpu.memory_space<vmem>>, vector<8x64xf32>
    %c1212 = arith.constant 1212 : index
    %c0_76 = arith.constant 0 : index
    %122 = vector.load %arg6[%c1212, %c0_76] : memref<2216x72xf32, #tpu.memory_space<vmem>>, vector<1x64xf32>
    %123 = vector.broadcast %122 : vector<1x64xf32> to vector<8x64xf32>
    %124 = arith.mulf %121, %123 : vector<8x64xf32>
    %125 = arith.addf %120, %124 : vector<8x64xf32>
    %c12_77 = arith.constant 12 : index
    %c0_78 = arith.constant 0 : index
    %126 = vector.load %arg8[%c12_77, %c0_78] : memref<24x64xf32, #tpu.memory_space<vmem>>, vector<8x64xf32>
    %c1213 = arith.constant 1213 : index
    %c0_79 = arith.constant 0 : index
    %127 = vector.load %arg6[%c1213, %c0_79] : memref<2216x72xf32, #tpu.memory_space<vmem>>, vector<1x64xf32>
    %128 = vector.broadcast %127 : vector<1x64xf32> to vector<8x64xf32>
    %129 = arith.mulf %126, %128 : vector<8x64xf32>
    %130 = arith.addf %125, %129 : vector<8x64xf32>
    %c16 = arith.constant 16 : index
    %c0_80 = arith.constant 0 : index
    %131 = vector.load %arg8[%c16, %c0_80] : memref<24x64xf32, #tpu.memory_space<vmem>>, vector<8x64xf32>
    %c1214 = arith.constant 1214 : index
    %c0_81 = arith.constant 0 : index
    %132 = vector.load %arg6[%c1214, %c0_81] : memref<2216x72xf32, #tpu.memory_space<vmem>>, vector<1x64xf32>
    %133 = vector.broadcast %132 : vector<1x64xf32> to vector<8x64xf32>
    %134 = arith.mulf %131, %133 : vector<8x64xf32>
    %135 = arith.addf %130, %134 : vector<8x64xf32>
    %c144 = arith.constant 144 : index
    %c0_82 = arith.constant 0 : index
    %136 = vector.load %arg5[%c144, %c0_82] : memref<432x192xf32, #tpu.memory_space<vmem>>, vector<64x192xf32>
    %cst_83 = arith.constant dense<0.000000e+00> : vector<8x192xf32>
    %137 = tpu.matmul %135, %136, %cst_83 {dimension_numbers = #tpu.dot_dimension_numbers<[1], [0], [0], [1], [0, 0, 1, 1], [], []>} : vector<8x64xf32>, vector<64x192xf32>, vector<8x192xf32> -> vector<8x192xf32>
    %c208 = arith.constant 208 : index
    %c0_84 = arith.constant 0 : index
    %138 = vector.load %arg5[%c208, %c0_84] : memref<432x192xf32, #tpu.memory_space<vmem>>, vector<1x192xf32>
    %139 = vector.broadcast %138 : vector<1x192xf32> to vector<8x192xf32>
    %140 = arith.addf %137, %139 : vector<8x192xf32>
    %141 = arith.negf %140 : vector<8x192xf32>
    %142 = math.exp %141 : vector<8x192xf32>
    %cst_85 = arith.constant 1.000000e+00 : f32
    %143 = vector.broadcast %cst_85 : f32 to vector<8x192xf32>
    %144 = arith.addf %143, %142 : vector<8x192xf32>
    %145 = arith.divf %143, %144 : vector<8x192xf32>
    %146 = arith.mulf %140, %145 : vector<8x192xf32>
    %c400 = arith.constant 400 : index
    %c0_86 = arith.constant 0 : index
    %147 = vector.load %arg6[%c400, %c0_86] : memref<2216x72xf32, #tpu.memory_space<vmem>>, vector<192x64xf32>
    %cst_87 = arith.constant dense<0.000000e+00> : vector<8x64xf32>
    %148 = tpu.matmul %146, %147, %cst_87 {dimension_numbers = #tpu.dot_dimension_numbers<[1], [0], [0], [1], [0, 0, 1, 1], [], []>} : vector<8x192xf32>, vector<192x64xf32>, vector<8x64xf32> -> vector<8x64xf32>
    %c592 = arith.constant 592 : index
    %c0_88 = arith.constant 0 : index
    %149 = vector.load %arg6[%c592, %c0_88] : memref<2216x72xf32, #tpu.memory_space<vmem>>, vector<1x64xf32>
    %150 = vector.broadcast %149 : vector<1x64xf32> to vector<8x64xf32>
    %151 = arith.addf %148, %150 : vector<8x64xf32>
    %152 = arith.addf %105, %151 : vector<8x64xf32>
    %c8_89 = arith.constant 8 : index
    %c0_90 = arith.constant 0 : index
    %153 = vector.load %arg8[%c8_89, %c0_90] : memref<24x64xf32, #tpu.memory_space<vmem>>, vector<8x64xf32>
    tpu.vector_store %arg8[%c8_89, %c0_90], %152 {strides = array<i32>} : memref<24x64xf32, #tpu.memory_space<vmem>>, vector<8x64xf32>,
    %cst_91 = arith.constant 0.000000e+00 : f32
    %154 = vector.broadcast %cst_91 : f32 to vector<8x64xf32>
    %c0_92 = arith.constant 0 : index
    %c256 = arith.constant 256 : index
    %155 = vector.load %arg9[%c0_92, %c256] : memref<1x448xf32, #tpu.memory_space<vmem>>, vector<1x64xf32>
    %156 = vector.broadcast %155 : vector<1x64xf32> to vector<8x64xf32>
    %157 = arith.addf %154, %156 : vector<8x64xf32>
    %c6_93 = arith.constant 6 : index
    %c0_94 = arith.constant 0 : index
    %158 = vector.load %arg8[%c6_93, %c0_94] : memref<24x64xf32, #tpu.memory_space<vmem>>, vector<8x64xf32>
    %c1215 = arith.constant 1215 : index
    %c0_95 = arith.constant 0 : index
    %159 = vector.load %arg6[%c1215, %c0_95] : memref<2216x72xf32, #tpu.memory_space<vmem>>, vector<1x64xf32>
    %160 = vector.broadcast %159 : vector<1x64xf32> to vector<8x64xf32>
    %161 = arith.mulf %158, %160 : vector<8x64xf32>
    %162 = arith.addf %157, %161 : vector<8x64xf32>
    %c7_96 = arith.constant 7 : index
    %c0_97 = arith.constant 0 : index
    %163 = vector.load %arg8[%c7_96, %c0_97] : memref<24x64xf32, #tpu.memory_space<vmem>>, vector<8x64xf32>
    %c1216 = arith.constant 1216 : index
    %c0_98 = arith.constant 0 : index
    %164 = vector.load %arg6[%c1216, %c0_98] : memref<2216x72xf32, #tpu.memory_space<vmem>>, vector<1x64xf32>
    %165 = vector.broadcast %164 : vector<1x64xf32> to vector<8x64xf32>
    %166 = arith.mulf %163, %165 : vector<8x64xf32>
    %167 = arith.addf %162, %166 : vector<8x64xf32>
    %c8_99 = arith.constant 8 : index
    %c0_100 = arith.constant 0 : index
    %168 = vector.load %arg8[%c8_99, %c0_100] : memref<24x64xf32, #tpu.memory_space<vmem>>, vector<8x64xf32>
    %c1217 = arith.constant 1217 : index
    %c0_101 = arith.constant 0 : index
    %169 = vector.load %arg6[%c1217, %c0_101] : memref<2216x72xf32, #tpu.memory_space<vmem>>, vector<1x64xf32>
    %170 = vector.broadcast %169 : vector<1x64xf32> to vector<8x64xf32>
    %171 = arith.mulf %168, %170 : vector<8x64xf32>
    %172 = arith.addf %167, %171 : vector<8x64xf32>
    %c9_102 = arith.constant 9 : index
    %c0_103 = arith.constant 0 : index
    %173 = vector.load %arg8[%c9_102, %c0_103] : memref<24x64xf32, #tpu.memory_space<vmem>>, vector<8x64xf32>
    %c1218 = arith.constant 1218 : index
    %c0_104 = arith.constant 0 : index
    %174 = vector.load %arg6[%c1218, %c0_104] : memref<2216x72xf32, #tpu.memory_space<vmem>>, vector<1x64xf32>
    %175 = vector.broadcast %174 : vector<1x64xf32> to vector<8x64xf32>
    %176 = arith.mulf %173, %175 : vector<8x64xf32>
    %177 = arith.addf %172, %176 : vector<8x64xf32>
    %c10_105 = arith.constant 10 : index
    %c0_106 = arith.constant 0 : index
    %178 = vector.load %arg8[%c10_105, %c0_106] : memref<24x64xf32, #tpu.memory_space<vmem>>, vector<8x64xf32>
    %c1219 = arith.constant 1219 : index
    %c0_107 = arith.constant 0 : index
    %179 = vector.load %arg6[%c1219, %c0_107] : memref<2216x72xf32, #tpu.memory_space<vmem>>, vector<1x64xf32>
    %180 = vector.broadcast %179 : vector<1x64xf32> to vector<8x64xf32>
    %181 = arith.mulf %178, %180 : vector<8x64xf32>
    %182 = arith.addf %177, %181 : vector<8x64xf32>
    %c216 = arith.constant 216 : index
    %c0_108 = arith.constant 0 : index
    %183 = vector.load %arg5[%c216, %c0_108] : memref<432x192xf32, #tpu.memory_space<vmem>>, vector<64x192xf32>
    %cst_109 = arith.constant dense<0.000000e+00> : vector<8x192xf32>
    %184 = tpu.matmul %182, %183, %cst_109 {dimension_numbers = #tpu.dot_dimension_numbers<[1], [0], [0], [1], [0, 0, 1, 1], [], []>} : vector<8x64xf32>, vector<64x192xf32>, vector<8x192xf32> -> vector<8x192xf32>
    %c280 = arith.constant 280 : index
    %c0_110 = arith.constant 0 : index
    %185 = vector.load %arg5[%c280, %c0_110] : memref<432x192xf32, #tpu.memory_space<vmem>>, vector<1x192xf32>
    %186 = vector.broadcast %185 : vector<1x192xf32> to vector<8x192xf32>
    %187 = arith.addf %184, %186 : vector<8x192xf32>
    %188 = arith.negf %187 : vector<8x192xf32>
    %189 = math.exp %188 : vector<8x192xf32>
    %cst_111 = arith.constant 1.000000e+00 : f32
    %190 = vector.broadcast %cst_111 : f32 to vector<8x192xf32>
    %191 = arith.addf %190, %189 : vector<8x192xf32>
    %192 = arith.divf %190, %191 : vector<8x192xf32>
    %193 = arith.mulf %187, %192 : vector<8x192xf32>
    %c600 = arith.constant 600 : index
    %c0_112 = arith.constant 0 : index
    %194 = vector.load %arg6[%c600, %c0_112] : memref<2216x72xf32, #tpu.memory_space<vmem>>, vector<192x64xf32>
    %cst_113 = arith.constant dense<0.000000e+00> : vector<8x64xf32>
    %195 = tpu.matmul %193, %194, %cst_113 {dimension_numbers = #tpu.dot_dimension_numbers<[1], [0], [0], [1], [0, 0, 1, 1], [], []>} : vector<8x192xf32>, vector<192x64xf32>, vector<8x64xf32> -> vector<8x64xf32>
    %c792 = arith.constant 792 : index
    %c0_114 = arith.constant 0 : index
    %196 = vector.load %arg6[%c792, %c0_114] : memref<2216x72xf32, #tpu.memory_space<vmem>>, vector<1x64xf32>
    %197 = vector.broadcast %196 : vector<1x64xf32> to vector<8x64xf32>
    %198 = arith.addf %195, %197 : vector<8x64xf32>
    %199 = arith.addf %152, %198 : vector<8x64xf32>
    %c8_115 = arith.constant 8 : index
    %c0_116 = arith.constant 0 : index
    %200 = vector.load %arg8[%c8_115, %c0_116] : memref<24x64xf32, #tpu.memory_space<vmem>>, vector<8x64xf32>
    tpu.vector_store %arg8[%c8_115, %c0_116], %199 {strides = array<i32>} : memref<24x64xf32, #tpu.memory_space<vmem>>, vector<8x64xf32>,
    %cst_117 = arith.constant 0.000000e+00 : f32
    %201 = vector.broadcast %cst_117 : f32 to vector<8x64xf32>
    %c0_118 = arith.constant 0 : index
    %c320 = arith.constant 320 : index
    %202 = vector.load %arg9[%c0_118, %c320] : memref<1x448xf32, #tpu.memory_space<vmem>>, vector<1x64xf32>
    %203 = vector.broadcast %202 : vector<1x64xf32> to vector<8x64xf32>
    %204 = arith.addf %201, %203 : vector<8x64xf32>
    %c4_119 = arith.constant 4 : index
    %c0_120 = arith.constant 0 : index
    %205 = vector.load %arg8[%c4_119, %c0_120] : memref<24x64xf32, #tpu.memory_space<vmem>>, vector<8x64xf32>
    %c1220 = arith.constant 1220 : index
    %c0_121 = arith.constant 0 : index
    %206 = vector.load %arg6[%c1220, %c0_121] : memref<2216x72xf32, #tpu.memory_space<vmem>>, vector<1x64xf32>
    %207 = vector.broadcast %206 : vector<1x64xf32> to vector<8x64xf32>
    %208 = arith.mulf %205, %207 : vector<8x64xf32>
    %209 = arith.addf %204, %208 : vector<8x64xf32>
    %c6_122 = arith.constant 6 : index
    %c0_123 = arith.constant 0 : index
    %210 = vector.load %arg8[%c6_122, %c0_123] : memref<24x64xf32, #tpu.memory_space<vmem>>, vector<8x64xf32>
    %c1221 = arith.constant 1221 : index
    %c0_124 = arith.constant 0 : index
    %211 = vector.load %arg6[%c1221, %c0_124] : memref<2216x72xf32, #tpu.memory_space<vmem>>, vector<1x64xf32>
    %212 = vector.broadcast %211 : vector<1x64xf32> to vector<8x64xf32>
    %213 = arith.mulf %210, %212 : vector<8x64xf32>
    %214 = arith.addf %209, %213 : vector<8x64xf32>
    %c8_125 = arith.constant 8 : index
    %c0_126 = arith.constant 0 : index
    %215 = vector.load %arg8[%c8_125, %c0_126] : memref<24x64xf32, #tpu.memory_space<vmem>>, vector<8x64xf32>
    %c1222 = arith.constant 1222 : index
    %c0_127 = arith.constant 0 : index
    %216 = vector.load %arg6[%c1222, %c0_127] : memref<2216x72xf32, #tpu.memory_space<vmem>>, vector<1x64xf32>
    %217 = vector.broadcast %216 : vector<1x64xf32> to vector<8x64xf32>
    %218 = arith.mulf %215, %217 : vector<8x64xf32>
    %219 = arith.addf %214, %218 : vector<8x64xf32>
    %c10_128 = arith.constant 10 : index
    %c0_129 = arith.constant 0 : index
    %220 = vector.load %arg8[%c10_128, %c0_129] : memref<24x64xf32, #tpu.memory_space<vmem>>, vector<8x64xf32>
    %c1223 = arith.constant 1223 : index
    %c0_130 = arith.constant 0 : index
    %221 = vector.load %arg6[%c1223, %c0_130] : memref<2216x72xf32, #tpu.memory_space<vmem>>, vector<1x64xf32>
    %222 = vector.broadcast %221 : vector<1x64xf32> to vector<8x64xf32>
    %223 = arith.mulf %220, %222 : vector<8x64xf32>
    %224 = arith.addf %219, %223 : vector<8x64xf32>
    %c12_131 = arith.constant 12 : index
    %c0_132 = arith.constant 0 : index
    %225 = vector.load %arg8[%c12_131, %c0_132] : memref<24x64xf32, #tpu.memory_space<vmem>>, vector<8x64xf32>
    %c1224 = arith.constant 1224 : index
    %c0_133 = arith.constant 0 : index
    %226 = vector.load %arg6[%c1224, %c0_133] : memref<2216x72xf32, #tpu.memory_space<vmem>>, vector<1x64xf32>
    %227 = vector.broadcast %226 : vector<1x64xf32> to vector<8x64xf32>
    %228 = arith.mulf %225, %227 : vector<8x64xf32>
    %229 = arith.addf %224, %228 : vector<8x64xf32>
    %c288 = arith.constant 288 : index
    %c0_134 = arith.constant 0 : index
    %230 = vector.load %arg5[%c288, %c0_134] : memref<432x192xf32, #tpu.memory_space<vmem>>, vector<64x192xf32>
    %cst_135 = arith.constant dense<0.000000e+00> : vector<8x192xf32>
    %231 = tpu.matmul %229, %230, %cst_135 {dimension_numbers = #tpu.dot_dimension_numbers<[1], [0], [0], [1], [0, 0, 1, 1], [], []>} : vector<8x64xf32>, vector<64x192xf32>, vector<8x192xf32> -> vector<8x192xf32>
    %c352 = arith.constant 352 : index
    %c0_136 = arith.constant 0 : index
    %232 = vector.load %arg5[%c352, %c0_136] : memref<432x192xf32, #tpu.memory_space<vmem>>, vector<1x192xf32>
    %233 = vector.broadcast %232 : vector<1x192xf32> to vector<8x192xf32>
    %234 = arith.addf %231, %233 : vector<8x192xf32>
    %235 = arith.negf %234 : vector<8x192xf32>
    %236 = math.exp %235 : vector<8x192xf32>
    %cst_137 = arith.constant 1.000000e+00 : f32
    %237 = vector.broadcast %cst_137 : f32 to vector<8x192xf32>
    %238 = arith.addf %237, %236 : vector<8x192xf32>
    %239 = arith.divf %237, %238 : vector<8x192xf32>
    %240 = arith.mulf %234, %239 : vector<8x192xf32>
    %c800 = arith.constant 800 : index
    %c0_138 = arith.constant 0 : index
    %241 = vector.load %arg6[%c800, %c0_138] : memref<2216x72xf32, #tpu.memory_space<vmem>>, vector<192x64xf32>
    %cst_139 = arith.constant dense<0.000000e+00> : vector<8x64xf32>
    %242 = tpu.matmul %240, %241, %cst_139 {dimension_numbers = #tpu.dot_dimension_numbers<[1], [0], [0], [1], [0, 0, 1, 1], [], []>} : vector<8x192xf32>, vector<192x64xf32>, vector<8x64xf32> -> vector<8x64xf32>
    %c992 = arith.constant 992 : index
    %c0_140 = arith.constant 0 : index
    %243 = vector.load %arg6[%c992, %c0_140] : memref<2216x72xf32, #tpu.memory_space<vmem>>, vector<1x64xf32>
    %244 = vector.broadcast %243 : vector<1x64xf32> to vector<8x64xf32>
    %245 = arith.addf %242, %244 : vector<8x64xf32>
    %246 = arith.addf %199, %245 : vector<8x64xf32>
    %c8_141 = arith.constant 8 : index
    %c0_142 = arith.constant 0 : index
    %247 = vector.load %arg8[%c8_141, %c0_142] : memref<24x64xf32, #tpu.memory_space<vmem>>, vector<8x64xf32>
    tpu.vector_store %arg8[%c8_141, %c0_142], %246 {strides = array<i32>} : memref<24x64xf32, #tpu.memory_space<vmem>>, vector<8x64xf32>,
    %cst_143 = arith.constant 0.000000e+00 : f32
    %248 = vector.broadcast %cst_143 : f32 to vector<8x64xf32>
    %c0_144 = arith.constant 0 : index
    %c384 = arith.constant 384 : index
    %249 = vector.load %arg9[%c0_144, %c384] : memref<1x448xf32, #tpu.memory_space<vmem>>, vector<1x64xf32>
    %250 = vector.broadcast %249 : vector<1x64xf32> to vector<8x64xf32>
    %251 = arith.addf %248, %250 : vector<8x64xf32>
    %c0_145 = arith.constant 0 : index
    %c0_146 = arith.constant 0 : index
    %252 = vector.load %arg8[%c0_145, %c0_146] : memref<24x64xf32, #tpu.memory_space<vmem>>, vector<8x64xf32>
    %c1225 = arith.constant 1225 : index
    %c0_147 = arith.constant 0 : index
    %253 = vector.load %arg6[%c1225, %c0_147] : memref<2216x72xf32, #tpu.memory_space<vmem>>, vector<1x64xf32>
    %254 = vector.broadcast %253 : vector<1x64xf32> to vector<8x64xf32>
    %255 = arith.mulf %252, %254 : vector<8x64xf32>
    %256 = arith.addf %251, %255 : vector<8x64xf32>
    %c4_148 = arith.constant 4 : index
    %c0_149 = arith.constant 0 : index
    %257 = vector.load %arg8[%c4_148, %c0_149] : memref<24x64xf32, #tpu.memory_space<vmem>>, vector<8x64xf32>
    %c1226 = arith.constant 1226 : index
    %c0_150 = arith.constant 0 : index
    %258 = vector.load %arg6[%c1226, %c0_150] : memref<2216x72xf32, #tpu.memory_space<vmem>>, vector<1x64xf32>
    %259 = vector.broadcast %258 : vector<1x64xf32> to vector<8x64xf32>
    %260 = arith.mulf %257, %259 : vector<8x64xf32>
    %261 = arith.addf %256, %260 : vector<8x64xf32>
    %c8_151 = arith.constant 8 : index
    %c0_152 = arith.constant 0 : index
    %262 = vector.load %arg8[%c8_151, %c0_152] : memref<24x64xf32, #tpu.memory_space<vmem>>, vector<8x64xf32>
    %c1227 = arith.constant 1227 : index
    %c0_153 = arith.constant 0 : index
    %263 = vector.load %arg6[%c1227, %c0_153] : memref<2216x72xf32, #tpu.memory_space<vmem>>, vector<1x64xf32>
    %264 = vector.broadcast %263 : vector<1x64xf32> to vector<8x64xf32>
    %265 = arith.mulf %262, %264 : vector<8x64xf32>
    %266 = arith.addf %261, %265 : vector<8x64xf32>
    %c12_154 = arith.constant 12 : index
    %c0_155 = arith.constant 0 : index
    %267 = vector.load %arg8[%c12_154, %c0_155] : memref<24x64xf32, #tpu.memory_space<vmem>>, vector<8x64xf32>
    %c1228 = arith.constant 1228 : index
    %c0_156 = arith.constant 0 : index
    %268 = vector.load %arg6[%c1228, %c0_156] : memref<2216x72xf32, #tpu.memory_space<vmem>>, vector<1x64xf32>
    %269 = vector.broadcast %268 : vector<1x64xf32> to vector<8x64xf32>
    %270 = arith.mulf %267, %269 : vector<8x64xf32>
    %271 = arith.addf %266, %270 : vector<8x64xf32>
    %c16_157 = arith.constant 16 : index
    %c0_158 = arith.constant 0 : index
    %272 = vector.load %arg8[%c16_157, %c0_158] : memref<24x64xf32, #tpu.memory_space<vmem>>, vector<8x64xf32>
    %c1229 = arith.constant 1229 : index
    %c0_159 = arith.constant 0 : index
    %273 = vector.load %arg6[%c1229, %c0_159] : memref<2216x72xf32, #tpu.memory_space<vmem>>, vector<1x64xf32>
    %274 = vector.broadcast %273 : vector<1x64xf32> to vector<8x64xf32>
    %275 = arith.mulf %272, %274 : vector<8x64xf32>
    %276 = arith.addf %271, %275 : vector<8x64xf32>
    %c360 = arith.constant 360 : index
    %c0_160 = arith.constant 0 : index
    %277 = vector.load %arg5[%c360, %c0_160] : memref<432x192xf32, #tpu.memory_space<vmem>>, vector<64x192xf32>
    %cst_161 = arith.constant dense<0.000000e+00> : vector<8x192xf32>
    %278 = tpu.matmul %276, %277, %cst_161 {dimension_numbers = #tpu.dot_dimension_numbers<[1], [0], [0], [1], [0, 0, 1, 1], [], []>} : vector<8x64xf32>, vector<64x192xf32>, vector<8x192xf32> -> vector<8x192xf32>
    %c424 = arith.constant 424 : index
    %c0_162 = arith.constant 0 : index
    %279 = vector.load %arg5[%c424, %c0_162] : memref<432x192xf32, #tpu.memory_space<vmem>>, vector<1x192xf32>
    %280 = vector.broadcast %279 : vector<1x192xf32> to vector<8x192xf32>
    %281 = arith.addf %278, %280 : vector<8x192xf32>
    %282 = arith.negf %281 : vector<8x192xf32>
    %283 = math.exp %282 : vector<8x192xf32>
    %cst_163 = arith.constant 1.000000e+00 : f32
    %284 = vector.broadcast %cst_163 : f32 to vector<8x192xf32>
    %285 = arith.addf %284, %283 : vector<8x192xf32>
    %286 = arith.divf %284, %285 : vector<8x192xf32>
    %287 = arith.mulf %281, %286 : vector<8x192xf32>
    %c1000 = arith.constant 1000 : index
    %c0_164 = arith.constant 0 : index
    %288 = vector.load %arg6[%c1000, %c0_164] : memref<2216x72xf32, #tpu.memory_space<vmem>>, vector<192x64xf32>
    %cst_165 = arith.constant dense<0.000000e+00> : vector<8x64xf32>
    %289 = tpu.matmul %287, %288, %cst_165 {dimension_numbers = #tpu.dot_dimension_numbers<[1], [0], [0], [1], [0, 0, 1, 1], [], []>} : vector<8x192xf32>, vector<192x64xf32>, vector<8x64xf32> -> vector<8x64xf32>
    %c1192 = arith.constant 1192 : index
    %c0_166 = arith.constant 0 : index
    %290 = vector.load %arg6[%c1192, %c0_166] : memref<2216x72xf32, #tpu.memory_space<vmem>>, vector<1x64xf32>
    %291 = vector.broadcast %290 : vector<1x64xf32> to vector<8x64xf32>
    %292 = arith.addf %289, %291 : vector<8x64xf32>
    %293 = arith.addf %246, %292 : vector<8x64xf32>
    %c1232 = arith.constant 1232 : index
    %c0_167 = arith.constant 0 : index
    %294 = vector.load %arg6[%c1232, %c0_167] : memref<2216x72xf32, #tpu.memory_space<vmem>>, vector<64x36xf32>
    %cst_168 = arith.constant dense<0.000000e+00> : vector<8x36xf32>
    %295 = tpu.matmul %293, %294, %cst_168 {dimension_numbers = #tpu.dot_dimension_numbers<[1], [0], [0], [1], [0, 0, 1, 1], [], []>} : vector<8x64xf32>, vector<64x36xf32>, vector<8x36xf32> -> vector<8x36xf32>
    %c1296 = arith.constant 1296 : index
    %c0_169 = arith.constant 0 : index
    %296 = vector.load %arg6[%c1296, %c0_169] : memref<2216x72xf32, #tpu.memory_space<vmem>>, vector<1x36xf32>
    %297 = vector.broadcast %296 : vector<1x36xf32> to vector<8x36xf32>
    %298 = arith.addf %295, %297 : vector<8x36xf32>
    %c0_170 = arith.constant 0 : index
    %c0_171 = arith.constant 0 : index
    %299 = vector.load %arg10[%c0_170, %c0_171] : memref<8x36xf32, #tpu.memory_space<vmem>>, vector<8x36xf32>
    tpu.vector_store %arg10[%c0_170, %c0_171], %298 {strides = array<i32>} : memref<8x36xf32, #tpu.memory_space<vmem>>, vector<8x36xf32>,
    %c0_172 = arith.constant 0 : index
    %c0_173 = arith.constant 0 : index
    %300 = vector.load %arg10[%c0_172, %c0_173] : memref<8x36xf32, #tpu.memory_space<vmem>>, vector<8x18xf32>
    %301 = math.exp %300 : vector<8x18xf32>
    %cst_174 = arith.constant 1.000000e+02 : f32
    %302 = vector.broadcast %cst_174 : f32 to vector<8x18xf32>
    %303 = arith.minimumf %301, %302 : vector<8x18xf32>
    %c0_175 = arith.constant 0 : index
    %c18 = arith.constant 18 : index
    %304 = vector.load %arg10[%c0_175, %c18] : memref<8x36xf32, #tpu.memory_space<vmem>>, vector<8x18xf32>
    %305 = math.cos %304 : vector<8x18xf32>
    %306 = arith.mulf %303, %305 : vector<8x18xf32>
    %c0_176 = arith.constant 0 : index
    %c0_177 = arith.constant 0 : index
    %307 = vector.load %arg11[%c0_176, %c0_177] : memref<8x36xf32, #tpu.memory_space<vmem>>, vector<8x18xf32>
    tpu.vector_store %arg11[%c0_176, %c0_177], %306 {strides = array<i32>} : memref<8x36xf32, #tpu.memory_space<vmem>>, vector<8x18xf32>,
    %308 = math.sin %304 : vector<8x18xf32>
    %309 = arith.mulf %303, %308 : vector<8x18xf32>
    %c0_178 = arith.constant 0 : index
    %c18_179 = arith.constant 18 : index
    %310 = vector.load %arg11[%c0_178, %c18_179] : memref<8x36xf32, #tpu.memory_space<vmem>>, vector<8x18xf32>
    tpu.vector_store %arg11[%c0_178, %c18_179], %309 {strides = array<i32>} : memref<8x36xf32, #tpu.memory_space<vmem>>, vector<8x18xf32>,
    %cst_180 = arith.constant 0.000000e+00 : f32
    %311 = vector.broadcast %cst_180 : f32 to vector<1x72xf32>
    %c0_181 = arith.constant 0 : index
    %c0_182 = arith.constant 0 : index
    %312 = vector.load %arg11[%c0_181, %c0_182] : memref<8x36xf32, #tpu.memory_space<vmem>>, vector<1x36xf32>
    %c1304 = arith.constant 1304 : index
    %c0_183 = arith.constant 0 : index
    %313 = vector.load %arg6[%c1304, %c0_183] : memref<2216x72xf32, #tpu.memory_space<vmem>>, vector<36x72xf32>
    %cst_184 = arith.constant dense<0.000000e+00> : vector<1x72xf32>
    %314 = tpu.matmul %312, %313, %cst_184 {dimension_numbers = #tpu.dot_dimension_numbers<[1], [0], [0], [1], [0, 0, 1, 1], [], []>} : vector<1x36xf32>, vector<36x72xf32>, vector<1x72xf32> -> vector<1x72xf32>
    %315 = arith.addf %311, %314 : vector<1x72xf32>
    %c1 = arith.constant 1 : index
    %c0_185 = arith.constant 0 : index
    %316 = vector.load %arg11[%c1, %c0_185] : memref<8x36xf32, #tpu.memory_space<vmem>>, vector<1x36xf32>
    %c1344 = arith.constant 1344 : index
    %c0_186 = arith.constant 0 : index
    %317 = vector.load %arg6[%c1344, %c0_186] : memref<2216x72xf32, #tpu.memory_space<vmem>>, vector<36x72xf32>
    %cst_187 = arith.constant dense<0.000000e+00> : vector<1x72xf32>
    %318 = tpu.matmul %316, %317, %cst_187 {dimension_numbers = #tpu.dot_dimension_numbers<[1], [0], [0], [1], [0, 0, 1, 1], [], []>} : vector<1x36xf32>, vector<36x72xf32>, vector<1x72xf32> -> vector<1x72xf32>
    %319 = arith.addf %315, %318 : vector<1x72xf32>
    %c2 = arith.constant 2 : index
    %c0_188 = arith.constant 0 : index
    %320 = vector.load %arg11[%c2, %c0_188] : memref<8x36xf32, #tpu.memory_space<vmem>>, vector<1x36xf32>
    %c1384 = arith.constant 1384 : index
    %c0_189 = arith.constant 0 : index
    %321 = vector.load %arg6[%c1384, %c0_189] : memref<2216x72xf32, #tpu.memory_space<vmem>>, vector<36x72xf32>
    %cst_190 = arith.constant dense<0.000000e+00> : vector<1x72xf32>
    %322 = tpu.matmul %320, %321, %cst_190 {dimension_numbers = #tpu.dot_dimension_numbers<[1], [0], [0], [1], [0, 0, 1, 1], [], []>} : vector<1x36xf32>, vector<36x72xf32>, vector<1x72xf32> -> vector<1x72xf32>
    %323 = arith.addf %319, %322 : vector<1x72xf32>
    %c3 = arith.constant 3 : index
    %c0_191 = arith.constant 0 : index
    %324 = vector.load %arg11[%c3, %c0_191] : memref<8x36xf32, #tpu.memory_space<vmem>>, vector<1x36xf32>
    %c1424 = arith.constant 1424 : index
    %c0_192 = arith.constant 0 : index
    %325 = vector.load %arg6[%c1424, %c0_192] : memref<2216x72xf32, #tpu.memory_space<vmem>>, vector<36x72xf32>
    %cst_193 = arith.constant dense<0.000000e+00> : vector<1x72xf32>
    %326 = tpu.matmul %324, %325, %cst_193 {dimension_numbers = #tpu.dot_dimension_numbers<[1], [0], [0], [1], [0, 0, 1, 1], [], []>} : vector<1x36xf32>, vector<36x72xf32>, vector<1x72xf32> -> vector<1x72xf32>
    %327 = arith.addf %323, %326 : vector<1x72xf32>
    %c4_194 = arith.constant 4 : index
    %c0_195 = arith.constant 0 : index
    %328 = vector.load %arg11[%c4_194, %c0_195] : memref<8x36xf32, #tpu.memory_space<vmem>>, vector<1x36xf32>
    %c1464 = arith.constant 1464 : index
    %c0_196 = arith.constant 0 : index
    %329 = vector.load %arg6[%c1464, %c0_196] : memref<2216x72xf32, #tpu.memory_space<vmem>>, vector<36x72xf32>
    %cst_197 = arith.constant dense<0.000000e+00> : vector<1x72xf32>
    %330 = tpu.matmul %328, %329, %cst_197 {dimension_numbers = #tpu.dot_dimension_numbers<[1], [0], [0], [1], [0, 0, 1, 1], [], []>} : vector<1x36xf32>, vector<36x72xf32>, vector<1x72xf32> -> vector<1x72xf32>
    %331 = arith.addf %327, %330 : vector<1x72xf32>
    %c5 = arith.constant 5 : index
    %c0_198 = arith.constant 0 : index
    %332 = vector.load %arg11[%c5, %c0_198] : memref<8x36xf32, #tpu.memory_space<vmem>>, vector<1x36xf32>
    %c1504 = arith.constant 1504 : index
    %c0_199 = arith.constant 0 : index
    %333 = vector.load %arg6[%c1504, %c0_199] : memref<2216x72xf32, #tpu.memory_space<vmem>>, vector<36x72xf32>
    %cst_200 = arith.constant dense<0.000000e+00> : vector<1x72xf32>
    %334 = tpu.matmul %332, %333, %cst_200 {dimension_numbers = #tpu.dot_dimension_numbers<[1], [0], [0], [1], [0, 0, 1, 1], [], []>} : vector<1x36xf32>, vector<36x72xf32>, vector<1x72xf32> -> vector<1x72xf32>
    %335 = arith.addf %331, %334 : vector<1x72xf32>
    %c6_201 = arith.constant 6 : index
    %c0_202 = arith.constant 0 : index
    %336 = vector.load %arg11[%c6_201, %c0_202] : memref<8x36xf32, #tpu.memory_space<vmem>>, vector<1x36xf32>
    %c1544 = arith.constant 1544 : index
    %c0_203 = arith.constant 0 : index
    %337 = vector.load %arg6[%c1544, %c0_203] : memref<2216x72xf32, #tpu.memory_space<vmem>>, vector<36x72xf32>
    %cst_204 = arith.constant dense<0.000000e+00> : vector<1x72xf32>
    %338 = tpu.matmul %336, %337, %cst_204 {dimension_numbers = #tpu.dot_dimension_numbers<[1], [0], [0], [1], [0, 0, 1, 1], [], []>} : vector<1x36xf32>, vector<36x72xf32>, vector<1x72xf32> -> vector<1x72xf32>
    %339 = arith.addf %335, %338 : vector<1x72xf32>
    %c7_205 = arith.constant 7 : index
    %c0_206 = arith.constant 0 : index
    %340 = vector.load %arg11[%c7_205, %c0_206] : memref<8x36xf32, #tpu.memory_space<vmem>>, vector<1x36xf32>
    %c1584 = arith.constant 1584 : index
    %c0_207 = arith.constant 0 : index
    %341 = vector.load %arg6[%c1584, %c0_207] : memref<2216x72xf32, #tpu.memory_space<vmem>>, vector<36x72xf32>
    %cst_208 = arith.constant dense<0.000000e+00> : vector<1x72xf32>
    %342 = tpu.matmul %340, %341, %cst_208 {dimension_numbers = #tpu.dot_dimension_numbers<[1], [0], [0], [1], [0, 0, 1, 1], [], []>} : vector<1x36xf32>, vector<36x72xf32>, vector<1x72xf32> -> vector<1x72xf32>
    %343 = arith.addf %339, %342 : vector<1x72xf32>
    %c0_209 = arith.constant 0 : index
    %c0_210 = arith.constant 0 : index
    %344 = vector.load %arg12[%c0_209, %c0_210] : memref<1x72xf32, #tpu.memory_space<vmem>>, vector<1x72xf32>
    tpu.vector_store %arg12[%c0_209, %c0_210], %343 {strides = array<i32>} : memref<1x72xf32, #tpu.memory_space<vmem>>, vector<1x72xf32>,
    %c0_211 = arith.constant 0 : index
    %c0_212 = arith.constant 0 : index
    %345 = vector.load %arg12[%c0_211, %c0_212] : memref<1x72xf32, #tpu.memory_space<vmem>>, vector<1x36xf32>
    %346 = vector.shape_cast %345 : vector<1x36xf32> to vector<1x36xf32>
    %347 = vector.broadcast %346 : vector<1x36xf32> to vector<8x36xf32>
    %c0_213 = arith.constant 0 : index
    %c0_214 = arith.constant 0 : index
    %348 = vector.load %arg13[%c0_213, %c0_214] : memref<16x36xf32, #tpu.memory_space<vmem>>, vector<8x36xf32>
    tpu.vector_store %arg13[%c0_213, %c0_214], %347 {strides = array<i32>} : memref<16x36xf32, #tpu.memory_space<vmem>>, vector<8x36xf32>,
    %c0_215 = arith.constant 0 : index
    %c36 = arith.constant 36 : index
    %349 = vector.load %arg12[%c0_215, %c36] : memref<1x72xf32, #tpu.memory_space<vmem>>, vector<1x36xf32>
    %350 = vector.shape_cast %349 : vector<1x36xf32> to vector<1x36xf32>
    %351 = vector.broadcast %350 : vector<1x36xf32> to vector<8x36xf32>
    %c8_216 = arith.constant 8 : index
    %c0_217 = arith.constant 0 : index
    %352 = vector.load %arg13[%c8_216, %c0_217] : memref<16x36xf32, #tpu.memory_space<vmem>>, vector<8x36xf32>
    tpu.vector_store %arg13[%c8_216, %c0_217], %351 {strides = array<i32>} : memref<16x36xf32, #tpu.memory_space<vmem>>, vector<8x36xf32>,
    %cst_218 = arith.constant 0.000000e+00 : f32
    %353 = vector.broadcast %cst_218 : f32 to vector<16x28xf32>
    %c2128 = arith.constant 2128 : index
    %c0_219 = arith.constant 0 : index
    %354 = vector.load %arg6[%c2128, %c0_219] : memref<2216x72xf32, #tpu.memory_space<vmem>>, vector<16x1xf32>
    %355 = vector.broadcast %354 : vector<16x1xf32> to vector<16x28xf32>
    %356 = arith.addf %353, %355 : vector<16x28xf32>
    %c1984 = arith.constant 1984 : index
    %c0_220 = arith.constant 0 : index
    %357 = vector.load %arg6[%c1984, %c0_220] : memref<2216x72xf32, #tpu.memory_space<vmem>>, vector<16x1xf32>
    %c0_221 = arith.constant 0 : index
    %c0_222 = arith.constant 0 : index
    %358 = vector.load %arg13[%c0_221, %c0_222] : memref<16x36xf32, #tpu.memory_space<vmem>>, vector<16x28xf32>
    %359 = vector.broadcast %357 : vector<16x1xf32> to vector<16x28xf32>
    %360 = arith.mulf %359, %358 : vector<16x28xf32>
    %361 = arith.addf %356, %360 : vector<16x28xf32>
    %c2000 = arith.constant 2000 : index
    %c0_223 = arith.constant 0 : index
    %362 = vector.load %arg6[%c2000, %c0_223] : memref<2216x72xf32, #tpu.memory_space<vmem>>, vector<16x1xf32>
    %c0_224 = arith.constant 0 : index
    %c1_225 = arith.constant 1 : index
    %363 = vector.load %arg13[%c0_224, %c1_225] : memref<16x36xf32, #tpu.memory_space<vmem>>, vector<16x28xf32>
    %364 = vector.broadcast %362 : vector<16x1xf32> to vector<16x28xf32>
    %365 = arith.mulf %364, %363 : vector<16x28xf32>
    %366 = arith.addf %361, %365 : vector<16x28xf32>
    %c2016 = arith.constant 2016 : index
    %c0_226 = arith.constant 0 : index
    %367 = vector.load %arg6[%c2016, %c0_226] : memref<2216x72xf32, #tpu.memory_space<vmem>>, vector<16x1xf32>
    %c0_227 = arith.constant 0 : index
    %c2_228 = arith.constant 2 : index
    %368 = vector.load %arg13[%c0_227, %c2_228] : memref<16x36xf32, #tpu.memory_space<vmem>>, vector<16x28xf32>
    %369 = vector.broadcast %367 : vector<16x1xf32> to vector<16x28xf32>
    %370 = arith.mulf %369, %368 : vector<16x28xf32>
    %371 = arith.addf %366, %370 : vector<16x28xf32>
    %c2032 = arith.constant 2032 : index
    %c0_229 = arith.constant 0 : index
    %372 = vector.load %arg6[%c2032, %c0_229] : memref<2216x72xf32, #tpu.memory_space<vmem>>, vector<16x1xf32>
    %c0_230 = arith.constant 0 : index
    %c3_231 = arith.constant 3 : index
    %373 = vector.load %arg13[%c0_230, %c3_231] : memref<16x36xf32, #tpu.memory_space<vmem>>, vector<16x28xf32>
    %374 = vector.broadcast %372 : vector<16x1xf32> to vector<16x28xf32>
    %375 = arith.mulf %374, %373 : vector<16x28xf32>
    %376 = arith.addf %371, %375 : vector<16x28xf32>
    %c2048 = arith.constant 2048 : index
    %c0_232 = arith.constant 0 : index
    %377 = vector.load %arg6[%c2048, %c0_232] : memref<2216x72xf32, #tpu.memory_space<vmem>>, vector<16x1xf32>
    %c0_233 = arith.constant 0 : index
    %c4_234 = arith.constant 4 : index
    %378 = vector.load %arg13[%c0_233, %c4_234] : memref<16x36xf32, #tpu.memory_space<vmem>>, vector<16x28xf32>
    %379 = vector.broadcast %377 : vector<16x1xf32> to vector<16x28xf32>
    %380 = arith.mulf %379, %378 : vector<16x28xf32>
    %381 = arith.addf %376, %380 : vector<16x28xf32>
    %c2064 = arith.constant 2064 : index
    %c0_235 = arith.constant 0 : index
    %382 = vector.load %arg6[%c2064, %c0_235] : memref<2216x72xf32, #tpu.memory_space<vmem>>, vector<16x1xf32>
    %c0_236 = arith.constant 0 : index
    %c5_237 = arith.constant 5 : index
    %383 = vector.load %arg13[%c0_236, %c5_237] : memref<16x36xf32, #tpu.memory_space<vmem>>, vector<16x28xf32>
    %384 = vector.broadcast %382 : vector<16x1xf32> to vector<16x28xf32>
    %385 = arith.mulf %384, %383 : vector<16x28xf32>
    %386 = arith.addf %381, %385 : vector<16x28xf32>
    %c2080 = arith.constant 2080 : index
    %c0_238 = arith.constant 0 : index
    %387 = vector.load %arg6[%c2080, %c0_238] : memref<2216x72xf32, #tpu.memory_space<vmem>>, vector<16x1xf32>
    %c0_239 = arith.constant 0 : index
    %c6_240 = arith.constant 6 : index
    %388 = vector.load %arg13[%c0_239, %c6_240] : memref<16x36xf32, #tpu.memory_space<vmem>>, vector<16x28xf32>
    %389 = vector.broadcast %387 : vector<16x1xf32> to vector<16x28xf32>
    %390 = arith.mulf %389, %388 : vector<16x28xf32>
    %391 = arith.addf %386, %390 : vector<16x28xf32>
    %c2096 = arith.constant 2096 : index
    %c0_241 = arith.constant 0 : index
    %392 = vector.load %arg6[%c2096, %c0_241] : memref<2216x72xf32, #tpu.memory_space<vmem>>, vector<16x1xf32>
    %c0_242 = arith.constant 0 : index
    %c7_243 = arith.constant 7 : index
    %393 = vector.load %arg13[%c0_242, %c7_243] : memref<16x36xf32, #tpu.memory_space<vmem>>, vector<16x28xf32>
    %394 = vector.broadcast %392 : vector<16x1xf32> to vector<16x28xf32>
    %395 = arith.mulf %394, %393 : vector<16x28xf32>
    %396 = arith.addf %391, %395 : vector<16x28xf32>
    %c2112 = arith.constant 2112 : index
    %c0_244 = arith.constant 0 : index
    %397 = vector.load %arg6[%c2112, %c0_244] : memref<2216x72xf32, #tpu.memory_space<vmem>>, vector<16x1xf32>
    %c0_245 = arith.constant 0 : index
    %c8_246 = arith.constant 8 : index
    %398 = vector.load %arg13[%c0_245, %c8_246] : memref<16x36xf32, #tpu.memory_space<vmem>>, vector<16x28xf32>
    %399 = vector.broadcast %397 : vector<16x1xf32> to vector<16x28xf32>
    %400 = arith.mulf %399, %398 : vector<16x28xf32>
    %401 = arith.addf %396, %400 : vector<16x28xf32>
    %c2144 = arith.constant 2144 : index
    %c0_247 = arith.constant 0 : index
    %402 = vector.load %arg6[%c2144, %c0_247] : memref<2216x72xf32, #tpu.memory_space<vmem>>, vector<16x1xf32>
    %403 = vector.broadcast %402 : vector<16x1xf32> to vector<16x28xf32>
    %404 = arith.mulf %403, %401 : vector<16x28xf32>
    %405 = math.sin %404 : vector<16x28xf32>
    %406 = arith.mulf %405, %405 : vector<16x28xf32>
    %cst_248 = arith.constant 9.99999974E-6 : f32
    %407 = vector.broadcast %cst_248 : f32 to vector<16x1xf32>
    %408 = arith.addf %402, %407 : vector<16x1xf32>
    %409 = vector.broadcast %408 : vector<16x1xf32> to vector<16x28xf32>
    %410 = arith.divf %406, %409 : vector<16x28xf32>
    %411 = arith.addf %401, %410 : vector<16x28xf32>
    %c0_249 = arith.constant 0 : index
    %c4_250 = arith.constant 4 : index
    %412 = vector.load %arg13[%c0_249, %c4_250] : memref<16x36xf32, #tpu.memory_space<vmem>>, vector<16x28xf32>
    tpu.vector_store %arg13[%c0_249, %c4_250], %411 {strides = array<i32>} : memref<16x36xf32, #tpu.memory_space<vmem>>, vector<16x28xf32>,
    %cst_251 = arith.constant 0.000000e+00 : f32
    %413 = vector.broadcast %cst_251 : f32 to vector<16x28xf32>
    %c2176 = arith.constant 2176 : index
    %c0_252 = arith.constant 0 : index
    %414 = vector.load %arg6[%c2176, %c0_252] : memref<2216x72xf32, #tpu.memory_space<vmem>>, vector<16x1xf32>
    %415 = vector.broadcast %414 : vector<16x1xf32> to vector<16x28xf32>
    %416 = arith.addf %413, %415 : vector<16x28xf32>
    %c1624 = arith.constant 1624 : index
    %c0_253 = arith.constant 0 : index
    %417 = vector.load %arg6[%c1624, %c0_253] : memref<2216x72xf32, #tpu.memory_space<vmem>>, vector<16x16xf32>
    %c0_254 = arith.constant 0 : index
    %c0_255 = arith.constant 0 : index
    %418 = vector.load %arg13[%c0_254, %c0_255] : memref<16x36xf32, #tpu.memory_space<vmem>>, vector<16x28xf32>
    %cst_256 = arith.constant dense<0.000000e+00> : vector<16x28xf32>
    %419 = tpu.matmul %417, %418, %cst_256 {dimension_numbers = #tpu.dot_dimension_numbers<[1], [0], [0], [1], [0, 0, 1, 1], [], []>} : vector<16x16xf32>, vector<16x28xf32>, vector<16x28xf32> -> vector<16x28xf32>
    %420 = arith.addf %416, %419 : vector<16x28xf32>
    %c1640 = arith.constant 1640 : index
    %c0_257 = arith.constant 0 : index
    %421 = vector.load %arg6[%c1640, %c0_257] : memref<2216x72xf32, #tpu.memory_space<vmem>>, vector<16x16xf32>
    %c0_258 = arith.constant 0 : index
    %c1_259 = arith.constant 1 : index
    %422 = vector.load %arg13[%c0_258, %c1_259] : memref<16x36xf32, #tpu.memory_space<vmem>>, vector<16x28xf32>
    %cst_260 = arith.constant dense<0.000000e+00> : vector<16x28xf32>
    %423 = tpu.matmul %421, %422, %cst_260 {dimension_numbers = #tpu.dot_dimension_numbers<[1], [0], [0], [1], [0, 0, 1, 1], [], []>} : vector<16x16xf32>, vector<16x28xf32>, vector<16x28xf32> -> vector<16x28xf32>
    %424 = arith.addf %420, %423 : vector<16x28xf32>
    %c1656 = arith.constant 1656 : index
    %c0_261 = arith.constant 0 : index
    %425 = vector.load %arg6[%c1656, %c0_261] : memref<2216x72xf32, #tpu.memory_space<vmem>>, vector<16x16xf32>
    %c0_262 = arith.constant 0 : index
    %c2_263 = arith.constant 2 : index
    %426 = vector.load %arg13[%c0_262, %c2_263] : memref<16x36xf32, #tpu.memory_space<vmem>>, vector<16x28xf32>
    %cst_264 = arith.constant dense<0.000000e+00> : vector<16x28xf32>
    %427 = tpu.matmul %425, %426, %cst_264 {dimension_numbers = #tpu.dot_dimension_numbers<[1], [0], [0], [1], [0, 0, 1, 1], [], []>} : vector<16x16xf32>, vector<16x28xf32>, vector<16x28xf32> -> vector<16x28xf32>
    %428 = arith.addf %424, %427 : vector<16x28xf32>
    %c1672 = arith.constant 1672 : index
    %c0_265 = arith.constant 0 : index
    %429 = vector.load %arg6[%c1672, %c0_265] : memref<2216x72xf32, #tpu.memory_space<vmem>>, vector<16x16xf32>
    %c0_266 = arith.constant 0 : index
    %c3_267 = arith.constant 3 : index
    %430 = vector.load %arg13[%c0_266, %c3_267] : memref<16x36xf32, #tpu.memory_space<vmem>>, vector<16x28xf32>
    %cst_268 = arith.constant dense<0.000000e+00> : vector<16x28xf32>
    %431 = tpu.matmul %429, %430, %cst_268 {dimension_numbers = #tpu.dot_dimension_numbers<[1], [0], [0], [1], [0, 0, 1, 1], [], []>} : vector<16x16xf32>, vector<16x28xf32>, vector<16x28xf32> -> vector<16x28xf32>
    %432 = arith.addf %428, %431 : vector<16x28xf32>
    %c1688 = arith.constant 1688 : index
    %c0_269 = arith.constant 0 : index
    %433 = vector.load %arg6[%c1688, %c0_269] : memref<2216x72xf32, #tpu.memory_space<vmem>>, vector<16x16xf32>
    %c0_270 = arith.constant 0 : index
    %c4_271 = arith.constant 4 : index
    %434 = vector.load %arg13[%c0_270, %c4_271] : memref<16x36xf32, #tpu.memory_space<vmem>>, vector<16x28xf32>
    %cst_272 = arith.constant dense<0.000000e+00> : vector<16x28xf32>
    %435 = tpu.matmul %433, %434, %cst_272 {dimension_numbers = #tpu.dot_dimension_numbers<[1], [0], [0], [1], [0, 0, 1, 1], [], []>} : vector<16x16xf32>, vector<16x28xf32>, vector<16x28xf32> -> vector<16x28xf32>
    %436 = arith.addf %432, %435 : vector<16x28xf32>
    %c1704 = arith.constant 1704 : index
    %c0_273 = arith.constant 0 : index
    %437 = vector.load %arg6[%c1704, %c0_273] : memref<2216x72xf32, #tpu.memory_space<vmem>>, vector<16x16xf32>
    %c0_274 = arith.constant 0 : index
    %c5_275 = arith.constant 5 : index
    %438 = vector.load %arg13[%c0_274, %c5_275] : memref<16x36xf32, #tpu.memory_space<vmem>>, vector<16x28xf32>
    %cst_276 = arith.constant dense<0.000000e+00> : vector<16x28xf32>
    %439 = tpu.matmul %437, %438, %cst_276 {dimension_numbers = #tpu.dot_dimension_numbers<[1], [0], [0], [1], [0, 0, 1, 1], [], []>} : vector<16x16xf32>, vector<16x28xf32>, vector<16x28xf32> -> vector<16x28xf32>
    %440 = arith.addf %436, %439 : vector<16x28xf32>
    %c1720 = arith.constant 1720 : index
    %c0_277 = arith.constant 0 : index
    %441 = vector.load %arg6[%c1720, %c0_277] : memref<2216x72xf32, #tpu.memory_space<vmem>>, vector<16x16xf32>
    %c0_278 = arith.constant 0 : index
    %c6_279 = arith.constant 6 : index
    %442 = vector.load %arg13[%c0_278, %c6_279] : memref<16x36xf32, #tpu.memory_space<vmem>>, vector<16x28xf32>
    %cst_280 = arith.constant dense<0.000000e+00> : vector<16x28xf32>
    %443 = tpu.matmul %441, %442, %cst_280 {dimension_numbers = #tpu.dot_dimension_numbers<[1], [0], [0], [1], [0, 0, 1, 1], [], []>} : vector<16x16xf32>, vector<16x28xf32>, vector<16x28xf32> -> vector<16x28xf32>
    %444 = arith.addf %440, %443 : vector<16x28xf32>
    %c1736 = arith.constant 1736 : index
    %c0_281 = arith.constant 0 : index
    %445 = vector.load %arg6[%c1736, %c0_281] : memref<2216x72xf32, #tpu.memory_space<vmem>>, vector<16x16xf32>
    %c0_282 = arith.constant 0 : index
    %c7_283 = arith.constant 7 : index
    %446 = vector.load %arg13[%c0_282, %c7_283] : memref<16x36xf32, #tpu.memory_space<vmem>>, vector<16x28xf32>
    %cst_284 = arith.constant dense<0.000000e+00> : vector<16x28xf32>
    %447 = tpu.matmul %445, %446, %cst_284 {dimension_numbers = #tpu.dot_dimension_numbers<[1], [0], [0], [1], [0, 0, 1, 1], [], []>} : vector<16x16xf32>, vector<16x28xf32>, vector<16x28xf32> -> vector<16x28xf32>
    %448 = arith.addf %444, %447 : vector<16x28xf32>
    %c1752 = arith.constant 1752 : index
    %c0_285 = arith.constant 0 : index
    %449 = vector.load %arg6[%c1752, %c0_285] : memref<2216x72xf32, #tpu.memory_space<vmem>>, vector<16x16xf32>
    %c0_286 = arith.constant 0 : index
    %c8_287 = arith.constant 8 : index
    %450 = vector.load %arg13[%c0_286, %c8_287] : memref<16x36xf32, #tpu.memory_space<vmem>>, vector<16x28xf32>
    %cst_288 = arith.constant dense<0.000000e+00> : vector<16x28xf32>
    %451 = tpu.matmul %449, %450, %cst_288 {dimension_numbers = #tpu.dot_dimension_numbers<[1], [0], [0], [1], [0, 0, 1, 1], [], []>} : vector<16x16xf32>, vector<16x28xf32>, vector<16x28xf32> -> vector<16x28xf32>
    %452 = arith.addf %448, %451 : vector<16x28xf32>
    %453 = arith.addf %401, %452 : vector<16x28xf32>
    %c2160 = arith.constant 2160 : index
    %c0_289 = arith.constant 0 : index
    %454 = vector.load %arg6[%c2160, %c0_289] : memref<2216x72xf32, #tpu.memory_space<vmem>>, vector<16x1xf32>
    %455 = vector.broadcast %454 : vector<16x1xf32> to vector<16x28xf32>
    %456 = arith.mulf %455, %453 : vector<16x28xf32>
    %457 = math.sin %456 : vector<16x28xf32>
    %458 = arith.mulf %457, %457 : vector<16x28xf32>
    %cst_290 = arith.constant 9.99999974E-6 : f32
    %459 = vector.broadcast %cst_290 : f32 to vector<16x1xf32>
    %460 = arith.addf %454, %459 : vector<16x1xf32>
    %461 = vector.broadcast %460 : vector<16x1xf32> to vector<16x28xf32>
    %462 = arith.divf %458, %461 : vector<16x28xf32>
    %463 = arith.addf %453, %462 : vector<16x28xf32>
    %c0_291 = arith.constant 0 : index
    %c4_292 = arith.constant 4 : index
    %464 = vector.load %arg13[%c0_291, %c4_292] : memref<16x36xf32, #tpu.memory_space<vmem>>, vector<16x28xf32>
    tpu.vector_store %arg13[%c0_291, %c4_292], %463 {strides = array<i32>} : memref<16x36xf32, #tpu.memory_space<vmem>>, vector<16x28xf32>,
    %cst_293 = arith.constant 0.000000e+00 : f32
    %465 = vector.broadcast %cst_293 : f32 to vector<16x28xf32>
    %c2192 = arith.constant 2192 : index
    %c0_294 = arith.constant 0 : index
    %466 = vector.load %arg6[%c2192, %c0_294] : memref<2216x72xf32, #tpu.memory_space<vmem>>, vector<16x1xf32>
    %467 = vector.broadcast %466 : vector<16x1xf32> to vector<16x28xf32>
    %468 = arith.addf %465, %467 : vector<16x28xf32>
    %c1768 = arith.constant 1768 : index
    %c0_295 = arith.constant 0 : index
    %469 = vector.load %arg6[%c1768, %c0_295] : memref<2216x72xf32, #tpu.memory_space<vmem>>, vector<16x16xf32>
    %c0_296 = arith.constant 0 : index
    %c0_297 = arith.constant 0 : index
    %470 = vector.load %arg13[%c0_296, %c0_297] : memref<16x36xf32, #tpu.memory_space<vmem>>, vector<16x28xf32>
    %cst_298 = arith.constant dense<0.000000e+00> : vector<16x28xf32>
    %471 = tpu.matmul %469, %470, %cst_298 {dimension_numbers = #tpu.dot_dimension_numbers<[1], [0], [0], [1], [0, 0, 1, 1], [], []>} : vector<16x16xf32>, vector<16x28xf32>, vector<16x28xf32> -> vector<16x28xf32>
    %472 = arith.addf %468, %471 : vector<16x28xf32>
    %c1784 = arith.constant 1784 : index
    %c0_299 = arith.constant 0 : index
    %473 = vector.load %arg6[%c1784, %c0_299] : memref<2216x72xf32, #tpu.memory_space<vmem>>, vector<16x16xf32>
    %c0_300 = arith.constant 0 : index
    %c1_301 = arith.constant 1 : index
    %474 = vector.load %arg13[%c0_300, %c1_301] : memref<16x36xf32, #tpu.memory_space<vmem>>, vector<16x28xf32>
    %cst_302 = arith.constant dense<0.000000e+00> : vector<16x28xf32>
    %475 = tpu.matmul %473, %474, %cst_302 {dimension_numbers = #tpu.dot_dimension_numbers<[1], [0], [0], [1], [0, 0, 1, 1], [], []>} : vector<16x16xf32>, vector<16x28xf32>, vector<16x28xf32> -> vector<16x28xf32>
    %476 = arith.addf %472, %475 : vector<16x28xf32>
    %c1800 = arith.constant 1800 : index
    %c0_303 = arith.constant 0 : index
    %477 = vector.load %arg6[%c1800, %c0_303] : memref<2216x72xf32, #tpu.memory_space<vmem>>, vector<16x16xf32>
    %c0_304 = arith.constant 0 : index
    %c2_305 = arith.constant 2 : index
    %478 = vector.load %arg13[%c0_304, %c2_305] : memref<16x36xf32, #tpu.memory_space<vmem>>, vector<16x28xf32>
    %cst_306 = arith.constant dense<0.000000e+00> : vector<16x28xf32>
    %479 = tpu.matmul %477, %478, %cst_306 {dimension_numbers = #tpu.dot_dimension_numbers<[1], [0], [0], [1], [0, 0, 1, 1], [], []>} : vector<16x16xf32>, vector<16x28xf32>, vector<16x28xf32> -> vector<16x28xf32>
    %480 = arith.addf %476, %479 : vector<16x28xf32>
    %c1816 = arith.constant 1816 : index
    %c0_307 = arith.constant 0 : index
    %481 = vector.load %arg6[%c1816, %c0_307] : memref<2216x72xf32, #tpu.memory_space<vmem>>, vector<16x16xf32>
    %c0_308 = arith.constant 0 : index
    %c3_309 = arith.constant 3 : index
    %482 = vector.load %arg13[%c0_308, %c3_309] : memref<16x36xf32, #tpu.memory_space<vmem>>, vector<16x28xf32>
    %cst_310 = arith.constant dense<0.000000e+00> : vector<16x28xf32>
    %483 = tpu.matmul %481, %482, %cst_310 {dimension_numbers = #tpu.dot_dimension_numbers<[1], [0], [0], [1], [0, 0, 1, 1], [], []>} : vector<16x16xf32>, vector<16x28xf32>, vector<16x28xf32> -> vector<16x28xf32>
    %484 = arith.addf %480, %483 : vector<16x28xf32>
    %c1832 = arith.constant 1832 : index
    %c0_311 = arith.constant 0 : index
    %485 = vector.load %arg6[%c1832, %c0_311] : memref<2216x72xf32, #tpu.memory_space<vmem>>, vector<16x16xf32>
    %c0_312 = arith.constant 0 : index
    %c4_313 = arith.constant 4 : index
    %486 = vector.load %arg13[%c0_312, %c4_313] : memref<16x36xf32, #tpu.memory_space<vmem>>, vector<16x28xf32>
    %cst_314 = arith.constant dense<0.000000e+00> : vector<16x28xf32>
    %487 = tpu.matmul %485, %486, %cst_314 {dimension_numbers = #tpu.dot_dimension_numbers<[1], [0], [0], [1], [0, 0, 1, 1], [], []>} : vector<16x16xf32>, vector<16x28xf32>, vector<16x28xf32> -> vector<16x28xf32>
    %488 = arith.addf %484, %487 : vector<16x28xf32>
    %c1848 = arith.constant 1848 : index
    %c0_315 = arith.constant 0 : index
    %489 = vector.load %arg6[%c1848, %c0_315] : memref<2216x72xf32, #tpu.memory_space<vmem>>, vector<16x16xf32>
    %c0_316 = arith.constant 0 : index
    %c5_317 = arith.constant 5 : index
    %490 = vector.load %arg13[%c0_316, %c5_317] : memref<16x36xf32, #tpu.memory_space<vmem>>, vector<16x28xf32>
    %cst_318 = arith.constant dense<0.000000e+00> : vector<16x28xf32>
    %491 = tpu.matmul %489, %490, %cst_318 {dimension_numbers = #tpu.dot_dimension_numbers<[1], [0], [0], [1], [0, 0, 1, 1], [], []>} : vector<16x16xf32>, vector<16x28xf32>, vector<16x28xf32> -> vector<16x28xf32>
    %492 = arith.addf %488, %491 : vector<16x28xf32>
    %c1864 = arith.constant 1864 : index
    %c0_319 = arith.constant 0 : index
    %493 = vector.load %arg6[%c1864, %c0_319] : memref<2216x72xf32, #tpu.memory_space<vmem>>, vector<16x16xf32>
    %c0_320 = arith.constant 0 : index
    %c6_321 = arith.constant 6 : index
    %494 = vector.load %arg13[%c0_320, %c6_321] : memref<16x36xf32, #tpu.memory_space<vmem>>, vector<16x28xf32>
    %cst_322 = arith.constant dense<0.000000e+00> : vector<16x28xf32>
    %495 = tpu.matmul %493, %494, %cst_322 {dimension_numbers = #tpu.dot_dimension_numbers<[1], [0], [0], [1], [0, 0, 1, 1], [], []>} : vector<16x16xf32>, vector<16x28xf32>, vector<16x28xf32> -> vector<16x28xf32>
    %496 = arith.addf %492, %495 : vector<16x28xf32>
    %c1880 = arith.constant 1880 : index
    %c0_323 = arith.constant 0 : index
    %497 = vector.load %arg6[%c1880, %c0_323] : memref<2216x72xf32, #tpu.memory_space<vmem>>, vector<16x16xf32>
    %c0_324 = arith.constant 0 : index
    %c7_325 = arith.constant 7 : index
    %498 = vector.load %arg13[%c0_324, %c7_325] : memref<16x36xf32, #tpu.memory_space<vmem>>, vector<16x28xf32>
    %cst_326 = arith.constant dense<0.000000e+00> : vector<16x28xf32>
    %499 = tpu.matmul %497, %498, %cst_326 {dimension_numbers = #tpu.dot_dimension_numbers<[1], [0], [0], [1], [0, 0, 1, 1], [], []>} : vector<16x16xf32>, vector<16x28xf32>, vector<16x28xf32> -> vector<16x28xf32>
    %500 = arith.addf %496, %499 : vector<16x28xf32>
    %c1896 = arith.constant 1896 : index
    %c0_327 = arith.constant 0 : index
    %501 = vector.load %arg6[%c1896, %c0_327] : memref<2216x72xf32, #tpu.memory_space<vmem>>, vector<16x16xf32>
    %c0_328 = arith.constant 0 : index
    %c8_329 = arith.constant 8 : index
    %502 = vector.load %arg13[%c0_328, %c8_329] : memref<16x36xf32, #tpu.memory_space<vmem>>, vector<16x28xf32>
    %cst_330 = arith.constant dense<0.000000e+00> : vector<16x28xf32>
    %503 = tpu.matmul %501, %502, %cst_330 {dimension_numbers = #tpu.dot_dimension_numbers<[1], [0], [0], [1], [0, 0, 1, 1], [], []>} : vector<16x16xf32>, vector<16x28xf32>, vector<16x28xf32> -> vector<16x28xf32>
    %504 = arith.addf %500, %503 : vector<16x28xf32>
    %505 = arith.addf %453, %504 : vector<16x28xf32>
    %c0_331 = arith.constant 0 : index
    %c4_332 = arith.constant 4 : index
    %506 = vector.load %arg13[%c0_331, %c4_332] : memref<16x36xf32, #tpu.memory_space<vmem>>, vector<16x28xf32>
    tpu.vector_store %arg13[%c0_331, %c4_332], %505 {strides = array<i32>} : memref<16x36xf32, #tpu.memory_space<vmem>>, vector<16x28xf32>,
    %cst_333 = arith.constant 0.000000e+00 : f32
    %507 = vector.broadcast %cst_333 : f32 to vector<2x28xf32>
    %c2208 = arith.constant 2208 : index
    %c0_334 = arith.constant 0 : index
    %508 = vector.load %arg6[%c2208, %c0_334] : memref<2216x72xf32, #tpu.memory_space<vmem>>, vector<2x1xf32>
    %509 = vector.broadcast %508 : vector<2x1xf32> to vector<2x28xf32>
    %510 = arith.addf %507, %509 : vector<2x28xf32>
    %c1912 = arith.constant 1912 : index
    %c0_335 = arith.constant 0 : index
    %511 = vector.load %arg6[%c1912, %c0_335] : memref<2216x72xf32, #tpu.memory_space<vmem>>, vector<2x16xf32>
    %c0_336 = arith.constant 0 : index
    %c0_337 = arith.constant 0 : index
    %512 = vector.load %arg13[%c0_336, %c0_337] : memref<16x36xf32, #tpu.memory_space<vmem>>, vector<16x28xf32>
    %cst_338 = arith.constant dense<0.000000e+00> : vector<2x28xf32>
    %513 = tpu.matmul %511, %512, %cst_338 {dimension_numbers = #tpu.dot_dimension_numbers<[1], [0], [0], [1], [0, 0, 1, 1], [], []>} : vector<2x16xf32>, vector<16x28xf32>, vector<2x28xf32> -> vector<2x28xf32>
    %514 = arith.addf %510, %513 : vector<2x28xf32>
    %c1920 = arith.constant 1920 : index
    %c0_339 = arith.constant 0 : index
    %515 = vector.load %arg6[%c1920, %c0_339] : memref<2216x72xf32, #tpu.memory_space<vmem>>, vector<2x16xf32>
    %c0_340 = arith.constant 0 : index
    %c1_341 = arith.constant 1 : index
    %516 = vector.load %arg13[%c0_340, %c1_341] : memref<16x36xf32, #tpu.memory_space<vmem>>, vector<16x28xf32>
    %cst_342 = arith.constant dense<0.000000e+00> : vector<2x28xf32>
    %517 = tpu.matmul %515, %516, %cst_342 {dimension_numbers = #tpu.dot_dimension_numbers<[1], [0], [0], [1], [0, 0, 1, 1], [], []>} : vector<2x16xf32>, vector<16x28xf32>, vector<2x28xf32> -> vector<2x28xf32>
    %518 = arith.addf %514, %517 : vector<2x28xf32>
    %c1928 = arith.constant 1928 : index
    %c0_343 = arith.constant 0 : index
    %519 = vector.load %arg6[%c1928, %c0_343] : memref<2216x72xf32, #tpu.memory_space<vmem>>, vector<2x16xf32>
    %c0_344 = arith.constant 0 : index
    %c2_345 = arith.constant 2 : index
    %520 = vector.load %arg13[%c0_344, %c2_345] : memref<16x36xf32, #tpu.memory_space<vmem>>, vector<16x28xf32>
    %cst_346 = arith.constant dense<0.000000e+00> : vector<2x28xf32>
    %521 = tpu.matmul %519, %520, %cst_346 {dimension_numbers = #tpu.dot_dimension_numbers<[1], [0], [0], [1], [0, 0, 1, 1], [], []>} : vector<2x16xf32>, vector<16x28xf32>, vector<2x28xf32> -> vector<2x28xf32>
    %522 = arith.addf %518, %521 : vector<2x28xf32>
    %c1936 = arith.constant 1936 : index
    %c0_347 = arith.constant 0 : index
    %523 = vector.load %arg6[%c1936, %c0_347] : memref<2216x72xf32, #tpu.memory_space<vmem>>, vector<2x16xf32>
    %c0_348 = arith.constant 0 : index
    %c3_349 = arith.constant 3 : index
    %524 = vector.load %arg13[%c0_348, %c3_349] : memref<16x36xf32, #tpu.memory_space<vmem>>, vector<16x28xf32>
    %cst_350 = arith.constant dense<0.000000e+00> : vector<2x28xf32>
    %525 = tpu.matmul %523, %524, %cst_350 {dimension_numbers = #tpu.dot_dimension_numbers<[1], [0], [0], [1], [0, 0, 1, 1], [], []>} : vector<2x16xf32>, vector<16x28xf32>, vector<2x28xf32> -> vector<2x28xf32>
    %526 = arith.addf %522, %525 : vector<2x28xf32>
    %c1944 = arith.constant 1944 : index
    %c0_351 = arith.constant 0 : index
    %527 = vector.load %arg6[%c1944, %c0_351] : memref<2216x72xf32, #tpu.memory_space<vmem>>, vector<2x16xf32>
    %c0_352 = arith.constant 0 : index
    %c4_353 = arith.constant 4 : index
    %528 = vector.load %arg13[%c0_352, %c4_353] : memref<16x36xf32, #tpu.memory_space<vmem>>, vector<16x28xf32>
    %cst_354 = arith.constant dense<0.000000e+00> : vector<2x28xf32>
    %529 = tpu.matmul %527, %528, %cst_354 {dimension_numbers = #tpu.dot_dimension_numbers<[1], [0], [0], [1], [0, 0, 1, 1], [], []>} : vector<2x16xf32>, vector<16x28xf32>, vector<2x28xf32> -> vector<2x28xf32>
    %530 = arith.addf %526, %529 : vector<2x28xf32>
    %c1952 = arith.constant 1952 : index
    %c0_355 = arith.constant 0 : index
    %531 = vector.load %arg6[%c1952, %c0_355] : memref<2216x72xf32, #tpu.memory_space<vmem>>, vector<2x16xf32>
    %c0_356 = arith.constant 0 : index
    %c5_357 = arith.constant 5 : index
    %532 = vector.load %arg13[%c0_356, %c5_357] : memref<16x36xf32, #tpu.memory_space<vmem>>, vector<16x28xf32>
    %cst_358 = arith.constant dense<0.000000e+00> : vector<2x28xf32>
    %533 = tpu.matmul %531, %532, %cst_358 {dimension_numbers = #tpu.dot_dimension_numbers<[1], [0], [0], [1], [0, 0, 1, 1], [], []>} : vector<2x16xf32>, vector<16x28xf32>, vector<2x28xf32> -> vector<2x28xf32>
    %534 = arith.addf %530, %533 : vector<2x28xf32>
    %c1960 = arith.constant 1960 : index
    %c0_359 = arith.constant 0 : index
    %535 = vector.load %arg6[%c1960, %c0_359] : memref<2216x72xf32, #tpu.memory_space<vmem>>, vector<2x16xf32>
    %c0_360 = arith.constant 0 : index
    %c6_361 = arith.constant 6 : index
    %536 = vector.load %arg13[%c0_360, %c6_361] : memref<16x36xf32, #tpu.memory_space<vmem>>, vector<16x28xf32>
    %cst_362 = arith.constant dense<0.000000e+00> : vector<2x28xf32>
    %537 = tpu.matmul %535, %536, %cst_362 {dimension_numbers = #tpu.dot_dimension_numbers<[1], [0], [0], [1], [0, 0, 1, 1], [], []>} : vector<2x16xf32>, vector<16x28xf32>, vector<2x28xf32> -> vector<2x28xf32>
    %538 = arith.addf %534, %537 : vector<2x28xf32>
    %c1968 = arith.constant 1968 : index
    %c0_363 = arith.constant 0 : index
    %539 = vector.load %arg6[%c1968, %c0_363] : memref<2216x72xf32, #tpu.memory_space<vmem>>, vector<2x16xf32>
    %c0_364 = arith.constant 0 : index
    %c7_365 = arith.constant 7 : index
    %540 = vector.load %arg13[%c0_364, %c7_365] : memref<16x36xf32, #tpu.memory_space<vmem>>, vector<16x28xf32>
    %cst_366 = arith.constant dense<0.000000e+00> : vector<2x28xf32>
    %541 = tpu.matmul %539, %540, %cst_366 {dimension_numbers = #tpu.dot_dimension_numbers<[1], [0], [0], [1], [0, 0, 1, 1], [], []>} : vector<2x16xf32>, vector<16x28xf32>, vector<2x28xf32> -> vector<2x28xf32>
    %542 = arith.addf %538, %541 : vector<2x28xf32>
    %c1976 = arith.constant 1976 : index
    %c0_367 = arith.constant 0 : index
    %543 = vector.load %arg6[%c1976, %c0_367] : memref<2216x72xf32, #tpu.memory_space<vmem>>, vector<2x16xf32>
    %c0_368 = arith.constant 0 : index
    %c8_369 = arith.constant 8 : index
    %544 = vector.load %arg13[%c0_368, %c8_369] : memref<16x36xf32, #tpu.memory_space<vmem>>, vector<16x28xf32>
    %cst_370 = arith.constant dense<0.000000e+00> : vector<2x28xf32>
    %545 = tpu.matmul %543, %544, %cst_370 {dimension_numbers = #tpu.dot_dimension_numbers<[1], [0], [0], [1], [0, 0, 1, 1], [], []>} : vector<2x16xf32>, vector<16x28xf32>, vector<2x28xf32> -> vector<2x28xf32>
    %546 = arith.addf %542, %545 : vector<2x28xf32>
    %547 = math.tanh %546 : vector<2x28xf32>
    %c0_371 = arith.constant 0 : index
    %c0_372 = arith.constant 0 : index
    %548 = vector.load %arg7[%c0_371, %c0_372] : memref<2x28xf32, #tpu.memory_space<vmem>>, vector<2x28xf32>
    tpu.vector_store %arg7[%c0_371, %c0_372], %547 {strides = array<i32>} : memref<2x28xf32, #tpu.memory_space<vmem>>, vector<2x28xf32>,
    return
  }
  func.func @transform_0(%arg0: i32) -> (i32, i32) {
    %c0_i32 = arith.constant 0 : i32
    %c0_i32_0 = arith.constant 0 : i32
    %c0_i32_1 = arith.constant 0 : i32
    return %c0_i32, %c0_i32_0 : i32, i32
  }
  func.func @transform_1(%arg0: i32) -> (i32, i32) {
    %c0_i32 = arith.constant 0 : i32
    %c0_i32_0 = arith.constant 0 : i32
    %c0_i32_1 = arith.constant 0 : i32
    return %c0_i32, %c0_i32_0 : i32, i32
  }
  func.func @transform_2(%arg0: i32) -> (i32, i32) {
    %c0_i32 = arith.constant 0 : i32
    %c0_i32_0 = arith.constant 0 : i32
    %c0_i32_1 = arith.constant 0 : i32
    return %c0_i32, %c0_i32_0 : i32, i32
  }
  func.func @transform_3(%arg0: i32) -> (i32, i32) {
    %c0_i32 = arith.constant 0 : i32
    %c0_i32_0 = arith.constant 0 : i32
    %c0_i32_1 = arith.constant 0 : i32
    return %c0_i32, %c0_i32_0 : i32, i32
  }
  func.func @transform_4(%arg0: i32) -> (i32, i32) {
    %c0_i32 = arith.constant 0 : i32
    %c0_i32_0 = arith.constant 0 : i32
    %c0_i32_1 = arith.constant 0 : i32
    return %c0_i32, %c0_i32_0 : i32, i32
  }
  func.func @transform_5(%arg0: i32) -> (i32, i32) {
    %c0_i32 = arith.constant 0 : i32
    %c0_i32_0 = arith.constant 0 : i32
    %c0_i32_1 = arith.constant 0 : i32
    return %c0_i32, %c0_i32_0 : i32, i32
  }
  func.func @transform_6(%arg0: i32) -> (i32, i32) {
    %c0_i32 = arith.constant 0 : i32
    %c0_i32_0 = arith.constant 0 : i32
    %c0_i32_1 = arith.constant 0 : i32
    return %c0_i32, %c0_i32_0 : i32, i32
  }
}

</mosaic_0001>

<llo_original>
// kernel: synthesizer_forward.1
$region0: #{synthesizer_forward.1}
  #allocation0 [shape = 'u32[]', space=smem, size = 0x4, offset = 0x4, fixed_abs, tag = 'smem constant byte address 0x4 - core index']
  #allocation1 [shape = 'u32[144,128]{1,0:T(1,128)}', space=vmem, size = 0x12000, scoped, tag = 'internal scratch']
  #allocation2 [shape = 'f32[24,64]{1,0:T(8,128)}', space=vmem, size = 0x3000, scoped, tag = 'scratch operand']
  #allocation3 [shape = 'f32[1,448]{1,0:T(1,128)}', space=vmem, size = 0x800, scoped, tag = 'scratch operand']
  #allocation4 [shape = 'f32[8,36]{1,0:T(8,128)}', space=vmem, size = 0x1000, scoped, tag = 'scratch operand']
  #allocation5 [shape = 'f32[8,36]{1,0:T(8,128)}', space=vmem, size = 0x1000, scoped, tag = 'scratch operand']
  #allocation6 [shape = 'f32[1,72]{1,0:T(1,128)}', space=vmem, size = 0x200, scoped, tag = 'scratch operand']
  #allocation7 [shape = 'f32[16,36]{1,0:T(8,128)}', space=vmem, size = 0x2000, scoped, tag = 'scratch operand']
  %s0 = inlined_call_operand.vmem [shape: f32[8,48], index: 0, kind: input, shape index: {}]
  %s1 = inlined_call_operand.vmem [shape: f32[1,40], index: 1, kind: input, shape index: {}]
  %s2 = inlined_call_operand.vmem [shape: f32[48,64], index: 2, kind: input, shape index: {}]
  %s3 = inlined_call_operand.vmem [shape: f32[40,448], index: 3, kind: input, shape index: {}]
  %s4 = inlined_call_operand.vmem [shape: f32[432,192], index: 4, kind: input, shape index: {}]
  %s5 = inlined_call_operand.vmem [shape: f32[2216,72], index: 5, kind: input, shape index: {}]
  %s6 = inlined_call_operand.hbm [shape: f32[2,28], index: 6, kind: output, shape index: {}]
  %s7 = sld [smem:[#allocation0]]
  $region34: #{synthesizer_forward.1} parent=0
    _
  %s9 = ssub.s32 1, %s7
  %s10 = scalar_select 0, %s9, %s7
  $region1: #{synthesizer_forward.1} parent=0
    #allocation8 [shape = 'u8[1024]{0}', space=vmem, size = 0x400, scoped, tag = 'output window, operand 0, single buffered']
    #allocation9 [shape = 's32[1]{0}', space=sflag, size = 0x4, scoped, tag = 'scoped memory for synthesizer_forward.1']
    %11 = vsyncpa [#allocation9], 0
    // Predicated region
    $region2: #{synthesizer_forward.1} parent=1 // pred_check
      _
    $region3: #{synthesizer_forward.1} parent=1 // pred_check_branch
      %13 = sbr.rel (0) target = $region5
    $region4: #{synthesizer_forward.1} parent=1 // pred_region
      _
    $region5: #{synthesizer_forward.1} parent=1 // pred_fallthru
      _
    // Predicated region
    $region6: #{synthesizer_forward.1} parent=1 // pred_check
      _
    $region7: #{synthesizer_forward.1} parent=1 // pred_check_branch
      %15 = sbr.rel (0) target = $region9
    $region8: #{synthesizer_forward.1} parent=1 // pred_region
      _
    $region9: #{synthesizer_forward.1} parent=1 // pred_fallthru
      _
    // Predicated region
    $region10: #{synthesizer_forward.1} parent=1 // pred_check
      _
    $region11: #{synthesizer_forward.1} parent=1 // pred_check_branch
      %17 = sbr.rel (0) target = $region13
    $region12: #{synthesizer_forward.1} parent=1 // pred_region
      _
    $region13: #{synthesizer_forward.1} parent=1 // pred_fallthru
      _
    // Predicated region
    $region14: #{synthesizer_forward.1} parent=1 // pred_check
      _
    $region15: #{synthesizer_forward.1} parent=1 // pred_check_branch
      %19 = sbr.rel (0) target = $region17
    $region16: #{synthesizer_forward.1} parent=1 // pred_region
      _
    $region17: #{synthesizer_forward.1} parent=1 // pred_fallthru
      _
    // Predicated region
    $region18: #{synthesizer_forward.1} parent=1 // pred_check
      _
    $region19: #{synthesizer_forward.1} parent=1 // pred_check_branch
      %21 = sbr.rel (0) target = $region21
    $region20: #{synthesizer_forward.1} parent=1 // pred_region
      _
    $region21: #{synthesizer_forward.1} parent=1 // pred_fallthru
      _
    // Predicated region
    $region22: #{synthesizer_forward.1} parent=1 // pred_check
      _
    $region23: #{synthesizer_forward.1} parent=1 // pred_check_branch
      %23 = sbr.rel (0) target = $region25
    $region24: #{synthesizer_forward.1} parent=1 // pred_region
      _
    $region25: #{synthesizer_forward.1} parent=1 // pred_fallthru
      _
    %vm24 = vcmask 523264
    %25 = vst.msk [vmem:[#allocation2] sm:$0xff] %vm24, 0.0
    %26 = vst.msk [vmem:[#allocation2 + $0x8] sm:$0xff] %vm24, 0.0
    %27 = vst.msk [vmem:[#allocation2 + $0x10] sm:$0xff] %vm24, 0.0
    %v28 = vld [vmem:[%s1] sm:$0x1]
    %v29 = vld [vmem:[%s3] sm:$0xff]
    %v30 = vld [vmem:[%s3 + $0x8] sm:$0xff]
    %v31 = vld [vmem:[%s3 + $0x10] sm:$0xff]
    %v32 = vld [vmem:[%s3 + $0x18] sm:$0xff]
    %v33 = vld [vmem:[%s3 + $0x20] sm:$0xff]
    %v34 = vld [vmem:[%s3 + $0x28] sm:$0xff]
    %v35 = vld [vmem:[%s3 + $0x30] sm:$0xff]
    %v36 = vld [vmem:[%s3 + $0x38] sm:$0xff]
    %v37 = vld [vmem:[%s3 + $0x40] sm:$0xff]
    %v38 = vld [vmem:[%s3 + $0x48] sm:$0xff]
    %v39 = vld [vmem:[%s3 + $0x50] sm:$0xff]
    %v40 = vld [vmem:[%s3 + $0x58] sm:$0xff]
    %v41 = vld [vmem:[%s3 + $0x60] sm:$0xff]
    %v42 = vld [vmem:[%s3 + $0x68] sm:$0xff]
    %v43 = vld [vmem:[%s3 + $0x70] sm:$0xff]
    %v44 = vld [vmem:[%s3 + $0x78] sm:$0xff]
    %v45 = vld [vmem:[%s3 + $0x80] sm:$0xff]
    %v46 = vld [vmem:[%s3 + $0x88] sm:$0xff]
    %v47 = vld [vmem:[%s3 + $0x90] sm:$0xff]
    %v48 = vld [vmem:[%s3 + $0x98] sm:$0xff]
    %vm49 = vcmask 326656
    %v51 = vsel %vm49, %v28, 0
    %53 = vmatprep.subr.mxu0 0.0
    %54 = vmatpush1.msra.mxu0 0.0
    %55 = vmatprep.subr.mxu0 0.0
    %56 = vmatpush1.msra.mxu0 0.0
    %57 = vmatprep.subr.mxu0 0.0
    %58 = vmatpush1.msra.mxu0 0.0
    %59 = vmatprep.subr.mxu0 0.0
    %60 = vmatpush1.msra.mxu0 0.0
    %61 = vmatprep.subr.mxu0 0.0
    %62 = vmatpush1.msra.mxu0 0.0
    %63 = vmatprep.subr.mxu0 0.0
    %64 = vmatpush1.msra.mxu0 0.0
    %65 = vmatprep.subr.mxu0 0.0
    %66 = vmatpush1.msra.mxu0 0.0
    %67 = vmatprep.subr.mxu0 0.0
    %68 = vmatpush1.msra.mxu0 0.0
    %69 = vmatprep.subr.mxu0 0.0
    %70 = vmatpush1.msra.mxu0 0.0
    %71 = vmatprep.subr.mxu0 0.0
    %72 = vmatpush1.msra.mxu0 0.0
    %73 = vmatprep.subr.mxu0 0.0
    %74 = vmatpush1.msra.mxu0 0.0
    %75 = vmatprep.subr.mxu0 %v46
    %76 = vmatpush1.msra.mxu0 %v45
    %77 = vmatprep.subr.mxu0 %v42
    %78 = vmatpush1.msra.mxu0 %v41
    %79 = vmatprep.subr.mxu0 %v38
    %80 = vmatpush1.msra.mxu0 %v37
    %81 = vmatprep.subr.mxu0 %v34
    %82 = vmatpush1.msra.mxu0 %v33
    %83 = vmatprep.subr.mxu0 %v30
    %84 = vmatpush1.msra.mxu0 %v29
    %85 = vmatprep.subr.mxu0 0.0
    %86 = vmatpush2.msra.mxu0 0.0
    %87 = vmatprep.subr.mxu0 0.0
    %88 = vmatpush2.msra.mxu0 0.0
    %89 = vmatprep.subr.mxu0 0.0
    %90 = vmatpush2.msra.mxu0 0.0
    %91 = vmatprep.subr.mxu0 0.0
    %92 = vmatpush2.msra.mxu0 0.0
    %93 = vmatprep.subr.mxu0 0.0
    %94 = vmatpush2.msra.mxu0 0.0
    %95 = vmatprep.subr.mxu0 0.0
    %96 = vmatpush2.msra.mxu0 0.0
    %97 = vmatprep.subr.mxu0 0.0
    %98 = vmatpush2.msra.mxu0 0.0
    %99 = vmatprep.subr.mxu0 0.0
    %100 = vmatpush2.msra.mxu0 0.0
    %101 = vmatprep.subr.mxu0 0.0
    %102 = vmatpush2.msra.mxu0 0.0
    %103 = vmatprep.subr.mxu0 0.0
    %104 = vmatpush2.msra.mxu0 0.0
    %105 = vmatprep.subr.mxu0 0.0
    %106 = vmatpush2.msra.mxu0 0.0
    %107 = vmatprep.subr.mxu0 0.0
    %108 = vmatpush2.msra.mxu0 0.0
    %109 = vmatprep.subr.mxu0 0.0
    %110 = vmatpush2.msra.mxu0 0.0
    %111 = vmatprep.subr.mxu0 0.0
    %112 = vmatpush2.msra.mxu0 0.0
    %113 = vmatprep.subr.mxu0 0.0
    %114 = vmatpush2.msra.mxu0 0.0
    %115 = vmatprep.subr.mxu0 0.0
    %116 = vmatpush2.msra.mxu0 0.0
    %117 = vmatprep.mubr.f32.mxu0 0.0
    %118 = vmatmul.mubr.f32.gmra.mxu0 %v51
    %v119 = vpop.f32.mrf.mxu0
    %v120 = vadd.f32 0.0, %v119
    %v121 = vpop.f32.mrf.mxu0
    %v122 = vadd.f32 0.0, %v121
    %123 = vdwg.mxu0
    %124 = vmatprep.subr.mxu0 0.0
    %125 = vmatpush1.msra.mxu0 0.0
    %126 = vmatprep.subr.mxu0 0.0
    %127 = vmatpush1.msra.mxu0 0.0
    %128 = vmatprep.subr.mxu0 0.0
    %129 = vmatpush1.msra.mxu0 0.0
    %130 = vmatprep.subr.mxu0 0.0
    %131 = vmatpush1.msra.mxu0 0.0
    %132 = vmatprep.subr.mxu0 0.0
    %133 = vmatpush1.msra.mxu0 0.0
    %134 = vmatprep.subr.mxu0 0.0
    %135 = vmatpush1.msra.mxu0 0.0
    %136 = vmatprep.subr.mxu0 0.0
    %137 = vmatpush1.msra.mxu0 0.0
    %138 = vmatprep.subr.mxu0 0.0
    %139 = vmatpush1.msra.mxu0 0.0
    %140 = vmatprep.subr.mxu0 0.0
    %141 = vmatpush1.msra.mxu0 0.0
    %142 = vmatprep.subr.mxu0 0.0
    %143 = vmatpush1.msra.mxu0 0.0
    %144 = vmatprep.subr.mxu0 0.0
    %145 = vmatpush1.msra.mxu0 0.0
    %146 = vmatprep.subr.mxu0 %v48
    %147 = vmatpush1.msra.mxu0 %v47
    %148 = vmatprep.subr.mxu0 %v44
    %149 = vmatpush1.msra.mxu0 %v43
    %150 = vmatprep.subr.mxu0 %v40
    %151 = vmatpush1.msra.mxu0 %v39
    %152 = vmatprep.subr.mxu0 %v36
    %153 = vmatpush1.msra.mxu0 %v35
    %154 = vmatprep.subr.mxu0 %v32
    %155 = vmatpush1.msra.mxu0 %v31
    %156 = vmatprep.subr.mxu0 0.0
    %157 = vmatpush2.msra.mxu0 0.0
    %158 = vmatprep.subr.mxu0 0.0
    %159 = vmatpush2.msra.mxu0 0.0
    %160 = vmatprep.subr.mxu0 0.0
    %161 = vmatpush2.msra.mxu0 0.0
    %162 = vmatprep.subr.mxu0 0.0
    %163 = vmatpush2.msra.mxu0 0.0
    %164 = vmatprep.subr.mxu0 0.0
    %165 = vmatpush2.msra.mxu0 0.0
    %166 = vmatprep.subr.mxu0 0.0
    %167 = vmatpush2.msra.mxu0 0.0
    %168 = vmatprep.subr.mxu0 0.0
    %169 = vmatpush2.msra.mxu0 0.0
    %170 = vmatprep.subr.mxu0 0.0
    %171 = vmatpush2.msra.mxu0 0.0
    %172 = vmatprep.subr.mxu0 0.0
    %173 = vmatpush2.msra.mxu0 0.0
    %174 = vmatprep.subr.mxu0 0.0
    %175 = vmatpush2.msra.mxu0 0.0
    %176 = vmatprep.subr.mxu0 0.0
    %177 = vmatpush2.msra.mxu0 0.0
    %178 = vmatprep.subr.mxu0 0.0
    %179 = vmatpush2.msra.mxu0 0.0
    %180 = vmatprep.subr.mxu0 0.0
    %181 = vmatpush2.msra.mxu0 0.0
    %182 = vmatprep.subr.mxu0 0.0
    %183 = vmatpush2.msra.mxu0 0.0
    %184 = vmatprep.subr.mxu0 0.0
    %185 = vmatpush2.msra.mxu0 0.0
    %186 = vmatprep.subr.mxu0 0.0
    %187 = vmatpush2.msra.mxu0 0.0
    %188 = vmatprep.mubr.f32.mxu0 0.0
    %189 = vmatmul.mubr.f32.gmra.mxu0 %v51
    %v190 = vpop.f32.mrf.mxu0
    %v191 = vadd.f32 0.0, %v190
    %v192 = vpop.f32.mrf.mxu0
    %v193 = vadd.f32 0.0, %v192
    %194 = vdwg.mxu0
    %v199 = vcombine.low %v120, %v122
    %v200 = vcombine.low %v191, %v193
    %v202 = vunpack.c.l.s4 1966171168
    %v203 = vunpack.c.0.s8 %v202
    %v204 = vlaneseq
    %v205 = vshrl.u32 %v204, 7
    %v206 = vsub.s32 %v203, %v205
    %v207 = vrot.slane %v199, %v206
    %v209 = vunpack.c.l.s4 1966171168
    %v210 = vunpack.c.0.s8 %v209
    %v211 = vlaneseq
    %v212 = vshrl.u32 %v211, 7
    %v213 = vsub.s32 %v210, %v212
    %v214 = vrot.slane %v200, %v213
    %v215 = vcombine.low %v207, %v214
    %v217 = vunpack.c.l.s4 1966171168
    %v218 = vunpack.c.0.s8 %v217
    %v219 = vlaneseq
    %v220 = vshrl.u32 %v219, 7
    %v221 = vsub.s32 %v218, %v220
    %v222 = vrot.slane %v215, %v221
    %v224 = vlaneseq
    %vm225 = vcmp.ge.s32.totalorder %v224, 0
    %vm226 = vcmp.lt.s32.totalorder %v224, 448
    %vm227 = vmand %vm225, %vm226
    %228 = vst.msk [vmem:[#allocation3] sm:$0xf] %vm227, %v222
    %v229 = vld [vmem:[%s0] sm:$0xff]
    %v230 = vld [vmem:[%s2] sm:$0xff]
    %v231 = vld [vmem:[%s2 + $0x8] sm:$0xff]
    %v232 = vld [vmem:[%s2 + $0x10] sm:$0xff]
    %v233 = vld [vmem:[%s2 + $0x18] sm:$0xff]
    %v234 = vld [vmem:[%s2 + $0x20] sm:$0xff]
    %v235 = vld [vmem:[%s2 + $0x28] sm:$0xff]
    %v236 = vld [vmem:[#allocation3] sm:$0x1]
    %v238 = vlaneseq
    %v239 = vshrl.u32 %v238, 7
    %v240 = vsub.s32 0, %v239
    %v241 = vrot.slane %v236, %v240
    %vm243 = vcmask 392192
    %v245 = vsel %vm243, %v229, 0
    %247 = vmatprep.subr.mxu0 0.0
    %248 = vmatpush1.msra.mxu0 0.0
    %249 = vmatprep.subr.mxu0 0.0
    %250 = vmatpush1.msra.mxu0 0.0
    %251 = vmatprep.subr.mxu0 0.0
    %252 = vmatpush1.msra.mxu0 0.0
    %253 = vmatprep.subr.mxu0 0.0
    %254 = vmatpush1.msra.mxu0 0.0
    %255 = vmatprep.subr.mxu0 0.0
    %256 = vmatpush1.msra.mxu0 0.0
    %257 = vmatprep.subr.mxu0 0.0
    %258 = vmatpush1.msra.mxu0 0.0
    %259 = vmatprep.subr.mxu0 0.0
    %260 = vmatpush1.msra.mxu0 0.0
    %261 = vmatprep.subr.mxu0 0.0
    %262 = vmatpush1.msra.mxu0 0.0
    %263 = vmatprep.subr.mxu0 0.0
    %264 = vmatpush1.msra.mxu0 0.0
    %265 = vmatprep.subr.mxu0 0.0
    %266 = vmatpush1.msra.mxu0 0.0
    %267 = vmatprep.subr.mxu0 0.0
    %268 = vmatpush1.msra.mxu0 %v235
    %269 = vmatprep.subr.mxu0 0.0
    %270 = vmatpush1.msra.mxu0 %v234
    %271 = vmatprep.subr.mxu0 0.0
    %272 = vmatpush1.msra.mxu0 %v233
    %273 = vmatprep.subr.mxu0 0.0
    %274 = vmatpush1.msra.mxu0 %v232
    %275 = vmatprep.subr.mxu0 0.0
    %276 = vmatpush1.msra.mxu0 %v231
    %277 = vmatprep.subr.mxu0 0.0
    %278 = vmatpush1.msra.mxu0 %v230
    %279 = vmatprep.subr.mxu0 0.0
    %280 = vmatpush2.msra.mxu0 0.0
    %281 = vmatprep.subr.mxu0 0.0
    %282 = vmatpush2.msra.mxu0 0.0
    %283 = vmatprep.subr.mxu0 0.0
    %284 = vmatpush2.msra.mxu0 0.0
    %285 = vmatprep.subr.mxu0 0.0
    %286 = vmatpush2.msra.mxu0 0.0
    %287 = vmatprep.subr.mxu0 0.0
    %288 = vmatpush2.msra.mxu0 0.0
    %289 = vmatprep.subr.mxu0 0.0
    %290 = vmatpush2.msra.mxu0 0.0
    %291 = vmatprep.subr.mxu0 0.0
    %292 = vmatpush2.msra.mxu0 0.0
    %293 = vmatprep.subr.mxu0 0.0
    %294 = vmatpush2.msra.mxu0 0.0
    %295 = vmatprep.subr.mxu0 0.0
    %296 = vmatpush2.msra.mxu0 0.0
    %297 = vmatprep.subr.mxu0 0.0
    %298 = vmatpush2.msra.mxu0 0.0
    %299 = vmatprep.subr.mxu0 0.0
    %300 = vmatpush2.msra.mxu0 0.0
    %301 = vmatprep.subr.mxu0 0.0
    %302 = vmatpush2.msra.mxu0 0.0
    %303 = vmatprep.subr.mxu0 0.0
    %304 = vmatpush2.msra.mxu0 0.0
    %305 = vmatprep.subr.mxu0 0.0
    %306 = vmatpush2.msra.mxu0 0.0
    %307 = vmatprep.subr.mxu0 0.0
    %308 = vmatpush2.msra.mxu0 0.0
    %309 = vmatprep.subr.mxu0 0.0
    %310 = vmatpush2.msra.mxu0 0.0
    %311 = vmatprep.mubr.f32.mxu0 0.0
    %312 = vmatmul.mubr.f32.gmra.mxu0 %v245
    %v313 = vpop.f32.mrf.mxu0
    %v314 = vadd.f32 %v241, %v313
    %v315 = vpop.f32.mrf.mxu0
    %316 = vdwg.mxu0
    %317 = vst.msk [vmem:[#allocation2 + $0x8] sm:$0xff] %vm24, %v314
    %v318 = vld [vmem:[#allocation3] sm:$0x1]
    %v320 = vlaneseq
    %v321 = vshrl.u32 %v320, 7
    %v322 = vsub.s32 0, %v321
    %v323 = vrot.slane %v318, %v322
    %v325 = vadd.f32 %v323, 0.0
    %v326 = vld [vmem:[#allocation2 + $0x6] sm:$0xff]
    %v327 = vld [vmem:[%s5 + $0x4b0] sm:$0x1]
    %v328 = vlaneseq
    %v329 = vshrl.u32 %v328, 7
    %v330 = vsub.s32 0, %v329
    %v331 = vrot.slane %v327, %v330
    %v332 = vmul.f32 %v326, %v331
    %334 = vrot.lane.b32.xlu0 %v332, 64
    %v335 = vpop.permute.xlu0 %334
    %v337 = vadd.f32 %v325, %v335
    %v338 = vld [vmem:[#allocation2 + $0x7] sm:$0xff]
    %v339 = vld [vmem:[%s5 + $0x4b1] sm:$0x1]
    %v340 = vlaneseq
    %v341 = vshrl.u32 %v340, 7
    %v342 = vsub.s32 0, %v341
    %v343 = vrot.slane %v339, %v342
    %v344 = vmul.f32 %v338, %v343
    %346 = vrot.lane.b32.xlu0 %v344, 64
    %v347 = vpop.permute.xlu0 %346
    %v349 = vadd.f32 %v337, %v347
    %v350 = vld [vmem:[#allocation2 + $0x8] sm:$0xff]
    %v351 = vld [vmem:[%s5 + $0x4b2] sm:$0x1]
    %v352 = vlaneseq
    %v353 = vshrl.u32 %v352, 7
    %v354 = vsub.s32 0, %v353
    %v355 = vrot.slane %v351, %v354
    %v356 = vmul.f32 %v350, %v355
    %358 = vrot.lane.b32.xlu0 %v356, 64
    %v359 = vpop.permute.xlu0 %358
    %v361 = vadd.f32 %v349, %v359
    %v362 = vld [vmem:[#allocation2 + $0x9] sm:$0xff]
    %v363 = vld [vmem:[%s5 + $0x4b3] sm:$0x1]
    %v364 = vlaneseq
    %v365 = vshrl.u32 %v364, 7
    %v366 = vsub.s32 0, %v365
    %v367 = vrot.slane %v363, %v366
    %v368 = vmul.f32 %v362, %v367
    %370 = vrot.lane.b32.xlu0 %v368, 64
    %v371 = vpop.permute.xlu0 %370
    %v373 = vadd.f32 %v361, %v371
    %v374 = vld [vmem:[#allocation2 + $0xa] sm:$0xff]
    %v375 = vld [vmem:[%s5 + $0x4b4] sm:$0x1]
    %v376 = vlaneseq
    %v377 = vshrl.u32 %v376, 7
    %v378 = vsub.s32 0, %v377
    %v379 = vrot.slane %v375, %v378
    %v380 = vmul.f32 %v374, %v379
    %382 = vrot.lane.b32.xlu0 %v380, 64
    %v383 = vpop.permute.xlu0 %382
    %v385 = vadd.f32 %v373, %v383
    %v386 = vld [vmem:[%s4] sm:$0xff]
    %v387 = vld [vmem:[%s4 + $0x8] sm:$0xff]
    %v388 = vld [vmem:[%s4 + $0x10] sm:$0xff]
    %v389 = vld [vmem:[%s4 + $0x18] sm:$0xff]
    %v390 = vld [vmem:[%s4 + $0x20] sm:$0xff]
    %v391 = vld [vmem:[%s4 + $0x28] sm:$0xff]
    %v392 = vld [vmem:[%s4 + $0x30] sm:$0xff]
    %v393 = vld [vmem:[%s4 + $0x38] sm:$0xff]
    %v394 = vld [vmem:[%s4 + $0x40] sm:$0xff]
    %v395 = vld [vmem:[%s4 + $0x48] sm:$0xff]
    %v396 = vld [vmem:[%s4 + $0x50] sm:$0xff]
    %v397 = vld [vmem:[%s4 + $0x58] sm:$0xff]
    %v398 = vld [vmem:[%s4 + $0x60] sm:$0xff]
    %v399 = vld [vmem:[%s4 + $0x68] sm:$0xff]
    %v400 = vld [vmem:[%s4 + $0x70] sm:$0xff]
    %v401 = vld [vmem:[%s4 + $0x78] sm:$0xff]
    %s402 = scalar_lea.vmem %s4, 128
    %v403 = vld [vmem:[%s402] ss:$8 sm:$0x3]
    %v405 = vlaneseq
    %v406 = vshrl.u32 %v405, 7
    %v407 = vsub.s32 0, %v406
    %v408 = vrot.slane %v403, %v407
    %v409 = vlaneseq
    %v410 = vshrl.u32 %v409, 7
    %v411 = vsub.s32 1, %v410
    %v412 = vrot.slane %v403, %v411
    %416 = vrot.lane.b32.xlu0 %v385, 64
    %v417 = vpop.permute.xlu0 %416
    %v418 = vsel %vm24, %v417, 0
    %420 = vmatprep.subr.mxu0 0.0
    %421 = vmatpush1.msra.mxu0 0.0
    %422 = vmatprep.subr.mxu0 0.0
    %423 = vmatpush1.msra.mxu0 0.0
    %424 = vmatprep.subr.mxu0 0.0
    %425 = vmatpush1.msra.mxu0 0.0
    %426 = vmatprep.subr.mxu0 0.0
    %427 = vmatpush1.msra.mxu0 0.0
    %428 = vmatprep.subr.mxu0 0.0
    %429 = vmatpush1.msra.mxu0 0.0
    %430 = vmatprep.subr.mxu0 0.0
    %431 = vmatpush1.msra.mxu0 0.0
    %432 = vmatprep.subr.mxu0 0.0
    %433 = vmatpush1.msra.mxu0 0.0
    %434 = vmatprep.subr.mxu0 0.0
    %435 = vmatpush1.msra.mxu0 0.0
    %436 = vmatprep.subr.mxu0 %v401
    %437 = vmatpush1.msra.mxu0 %v400
    %438 = vmatprep.subr.mxu0 %v399
    %439 = vmatpush1.msra.mxu0 %v398
    %440 = vmatprep.subr.mxu0 %v397
    %441 = vmatpush1.msra.mxu0 %v396
    %442 = vmatprep.subr.mxu0 %v395
    %443 = vmatpush1.msra.mxu0 %v394
    %444 = vmatprep.subr.mxu0 %v393
    %445 = vmatpush1.msra.mxu0 %v392
    %446 = vmatprep.subr.mxu0 %v391
    %447 = vmatpush1.msra.mxu0 %v390
    %448 = vmatprep.subr.mxu0 %v389
    %449 = vmatpush1.msra.mxu0 %v388
    %450 = vmatprep.subr.mxu0 %v387
    %451 = vmatpush1.msra.mxu0 %v386
    %452 = vmatprep.subr.mxu0 0.0
    %453 = vmatpush2.msra.mxu0 0.0
    %454 = vmatprep.subr.mxu0 0.0
    %455 = vmatpush2.msra.mxu0 0.0
    %456 = vmatprep.subr.mxu0 0.0
    %457 = vmatpush2.msra.mxu0 0.0
    %458 = vmatprep.subr.mxu0 0.0
    %459 = vmatpush2.msra.mxu0 0.0
    %460 = vmatprep.subr.mxu0 0.0
    %461 = vmatpush2.msra.mxu0 0.0
    %462 = vmatprep.subr.mxu0 0.0
    %463 = vmatpush2.msra.mxu0 0.0
    %464 = vmatprep.subr.mxu0 0.0
    %465 = vmatpush2.msra.mxu0 0.0
    %466 = vmatprep.subr.mxu0 0.0
    %467 = vmatpush2.msra.mxu0 0.0
    %468 = vmatprep.subr.mxu0 0.0
    %469 = vmatpush2.msra.mxu0 0.0
    %470 = vmatprep.subr.mxu0 0.0
    %471 = vmatpush2.msra.mxu0 0.0
    %472 = vmatprep.subr.mxu0 0.0
    %473 = vmatpush2.msra.mxu0 0.0
    %474 = vmatprep.subr.mxu0 0.0
    %475 = vmatpush2.msra.mxu0 0.0
    %476 = vmatprep.subr.mxu0 0.0
    %477 = vmatpush2.msra.mxu0 0.0
    %478 = vmatprep.subr.mxu0 0.0
    %479 = vmatpush2.msra.mxu0 0.0
    %480 = vmatprep.subr.mxu0 0.0
    %481 = vmatpush2.msra.mxu0 0.0
    %482 = vmatprep.subr.mxu0 0.0
    %483 = vmatpush2.msra.mxu0 0.0
    %484 = vmatprep.mubr.f32.mxu0 0.0
    %485 = vmatmul.mubr.f32.gmra.mxu0 %v418
    %v486 = vpop.f32.mrf.mxu0
    %v487 = vadd.f32 %v408, %v486
    %v488 = vpop.f32.mrf.mxu0
    %v489 = vadd.f32 %v412, %v488
    %490 = vdwg.mxu0
    %v491 = vxor.u32 %v487, 2147483648
    %v492 = vxor.u32 %v489, 2147483648
    %v493 = vmul.f32 %v491, 1.442695
    %v494 = vpow.pop %v493
    %v495 = vmul.f32 %v492, 1.442695
    %v496 = vpow.pop %v495
    %v497 = vadd.f32 %v494, 1.0
    %v498 = vadd.f32 %v496, 1.0
    %v499 = vrcp.pop %v497
    %v500 = vmul.f32 1.0, %v499
    %v501 = vrcp.pop %v498
    %v502 = vmul.f32 1.0, %v501
    %v503 = vmul.f32 %v487, %v500
    %v504 = vmul.f32 %v489, %v502
    %v505 = vld [vmem:[%s5] sm:$0xff]
    %v506 = vld [vmem:[%s5 + $0x8] sm:$0xff]
    %v507 = vld [vmem:[%s5 + $0x10] sm:$0xff]
    %v508 = vld [vmem:[%s5 + $0x18] sm:$0xff]
    %v509 = vld [vmem:[%s5 + $0x20] sm:$0xff]
    %v510 = vld [vmem:[%s5 + $0x28] sm:$0xff]
    %v511 = vld [vmem:[%s5 + $0x30] sm:$0xff]
    %v512 = vld [vmem:[%s5 + $0x38] sm:$0xff]
    %v513 = vld [vmem:[%s5 + $0x40] sm:$0xff]
    %v514 = vld [vmem:[%s5 + $0x48] sm:$0xff]
    %v515 = vld [vmem:[%s5 + $0x50] sm:$0xff]
    %v516 = vld [vmem:[%s5 + $0x58] sm:$0xff]
    %v517 = vld [vmem:[%s5 + $0x60] sm:$0xff]
    %v518 = vld [vmem:[%s5 + $0x68] sm:$0xff]
    %v519 = vld [vmem:[%s5 + $0x70] sm:$0xff]
    %v520 = vld [vmem:[%s5 + $0x78] sm:$0xff]
    %v521 = vld [vmem:[%s5 + $0x80] sm:$0xff]
    %v522 = vld [vmem:[%s5 + $0x88] sm:$0xff]
    %v523 = vld [vmem:[%s5 + $0x90] sm:$0xff]
    %v524 = vld [vmem:[%s5 + $0x98] sm:$0xff]
    %v525 = vld [vmem:[%s5 + $0xa0] sm:$0xff]
    %v526 = vld [vmem:[%s5 + $0xa8] sm:$0xff]
    %v527 = vld [vmem:[%s5 + $0xb0] sm:$0xff]
    %v528 = vld [vmem:[%s5 + $0xb8] sm:$0xff]
    %v529 = vld [vmem:[%s5 + $0xc0] sm:$0x1]
    %v530 = vlaneseq
    %v531 = vshrl.u32 %v530, 7
    %v532 = vsub.s32 0, %v531
    %v533 = vrot.slane %v529, %v532
    %v535 = vsel %vm24, %v504, 0
    %537 = vmatprep.subr.mxu0 0.0
    %538 = vmatpush1.msra.mxu0 %v520
    %539 = vmatprep.subr.mxu0 0.0
    %540 = vmatpush1.msra.mxu0 %v519
    %541 = vmatprep.subr.mxu0 0.0
    %542 = vmatpush1.msra.mxu0 %v518
    %543 = vmatprep.subr.mxu0 0.0
    %544 = vmatpush1.msra.mxu0 %v517
    %545 = vmatprep.subr.mxu0 0.0
    %546 = vmatpush1.msra.mxu0 %v516
    %547 = vmatprep.subr.mxu0 0.0
    %548 = vmatpush1.msra.mxu0 %v515
    %549 = vmatprep.subr.mxu0 0.0
    %550 = vmatpush1.msra.mxu0 %v514
    %551 = vmatprep.subr.mxu0 0.0
    %552 = vmatpush1.msra.mxu0 %v513
    %553 = vmatprep.subr.mxu0 0.0
    %554 = vmatpush1.msra.mxu0 %v512
    %555 = vmatprep.subr.mxu0 0.0
    %556 = vmatpush1.msra.mxu0 %v511
    %557 = vmatprep.subr.mxu0 0.0
    %558 = vmatpush1.msra.mxu0 %v510
    %559 = vmatprep.subr.mxu0 0.0
    %560 = vmatpush1.msra.mxu0 %v509
    %561 = vmatprep.subr.mxu0 0.0
    %562 = vmatpush1.msra.mxu0 %v508
    %563 = vmatprep.subr.mxu0 0.0
    %564 = vmatpush1.msra.mxu0 %v507
    %565 = vmatprep.subr.mxu0 0.0
    %566 = vmatpush1.msra.mxu0 %v506
    %567 = vmatprep.subr.mxu0 0.0
    %568 = vmatpush1.msra.mxu0 %v505
    %569 = vmatprep.subr.mxu0 0.0
    %570 = vmatpush2.msra.mxu0 0.0
    %571 = vmatprep.subr.mxu0 0.0
    %572 = vmatpush2.msra.mxu0 0.0
    %573 = vmatprep.subr.mxu0 0.0
    %574 = vmatpush2.msra.mxu0 0.0
    %575 = vmatprep.subr.mxu0 0.0
    %576 = vmatpush2.msra.mxu0 0.0
    %577 = vmatprep.subr.mxu0 0.0
    %578 = vmatpush2.msra.mxu0 0.0
    %579 = vmatprep.subr.mxu0 0.0
    %580 = vmatpush2.msra.mxu0 0.0
    %581 = vmatprep.subr.mxu0 0.0
    %582 = vmatpush2.msra.mxu0 0.0
    %583 = vmatprep.subr.mxu0 0.0
    %584 = vmatpush2.msra.mxu0 0.0
    %585 = vmatprep.subr.mxu0 0.0
    %586 = vmatpush2.msra.mxu0 %v528
    %587 = vmatprep.subr.mxu0 0.0
    %588 = vmatpush2.msra.mxu0 %v527
    %589 = vmatprep.subr.mxu0 0.0
    %590 = vmatpush2.msra.mxu0 %v526
    %591 = vmatprep.subr.mxu0 0.0
    %592 = vmatpush2.msra.mxu0 %v525
    %593 = vmatprep.subr.mxu0 0.0
    %594 = vmatpush2.msra.mxu0 %v524
    %595 = vmatprep.subr.mxu0 0.0
    %596 = vmatpush2.msra.mxu0 %v523
    %597 = vmatprep.subr.mxu0 0.0
    %598 = vmatpush2.msra.mxu0 %v522
    %599 = vmatprep.subr.mxu0 0.0
    %600 = vmatpush2.msra.mxu0 %v521
    %601 = vmatprep.mubr.f32.mxu0 %v535
    %602 = vmatmul.mubr.f32.gmra.mxu0 %v503
    %v603 = vpop.f32.mrf.mxu0
    %v604 = vadd.f32 %v533, %v603
    %v605 = vpop.f32.mrf.mxu0
    %606 = vdwg.mxu0
    %v607 = vadd.f32 %v314, %v604
    %608 = vst.msk [vmem:[#allocation2 + $0x8] sm:$0xff] %vm24, %v607
    %v609 = vld [vmem:[#allocation3 + $0x1] sm:$0x1]
    %v611 = vlaneseq
    %v612 = vshrl.u32 %v611, 7
    %v613 = vsub.s32 0, %v612
    %v614 = vrot.slane %v609, %v613
    %v616 = vadd.f32 %v614, 0.0
    %v617 = vld [vmem:[#allocation2 + $0x4] sm:$0xff]
    %v618 = vld [vmem:[%s5 + $0x4b5] sm:$0x1]
    %v619 = vlaneseq
    %v620 = vshrl.u32 %v619, 7
    %v621 = vsub.s32 0, %v620
    %v622 = vrot.slane %v618, %v621
    %v623 = vmul.f32 %v617, %v622
    %v624 = vadd.f32 %v616, %v623
    %v625 = vld [vmem:[#allocation2 + $0x6] sm:$0xff]
    %v626 = vld [vmem:[%s5 + $0x4b6] sm:$0x1]
    %v627 = vlaneseq
    %v628 = vshrl.u32 %v627, 7
    %v629 = vsub.s32 0, %v628
    %v630 = vrot.slane %v626, %v629
    %v631 = vmul.f32 %v625, %v630
    %v632 = vadd.f32 %v624, %v631
    %v633 = vld [vmem:[#allocation2 + $0x8] sm:$0xff]
    %v634 = vld [vmem:[%s5 + $0x4b7] sm:$0x1]
    %v635 = vlaneseq
    %v636 = vshrl.u32 %v635, 7
    %v637 = vsub.s32 0, %v636
    %v638 = vrot.slane %v634, %v637
    %v639 = vmul.f32 %v633, %v638
    %v640 = vadd.f32 %v632, %v639
    %v641 = vld [vmem:[#allocation2 + $0xa] sm:$0xff]
    %v642 = vld [vmem:[%s5 + $0x4b8] sm:$0x1]
    %v643 = vlaneseq
    %v644 = vshrl.u32 %v643, 7
    %v645 = vsub.s32 0, %v644
    %v646 = vrot.slane %v642, %v645
    %v647 = vmul.f32 %v641, %v646
    %v648 = vadd.f32 %v640, %v647
    %v649 = vld [vmem:[#allocation2 + $0xc] sm:$0xff]
    %v650 = vld [vmem:[%s5 + $0x4b9] sm:$0x1]
    %v651 = vlaneseq
    %v652 = vshrl.u32 %v651, 7
    %v653 = vsub.s32 0, %v652
    %v654 = vrot.slane %v650, %v653
    %v655 = vmul.f32 %v649, %v654
    %v656 = vadd.f32 %v648, %v655
    %v657 = vld [vmem:[%s4 + $0x90] sm:$0xff]
    %v658 = vld [vmem:[%s4 + $0x98] sm:$0xff]
    %v659 = vld [vmem:[%s4 + $0xa0] sm:$0xff]
    %v660 = vld [vmem:[%s4 + $0xa8] sm:$0xff]
    %v661 = vld [vmem:[%s4 + $0xb0] sm:$0xff]
    %v662 = vld [vmem:[%s4 + $0xb8] sm:$0xff]
    %v663 = vld [vmem:[%s4 + $0xc0] sm:$0xff]
    %v664 = vld [vmem:[%s4 + $0xc8] sm:$0xff]
    %v665 = vld [vmem:[%s4 + $0xd0] sm:$0xff]
    %v666 = vld [vmem:[%s4 + $0xd8] sm:$0xff]
    %v667 = vld [vmem:[%s4 + $0xe0] sm:$0xff]
    %v668 = vld [vmem:[%s4 + $0xe8] sm:$0xff]
    %v669 = vld [vmem:[%s4 + $0xf0] sm:$0xff]
    %v670 = vld [vmem:[%s4 + $0xf8] sm:$0xff]
    %v671 = vld [vmem:[%s4 + $0x100] sm:$0xff]
    %v672 = vld [vmem:[%s4 + $0x108] sm:$0xff]
    %s673 = scalar_lea.vmem %s4, 272
    %v674 = vld [vmem:[%s673] ss:$8 sm:$0x3]
    %v676 = vlaneseq
    %v677 = vshrl.u32 %v676, 7
    %v678 = vsub.s32 0, %v677
    %v679 = vrot.slane %v674, %v678
    %v680 = vlaneseq
    %v681 = vshrl.u32 %v680, 7
    %v682 = vsub.s32 1, %v681
    %v683 = vrot.slane %v674, %v682
    %v687 = vsel %vm24, %v656, 0
    %689 = vmatprep.subr.mxu0 0.0
    %690 = vmatpush1.msra.mxu0 0.0
    %691 = vmatprep.subr.mxu0 0.0
    %692 = vmatpush1.msra.mxu0 0.0
    %693 = vmatprep.subr.mxu0 0.0
    %694 = vmatpush1.msra.mxu0 0.0
    %695 = vmatprep.subr.mxu0 0.0
    %696 = vmatpush1.msra.mxu0 0.0
    %697 = vmatprep.subr.mxu0 0.0
    %698 = vmatpush1.msra.mxu0 0.0
    %699 = vmatprep.subr.mxu0 0.0
    %700 = vmatpush1.msra.mxu0 0.0
    %701 = vmatprep.subr.mxu0 0.0
    %702 = vmatpush1.msra.mxu0 0.0
    %703 = vmatprep.subr.mxu0 0.0
    %704 = vmatpush1.msra.mxu0 0.0
    %705 = vmatprep.subr.mxu0 %v672
    %706 = vmatpush1.msra.mxu0 %v671
    %707 = vmatprep.subr.mxu0 %v670
    %708 = vmatpush1.msra.mxu0 %v669
    %709 = vmatprep.subr.mxu0 %v668
    %710 = vmatpush1.msra.mxu0 %v667
    %711 = vmatprep.subr.mxu0 %v666
    %712 = vmatpush1.msra.mxu0 %v665
    %713 = vmatprep.subr.mxu0 %v664
    %714 = vmatpush1.msra.mxu0 %v663
    %715 = vmatprep.subr.mxu0 %v662
    %716 = vmatpush1.msra.mxu0 %v661
    %717 = vmatprep.subr.mxu0 %v660
    %718 = vmatpush1.msra.mxu0 %v659
    %719 = vmatprep.subr.mxu0 %v658
    %720 = vmatpush1.msra.mxu0 %v657
    %721 = vmatprep.subr.mxu0 0.0
    %722 = vmatpush2.msra.mxu0 0.0
    %723 = vmatprep.subr.mxu0 0.0
    %724 = vmatpush2.msra.mxu0 0.0
    %725 = vmatprep.subr.mxu0 0.0
    %726 = vmatpush2.msra.mxu0 0.0
    %727 = vmatprep.subr.mxu0 0.0
    %728 = vmatpush2.msra.mxu0 0.0
    %729 = vmatprep.subr.mxu0 0.0
    %730 = vmatpush2.msra.mxu0 0.0
    %731 = vmatprep.subr.mxu0 0.0
    %732 = vmatpush2.msra.mxu0 0.0
    %733 = vmatprep.subr.mxu0 0.0
    %734 = vmatpush2.msra.mxu0 0.0
    %735 = vmatprep.subr.mxu0 0.0
    %736 = vmatpush2.msra.mxu0 0.0
    %737 = vmatprep.subr.mxu0 0.0
    %738 = vmatpush2.msra.mxu0 0.0
    %739 = vmatprep.subr.mxu0 0.0
    %740 = vmatpush2.msra.mxu0 0.0
    %741 = vmatprep.subr.mxu0 0.0
    %742 = vmatpush2.msra.mxu0 0.0
    %743 = vmatprep.subr.mxu0 0.0
    %744 = vmatpush2.msra.mxu0 0.0
    %745 = vmatprep.subr.mxu0 0.0
    %746 = vmatpush2.msra.mxu0 0.0
    %747 = vmatprep.subr.mxu0 0.0
    %748 = vmatpush2.msra.mxu0 0.0
    %749 = vmatprep.subr.mxu0 0.0
    %750 = vmatpush2.msra.mxu0 0.0
    %751 = vmatprep.subr.mxu0 0.0
    %752 = vmatpush2.msra.mxu0 0.0
    %753 = vmatprep.mubr.f32.mxu0 0.0
    %754 = vmatmul.mubr.f32.gmra.mxu0 %v687
    %v755 = vpop.f32.mrf.mxu0
    %v756 = vadd.f32 %v679, %v755
    %v757 = vpop.f32.mrf.mxu0
    %v758 = vadd.f32 %v683, %v757
    %759 = vdwg.mxu0
    %v760 = vxor.u32 %v756, 2147483648
    %v761 = vxor.u32 %v758, 2147483648
    %v762 = vmul.f32 %v760, 1.442695
    %v763 = vpow.pop %v762
    %v764 = vmul.f32 %v761, 1.442695
    %v765 = vpow.pop %v764
    %v766 = vadd.f32 %v763, 1.0
    %v767 = vadd.f32 %v765, 1.0
    %v768 = vrcp.pop %v766
    %v769 = vmul.f32 1.0, %v768
    %v770 = vrcp.pop %v767
    %v771 = vmul.f32 1.0, %v770
    %v772 = vmul.f32 %v756, %v769
    %v773 = vmul.f32 %v758, %v771
    %v774 = vld [vmem:[%s5 + $0xc8] sm:$0xff]
    %v775 = vld [vmem:[%s5 + $0xd0] sm:$0xff]
    %v776 = vld [vmem:[%s5 + $0xd8] sm:$0xff]
    %v777 = vld [vmem:[%s5 + $0xe0] sm:$0xff]
    %v778 = vld [vmem:[%s5 + $0xe8] sm:$0xff]
    %v779 = vld [vmem:[%s5 + $0xf0] sm:$0xff]
    %v780 = vld [vmem:[%s5 + $0xf8] sm:$0xff]
    %v781 = vld [vmem:[%s5 + $0x100] sm:$0xff]
    %v782 = vld [vmem:[%s5 + $0x108] sm:$0xff]
    %v783 = vld [vmem:[%s5 + $0x110] sm:$0xff]
    %v784 = vld [vmem:[%s5 + $0x118] sm:$0xff]
    %v785 = vld [vmem:[%s5 + $0x120] sm:$0xff]
    %v786 = vld [vmem:[%s5 + $0x128] sm:$0xff]
    %v787 = vld [vmem:[%s5 + $0x130] sm:$0xff]
    %v788 = vld [vmem:[%s5 + $0x138] sm:$0xff]
    %v789 = vld [vmem:[%s5 + $0x140] sm:$0xff]
    %v790 = vld [vmem:[%s5 + $0x148] sm:$0xff]
    %v791 = vld [vmem:[%s5 + $0x150] sm:$0xff]
    %v792 = vld [vmem:[%s5 + $0x158] sm:$0xff]
    %v793 = vld [vmem:[%s5 + $0x160] sm:$0xff]
    %v794 = vld [vmem:[%s5 + $0x168] sm:$0xff]
    %v795 = vld [vmem:[%s5 + $0x170] sm:$0xff]
    %v796 = vld [vmem:[%s5 + $0x178] sm:$0xff]
    %v797 = vld [vmem:[%s5 + $0x180] sm:$0xff]
    %v798 = vld [vmem:[%s5 + $0x188] sm:$0x1]
    %v799 = vlaneseq
    %v800 = vshrl.u32 %v799, 7
    %v801 = vsub.s32 0, %v800
    %v802 = vrot.slane %v798, %v801
    %v804 = vsel %vm24, %v773, 0
    %806 = vmatprep.subr.mxu0 0.0
    %807 = vmatpush1.msra.mxu0 %v789
    %808 = vmatprep.subr.mxu0 0.0
    %809 = vmatpush1.msra.mxu0 %v788
    %810 = vmatprep.subr.mxu0 0.0
    %811 = vmatpush1.msra.mxu0 %v787
    %812 = vmatprep.subr.mxu0 0.0
    %813 = vmatpush1.msra.mxu0 %v786
    %814 = vmatprep.subr.mxu0 0.0
    %815 = vmatpush1.msra.mxu0 %v785
    %816 = vmatprep.subr.mxu0 0.0
    %817 = vmatpush1.msra.mxu0 %v784
    %818 = vmatprep.subr.mxu0 0.0
    %819 = vmatpush1.msra.mxu0 %v783
    %820 = vmatprep.subr.mxu0 0.0
    %821 = vmatpush1.msra.mxu0 %v782
    %822 = vmatprep.subr.mxu0 0.0
    %823 = vmatpush1.msra.mxu0 %v781
    %824 = vmatprep.subr.mxu0 0.0
    %825 = vmatpush1.msra.mxu0 %v780
    %826 = vmatprep.subr.mxu0 0.0
    %827 = vmatpush1.msra.mxu0 %v779
    %828 = vmatprep.subr.mxu0 0.0
    %829 = vmatpush1.msra.mxu0 %v778
    %830 = vmatprep.subr.mxu0 0.0
    %831 = vmatpush1.msra.mxu0 %v777
    %832 = vmatprep.subr.mxu0 0.0
    %833 = vmatpush1.msra.mxu0 %v776
    %834 = vmatprep.subr.mxu0 0.0
    %835 = vmatpush1.msra.mxu0 %v775
    %836 = vmatprep.subr.mxu0 0.0
    %837 = vmatpush1.msra.mxu0 %v774
    %838 = vmatprep.subr.mxu0 0.0
    %839 = vmatpush2.msra.mxu0 0.0
    %840 = vmatprep.subr.mxu0 0.0
    %841 = vmatpush2.msra.mxu0 0.0
    %842 = vmatprep.subr.mxu0 0.0
    %843 = vmatpush2.msra.mxu0 0.0
    %844 = vmatprep.subr.mxu0 0.0
    %845 = vmatpush2.msra.mxu0 0.0
    %846 = vmatprep.subr.mxu0 0.0
    %847 = vmatpush2.msra.mxu0 0.0
    %848 = vmatprep.subr.mxu0 0.0
    %849 = vmatpush2.msra.mxu0 0.0
    %850 = vmatprep.subr.mxu0 0.0
    %851 = vmatpush2.msra.mxu0 0.0
    %852 = vmatprep.subr.mxu0 0.0
    %853 = vmatpush2.msra.mxu0 0.0
    %854 = vmatprep.subr.mxu0 0.0
    %855 = vmatpush2.msra.mxu0 %v797
    %856 = vmatprep.subr.mxu0 0.0
    %857 = vmatpush2.msra.mxu0 %v796
    %858 = vmatprep.subr.mxu0 0.0
    %859 = vmatpush2.msra.mxu0 %v795
    %860 = vmatprep.subr.mxu0 0.0
    %861 = vmatpush2.msra.mxu0 %v794
    %862 = vmatprep.subr.mxu0 0.0
    %863 = vmatpush2.msra.mxu0 %v793
    %864 = vmatprep.subr.mxu0 0.0
    %865 = vmatpush2.msra.mxu0 %v792
    %866 = vmatprep.subr.mxu0 0.0
    %867 = vmatpush2.msra.mxu0 %v791
    %868 = vmatprep.subr.mxu0 0.0
    %869 = vmatpush2.msra.mxu0 %v790
    %870 = vmatprep.mubr.f32.mxu0 %v804
    %871 = vmatmul.mubr.f32.gmra.mxu0 %v772
    %v872 = vpop.f32.mrf.mxu0
    %v873 = vadd.f32 %v802, %v872
    %v874 = vpop.f32.mrf.mxu0
    %875 = vdwg.mxu0
    %v876 = vadd.f32 %v607, %v873
    %877 = vst.msk [vmem:[#allocation2 + $0x8] sm:$0xff] %vm24, %v876
    %v878 = vld [vmem:[#allocation3 + $0x1] sm:$0x1]
    %v880 = vlaneseq
    %v881 = vshrl.u32 %v880, 7
    %v882 = vsub.s32 0, %v881
    %v883 = vrot.slane %v878, %v882
    %v885 = vadd.f32 %v883, 0.0
    %v886 = vld [vmem:[#allocation2] sm:$0xff]
    %v887 = vld [vmem:[%s5 + $0x4ba] sm:$0x1]
    %v888 = vlaneseq
    %v889 = vshrl.u32 %v888, 7
    %v890 = vsub.s32 0, %v889
    %v891 = vrot.slane %v887, %v890
    %v892 = vmul.f32 %v886, %v891
    %894 = vrot.lane.b32.xlu0 %v892, 64
    %v895 = vpop.permute.xlu0 %894
    %v897 = vadd.f32 %v885, %v895
    %v898 = vld [vmem:[#allocation2 + $0x4] sm:$0xff]
    %v899 = vld [vmem:[%s5 + $0x4bb] sm:$0x1]
    %v900 = vlaneseq
    %v901 = vshrl.u32 %v900, 7
    %v902 = vsub.s32 0, %v901
    %v903 = vrot.slane %v899, %v902
    %v904 = vmul.f32 %v898, %v903
    %906 = vrot.lane.b32.xlu0 %v904, 64
    %v907 = vpop.permute.xlu0 %906
    %v909 = vadd.f32 %v897, %v907
    %v910 = vld [vmem:[#allocation2 + $0x8] sm:$0xff]
    %v911 = vld [vmem:[%s5 + $0x4bc] sm:$0x1]
    %v912 = vlaneseq
    %v913 = vshrl.u32 %v912, 7
    %v914 = vsub.s32 0, %v913
    %v915 = vrot.slane %v911, %v914
    %v916 = vmul.f32 %v910, %v915
    %918 = vrot.lane.b32.xlu0 %v916, 64
    %v919 = vpop.permute.xlu0 %918
    %v921 = vadd.f32 %v909, %v919
    %v922 = vld [vmem:[#allocation2 + $0xc] sm:$0xff]
    %v923 = vld [vmem:[%s5 + $0x4bd] sm:$0x1]
    %v924 = vlaneseq
    %v925 = vshrl.u32 %v924, 7
    %v926 = vsub.s32 0, %v925
    %v927 = vrot.slane %v923, %v926
    %v928 = vmul.f32 %v922, %v927
    %930 = vrot.lane.b32.xlu0 %v928, 64
    %v931 = vpop.permute.xlu0 %930
    %v933 = vadd.f32 %v921, %v931
    %v934 = vld [vmem:[#allocation2 + $0x10] sm:$0xff]
    %v935 = vld [vmem:[%s5 + $0x4be] sm:$0x1]
    %v936 = vlaneseq
    %v937 = vshrl.u32 %v936, 7
    %v938 = vsub.s32 0, %v937
    %v939 = vrot.slane %v935, %v938
    %v940 = vmul.f32 %v934, %v939
    %942 = vrot.lane.b32.xlu0 %v940, 64
    %v943 = vpop.permute.xlu0 %942
    %v945 = vadd.f32 %v933, %v943
    %v946 = vld [vmem:[%s4 + $0x120] sm:$0xff]
    %v947 = vld [vmem:[%s4 + $0x128] sm:$0xff]
    %v948 = vld [vmem:[%s4 + $0x130] sm:$0xff]
    %v949 = vld [vmem:[%s4 + $0x138] sm:$0xff]
    %v950 = vld [vmem:[%s4 + $0x140] sm:$0xff]
    %v951 = vld [vmem:[%s4 + $0x148] sm:$0xff]
    %v952 = vld [vmem:[%s4 + $0x150] sm:$0xff]
    %v953 = vld [vmem:[%s4 + $0x158] sm:$0xff]
    %v954 = vld [vmem:[%s4 + $0x160] sm:$0xff]
    %v955 = vld [vmem:[%s4 + $0x168] sm:$0xff]
    %v956 = vld [vmem:[%s4 + $0x170] sm:$0xff]
    %v957 = vld [vmem:[%s4 + $0x178] sm:$0xff]
    %v958 = vld [vmem:[%s4 + $0x180] sm:$0xff]
    %v959 = vld [vmem:[%s4 + $0x188] sm:$0xff]
    %v960 = vld [vmem:[%s4 + $0x190] sm:$0xff]
    %v961 = vld [vmem:[%s4 + $0x198] sm:$0xff]
    %s962 = scalar_lea.vmem %s4, 416
    %v963 = vld [vmem:[%s962] ss:$8 sm:$0x3]
    %v965 = vlaneseq
    %v966 = vshrl.u32 %v965, 7
    %v967 = vsub.s32 0, %v966
    %v968 = vrot.slane %v963, %v967
    %v969 = vlaneseq
    %v970 = vshrl.u32 %v969, 7
    %v971 = vsub.s32 1, %v970
    %v972 = vrot.slane %v963, %v971
    %976 = vrot.lane.b32.xlu0 %v945, 64
    %v977 = vpop.permute.xlu0 %976
    %v978 = vsel %vm24, %v977, 0
    %980 = vmatprep.subr.mxu0 0.0
    %981 = vmatpush1.msra.mxu0 0.0
    %982 = vmatprep.subr.mxu0 0.0
    %983 = vmatpush1.msra.mxu0 0.0
    %984 = vmatprep.subr.mxu0 0.0
    %985 = vmatpush1.msra.mxu0 0.0
    %986 = vmatprep.subr.mxu0 0.0
    %987 = vmatpush1.msra.mxu0 0.0
    %988 = vmatprep.subr.mxu0 0.0
    %989 = vmatpush1.msra.mxu0 0.0
    %990 = vmatprep.subr.mxu0 0.0
    %991 = vmatpush1.msra.mxu0 0.0
    %992 = vmatprep.subr.mxu0 0.0
    %993 = vmatpush1.msra.mxu0 0.0
    %994 = vmatprep.subr.mxu0 0.0
    %995 = vmatpush1.msra.mxu0 0.0
    %996 = vmatprep.subr.mxu0 %v961
    %997 = vmatpush1.msra.mxu0 %v960
    %998 = vmatprep.subr.mxu0 %v959
    %999 = vmatpush1.msra.mxu0 %v958
    %1000 = vmatprep.subr.mxu0 %v957
    %1001 = vmatpush1.msra.mxu0 %v956
    %1002 = vmatprep.subr.mxu0 %v955
    %1003 = vmatpush1.msra.mxu0 %v954
    %1004 = vmatprep.subr.mxu0 %v953
    %1005 = vmatpush1.msra.mxu0 %v952
    %1006 = vmatprep.subr.mxu0 %v951
    %1007 = vmatpush1.msra.mxu0 %v950
    %1008 = vmatprep.subr.mxu0 %v949
    %1009 = vmatpush1.msra.mxu0 %v948
    %1010 = vmatprep.subr.mxu0 %v947
    %1011 = vmatpush1.msra.mxu0 %v946
    %1012 = vmatprep.subr.mxu0 0.0
    %1013 = vmatpush2.msra.mxu0 0.0
    %1014 = vmatprep.subr.mxu0 0.0
    %1015 = vmatpush2.msra.mxu0 0.0
    %1016 = vmatprep.subr.mxu0 0.0
    %1017 = vmatpush2.msra.mxu0 0.0
    %1018 = vmatprep.subr.mxu0 0.0
    %1019 = vmatpush2.msra.mxu0 0.0
    %1020 = vmatprep.subr.mxu0 0.0
    %1021 = vmatpush2.msra.mxu0 0.0
    %1022 = vmatprep.subr.mxu0 0.0
    %1023 = vmatpush2.msra.mxu0 0.0
    %1024 = vmatprep.subr.mxu0 0.0
    %1025 = vmatpush2.msra.mxu0 0.0
    %1026 = vmatprep.subr.mxu0 0.0
    %1027 = vmatpush2.msra.mxu0 0.0
    %1028 = vmatprep.subr.mxu0 0.0
    %1029 = vmatpush2.msra.mxu0 0.0
    %1030 = vmatprep.subr.mxu0 0.0
    %1031 = vmatpush2.msra.mxu0 0.0
    %1032 = vmatprep.subr.mxu0 0.0
    %1033 = vmatpush2.msra.mxu0 0.0
    %1034 = vmatprep.subr.mxu0 0.0
    %1035 = vmatpush2.msra.mxu0 0.0
    %1036 = vmatprep.subr.mxu0 0.0
    %1037 = vmatpush2.msra.mxu0 0.0
    %1038 = vmatprep.subr.mxu0 0.0
    %1039 = vmatpush2.msra.mxu0 0.0
    %1040 = vmatprep.subr.mxu0 0.0
    %1041 = vmatpush2.msra.mxu0 0.0
    %1042 = vmatprep.subr.mxu0 0.0
    %1043 = vmatpush2.msra.mxu0 0.0
    %1044 = vmatprep.mubr.f32.mxu0 0.0
    %1045 = vmatmul.mubr.f32.gmra.mxu0 %v978
    %v1046 = vpop.f32.mrf.mxu0
    %v1047 = vadd.f32 %v968, %v1046
    %v1048 = vpop.f32.mrf.mxu0
    %v1049 = vadd.f32 %v972, %v1048
    %1050 = vdwg.mxu0
    %v1051 = vxor.u32 %v1047, 2147483648
    %v1052 = vxor.u32 %v1049, 2147483648
    %v1053 = vmul.f32 %v1051, 1.442695
    %v1054 = vpow.pop %v1053
    %v1055 = vmul.f32 %v1052, 1.442695
    %v1056 = vpow.pop %v1055
    %v1057 = vadd.f32 %v1054, 1.0
    %v1058 = vadd.f32 %v1056, 1.0
    %v1059 = vrcp.pop %v1057
    %v1060 = vmul.f32 1.0, %v1059
    %v1061 = vrcp.pop %v1058
    %v1062 = vmul.f32 1.0, %v1061
    %v1063 = vmul.f32 %v1047, %v1060
    %v1064 = vmul.f32 %v1049, %v1062
    %v1065 = vld [vmem:[%s5 + $0x190] sm:$0xff]
    %v1066 = vld [vmem:[%s5 + $0x198] sm:$0xff]
    %v1067 = vld [vmem:[%s5 + $0x1a0] sm:$0xff]
    %v1068 = vld [vmem:[%s5 + $0x1a8] sm:$0xff]
    %v1069 = vld [vmem:[%s5 + $0x1b0] sm:$0xff]
    %v1070 = vld [vmem:[%s5 + $0x1b8] sm:$0xff]
    %v1071 = vld [vmem:[%s5 + $0x1c0] sm:$0xff]
    %v1072 = vld [vmem:[%s5 + $0x1c8] sm:$0xff]
    %v1073 = vld [vmem:[%s5 + $0x1d0] sm:$0xff]
    %v1074 = vld [vmem:[%s5 + $0x1d8] sm:$0xff]
    %v1075 = vld [vmem:[%s5 + $0x1e0] sm:$0xff]
    %v1076 = vld [vmem:[%s5 + $0x1e8] sm:$0xff]
    %v1077 = vld [vmem:[%s5 + $0x1f0] sm:$0xff]
    %v1078 = vld [vmem:[%s5 + $0x1f8] sm:$0xff]
    %v1079 = vld [vmem:[%s5 + $0x200] sm:$0xff]
    %v1080 = vld [vmem:[%s5 + $0x208] sm:$0xff]
    %v1081 = vld [vmem:[%s5 + $0x210] sm:$0xff]
    %v1082 = vld [vmem:[%s5 + $0x218] sm:$0xff]
    %v1083 = vld [vmem:[%s5 + $0x220] sm:$0xff]
    %v1084 = vld [vmem:[%s5 + $0x228] sm:$0xff]
    %v1085 = vld [vmem:[%s5 + $0x230] sm:$0xff]
    %v1086 = vld [vmem:[%s5 + $0x238] sm:$0xff]
    %v1087 = vld [vmem:[%s5 + $0x240] sm:$0xff]
    %v1088 = vld [vmem:[%s5 + $0x248] sm:$0xff]
    %v1089 = vld [vmem:[%s5 + $0x250] sm:$0x1]
    %v1090 = vlaneseq
    %v1091 = vshrl.u32 %v1090, 7
    %v1092 = vsub.s32 0, %v1091
    %v1093 = vrot.slane %v1089, %v1092
    %v1095 = vsel %vm24, %v1064, 0
    %1097 = vmatprep.subr.mxu0 0.0
    %1098 = vmatpush1.msra.mxu0 %v1080
    %1099 = vmatprep.subr.mxu0 0.0
    %1100 = vmatpush1.msra.mxu0 %v1079
    %1101 = vmatprep.subr.mxu0 0.0
    %1102 = vmatpush1.msra.mxu0 %v1078
    %1103 = vmatprep.subr.mxu0 0.0
    %1104 = vmatpush1.msra.mxu0 %v1077
    %1105 = vmatprep.subr.mxu0 0.0
    %1106 = vmatpush1.msra.mxu0 %v1076
    %1107 = vmatprep.subr.mxu0 0.0
    %1108 = vmatpush1.msra.mxu0 %v1075
    %1109 = vmatprep.subr.mxu0 0.0
    %1110 = vmatpush1.msra.mxu0 %v1074
    %1111 = vmatprep.subr.mxu0 0.0
    %1112 = vmatpush1.msra.mxu0 %v1073
    %1113 = vmatprep.subr.mxu0 0.0
    %1114 = vmatpush1.msra.mxu0 %v1072
    %1115 = vmatprep.subr.mxu0 0.0
    %1116 = vmatpush1.msra.mxu0 %v1071
    %1117 = vmatprep.subr.mxu0 0.0
    %1118 = vmatpush1.msra.mxu0 %v1070
    %1119 = vmatprep.subr.mxu0 0.0
    %1120 = vmatpush1.msra.mxu0 %v1069
    %1121 = vmatprep.subr.mxu0 0.0
    %1122 = vmatpush1.msra.mxu0 %v1068
    %1123 = vmatprep.subr.mxu0 0.0
    %1124 = vmatpush1.msra.mxu0 %v1067
    %1125 = vmatprep.subr.mxu0 0.0
    %1126 = vmatpush1.msra.mxu0 %v1066
    %1127 = vmatprep.subr.mxu0 0.0
    %1128 = vmatpush1.msra.mxu0 %v1065
    %1129 = vmatprep.subr.mxu0 0.0
    %1130 = vmatpush2.msra.mxu0 0.0
    %1131 = vmatprep.subr.mxu0 0.0
    %1132 = vmatpush2.msra.mxu0 0.0
    %1133 = vmatprep.subr.mxu0 0.0
    %1134 = vmatpush2.msra.mxu0 0.0
    %1135 = vmatprep.subr.mxu0 0.0
    %1136 = vmatpush2.msra.mxu0 0.0
    %1137 = vmatprep.subr.mxu0 0.0
    %1138 = vmatpush2.msra.mxu0 0.0
    %1139 = vmatprep.subr.mxu0 0.0
    %1140 = vmatpush2.msra.mxu0 0.0
    %1141 = vmatprep.subr.mxu0 0.0
    %1142 = vmatpush2.msra.mxu0 0.0
    %1143 = vmatprep.subr.mxu0 0.0
    %1144 = vmatpush2.msra.mxu0 0.0
    %1145 = vmatprep.subr.mxu0 0.0
    %1146 = vmatpush2.msra.mxu0 %v1088
    %1147 = vmatprep.subr.mxu0 0.0
    %1148 = vmatpush2.msra.mxu0 %v1087
    %1149 = vmatprep.subr.mxu0 0.0
    %1150 = vmatpush2.msra.mxu0 %v1086
    %1151 = vmatprep.subr.mxu0 0.0
    %1152 = vmatpush2.msra.mxu0 %v1085
    %1153 = vmatprep.subr.mxu0 0.0
    %1154 = vmatpush2.msra.mxu0 %v1084
    %1155 = vmatprep.subr.mxu0 0.0
    %1156 = vmatpush2.msra.mxu0 %v1083
    %1157 = vmatprep.subr.mxu0 0.0
    %1158 = vmatpush2.msra.mxu0 %v1082
    %1159 = vmatprep.subr.mxu0 0.0
    %1160 = vmatpush2.msra.mxu0 %v1081
    %1161 = vmatprep.mubr.f32.mxu0 %v1095
    %1162 = vmatmul.mubr.f32.gmra.mxu0 %v1063
    %v1163 = vpop.f32.mrf.mxu0
    %v1164 = vadd.f32 %v1093, %v1163
    %v1165 = vpop.f32.mrf.mxu0
    %1166 = vdwg.mxu0
    %v1167 = vadd.f32 %v876, %v1164
    %1168 = vst.msk [vmem:[#allocation2 + $0x8] sm:$0xff] %vm24, %v1167
    %v1169 = vld [vmem:[#allocation3 + $0x2] sm:$0x1]
    %v1171 = vlaneseq
    %v1172 = vshrl.u32 %v1171, 7
    %v1173 = vsub.s32 0, %v1172
    %v1174 = vrot.slane %v1169, %v1173
    %v1176 = vadd.f32 %v1174, 0.0
    %v1177 = vld [vmem:[#allocation2 + $0x6] sm:$0xff]
    %v1178 = vld [vmem:[%s5 + $0x4bf] sm:$0x1]
    %v1179 = vlaneseq
    %v1180 = vshrl.u32 %v1179, 7
    %v1181 = vsub.s32 0, %v1180
    %v1182 = vrot.slane %v1178, %v1181
    %v1183 = vmul.f32 %v1177, %v1182
    %v1184 = vadd.f32 %v1176, %v1183
    %v1185 = vld [vmem:[#allocation2 + $0x7] sm:$0xff]
    %v1186 = vld [vmem:[%s5 + $0x4c0] sm:$0x1]
    %v1187 = vlaneseq
    %v1188 = vshrl.u32 %v1187, 7
    %v1189 = vsub.s32 0, %v1188
    %v1190 = vrot.slane %v1186, %v1189
    %v1191 = vmul.f32 %v1185, %v1190
    %v1192 = vadd.f32 %v1184, %v1191
    %v1193 = vld [vmem:[#allocation2 + $0x8] sm:$0xff]
    %v1194 = vld [vmem:[%s5 + $0x4c1] sm:$0x1]
    %v1195 = vlaneseq
    %v1196 = vshrl.u32 %v1195, 7
    %v1197 = vsub.s32 0, %v1196
    %v1198 = vrot.slane %v1194, %v1197
    %v1199 = vmul.f32 %v1193, %v1198
    %v1200 = vadd.f32 %v1192, %v1199
    %v1201 = vld [vmem:[#allocation2 + $0x9] sm:$0xff]
    %v1202 = vld [vmem:[%s5 + $0x4c2] sm:$0x1]
    %v1203 = vlaneseq
    %v1204 = vshrl.u32 %v1203, 7
    %v1205 = vsub.s32 0, %v1204
    %v1206 = vrot.slane %v1202, %v1205
    %v1207 = vmul.f32 %v1201, %v1206
    %v1208 = vadd.f32 %v1200, %v1207
    %v1209 = vld [vmem:[#allocation2 + $0xa] sm:$0xff]
    %v1210 = vld [vmem:[%s5 + $0x4c3] sm:$0x1]
    %v1211 = vlaneseq
    %v1212 = vshrl.u32 %v1211, 7
    %v1213 = vsub.s32 0, %v1212
    %v1214 = vrot.slane %v1210, %v1213
    %v1215 = vmul.f32 %v1209, %v1214
    %v1216 = vadd.f32 %v1208, %v1215
    %v1217 = vld [vmem:[%s4 + $0x1b0] sm:$0xff]
    %v1218 = vld [vmem:[%s4 + $0x1b8] sm:$0xff]
    %v1219 = vld [vmem:[%s4 + $0x1c0] sm:$0xff]
    %v1220 = vld [vmem:[%s4 + $0x1c8] sm:$0xff]
    %v1221 = vld [vmem:[%s4 + $0x1d0] sm:$0xff]
    %v1222 = vld [vmem:[%s4 + $0x1d8] sm:$0xff]
    %v1223 = vld [vmem:[%s4 + $0x1e0] sm:$0xff]
    %v1224 = vld [vmem:[%s4 + $0x1e8] sm:$0xff]
    %v1225 = vld [vmem:[%s4 + $0x1f0] sm:$0xff]
    %v1226 = vld [vmem:[%s4 + $0x1f8] sm:$0xff]
    %v1227 = vld [vmem:[%s4 + $0x200] sm:$0xff]
    %v1228 = vld [vmem:[%s4 + $0x208] sm:$0xff]
    %v1229 = vld [vmem:[%s4 + $0x210] sm:$0xff]
    %v1230 = vld [vmem:[%s4 + $0x218] sm:$0xff]
    %v1231 = vld [vmem:[%s4 + $0x220] sm:$0xff]
    %v1232 = vld [vmem:[%s4 + $0x228] sm:$0xff]
    %s1233 = scalar_lea.vmem %s4, 560
    %v1234 = vld [vmem:[%s1233] ss:$8 sm:$0x3]
    %v1236 = vlaneseq
    %v1237 = vshrl.u32 %v1236, 7
    %v1238 = vsub.s32 0, %v1237
    %v1239 = vrot.slane %v1234, %v1238
    %v1240 = vlaneseq
    %v1241 = vshrl.u32 %v1240, 7
    %v1242 = vsub.s32 1, %v1241
    %v1243 = vrot.slane %v1234, %v1242
    %v1247 = vsel %vm24, %v1216, 0
    %1249 = vmatprep.subr.mxu0 0.0
    %1250 = vmatpush1.msra.mxu0 0.0
    %1251 = vmatprep.subr.mxu0 0.0
    %1252 = vmatpush1.msra.mxu0 0.0
    %1253 = vmatprep.subr.mxu0 0.0
    %1254 = vmatpush1.msra.mxu0 0.0
    %1255 = vmatprep.subr.mxu0 0.0
    %1256 = vmatpush1.msra.mxu0 0.0
    %1257 = vmatprep.subr.mxu0 0.0
    %1258 = vmatpush1.msra.mxu0 0.0
    %1259 = vmatprep.subr.mxu0 0.0
    %1260 = vmatpush1.msra.mxu0 0.0
    %1261 = vmatprep.subr.mxu0 0.0
    %1262 = vmatpush1.msra.mxu0 0.0
    %1263 = vmatprep.subr.mxu0 0.0
    %1264 = vmatpush1.msra.mxu0 0.0
    %1265 = vmatprep.subr.mxu0 %v1232
    %1266 = vmatpush1.msra.mxu0 %v1231
    %1267 = vmatprep.subr.mxu0 %v1230
    %1268 = vmatpush1.msra.mxu0 %v1229
    %1269 = vmatprep.subr.mxu0 %v1228
    %1270 = vmatpush1.msra.mxu0 %v1227
    %1271 = vmatprep.subr.mxu0 %v1226
    %1272 = vmatpush1.msra.mxu0 %v1225
    %1273 = vmatprep.subr.mxu0 %v1224
    %1274 = vmatpush1.msra.mxu0 %v1223
    %1275 = vmatprep.subr.mxu0 %v1222
    %1276 = vmatpush1.msra.mxu0 %v1221
    %1277 = vmatprep.subr.mxu0 %v1220
    %1278 = vmatpush1.msra.mxu0 %v1219
    %1279 = vmatprep.subr.mxu0 %v1218
    %1280 = vmatpush1.msra.mxu0 %v1217
    %1281 = vmatprep.subr.mxu0 0.0
    %1282 = vmatpush2.msra.mxu0 0.0
    %1283 = vmatprep.subr.mxu0 0.0
    %1284 = vmatpush2.msra.mxu0 0.0
    %1285 = vmatprep.subr.mxu0 0.0
    %1286 = vmatpush2.msra.mxu0 0.0
    %1287 = vmatprep.subr.mxu0 0.0
    %1288 = vmatpush2.msra.mxu0 0.0
    %1289 = vmatprep.subr.mxu0 0.0
    %1290 = vmatpush2.msra.mxu0 0.0
    %1291 = vmatprep.subr.mxu0 0.0
    %1292 = vmatpush2.msra.mxu0 0.0
    %1293 = vmatprep.subr.mxu0 0.0
    %1294 = vmatpush2.msra.mxu0 0.0
    %1295 = vmatprep.subr.mxu0 0.0
    %1296 = vmatpush2.msra.mxu0 0.0
    %1297 = vmatprep.subr.mxu0 0.0
    %1298 = vmatpush2.msra.mxu0 0.0
    %1299 = vmatprep.subr.mxu0 0.0
    %1300 = vmatpush2.msra.mxu0 0.0
    %1301 = vmatprep.subr.mxu0 0.0
    %1302 = vmatpush2.msra.mxu0 0.0
    %1303 = vmatprep.subr.mxu0 0.0
    %1304 = vmatpush2.msra.mxu0 0.0
    %1305 = vmatprep.subr.mxu0 0.0
    %1306 = vmatpush2.msra.mxu0 0.0
    %1307 = vmatprep.subr.mxu0 0.0
    %1308 = vmatpush2.msra.mxu0 0.0
    %1309 = vmatprep.subr.mxu0 0.0
    %1310 = vmatpush2.msra.mxu0 0.0
    %1311 = vmatprep.subr.mxu0 0.0
    %1312 = vmatpush2.msra.mxu0 0.0
    %1313 = vmatprep.mubr.f32.mxu0 0.0
    %1314 = vmatmul.mubr.f32.gmra.mxu0 %v1247
    %v1315 = vpop.f32.mrf.mxu0
    %v1316 = vadd.f32 %v1239, %v1315
    %v1317 = vpop.f32.mrf.mxu0
    %v1318 = vadd.f32 %v1243, %v1317
    %1319 = vdwg.mxu0
    %v1320 = vxor.u32 %v1316, 2147483648
    %v1321 = vxor.u32 %v1318, 2147483648
    %v1322 = vmul.f32 %v1320, 1.442695
    %v1323 = vpow.pop %v1322
    %v1324 = vmul.f32 %v1321, 1.442695
    %v1325 = vpow.pop %v1324
    %v1326 = vadd.f32 %v1323, 1.0
    %v1327 = vadd.f32 %v1325, 1.0
    %v1328 = vrcp.pop %v1326
    %v1329 = vmul.f32 1.0, %v1328
    %v1330 = vrcp.pop %v1327
    %v1331 = vmul.f32 1.0, %v1330
    %v1332 = vmul.f32 %v1316, %v1329
    %v1333 = vmul.f32 %v1318, %v1331
    %v1334 = vld [vmem:[%s5 + $0x258] sm:$0xff]
    %v1335 = vld [vmem:[%s5 + $0x260] sm:$0xff]
    %v1336 = vld [vmem:[%s5 + $0x268] sm:$0xff]
    %v1337 = vld [vmem:[%s5 + $0x270] sm:$0xff]
    %v1338 = vld [vmem:[%s5 + $0x278] sm:$0xff]
    %v1339 = vld [vmem:[%s5 + $0x280] sm:$0xff]
    %v1340 = vld [vmem:[%s5 + $0x288] sm:$0xff]
    %v1341 = vld [vmem:[%s5 + $0x290] sm:$0xff]
    %v1342 = vld [vmem:[%s5 + $0x298] sm:$0xff]
    %v1343 = vld [vmem:[%s5 + $0x2a0] sm:$0xff]
    %v1344 = vld [vmem:[%s5 + $0x2a8] sm:$0xff]
    %v1345 = vld [vmem:[%s5 + $0x2b0] sm:$0xff]
    %v1346 = vld [vmem:[%s5 + $0x2b8] sm:$0xff]
    %v1347 = vld [vmem:[%s5 + $0x2c0] sm:$0xff]
    %v1348 = vld [vmem:[%s5 + $0x2c8] sm:$0xff]
    %v1349 = vld [vmem:[%s5 + $0x2d0] sm:$0xff]
    %v1350 = vld [vmem:[%s5 + $0x2d8] sm:$0xff]
    %v1351 = vld [vmem:[%s5 + $0x2e0] sm:$0xff]
    %v1352 = vld [vmem:[%s5 + $0x2e8] sm:$0xff]
    %v1353 = vld [vmem:[%s5 + $0x2f0] sm:$0xff]
    %v1354 = vld [vmem:[%s5 + $0x2f8] sm:$0xff]
    %v1355 = vld [vmem:[%s5 + $0x300] sm:$0xff]
    %v1356 = vld [vmem:[%s5 + $0x308] sm:$0xff]
    %v1357 = vld [vmem:[%s5 + $0x310] sm:$0xff]
    %v1358 = vld [vmem:[%s5 + $0x318] sm:$0x1]
    %v1359 = vlaneseq
    %v1360 = vshrl.u32 %v1359, 7
    %v1361 = vsub.s32 0, %v1360
    %v1362 = vrot.slane %v1358, %v1361
    %v1364 = vsel %vm24, %v1333, 0
    %1366 = vmatprep.subr.mxu0 0.0
    %1367 = vmatpush1.msra.mxu0 %v1349
    %1368 = vmatprep.subr.mxu0 0.0
    %1369 = vmatpush1.msra.mxu0 %v1348
    %1370 = vmatprep.subr.mxu0 0.0
    %1371 = vmatpush1.msra.mxu0 %v1347
    %1372 = vmatprep.subr.mxu0 0.0
    %1373 = vmatpush1.msra.mxu0 %v1346
    %1374 = vmatprep.subr.mxu0 0.0
    %1375 = vmatpush1.msra.mxu0 %v1345
    %1376 = vmatprep.subr.mxu0 0.0
    %1377 = vmatpush1.msra.mxu0 %v1344
    %1378 = vmatprep.subr.mxu0 0.0
    %1379 = vmatpush1.msra.mxu0 %v1343
    %1380 = vmatprep.subr.mxu0 0.0
    %1381 = vmatpush1.msra.mxu0 %v1342
    %1382 = vmatprep.subr.mxu0 0.0
    %1383 = vmatpush1.msra.mxu0 %v1341
    %1384 = vmatprep.subr.mxu0 0.0
    %1385 = vmatpush1.msra.mxu0 %v1340
    %1386 = vmatprep.subr.mxu0 0.0
    %1387 = vmatpush1.msra.mxu0 %v1339
    %1388 = vmatprep.subr.mxu0 0.0
    %1389 = vmatpush1.msra.mxu0 %v1338
    %1390 = vmatprep.subr.mxu0 0.0
    %1391 = vmatpush1.msra.mxu0 %v1337
    %1392 = vmatprep.subr.mxu0 0.0
    %1393 = vmatpush1.msra.mxu0 %v1336
    %1394 = vmatprep.subr.mxu0 0.0
    %1395 = vmatpush1.msra.mxu0 %v1335
    %1396 = vmatprep.subr.mxu0 0.0
    %1397 = vmatpush1.msra.mxu0 %v1334
    %1398 = vmatprep.subr.mxu0 0.0
    %1399 = vmatpush2.msra.mxu0 0.0
    %1400 = vmatprep.subr.mxu0 0.0
    %1401 = vmatpush2.msra.mxu0 0.0
    %1402 = vmatprep.subr.mxu0 0.0
    %1403 = vmatpush2.msra.mxu0 0.0
    %1404 = vmatprep.subr.mxu0 0.0
    %1405 = vmatpush2.msra.mxu0 0.0
    %1406 = vmatprep.subr.mxu0 0.0
    %1407 = vmatpush2.msra.mxu0 0.0
    %1408 = vmatprep.subr.mxu0 0.0
    %1409 = vmatpush2.msra.mxu0 0.0
    %1410 = vmatprep.subr.mxu0 0.0
    %1411 = vmatpush2.msra.mxu0 0.0
    %1412 = vmatprep.subr.mxu0 0.0
    %1413 = vmatpush2.msra.mxu0 0.0
    %1414 = vmatprep.subr.mxu0 0.0
    %1415 = vmatpush2.msra.mxu0 %v1357
    %1416 = vmatprep.subr.mxu0 0.0
    %1417 = vmatpush2.msra.mxu0 %v1356
    %1418 = vmatprep.subr.mxu0 0.0
    %1419 = vmatpush2.msra.mxu0 %v1355
    %1420 = vmatprep.subr.mxu0 0.0
    %1421 = vmatpush2.msra.mxu0 %v1354
    %1422 = vmatprep.subr.mxu0 0.0
    %1423 = vmatpush2.msra.mxu0 %v1353
    %1424 = vmatprep.subr.mxu0 0.0
    %1425 = vmatpush2.msra.mxu0 %v1352
    %1426 = vmatprep.subr.mxu0 0.0
    %1427 = vmatpush2.msra.mxu0 %v1351
    %1428 = vmatprep.subr.mxu0 0.0
    %1429 = vmatpush2.msra.mxu0 %v1350
    %1430 = vmatprep.mubr.f32.mxu0 %v1364
    %1431 = vmatmul.mubr.f32.gmra.mxu0 %v1332
    %v1432 = vpop.f32.mrf.mxu0
    %v1433 = vadd.f32 %v1362, %v1432
    %v1434 = vpop.f32.mrf.mxu0
    %1435 = vdwg.mxu0
    %v1436 = vadd.f32 %v1167, %v1433
    %1437 = vst.msk [vmem:[#allocation2 + $0x8] sm:$0xff] %vm24, %v1436
    %v1438 = vld [vmem:[#allocation3 + $0x2] sm:$0x1]
    %v1440 = vlaneseq
    %v1441 = vshrl.u32 %v1440, 7
    %v1442 = vsub.s32 0, %v1441
    %v1443 = vrot.slane %v1438, %v1442
    %v1445 = vadd.f32 %v1443, 0.0
    %v1446 = vld [vmem:[#allocation2 + $0x4] sm:$0xff]
    %v1447 = vld [vmem:[%s5 + $0x4c4] sm:$0x1]
    %v1448 = vlaneseq
    %v1449 = vshrl.u32 %v1448, 7
    %v1450 = vsub.s32 0, %v1449
    %v1451 = vrot.slane %v1447, %v1450
    %v1452 = vmul.f32 %v1446, %v1451
    %1454 = vrot.lane.b32.xlu0 %v1452, 64
    %v1455 = vpop.permute.xlu0 %1454
    %v1457 = vadd.f32 %v1445, %v1455
    %v1458 = vld [vmem:[#allocation2 + $0x6] sm:$0xff]
    %v1459 = vld [vmem:[%s5 + $0x4c5] sm:$0x1]
    %v1460 = vlaneseq
    %v1461 = vshrl.u32 %v1460, 7
    %v1462 = vsub.s32 0, %v1461
    %v1463 = vrot.slane %v1459, %v1462
    %v1464 = vmul.f32 %v1458, %v1463
    %1466 = vrot.lane.b32.xlu0 %v1464, 64
    %v1467 = vpop.permute.xlu0 %1466
    %v1469 = vadd.f32 %v1457, %v1467
    %v1470 = vld [vmem:[#allocation2 + $0x8] sm:$0xff]
    %v1471 = vld [vmem:[%s5 + $0x4c6] sm:$0x1]
    %v1472 = vlaneseq
    %v1473 = vshrl.u32 %v1472, 7
    %v1474 = vsub.s32 0, %v1473
    %v1475 = vrot.slane %v1471, %v1474
    %v1476 = vmul.f32 %v1470, %v1475
    %1478 = vrot.lane.b32.xlu0 %v1476, 64
    %v1479 = vpop.permute.xlu0 %1478
    %v1481 = vadd.f32 %v1469, %v1479
    %v1482 = vld [vmem:[#allocation2 + $0xa] sm:$0xff]
    %v1483 = vld [vmem:[%s5 + $0x4c7] sm:$0x1]
    %v1484 = vlaneseq
    %v1485 = vshrl.u32 %v1484, 7
    %v1486 = vsub.s32 0, %v1485
    %v1487 = vrot.slane %v1483, %v1486
    %v1488 = vmul.f32 %v1482, %v1487
    %1490 = vrot.lane.b32.xlu0 %v1488, 64
    %v1491 = vpop.permute.xlu0 %1490
    %v1493 = vadd.f32 %v1481, %v1491
    %v1494 = vld [vmem:[#allocation2 + $0xc] sm:$0xff]
    %v1495 = vld [vmem:[%s5 + $0x4c8] sm:$0x1]
    %v1496 = vlaneseq
    %v1497 = vshrl.u32 %v1496, 7
    %v1498 = vsub.s32 0, %v1497
    %v1499 = vrot.slane %v1495, %v1498
    %v1500 = vmul.f32 %v1494, %v1499
    %1502 = vrot.lane.b32.xlu0 %v1500, 64
    %v1503 = vpop.permute.xlu0 %1502
    %v1505 = vadd.f32 %v1493, %v1503
    %v1506 = vld [vmem:[%s4 + $0x240] sm:$0xff]
    %v1507 = vld [vmem:[%s4 + $0x248] sm:$0xff]
    %v1508 = vld [vmem:[%s4 + $0x250] sm:$0xff]
    %v1509 = vld [vmem:[%s4 + $0x258] sm:$0xff]
    %v1510 = vld [vmem:[%s4 + $0x260] sm:$0xff]
    %v1511 = vld [vmem:[%s4 + $0x268] sm:$0xff]
    %v1512 = vld [vmem:[%s4 + $0x270] sm:$0xff]
    %v1513 = vld [vmem:[%s4 + $0x278] sm:$0xff]
    %v1514 = vld [vmem:[%s4 + $0x280] sm:$0xff]
    %v1515 = vld [vmem:[%s4 + $0x288] sm:$0xff]
    %v1516 = vld [vmem:[%s4 + $0x290] sm:$0xff]
    %v1517 = vld [vmem:[%s4 + $0x298] sm:$0xff]
    %v1518 = vld [vmem:[%s4 + $0x2a0] sm:$0xff]
    %v1519 = vld [vmem:[%s4 + $0x2a8] sm:$0xff]
    %v1520 = vld [vmem:[%s4 + $0x2b0] sm:$0xff]
    %v1521 = vld [vmem:[%s4 + $0x2b8] sm:$0xff]
    %s1522 = scalar_lea.vmem %s4, 704
    %v1523 = vld [vmem:[%s1522] ss:$8 sm:$0x3]
    %v1525 = vlaneseq
    %v1526 = vshrl.u32 %v1525, 7
    %v1527 = vsub.s32 0, %v1526
    %v1528 = vrot.slane %v1523, %v1527
    %v1529 = vlaneseq
    %v1530 = vshrl.u32 %v1529, 7
    %v1531 = vsub.s32 1, %v1530
    %v1532 = vrot.slane %v1523, %v1531
    %1536 = vrot.lane.b32.xlu0 %v1505, 64
    %v1537 = vpop.permute.xlu0 %1536
    %v1538 = vsel %vm24, %v1537, 0
    %1540 = vmatprep.subr.mxu0 0.0
    %1541 = vmatpush1.msra.mxu0 0.0
    %1542 = vmatprep.subr.mxu0 0.0
    %1543 = vmatpush1.msra.mxu0 0.0
    %1544 = vmatprep.subr.mxu0 0.0
    %1545 = vmatpush1.msra.mxu0 0.0
    %1546 = vmatprep.subr.mxu0 0.0
    %1547 = vmatpush1.msra.mxu0 0.0
    %1548 = vmatprep.subr.mxu0 0.0
    %1549 = vmatpush1.msra.mxu0 0.0
    %1550 = vmatprep.subr.mxu0 0.0
    %1551 = vmatpush1.msra.mxu0 0.0
    %1552 = vmatprep.subr.mxu0 0.0
    %1553 = vmatpush1.msra.mxu0 0.0
    %1554 = vmatprep.subr.mxu0 0.0
    %1555 = vmatpush1.msra.mxu0 0.0
    %1556 = vmatprep.subr.mxu0 %v1521
    %1557 = vmatpush1.msra.mxu0 %v1520
    %1558 = vmatprep.subr.mxu0 %v1519
    %1559 = vmatpush1.msra.mxu0 %v1518
    %1560 = vmatprep.subr.mxu0 %v1517
    %1561 = vmatpush1.msra.mxu0 %v1516
    %1562 = vmatprep.subr.mxu0 %v1515
    %1563 = vmatpush1.msra.mxu0 %v1514
    %1564 = vmatprep.subr.mxu0 %v1513
    %1565 = vmatpush1.msra.mxu0 %v1512
    %1566 = vmatprep.subr.mxu0 %v1511
    %1567 = vmatpush1.msra.mxu0 %v1510
    %1568 = vmatprep.subr.mxu0 %v1509
    %1569 = vmatpush1.msra.mxu0 %v1508
    %1570 = vmatprep.subr.mxu0 %v1507
    %1571 = vmatpush1.msra.mxu0 %v1506
    %1572 = vmatprep.subr.mxu0 0.0
    %1573 = vmatpush2.msra.mxu0 0.0
    %1574 = vmatprep.subr.mxu0 0.0
    %1575 = vmatpush2.msra.mxu0 0.0
    %1576 = vmatprep.subr.mxu0 0.0
    %1577 = vmatpush2.msra.mxu0 0.0
    %1578 = vmatprep.subr.mxu0 0.0
    %1579 = vmatpush2.msra.mxu0 0.0
    %1580 = vmatprep.subr.mxu0 0.0
    %1581 = vmatpush2.msra.mxu0 0.0
    %1582 = vmatprep.subr.mxu0 0.0
    %1583 = vmatpush2.msra.mxu0 0.0
    %1584 = vmatprep.subr.mxu0 0.0
    %1585 = vmatpush2.msra.mxu0 0.0
    %1586 = vmatprep.subr.mxu0 0.0
    %1587 = vmatpush2.msra.mxu0 0.0
    %1588 = vmatprep.subr.mxu0 0.0
    %1589 = vmatpush2.msra.mxu0 0.0
    %1590 = vmatprep.subr.mxu0 0.0
    %1591 = vmatpush2.msra.mxu0 0.0
    %1592 = vmatprep.subr.mxu0 0.0
    %1593 = vmatpush2.msra.mxu0 0.0
    %1594 = vmatprep.subr.mxu0 0.0
    %1595 = vmatpush2.msra.mxu0 0.0
    %1596 = vmatprep.subr.mxu0 0.0
    %1597 = vmatpush2.msra.mxu0 0.0
    %1598 = vmatprep.subr.mxu0 0.0
    %1599 = vmatpush2.msra.mxu0 0.0
    %1600 = vmatprep.subr.mxu0 0.0
    %1601 = vmatpush2.msra.mxu0 0.0
    %1602 = vmatprep.subr.mxu0 0.0
    %1603 = vmatpush2.msra.mxu0 0.0
    %1604 = vmatprep.mubr.f32.mxu0 0.0
    %1605 = vmatmul.mubr.f32.gmra.mxu0 %v1538
    %v1606 = vpop.f32.mrf.mxu0
    %v1607 = vadd.f32 %v1528, %v1606
    %v1608 = vpop.f32.mrf.mxu0
    %v1609 = vadd.f32 %v1532, %v1608
    %1610 = vdwg.mxu0
    %v1611 = vxor.u32 %v1607, 2147483648
    %v1612 = vxor.u32 %v1609, 2147483648
    %v1613 = vmul.f32 %v1611, 1.442695
    %v1614 = vpow.pop %v1613
    %v1615 = vmul.f32 %v1612, 1.442695
    %v1616 = vpow.pop %v1615
    %v1617 = vadd.f32 %v1614, 1.0
    %v1618 = vadd.f32 %v1616, 1.0
    %v1619 = vrcp.pop %v1617
    %v1620 = vmul.f32 1.0, %v1619
    %v1621 = vrcp.pop %v1618
    %v1622 = vmul.f32 1.0, %v1621
    %v1623 = vmul.f32 %v1607, %v1620
    %v1624 = vmul.f32 %v1609, %v1622
    %v1625 = vld [vmem:[%s5 + $0x320] sm:$0xff]
    %v1626 = vld [vmem:[%s5 + $0x328] sm:$0xff]
    %v1627 = vld [vmem:[%s5 + $0x330] sm:$0xff]
    %v1628 = vld [vmem:[%s5 + $0x338] sm:$0xff]
    %v1629 = vld [vmem:[%s5 + $0x340] sm:$0xff]
    %v1630 = vld [vmem:[%s5 + $0x348] sm:$0xff]
    %v1631 = vld [vmem:[%s5 + $0x350] sm:$0xff]
    %v1632 = vld [vmem:[%s5 + $0x358] sm:$0xff]
    %v1633 = vld [vmem:[%s5 + $0x360] sm:$0xff]
    %v1634 = vld [vmem:[%s5 + $0x368] sm:$0xff]
    %v1635 = vld [vmem:[%s5 + $0x370] sm:$0xff]
    %v1636 = vld [vmem:[%s5 + $0x378] sm:$0xff]
    %v1637 = vld [vmem:[%s5 + $0x380] sm:$0xff]
    %v1638 = vld [vmem:[%s5 + $0x388] sm:$0xff]
    %v1639 = vld [vmem:[%s5 + $0x390] sm:$0xff]
    %v1640 = vld [vmem:[%s5 + $0x398] sm:$0xff]
    %v1641 = vld [vmem:[%s5 + $0x3a0] sm:$0xff]
    %v1642 = vld [vmem:[%s5 + $0x3a8] sm:$0xff]
    %v1643 = vld [vmem:[%s5 + $0x3b0] sm:$0xff]
    %v1644 = vld [vmem:[%s5 + $0x3b8] sm:$0xff]
    %v1645 = vld [vmem:[%s5 + $0x3c0] sm:$0xff]
    %v1646 = vld [vmem:[%s5 + $0x3c8] sm:$0xff]
    %v1647 = vld [vmem:[%s5 + $0x3d0] sm:$0xff]
    %v1648 = vld [vmem:[%s5 + $0x3d8] sm:$0xff]
    %v1649 = vld [vmem:[%s5 + $0x3e0] sm:$0x1]
    %v1650 = vlaneseq
    %v1651 = vshrl.u32 %v1650, 7
    %v1652 = vsub.s32 0, %v1651
    %v1653 = vrot.slane %v1649, %v1652
    %v1655 = vsel %vm24, %v1624, 0
    %1657 = vmatprep.subr.mxu0 0.0
    %1658 = vmatpush1.msra.mxu0 %v1640
    %1659 = vmatprep.subr.mxu0 0.0
    %1660 = vmatpush1.msra.mxu0 %v1639
    %1661 = vmatprep.subr.mxu0 0.0
    %1662 = vmatpush1.msra.mxu0 %v1638
    %1663 = vmatprep.subr.mxu0 0.0
    %1664 = vmatpush1.msra.mxu0 %v1637
    %1665 = vmatprep.subr.mxu0 0.0
    %1666 = vmatpush1.msra.mxu0 %v1636
    %1667 = vmatprep.subr.mxu0 0.0
    %1668 = vmatpush1.msra.mxu0 %v1635
    %1669 = vmatprep.subr.mxu0 0.0
    %1670 = vmatpush1.msra.mxu0 %v1634
    %1671 = vmatprep.subr.mxu0 0.0
    %1672 = vmatpush1.msra.mxu0 %v1633
    %1673 = vmatprep.subr.mxu0 0.0
    %1674 = vmatpush1.msra.mxu0 %v1632
    %1675 = vmatprep.subr.mxu0 0.0
    %1676 = vmatpush1.msra.mxu0 %v1631
    %1677 = vmatprep.subr.mxu0 0.0
    %1678 = vmatpush1.msra.mxu0 %v1630
    %1679 = vmatprep.subr.mxu0 0.0
    %1680 = vmatpush1.msra.mxu0 %v1629
    %1681 = vmatprep.subr.mxu0 0.0
    %1682 = vmatpush1.msra.mxu0 %v1628
    %1683 = vmatprep.subr.mxu0 0.0
    %1684 = vmatpush1.msra.mxu0 %v1627
    %1685 = vmatprep.subr.mxu0 0.0
    %1686 = vmatpush1.msra.mxu0 %v1626
    %1687 = vmatprep.subr.mxu0 0.0
    %1688 = vmatpush1.msra.mxu0 %v1625
    %1689 = vmatprep.subr.mxu0 0.0
    %1690 = vmatpush2.msra.mxu0 0.0
    %1691 = vmatprep.subr.mxu0 0.0
    %1692 = vmatpush2.msra.mxu0 0.0
    %1693 = vmatprep.subr.mxu0 0.0
    %1694 = vmatpush2.msra.mxu0 0.0
    %1695 = vmatprep.subr.mxu0 0.0
    %1696 = vmatpush2.msra.mxu0 0.0
    %1697 = vmatprep.subr.mxu0 0.0
    %1698 = vmatpush2.msra.mxu0 0.0
    %1699 = vmatprep.subr.mxu0 0.0
    %1700 = vmatpush2.msra.mxu0 0.0
    %1701 = vmatprep.subr.mxu0 0.0
    %1702 = vmatpush2.msra.mxu0 0.0
    %1703 = vmatprep.subr.mxu0 0.0
    %1704 = vmatpush2.msra.mxu0 0.0
    %1705 = vmatprep.subr.mxu0 0.0
    %1706 = vmatpush2.msra.mxu0 %v1648
    %1707 = vmatprep.subr.mxu0 0.0
    %1708 = vmatpush2.msra.mxu0 %v1647
    %1709 = vmatprep.subr.mxu0 0.0
    %1710 = vmatpush2.msra.mxu0 %v1646
    %1711 = vmatprep.subr.mxu0 0.0
    %1712 = vmatpush2.msra.mxu0 %v1645
    %1713 = vmatprep.subr.mxu0 0.0
    %1714 = vmatpush2.msra.mxu0 %v1644
    %1715 = vmatprep.subr.mxu0 0.0
    %1716 = vmatpush2.msra.mxu0 %v1643
    %1717 = vmatprep.subr.mxu0 0.0
    %1718 = vmatpush2.msra.mxu0 %v1642
    %1719 = vmatprep.subr.mxu0 0.0
    %1720 = vmatpush2.msra.mxu0 %v1641
    %1721 = vmatprep.mubr.f32.mxu0 %v1655
    %1722 = vmatmul.mubr.f32.gmra.mxu0 %v1623
    %v1723 = vpop.f32.mrf.mxu0
    %v1724 = vadd.f32 %v1653, %v1723
    %v1725 = vpop.f32.mrf.mxu0
    %1726 = vdwg.mxu0
    %v1727 = vadd.f32 %v1436, %v1724
    %1728 = vst.msk [vmem:[#allocation2 + $0x8] sm:$0xff] %vm24, %v1727
    %v1729 = vld [vmem:[#allocation3 + $0x3] sm:$0x1]
    %v1731 = vlaneseq
    %v1732 = vshrl.u32 %v1731, 7
    %v1733 = vsub.s32 0, %v1732
    %v1734 = vrot.slane %v1729, %v1733
    %v1736 = vadd.f32 %v1734, 0.0
    %v1737 = vld [vmem:[#allocation2] sm:$0xff]
    %v1738 = vld [vmem:[%s5 + $0x4c9] sm:$0x1]
    %v1739 = vlaneseq
    %v1740 = vshrl.u32 %v1739, 7
    %v1741 = vsub.s32 0, %v1740
    %v1742 = vrot.slane %v1738, %v1741
    %v1743 = vmul.f32 %v1737, %v1742
    %v1744 = vadd.f32 %v1736, %v1743
    %v1745 = vld [vmem:[#allocation2 + $0x4] sm:$0xff]
    %v1746 = vld [vmem:[%s5 + $0x4ca] sm:$0x1]
    %v1747 = vlaneseq
    %v1748 = vshrl.u32 %v1747, 7
    %v1749 = vsub.s32 0, %v1748
    %v1750 = vrot.slane %v1746, %v1749
    %v1751 = vmul.f32 %v1745, %v1750
    %v1752 = vadd.f32 %v1744, %v1751
    %v1753 = vld [vmem:[#allocation2 + $0x8] sm:$0xff]
    %v1754 = vld [vmem:[%s5 + $0x4cb] sm:$0x1]
    %v1755 = vlaneseq
    %v1756 = vshrl.u32 %v1755, 7
    %v1757 = vsub.s32 0, %v1756
    %v1758 = vrot.slane %v1754, %v1757
    %v1759 = vmul.f32 %v1753, %v1758
    %v1760 = vadd.f32 %v1752, %v1759
    %v1761 = vld [vmem:[#allocation2 + $0xc] sm:$0xff]
    %v1762 = vld [vmem:[%s5 + $0x4cc] sm:$0x1]
    %v1763 = vlaneseq
    %v1764 = vshrl.u32 %v1763, 7
    %v1765 = vsub.s32 0, %v1764
    %v1766 = vrot.slane %v1762, %v1765
    %v1767 = vmul.f32 %v1761, %v1766
    %v1768 = vadd.f32 %v1760, %v1767
    %v1769 = vld [vmem:[#allocation2 + $0x10] sm:$0xff]
    %v1770 = vld [vmem:[%s5 + $0x4cd] sm:$0x1]
    %v1771 = vlaneseq
    %v1772 = vshrl.u32 %v1771, 7
    %v1773 = vsub.s32 0, %v1772
    %v1774 = vrot.slane %v1770, %v1773
    %v1775 = vmul.f32 %v1769, %v1774
    %v1776 = vadd.f32 %v1768, %v1775
    %v1777 = vld [vmem:[%s4 + $0x2d0] sm:$0xff]
    %v1778 = vld [vmem:[%s4 + $0x2d8] sm:$0xff]
    %v1779 = vld [vmem:[%s4 + $0x2e0] sm:$0xff]
    %v1780 = vld [vmem:[%s4 + $0x2e8] sm:$0xff]
    %v1781 = vld [vmem:[%s4 + $0x2f0] sm:$0xff]
    %v1782 = vld [vmem:[%s4 + $0x2f8] sm:$0xff]
    %v1783 = vld [vmem:[%s4 + $0x300] sm:$0xff]
    %v1784 = vld [vmem:[%s4 + $0x308] sm:$0xff]
    %v1785 = vld [vmem:[%s4 + $0x310] sm:$0xff]
    %v1786 = vld [vmem:[%s4 + $0x318] sm:$0xff]
    %v1787 = vld [vmem:[%s4 + $0x320] sm:$0xff]
    %v1788 = vld [vmem:[%s4 + $0x328] sm:$0xff]
    %v1789 = vld [vmem:[%s4 + $0x330] sm:$0xff]
    %v1790 = vld [vmem:[%s4 + $0x338] sm:$0xff]
    %v1791 = vld [vmem:[%s4 + $0x340] sm:$0xff]
    %v1792 = vld [vmem:[%s4 + $0x348] sm:$0xff]
    %s1793 = scalar_lea.vmem %s4, 848
    %v1794 = vld [vmem:[%s1793] ss:$8 sm:$0x3]
    %v1796 = vlaneseq
    %v1797 = vshrl.u32 %v1796, 7
    %v1798 = vsub.s32 0, %v1797
    %v1799 = vrot.slane %v1794, %v1798
    %v1800 = vlaneseq
    %v1801 = vshrl.u32 %v1800, 7
    %v1802 = vsub.s32 1, %v1801
    %v1803 = vrot.slane %v1794, %v1802
    %v1807 = vsel %vm24, %v1776, 0
    %1809 = vmatprep.subr.mxu0 0.0
    %1810 = vmatpush1.msra.mxu0 0.0
    %1811 = vmatprep.subr.mxu0 0.0
    %1812 = vmatpush1.msra.mxu0 0.0
    %1813 = vmatprep.subr.mxu0 0.0
    %1814 = vmatpush1.msra.mxu0 0.0
    %1815 = vmatprep.subr.mxu0 0.0
    %1816 = vmatpush1.msra.mxu0 0.0
    %1817 = vmatprep.subr.mxu0 0.0
    %1818 = vmatpush1.msra.mxu0 0.0
    %1819 = vmatprep.subr.mxu0 0.0
    %1820 = vmatpush1.msra.mxu0 0.0
    %1821 = vmatprep.subr.mxu0 0.0
    %1822 = vmatpush1.msra.mxu0 0.0
    %1823 = vmatprep.subr.mxu0 0.0
    %1824 = vmatpush1.msra.mxu0 0.0
    %1825 = vmatprep.subr.mxu0 %v1792
    %1826 = vmatpush1.msra.mxu0 %v1791
    %1827 = vmatprep.subr.mxu0 %v1790
    %1828 = vmatpush1.msra.mxu0 %v1789
    %1829 = vmatprep.subr.mxu0 %v1788
    %1830 = vmatpush1.msra.mxu0 %v1787
    %1831 = vmatprep.subr.mxu0 %v1786
    %1832 = vmatpush1.msra.mxu0 %v1785
    %1833 = vmatprep.subr.mxu0 %v1784
    %1834 = vmatpush1.msra.mxu0 %v1783
    %1835 = vmatprep.subr.mxu0 %v1782
    %1836 = vmatpush1.msra.mxu0 %v1781
    %1837 = vmatprep.subr.mxu0 %v1780
    %1838 = vmatpush1.msra.mxu0 %v1779
    %1839 = vmatprep.subr.mxu0 %v1778
    %1840 = vmatpush1.msra.mxu0 %v1777
    %1841 = vmatprep.subr.mxu0 0.0
    %1842 = vmatpush2.msra.mxu0 0.0
    %1843 = vmatprep.subr.mxu0 0.0
    %1844 = vmatpush2.msra.mxu0 0.0
    %1845 = vmatprep.subr.mxu0 0.0
    %1846 = vmatpush2.msra.mxu0 0.0
    %1847 = vmatprep.subr.mxu0 0.0
    %1848 = vmatpush2.msra.mxu0 0.0
    %1849 = vmatprep.subr.mxu0 0.0
    %1850 = vmatpush2.msra.mxu0 0.0
    %1851 = vmatprep.subr.mxu0 0.0
    %1852 = vmatpush2.msra.mxu0 0.0
    %1853 = vmatprep.subr.mxu0 0.0
    %1854 = vmatpush2.msra.mxu0 0.0
    %1855 = vmatprep.subr.mxu0 0.0
    %1856 = vmatpush2.msra.mxu0 0.0
    %1857 = vmatprep.subr.mxu0 0.0
    %1858 = vmatpush2.msra.mxu0 0.0
    %1859 = vmatprep.subr.mxu0 0.0
    %1860 = vmatpush2.msra.mxu0 0.0
    %1861 = vmatprep.subr.mxu0 0.0
    %1862 = vmatpush2.msra.mxu0 0.0
    %1863 = vmatprep.subr.mxu0 0.0
    %1864 = vmatpush2.msra.mxu0 0.0
    %1865 = vmatprep.subr.mxu0 0.0
    %1866 = vmatpush2.msra.mxu0 0.0
    %1867 = vmatprep.subr.mxu0 0.0
    %1868 = vmatpush2.msra.mxu0 0.0
    %1869 = vmatprep.subr.mxu0 0.0
    %1870 = vmatpush2.msra.mxu0 0.0
    %1871 = vmatprep.subr.mxu0 0.0
    %1872 = vmatpush2.msra.mxu0 0.0
    %1873 = vmatprep.mubr.f32.mxu0 0.0
    %1874 = vmatmul.mubr.f32.gmra.mxu0 %v1807
    %v1875 = vpop.f32.mrf.mxu0
    %v1876 = vadd.f32 %v1799, %v1875
    %v1877 = vpop.f32.mrf.mxu0
    %v1878 = vadd.f32 %v1803, %v1877
    %1879 = vdwg.mxu0
    %v1880 = vxor.u32 %v1876, 2147483648
    %v1881 = vxor.u32 %v1878, 2147483648
    %v1882 = vmul.f32 %v1880, 1.442695
    %v1883 = vpow.pop %v1882
    %v1884 = vmul.f32 %v1881, 1.442695
    %v1885 = vpow.pop %v1884
    %v1886 = vadd.f32 %v1883, 1.0
    %v1887 = vadd.f32 %v1885, 1.0
    %v1888 = vrcp.pop %v1886
    %v1889 = vmul.f32 1.0, %v1888
    %v1890 = vrcp.pop %v1887
    %v1891 = vmul.f32 1.0, %v1890
    %v1892 = vmul.f32 %v1876, %v1889
    %v1893 = vmul.f32 %v1878, %v1891
    %v1894 = vld [vmem:[%s5 + $0x3e8] sm:$0xff]
    %v1895 = vld [vmem:[%s5 + $0x3f0] sm:$0xff]
    %v1896 = vld [vmem:[%s5 + $0x3f8] sm:$0xff]
    %v1897 = vld [vmem:[%s5 + $0x400] sm:$0xff]
    %v1898 = vld [vmem:[%s5 + $0x408] sm:$0xff]
    %v1899 = vld [vmem:[%s5 + $0x410] sm:$0xff]
    %v1900 = vld [vmem:[%s5 + $0x418] sm:$0xff]
    %v1901 = vld [vmem:[%s5 + $0x420] sm:$0xff]
    %v1902 = vld [vmem:[%s5 + $0x428] sm:$0xff]
    %v1903 = vld [vmem:[%s5 + $0x430] sm:$0xff]
    %v1904 = vld [vmem:[%s5 + $0x438] sm:$0xff]
    %v1905 = vld [vmem:[%s5 + $0x440] sm:$0xff]
    %v1906 = vld [vmem:[%s5 + $0x448] sm:$0xff]
    %v1907 = vld [vmem:[%s5 + $0x450] sm:$0xff]
    %v1908 = vld [vmem:[%s5 + $0x458] sm:$0xff]
    %v1909 = vld [vmem:[%s5 + $0x460] sm:$0xff]
    %v1910 = vld [vmem:[%s5 + $0x468] sm:$0xff]
    %v1911 = vld [vmem:[%s5 + $0x470] sm:$0xff]
    %v1912 = vld [vmem:[%s5 + $0x478] sm:$0xff]
    %v1913 = vld [vmem:[%s5 + $0x480] sm:$0xff]
    %v1914 = vld [vmem:[%s5 + $0x488] sm:$0xff]
    %v1915 = vld [vmem:[%s5 + $0x490] sm:$0xff]
    %v1916 = vld [vmem:[%s5 + $0x498] sm:$0xff]
    %v1917 = vld [vmem:[%s5 + $0x4a0] sm:$0xff]
    %v1918 = vld [vmem:[%s5 + $0x4a8] sm:$0x1]
    %v1919 = vlaneseq
    %v1920 = vshrl.u32 %v1919, 7
    %v1921 = vsub.s32 0, %v1920
    %v1922 = vrot.slane %v1918, %v1921
    %v1924 = vsel %vm24, %v1893, 0
    %1926 = vmatprep.subr.mxu0 0.0
    %1927 = vmatpush1.msra.mxu0 %v1909
    %1928 = vmatprep.subr.mxu0 0.0
    %1929 = vmatpush1.msra.mxu0 %v1908
    %1930 = vmatprep.subr.mxu0 0.0
    %1931 = vmatpush1.msra.mxu0 %v1907
    %1932 = vmatprep.subr.mxu0 0.0
    %1933 = vmatpush1.msra.mxu0 %v1906
    %1934 = vmatprep.subr.mxu0 0.0
    %1935 = vmatpush1.msra.mxu0 %v1905
    %1936 = vmatprep.subr.mxu0 0.0
    %1937 = vmatpush1.msra.mxu0 %v1904
    %1938 = vmatprep.subr.mxu0 0.0
    %1939 = vmatpush1.msra.mxu0 %v1903
    %1940 = vmatprep.subr.mxu0 0.0
    %1941 = vmatpush1.msra.mxu0 %v1902
    %1942 = vmatprep.subr.mxu0 0.0
    %1943 = vmatpush1.msra.mxu0 %v1901
    %1944 = vmatprep.subr.mxu0 0.0
    %1945 = vmatpush1.msra.mxu0 %v1900
    %1946 = vmatprep.subr.mxu0 0.0
    %1947 = vmatpush1.msra.mxu0 %v1899
    %1948 = vmatprep.subr.mxu0 0.0
    %1949 = vmatpush1.msra.mxu0 %v1898
    %1950 = vmatprep.subr.mxu0 0.0
    %1951 = vmatpush1.msra.mxu0 %v1897
    %1952 = vmatprep.subr.mxu0 0.0
    %1953 = vmatpush1.msra.mxu0 %v1896
    %1954 = vmatprep.subr.mxu0 0.0
    %1955 = vmatpush1.msra.mxu0 %v1895
    %1956 = vmatprep.subr.mxu0 0.0
    %1957 = vmatpush1.msra.mxu0 %v1894
    %1958 = vmatprep.subr.mxu0 0.0
    %1959 = vmatpush2.msra.mxu0 0.0
    %1960 = vmatprep.subr.mxu0 0.0
    %1961 = vmatpush2.msra.mxu0 0.0
    %1962 = vmatprep.subr.mxu0 0.0
    %1963 = vmatpush2.msra.mxu0 0.0
    %1964 = vmatprep.subr.mxu0 0.0
    %1965 = vmatpush2.msra.mxu0 0.0
    %1966 = vmatprep.subr.mxu0 0.0
    %1967 = vmatpush2.msra.mxu0 0.0
    %1968 = vmatprep.subr.mxu0 0.0
    %1969 = vmatpush2.msra.mxu0 0.0
    %1970 = vmatprep.subr.mxu0 0.0
    %1971 = vmatpush2.msra.mxu0 0.0
    %1972 = vmatprep.subr.mxu0 0.0
    %1973 = vmatpush2.msra.mxu0 0.0
    %1974 = vmatprep.subr.mxu0 0.0
    %1975 = vmatpush2.msra.mxu0 %v1917
    %1976 = vmatprep.subr.mxu0 0.0
    %1977 = vmatpush2.msra.mxu0 %v1916
    %1978 = vmatprep.subr.mxu0 0.0
    %1979 = vmatpush2.msra.mxu0 %v1915
    %1980 = vmatprep.subr.mxu0 0.0
    %1981 = vmatpush2.msra.mxu0 %v1914
    %1982 = vmatprep.subr.mxu0 0.0
    %1983 = vmatpush2.msra.mxu0 %v1913
    %1984 = vmatprep.subr.mxu0 0.0
    %1985 = vmatpush2.msra.mxu0 %v1912
    %1986 = vmatprep.subr.mxu0 0.0
    %1987 = vmatpush2.msra.mxu0 %v1911
    %1988 = vmatprep.subr.mxu0 0.0
    %1989 = vmatpush2.msra.mxu0 %v1910
    %1990 = vmatprep.mubr.f32.mxu0 %v1924
    %1991 = vmatmul.mubr.f32.gmra.mxu0 %v1892
    %v1992 = vpop.f32.mrf.mxu0
    %v1993 = vadd.f32 %v1922, %v1992
    %v1994 = vpop.f32.mrf.mxu0
    %1995 = vdwg.mxu0
    %v1996 = vadd.f32 %v1727, %v1993
    %v1997 = vld [vmem:[%s5 + $0x4d0] sm:$0xff]
    %v1998 = vld [vmem:[%s5 + $0x4d8] sm:$0xff]
    %v1999 = vld [vmem:[%s5 + $0x4e0] sm:$0xff]
    %v2000 = vld [vmem:[%s5 + $0x4e8] sm:$0xff]
    %v2001 = vld [vmem:[%s5 + $0x4f0] sm:$0xff]
    %v2002 = vld [vmem:[%s5 + $0x4f8] sm:$0xff]
    %v2003 = vld [vmem:[%s5 + $0x500] sm:$0xff]
    %v2004 = vld [vmem:[%s5 + $0x508] sm:$0xff]
    %v2005 = vld [vmem:[%s5 + $0x510] sm:$0x1]
    %v2006 = vlaneseq
    %v2007 = vshrl.u32 %v2006, 7
    %v2008 = vsub.s32 0, %v2007
    %v2009 = vrot.slane %v2005, %v2008
    %v2011 = vsel %vm24, %v1996, 0
    %2013 = vmatprep.subr.mxu0 0.0
    %2014 = vmatpush1.msra.mxu0 0.0
    %2015 = vmatprep.subr.mxu0 0.0
    %2016 = vmatpush1.msra.mxu0 0.0
    %2017 = vmatprep.subr.mxu0 0.0
    %2018 = vmatpush1.msra.mxu0 0.0
    %2019 = vmatprep.subr.mxu0 0.0
    %2020 = vmatpush1.msra.mxu0 0.0
    %2021 = vmatprep.subr.mxu0 0.0
    %2022 = vmatpush1.msra.mxu0 0.0
    %2023 = vmatprep.subr.mxu0 0.0
    %2024 = vmatpush1.msra.mxu0 0.0
    %2025 = vmatprep.subr.mxu0 0.0
    %2026 = vmatpush1.msra.mxu0 0.0
    %2027 = vmatprep.subr.mxu0 0.0
    %2028 = vmatpush1.msra.mxu0 0.0
    %2029 = vmatprep.subr.mxu0 0.0
    %2030 = vmatpush1.msra.mxu0 %v2004
    %2031 = vmatprep.subr.mxu0 0.0
    %2032 = vmatpush1.msra.mxu0 %v2003
    %2033 = vmatprep.subr.mxu0 0.0
    %2034 = vmatpush1.msra.mxu0 %v2002
    %2035 = vmatprep.subr.mxu0 0.0
    %2036 = vmatpush1.msra.mxu0 %v2001
    %2037 = vmatprep.subr.mxu0 0.0
    %2038 = vmatpush1.msra.mxu0 %v2000
    %2039 = vmatprep.subr.mxu0 0.0
    %2040 = vmatpush1.msra.mxu0 %v1999
    %2041 = vmatprep.subr.mxu0 0.0
    %2042 = vmatpush1.msra.mxu0 %v1998
    %2043 = vmatprep.subr.mxu0 0.0
    %2044 = vmatpush1.msra.mxu0 %v1997
    %2045 = vmatprep.subr.mxu0 0.0
    %2046 = vmatpush2.msra.mxu0 0.0
    %2047 = vmatprep.subr.mxu0 0.0
    %2048 = vmatpush2.msra.mxu0 0.0
    %2049 = vmatprep.subr.mxu0 0.0
    %2050 = vmatpush2.msra.mxu0 0.0
    %2051 = vmatprep.subr.mxu0 0.0
    %2052 = vmatpush2.msra.mxu0 0.0
    %2053 = vmatprep.subr.mxu0 0.0
    %2054 = vmatpush2.msra.mxu0 0.0
    %2055 = vmatprep.subr.mxu0 0.0
    %2056 = vmatpush2.msra.mxu0 0.0
    %2057 = vmatprep.subr.mxu0 0.0
    %2058 = vmatpush2.msra.mxu0 0.0
    %2059 = vmatprep.subr.mxu0 0.0
    %2060 = vmatpush2.msra.mxu0 0.0
    %2061 = vmatprep.subr.mxu0 0.0
    %2062 = vmatpush2.msra.mxu0 0.0
    %2063 = vmatprep.subr.mxu0 0.0
    %2064 = vmatpush2.msra.mxu0 0.0
    %2065 = vmatprep.subr.mxu0 0.0
    %2066 = vmatpush2.msra.mxu0 0.0
    %2067 = vmatprep.subr.mxu0 0.0
    %2068 = vmatpush2.msra.mxu0 0.0
    %2069 = vmatprep.subr.mxu0 0.0
    %2070 = vmatpush2.msra.mxu0 0.0
    %2071 = vmatprep.subr.mxu0 0.0
    %2072 = vmatpush2.msra.mxu0 0.0
    %2073 = vmatprep.subr.mxu0 0.0
    %2074 = vmatpush2.msra.mxu0 0.0
    %2075 = vmatprep.subr.mxu0 0.0
    %2076 = vmatpush2.msra.mxu0 0.0
    %2077 = vmatprep.mubr.f32.mxu0 0.0
    %2078 = vmatmul.mubr.f32.gmra.mxu0 %v2011
    %v2079 = vpop.f32.mrf.mxu0
    %v2080 = vadd.f32 %v2009, %v2079
    %v2081 = vpop.f32.mrf.mxu0
    %2082 = vdwg.mxu0
    %vm2083 = vcmask 293888
    %2084 = vst.msk [vmem:[#allocation4] sm:$0xff] %vm2083, %v2080
    %v2085 = vld [vmem:[#allocation4] sm:$0xff]
    %v2086 = vmul.f32 %v2085, 1.442695
    %v2087 = vpow.pop %v2086
    %v2088 = vmin.f32 %v2087, 100.0
    %v2089 = vand.u32 2147483647, %v2085
    %vm2090 = vcmp.le.f32.partialorder %v2089, 0.7853982
    %vm2091 = vcmp.lt.s32.totalorder %v2085, 0
    %v2092 = vand.u32 %v2085, 2139095040
    %v2093 = vshrl.u32 %v2092, 23
    %v2094 = vsub.s32 %v2093, 127
    %v2095 = vand.u32 2147483647, %v2085
    %v2096 = vand.u32 %v2095, 8388607
    %v2097 = vor.u32 %v2096, 8388608
    %v2098 = vsub.s32 0, %v2097
    %v2099 = vadd.s32 %v2094, 1
    %vm2100 = vcmp.gt.s32.totalorder %v2099, 0
    %v2101 = vsel %vm2100, %v2099, 0
    %v2102 = vshrl.u32 %v2101, 5
    %v2103 = vand.u32 %v2101, 31
    %v2104 = vsub.s32 32, %v2103
    %v2105 = vshrl.u32 683565275, %v2104
    %v2106 = vshll.u32 683565275, %v2103
    %v2107 = vshrl.u32 2475754826, %v2104
    %v2108 = vor.u32 %v2106, %v2107
    %v2109 = vshll.u32 2475754826, %v2103
    %v2110 = vshrl.u32 2131351028, %v2104
    %v2111 = vor.u32 %v2109, %v2110
    %v2112 = vshll.u32 2131351028, %v2103
    %v2113 = vshrl.u32 2102212464, %v2104
    %v2114 = vor.u32 %v2112, %v2113
    %v2115 = vshll.u32 2102212464, %v2103
    %v2116 = vshrl.u32 920167782, %v2104
    %v2117 = vor.u32 %v2115, %v2116
    %v2118 = vshll.u32 920167782, %v2103
    %v2119 = vshrl.u32 1326507024, %v2104
    %v2120 = vor.u32 %v2118, %v2119
    %vm2121 = vcmp.lt.s32.totalorder %v2102, 1
    %vm2122 = vcmp.lt.s32.totalorder %v2102, 2
    %vm2123 = vcmp.lt.s32.totalorder %v2102, 3
    %vm2124 = vcmp.lt.s32.totalorder %v2102, 4
    %v2125 = vsel %vm2121, %v2105, %v2108
    %v2126 = vsel %vm2124, %v2114, 2102212464
    %v2127 = vsel %vm2123, %v2111, %v2126
    %v2128 = vsel %vm2122, %v2125, %v2127
    %v2129 = vsel %vm2121, %v2108, %v2111
    %v2130 = vsel %vm2124, %v2117, 920167782
    %v2131 = vsel %vm2123, %v2114, %v2130
    %v2132 = vsel %vm2122, %v2129, %v2131
    %v2133 = vsel %vm2121, %v2111, %v2114
    %v2134 = vsel %vm2124, %v2120, 1326507024
    %v2135 = vsel %vm2123, %v2117, %v2134
    %v2136 = vsel %vm2122, %v2133, %v2135
    %v2137 = vshll.u32 %v2097, 8
    %v2138 = vmul.u32.u64.compose %v2137, %v2136
    %v2139 = vextract.low.u32 %v2138
    %v2140 = vextract.high.u32 %v2138
    %v2141 = vmul.u32.u64.compose %v2137, %v2132
    %v2142 = vextract.low.u32 %v2141
    %v2143 = vextract.high.u32 %v2141
    %v2144 = vmul.u32 %v2137, %v2128
    %v2145 = vadd.s32 %v2140, %v2142
    %vm2146 = vc.u32 %v2140, %v2142
    %v2147 = vadd.s32 %v2143, 1
    %v2148 = vsel %vm2146, %v2147, %v2143
    %v2149 = vadd.s32 %v2144, %v2148
    %v2150 = vadd.s32 %v2149, 536870912
    %v2151 = vshrl.u32 %v2150, 30
    %v2152 = vshll.u32 %v2151, 30
    %v2153 = vsub.s32 %v2149, %v2152
    %vm2154 = vcmp.lt.s32.totalorder %v2153, 0
    %v2155 = vsub.s32 0, %v2153
    %v2156 = vsel %vm2154, %v2155, %v2153
    %v2157 = vclz %v2156
    %v2158 = vsub.s32 %v2157, 2
    %vm2159 = vcmp.gt.s32.totalorder 0, %v2158
    %v2160 = vsel %vm2159, 0, %v2158
    %v2161 = vsub.s32 32, %v2160
    %v2162 = vshll.u32 %v2153, %v2160
    %v2163 = vshrl.u32 %v2145, %v2161
    %v2164 = vor.u32 %v2162, %v2163
    %v2165 = vsub.s32 4294967266, %v2160
    %v2166 = vadd.s32 %v2165, 127
    %v2167 = vshll.u32 %v2166, 23
    %v2168 = vor.u32 4788187, %v2167
    %v2169 = vand.u32 2147483647, %v2168
    %v2171 = vcvt.s32.f32 %v2164
    %v2172 = vmul.f32 %v2171, %v2169
    %v2173 = vxor.u32 %v2172, 2147483648
    %v2174 = vsel %vm2091, %v2173, %v2172
    %v2175 = vsub.s32 4, %v2151
    %v2176 = vsel %vm2091, %v2175, %v2151
    %v2177 = vsel %vm2090, %v2085, %v2174
    %v2178 = vsel %vm2090, 0, %v2176
    %v2179 = vcosq.f32.pop %v2177
    %v2180 = vsinq.f32.pop %v2177
    %vm2181 = vweird.f32 %v2085
    %v2182 = vand.u32 %v2178, 3
    %vm2183 = vcmp.lt.s32.totalorder %v2182, 2
    %vm2184 = vcmp.eq.s32.totalorder %v2182, 0
    %v2185 = vxor.u32 %v2180, 2147483648
    %v2186 = vsel %vm2184, %v2179, %v2185
    %vm2187 = vcmp.eq.s32.totalorder %v2182, 2
    %v2188 = vxor.u32 %v2179, 2147483648
    %v2189 = vsel %vm2187, %v2188, %v2180
    %v2190 = vsel %vm2183, %v2186, %v2189
    %v2191 = vsel %vm2181, nan, %v2190
    %2193 = vrot.lane.b32.xlu0 %v2191, 110
    %v2194 = vpop.permute.xlu0 %2193
    %v2196 = vmul.f32 %v2088, %v2194
    %vm2197 = vcmask 146432
    %2198 = vst.msk [vmem:[#allocation5] sm:$0xff] %vm2197, %v2196
    %v2199 = vand.u32 2147483647, %v2085
    %vm2200 = vcmp.le.f32.partialorder %v2199, 0.7853982
    %vm2201 = vcmp.lt.s32.totalorder %v2085, 0
    %v2202 = vand.u32 %v2085, 2139095040
    %v2203 = vshrl.u32 %v2202, 23
    %v2204 = vsub.s32 %v2203, 127
    %v2205 = vand.u32 2147483647, %v2085
    %v2206 = vand.u32 %v2205, 8388607
    %v2207 = vor.u32 %v2206, 8388608
    %v2208 = vsub.s32 0, %v2207
    %v2209 = vadd.s32 %v2204, 1
    %vm2210 = vcmp.gt.s32.totalorder %v2209, 0
    %v2211 = vsel %vm2210, %v2209, 0
    %v2212 = vshrl.u32 %v2211, 5
    %v2213 = vand.u32 %v2211, 31
    %v2214 = vsub.s32 32, %v2213
    %v2215 = vshrl.u32 683565275, %v2214
    %v2216 = vshll.u32 683565275, %v2213
    %v2217 = vshrl.u32 2475754826, %v2214
    %v2218 = vor.u32 %v2216, %v2217
    %v2219 = vshll.u32 2475754826, %v2213
    %v2220 = vshrl.u32 2131351028, %v2214
    %v2221 = vor.u32 %v2219, %v2220
    %v2222 = vshll.u32 2131351028, %v2213
    %v2223 = vshrl.u32 2102212464, %v2214
    %v2224 = vor.u32 %v2222, %v2223
    %v2225 = vshll.u32 2102212464, %v2213
    %v2226 = vshrl.u32 920167782, %v2214
    %v2227 = vor.u32 %v2225, %v2226
    %v2228 = vshll.u32 920167782, %v2213
    %v2229 = vshrl.u32 1326507024, %v2214
    %v2230 = vor.u32 %v2228, %v2229
    %vm2231 = vcmp.lt.s32.totalorder %v2212, 1
    %vm2232 = vcmp.lt.s32.totalorder %v2212, 2
    %vm2233 = vcmp.lt.s32.totalorder %v2212, 3
    %vm2234 = vcmp.lt.s32.totalorder %v2212, 4
    %v2235 = vsel %vm2231, %v2215, %v2218
    %v2236 = vsel %vm2234, %v2224, 2102212464
    %v2237 = vsel %vm2233, %v2221, %v2236
    %v2238 = vsel %vm2232, %v2235, %v2237
    %v2239 = vsel %vm2231, %v2218, %v2221
    %v2240 = vsel %vm2234, %v2227, 920167782
    %v2241 = vsel %vm2233, %v2224, %v2240
    %v2242 = vsel %vm2232, %v2239, %v2241
    %v2243 = vsel %vm2231, %v2221, %v2224
    %v2244 = vsel %vm2234, %v2230, 1326507024
    %v2245 = vsel %vm2233, %v2227, %v2244
    %v2246 = vsel %vm2232, %v2243, %v2245
    %v2247 = vshll.u32 %v2207, 8
    %v2248 = vmul.u32.u64.compose %v2247, %v2246
    %v2249 = vextract.low.u32 %v2248
    %v2250 = vextract.high.u32 %v2248
    %v2251 = vmul.u32.u64.compose %v2247, %v2242
    %v2252 = vextract.low.u32 %v2251
    %v2253 = vextract.high.u32 %v2251
    %v2254 = vmul.u32 %v2247, %v2238
    %v2255 = vadd.s32 %v2250, %v2252
    %vm2256 = vc.u32 %v2250, %v2252
    %v2257 = vadd.s32 %v2253, 1
    %v2258 = vsel %vm2256, %v2257, %v2253
    %v2259 = vadd.s32 %v2254, %v2258
    %v2260 = vadd.s32 %v2259, 536870912
    %v2261 = vshrl.u32 %v2260, 30
    %v2262 = vshll.u32 %v2261, 30
    %v2263 = vsub.s32 %v2259, %v2262
    %vm2264 = vcmp.lt.s32.totalorder %v2263, 0
    %v2265 = vsub.s32 0, %v2263
    %v2266 = vsel %vm2264, %v2265, %v2263
    %v2267 = vclz %v2266
    %v2268 = vsub.s32 %v2267, 2
    %vm2269 = vcmp.gt.s32.totalorder 0, %v2268
    %v2270 = vsel %vm2269, 0, %v2268
    %v2271 = vsub.s32 32, %v2270
    %v2272 = vshll.u32 %v2263, %v2270
    %v2273 = vshrl.u32 %v2255, %v2271
    %v2274 = vor.u32 %v2272, %v2273
    %v2275 = vsub.s32 4294967266, %v2270
    %v2276 = vadd.s32 %v2275, 127
    %v2277 = vshll.u32 %v2276, 23
    %v2278 = vor.u32 4788187, %v2277
    %v2279 = vand.u32 2147483647, %v2278
    %v2281 = vcvt.s32.f32 %v2274
    %v2282 = vmul.f32 %v2281, %v2279
    %v2283 = vxor.u32 %v2282, 2147483648
    %v2284 = vsel %vm2201, %v2283, %v2282
    %v2285 = vsub.s32 4, %v2261
    %v2286 = vsel %vm2201, %v2285, %v2261
    %v2287 = vsel %vm2200, %v2085, %v2284
    %v2288 = vsel %vm2200, 0, %v2286
    %v2289 = vcosq.f32.pop %v2287
    %v2290 = vsinq.f32.pop %v2287
    %vm2291 = vweird.f32 %v2085
    %v2292 = vadd.s32 %v2288, 3
    %v2293 = vand.u32 %v2292, 3
    %vm2294 = vcmp.lt.s32.totalorder %v2293, 2
    %vm2295 = vcmp.eq.s32.totalorder %v2293, 0
    %v2296 = vxor.u32 %v2290, 2147483648
    %v2297 = vsel %vm2295, %v2289, %v2296
    %vm2298 = vcmp.eq.s32.totalorder %v2293, 2
    %v2299 = vxor.u32 %v2289, 2147483648
    %v2300 = vsel %vm2298, %v2299, %v2290
    %v2301 = vsel %vm2294, %v2297, %v2300
    %v2302 = vsel %vm2291, nan, %v2301
    %2304 = vrot.lane.b32.xlu0 %v2302, 110
    %v2305 = vpop.permute.xlu0 %2304
    %v2307 = vmul.f32 %v2088, %v2305
    %2309 = vrot.lane.b32.xlu0 %v2307, 18
    %v2310 = vpop.permute.xlu0 %2309
    %vm2312 = vcmask 294032
    %2313 = vst.msk [vmem:[#allocation5] sm:$0xff] %vm2312, %v2310
    %v2314 = vld [vmem:[#allocation5] sm:$0x1]
    %v2315 = vld [vmem:[%s5 + $0x518] sm:$0xff]
    %v2316 = vld [vmem:[%s5 + $0x520] sm:$0xff]
    %v2317 = vld [vmem:[%s5 + $0x528] sm:$0xff]
    %v2318 = vld [vmem:[%s5 + $0x530] sm:$0xff]
    %v2319 = vld [vmem:[%s5 + $0x538] sm:$0xf]
    %v2320 = vld [vmem:[#allocation5 + $0x1] sm:$0x1]
    %v2321 = vld [vmem:[%s5 + $0x540] sm:$0xff]
    %v2322 = vld [vmem:[%s5 + $0x548] sm:$0xff]
    %v2323 = vld [vmem:[%s5 + $0x550] sm:$0xff]
    %v2324 = vld [vmem:[%s5 + $0x558] sm:$0xff]
    %v2325 = vld [vmem:[%s5 + $0x560] sm:$0xf]
    %v2327 = vsel %vm2083, %v2320, 0
    %vm2329 = vcmask 1043456
    %v2331 = vsel %vm2329, %v2325, 0
    %2333 = vmatprep.subr.mxu0 0.0
    %2334 = vmatpush1.msra.mxu0 0.0
    %2335 = vmatprep.subr.mxu0 0.0
    %2336 = vmatpush1.msra.mxu0 0.0
    %2337 = vmatprep.subr.mxu0 0.0
    %2338 = vmatpush1.msra.mxu0 0.0
    %2339 = vmatprep.subr.mxu0 0.0
    %2340 = vmatpush1.msra.mxu0 0.0
    %2341 = vmatprep.subr.mxu0 0.0
    %2342 = vmatpush1.msra.mxu0 0.0
    %2343 = vmatprep.subr.mxu0 0.0
    %2344 = vmatpush1.msra.mxu0 0.0
    %2345 = vmatprep.subr.mxu0 0.0
    %2346 = vmatpush1.msra.mxu0 0.0
    %2347 = vmatprep.subr.mxu0 0.0
    %2348 = vmatpush1.msra.mxu0 0.0
    %2349 = vmatprep.subr.mxu0 0.0
    %2350 = vmatpush1.msra.mxu0 0.0
    %2351 = vmatprep.subr.mxu0 0.0
    %2352 = vmatpush1.msra.mxu0 0.0
    %2353 = vmatprep.subr.mxu0 0.0
    %2354 = vmatpush1.msra.mxu0 0.0
    %2355 = vmatprep.subr.mxu0 0.0
    %2356 = vmatpush1.msra.mxu0 %v2331
    %2357 = vmatprep.subr.mxu0 0.0
    %2358 = vmatpush1.msra.mxu0 %v2324
    %2359 = vmatprep.subr.mxu0 0.0
    %2360 = vmatpush1.msra.mxu0 %v2323
    %2361 = vmatprep.subr.mxu0 0.0
    %2362 = vmatpush1.msra.mxu0 %v2322
    %2363 = vmatprep.subr.mxu0 0.0
    %2364 = vmatpush1.msra.mxu0 %v2321
    %2365 = vmatprep.subr.mxu0 0.0
    %2366 = vmatpush2.msra.mxu0 0.0
    %2367 = vmatprep.subr.mxu0 0.0
    %2368 = vmatpush2.msra.mxu0 0.0
    %2369 = vmatprep.subr.mxu0 0.0
    %2370 = vmatpush2.msra.mxu0 0.0
    %2371 = vmatprep.subr.mxu0 0.0
    %2372 = vmatpush2.msra.mxu0 0.0
    %2373 = vmatprep.subr.mxu0 0.0
    %2374 = vmatpush2.msra.mxu0 0.0
    %2375 = vmatprep.subr.mxu0 0.0
    %2376 = vmatpush2.msra.mxu0 0.0
    %2377 = vmatprep.subr.mxu0 0.0
    %2378 = vmatpush2.msra.mxu0 0.0
    %2379 = vmatprep.subr.mxu0 0.0
    %2380 = vmatpush2.msra.mxu0 0.0
    %2381 = vmatprep.subr.mxu0 0.0
    %2382 = vmatpush2.msra.mxu0 0.0
    %2383 = vmatprep.subr.mxu0 0.0
    %2384 = vmatpush2.msra.mxu0 0.0
    %2385 = vmatprep.subr.mxu0 0.0
    %2386 = vmatpush2.msra.mxu0 0.0
    %2387 = vmatprep.subr.mxu0 0.0
    %2388 = vmatpush2.msra.mxu0 0.0
    %2389 = vmatprep.subr.mxu0 0.0
    %2390 = vmatpush2.msra.mxu0 0.0
    %2391 = vmatprep.subr.mxu0 0.0
    %2392 = vmatpush2.msra.mxu0 0.0
    %2393 = vmatprep.subr.mxu0 0.0
    %2394 = vmatpush2.msra.mxu0 0.0
    %2395 = vmatprep.subr.mxu0 0.0
    %2396 = vmatpush2.msra.mxu0 0.0
    %2397 = vmatprep.mubr.f32.mxu0 0.0
    %2398 = vmatmul.mubr.f32.gmra.mxu0 %v2327
    %v2399 = vpop.f32.mrf.mxu0
    %v2400 = vadd.f32 0.0, %v2399
    %v2401 = vpop.f32.mrf.mxu0
    %2402 = vdwg.mxu0
    %v2404 = vsel %vm2083, %v2314, 0
    %v2407 = vsel %vm2329, %v2319, 0
    %2409 = vmatprep.subr.mxu0 0.0
    %2410 = vmatpush1.msra.mxu0 0.0
    %2411 = vmatprep.subr.mxu0 0.0
    %2412 = vmatpush1.msra.mxu0 0.0
    %2413 = vmatprep.subr.mxu0 0.0
    %2414 = vmatpush1.msra.mxu0 0.0
    %2415 = vmatprep.subr.mxu0 0.0
    %2416 = vmatpush1.msra.mxu0 0.0
    %2417 = vmatprep.subr.mxu0 0.0
    %2418 = vmatpush1.msra.mxu0 0.0
    %2419 = vmatprep.subr.mxu0 0.0
    %2420 = vmatpush1.msra.mxu0 0.0
    %2421 = vmatprep.subr.mxu0 0.0
    %2422 = vmatpush1.msra.mxu0 0.0
    %2423 = vmatprep.subr.mxu0 0.0
    %2424 = vmatpush1.msra.mxu0 0.0
    %2425 = vmatprep.subr.mxu0 0.0
    %2426 = vmatpush1.msra.mxu0 0.0
    %2427 = vmatprep.subr.mxu0 0.0
    %2428 = vmatpush1.msra.mxu0 0.0
    %2429 = vmatprep.subr.mxu0 0.0
    %2430 = vmatpush1.msra.mxu0 0.0
    %2431 = vmatprep.subr.mxu0 0.0
    %2432 = vmatpush1.msra.mxu0 %v2407
    %2433 = vmatprep.subr.mxu0 0.0
    %2434 = vmatpush1.msra.mxu0 %v2318
    %2435 = vmatprep.subr.mxu0 0.0
    %2436 = vmatpush1.msra.mxu0 %v2317
    %2437 = vmatprep.subr.mxu0 0.0
    %2438 = vmatpush1.msra.mxu0 %v2316
    %2439 = vmatprep.subr.mxu0 0.0
    %2440 = vmatpush1.msra.mxu0 %v2315
    %2441 = vmatprep.subr.mxu0 0.0
    %2442 = vmatpush2.msra.mxu0 0.0
    %2443 = vmatprep.subr.mxu0 0.0
    %2444 = vmatpush2.msra.mxu0 0.0
    %2445 = vmatprep.subr.mxu0 0.0
    %2446 = vmatpush2.msra.mxu0 0.0
    %2447 = vmatprep.subr.mxu0 0.0
    %2448 = vmatpush2.msra.mxu0 0.0
    %2449 = vmatprep.subr.mxu0 0.0
    %2450 = vmatpush2.msra.mxu0 0.0
    %2451 = vmatprep.subr.mxu0 0.0
    %2452 = vmatpush2.msra.mxu0 0.0
    %2453 = vmatprep.subr.mxu0 0.0
    %2454 = vmatpush2.msra.mxu0 0.0
    %2455 = vmatprep.subr.mxu0 0.0
    %2456 = vmatpush2.msra.mxu0 0.0
    %2457 = vmatprep.subr.mxu0 0.0
    %2458 = vmatpush2.msra.mxu0 0.0
    %2459 = vmatprep.subr.mxu0 0.0
    %2460 = vmatpush2.msra.mxu0 0.0
    %2461 = vmatprep.subr.mxu0 0.0
    %2462 = vmatpush2.msra.mxu0 0.0
    %2463 = vmatprep.subr.mxu0 0.0
    %2464 = vmatpush2.msra.mxu0 0.0
    %2465 = vmatprep.subr.mxu0 0.0
    %2466 = vmatpush2.msra.mxu0 0.0
    %2467 = vmatprep.subr.mxu0 0.0
    %2468 = vmatpush2.msra.mxu0 0.0
    %2469 = vmatprep.subr.mxu0 0.0
    %2470 = vmatpush2.msra.mxu0 0.0
    %2471 = vmatprep.subr.mxu0 0.0
    %2472 = vmatpush2.msra.mxu0 0.0
    %2473 = vmatprep.mubr.f32.mxu0 0.0
    %2474 = vmatmul.mubr.f32.gmra.mxu0 %v2404
    %v2475 = vpop.f32.mrf.mxu0
    %v2476 = vadd.f32 %v2400, %v2475
    %v2477 = vpop.f32.mrf.mxu0
    %2478 = vdwg.mxu0
    %v2479 = vld [vmem:[#allocation5 + $0x2] sm:$0x1]
    %v2480 = vld [vmem:[%s5 + $0x568] sm:$0xff]
    %v2481 = vld [vmem:[%s5 + $0x570] sm:$0xff]
    %v2482 = vld [vmem:[%s5 + $0x578] sm:$0xff]
    %v2483 = vld [vmem:[%s5 + $0x580] sm:$0xff]
    %v2484 = vld [vmem:[%s5 + $0x588] sm:$0xf]
    %v2486 = vsel %vm2083, %v2479, 0
    %v2489 = vsel %vm2329, %v2484, 0
    %2491 = vmatprep.subr.mxu0 0.0
    %2492 = vmatpush1.msra.mxu0 0.0
    %2493 = vmatprep.subr.mxu0 0.0
    %2494 = vmatpush1.msra.mxu0 0.0
    %2495 = vmatprep.subr.mxu0 0.0
    %2496 = vmatpush1.msra.mxu0 0.0
    %2497 = vmatprep.subr.mxu0 0.0
    %2498 = vmatpush1.msra.mxu0 0.0
    %2499 = vmatprep.subr.mxu0 0.0
    %2500 = vmatpush1.msra.mxu0 0.0
    %2501 = vmatprep.subr.mxu0 0.0
    %2502 = vmatpush1.msra.mxu0 0.0
    %2503 = vmatprep.subr.mxu0 0.0
    %2504 = vmatpush1.msra.mxu0 0.0
    %2505 = vmatprep.subr.mxu0 0.0
    %2506 = vmatpush1.msra.mxu0 0.0
    %2507 = vmatprep.subr.mxu0 0.0
    %2508 = vmatpush1.msra.mxu0 0.0
    %2509 = vmatprep.subr.mxu0 0.0
    %2510 = vmatpush1.msra.mxu0 0.0
    %2511 = vmatprep.subr.mxu0 0.0
    %2512 = vmatpush1.msra.mxu0 0.0
    %2513 = vmatprep.subr.mxu0 0.0
    %2514 = vmatpush1.msra.mxu0 %v2489
    %2515 = vmatprep.subr.mxu0 0.0
    %2516 = vmatpush1.msra.mxu0 %v2483
    %2517 = vmatprep.subr.mxu0 0.0
    %2518 = vmatpush1.msra.mxu0 %v2482
    %2519 = vmatprep.subr.mxu0 0.0
    %2520 = vmatpush1.msra.mxu0 %v2481
    %2521 = vmatprep.subr.mxu0 0.0
    %2522 = vmatpush1.msra.mxu0 %v2480
    %2523 = vmatprep.subr.mxu0 0.0
    %2524 = vmatpush2.msra.mxu0 0.0
    %2525 = vmatprep.subr.mxu0 0.0
    %2526 = vmatpush2.msra.mxu0 0.0
    %2527 = vmatprep.subr.mxu0 0.0
    %2528 = vmatpush2.msra.mxu0 0.0
    %2529 = vmatprep.subr.mxu0 0.0
    %2530 = vmatpush2.msra.mxu0 0.0
    %2531 = vmatprep.subr.mxu0 0.0
    %2532 = vmatpush2.msra.mxu0 0.0
    %2533 = vmatprep.subr.mxu0 0.0
    %2534 = vmatpush2.msra.mxu0 0.0
    %2535 = vmatprep.subr.mxu0 0.0
    %2536 = vmatpush2.msra.mxu0 0.0
    %2537 = vmatprep.subr.mxu0 0.0
    %2538 = vmatpush2.msra.mxu0 0.0
    %2539 = vmatprep.subr.mxu0 0.0
    %2540 = vmatpush2.msra.mxu0 0.0
    %2541 = vmatprep.subr.mxu0 0.0
    %2542 = vmatpush2.msra.mxu0 0.0
    %2543 = vmatprep.subr.mxu0 0.0
    %2544 = vmatpush2.msra.mxu0 0.0
    %2545 = vmatprep.subr.mxu0 0.0
    %2546 = vmatpush2.msra.mxu0 0.0
    %2547 = vmatprep.subr.mxu0 0.0
    %2548 = vmatpush2.msra.mxu0 0.0
    %2549 = vmatprep.subr.mxu0 0.0
    %2550 = vmatpush2.msra.mxu0 0.0
    %2551 = vmatprep.subr.mxu0 0.0
    %2552 = vmatpush2.msra.mxu0 0.0
    %2553 = vmatprep.subr.mxu0 0.0
    %2554 = vmatpush2.msra.mxu0 0.0
    %2555 = vmatprep.mubr.f32.mxu0 0.0
    %2556 = vmatmul.mubr.f32.gmra.mxu0 %v2486
    %v2557 = vpop.f32.mrf.mxu0
    %v2558 = vadd.f32 0.0, %v2557
    %v2559 = vpop.f32.mrf.mxu0
    %2560 = vdwg.mxu0
    %v2561 = vadd.f32 %v2476, %v2558
    %v2562 = vld [vmem:[#allocation5 + $0x3] sm:$0x1]
    %v2563 = vld [vmem:[%s5 + $0x590] sm:$0xff]
    %v2564 = vld [vmem:[%s5 + $0x598] sm:$0xff]
    %v2565 = vld [vmem:[%s5 + $0x5a0] sm:$0xff]
    %v2566 = vld [vmem:[%s5 + $0x5a8] sm:$0xff]
    %v2567 = vld [vmem:[%s5 + $0x5b0] sm:$0xf]
    %v2569 = vsel %vm2083, %v2562, 0
    %v2572 = vsel %vm2329, %v2567, 0
    %2574 = vmatprep.subr.mxu0 0.0
    %2575 = vmatpush1.msra.mxu0 0.0
    %2576 = vmatprep.subr.mxu0 0.0
    %2577 = vmatpush1.msra.mxu0 0.0
    %2578 = vmatprep.subr.mxu0 0.0
    %2579 = vmatpush1.msra.mxu0 0.0
    %2580 = vmatprep.subr.mxu0 0.0
    %2581 = vmatpush1.msra.mxu0 0.0
    %2582 = vmatprep.subr.mxu0 0.0
    %2583 = vmatpush1.msra.mxu0 0.0
    %2584 = vmatprep.subr.mxu0 0.0
    %2585 = vmatpush1.msra.mxu0 0.0
    %2586 = vmatprep.subr.mxu0 0.0
    %2587 = vmatpush1.msra.mxu0 0.0
    %2588 = vmatprep.subr.mxu0 0.0
    %2589 = vmatpush1.msra.mxu0 0.0
    %2590 = vmatprep.subr.mxu0 0.0
    %2591 = vmatpush1.msra.mxu0 0.0
    %2592 = vmatprep.subr.mxu0 0.0
    %2593 = vmatpush1.msra.mxu0 0.0
    %2594 = vmatprep.subr.mxu0 0.0
    %2595 = vmatpush1.msra.mxu0 0.0
    %2596 = vmatprep.subr.mxu0 0.0
    %2597 = vmatpush1.msra.mxu0 %v2572
    %2598 = vmatprep.subr.mxu0 0.0
    %2599 = vmatpush1.msra.mxu0 %v2566
    %2600 = vmatprep.subr.mxu0 0.0
    %2601 = vmatpush1.msra.mxu0 %v2565
    %2602 = vmatprep.subr.mxu0 0.0
    %2603 = vmatpush1.msra.mxu0 %v2564
    %2604 = vmatprep.subr.mxu0 0.0
    %2605 = vmatpush1.msra.mxu0 %v2563
    %2606 = vmatprep.subr.mxu0 0.0
    %2607 = vmatpush2.msra.mxu0 0.0
    %2608 = vmatprep.subr.mxu0 0.0
    %2609 = vmatpush2.msra.mxu0 0.0
    %2610 = vmatprep.subr.mxu0 0.0
    %2611 = vmatpush2.msra.mxu0 0.0
    %2612 = vmatprep.subr.mxu0 0.0
    %2613 = vmatpush2.msra.mxu0 0.0
    %2614 = vmatprep.subr.mxu0 0.0
    %2615 = vmatpush2.msra.mxu0 0.0
    %2616 = vmatprep.subr.mxu0 0.0
    %2617 = vmatpush2.msra.mxu0 0.0
    %2618 = vmatprep.subr.mxu0 0.0
    %2619 = vmatpush2.msra.mxu0 0.0
    %2620 = vmatprep.subr.mxu0 0.0
    %2621 = vmatpush2.msra.mxu0 0.0
    %2622 = vmatprep.subr.mxu0 0.0
    %2623 = vmatpush2.msra.mxu0 0.0
    %2624 = vmatprep.subr.mxu0 0.0
    %2625 = vmatpush2.msra.mxu0 0.0
    %2626 = vmatprep.subr.mxu0 0.0
    %2627 = vmatpush2.msra.mxu0 0.0
    %2628 = vmatprep.subr.mxu0 0.0
    %2629 = vmatpush2.msra.mxu0 0.0
    %2630 = vmatprep.subr.mxu0 0.0
    %2631 = vmatpush2.msra.mxu0 0.0
    %2632 = vmatprep.subr.mxu0 0.0
    %2633 = vmatpush2.msra.mxu0 0.0
    %2634 = vmatprep.subr.mxu0 0.0
    %2635 = vmatpush2.msra.mxu0 0.0
    %2636 = vmatprep.subr.mxu0 0.0
    %2637 = vmatpush2.msra.mxu0 0.0
    %2638 = vmatprep.mubr.f32.mxu0 0.0
    %2639 = vmatmul.mubr.f32.gmra.mxu0 %v2569
    %v2640 = vpop.f32.mrf.mxu0
    %v2641 = vadd.f32 0.0, %v2640
    %v2642 = vpop.f32.mrf.mxu0
    %2643 = vdwg.mxu0
    %v2644 = vadd.f32 %v2561, %v2641
    %v2645 = vld [vmem:[#allocation5 + $0x4] sm:$0x1]
    %v2646 = vld [vmem:[%s5 + $0x5b8] sm:$0xff]
    %v2647 = vld [vmem:[%s5 + $0x5c0] sm:$0xff]
    %v2648 = vld [vmem:[%s5 + $0x5c8] sm:$0xff]
    %v2649 = vld [vmem:[%s5 + $0x5d0] sm:$0xff]
    %v2650 = vld [vmem:[%s5 + $0x5d8] sm:$0xf]
    %v2652 = vsel %vm2083, %v2645, 0
    %v2655 = vsel %vm2329, %v2650, 0
    %2657 = vmatprep.subr.mxu0 0.0
    %2658 = vmatpush1.msra.mxu0 0.0
    %2659 = vmatprep.subr.mxu0 0.0
    %2660 = vmatpush1.msra.mxu0 0.0
    %2661 = vmatprep.subr.mxu0 0.0
    %2662 = vmatpush1.msra.mxu0 0.0
    %2663 = vmatprep.subr.mxu0 0.0
    %2664 = vmatpush1.msra.mxu0 0.0
    %2665 = vmatprep.subr.mxu0 0.0
    %2666 = vmatpush1.msra.mxu0 0.0
    %2667 = vmatprep.subr.mxu0 0.0
    %2668 = vmatpush1.msra.mxu0 0.0
    %2669 = vmatprep.subr.mxu0 0.0
    %2670 = vmatpush1.msra.mxu0 0.0
    %2671 = vmatprep.subr.mxu0 0.0
    %2672 = vmatpush1.msra.mxu0 0.0
    %2673 = vmatprep.subr.mxu0 0.0
    %2674 = vmatpush1.msra.mxu0 0.0
    %2675 = vmatprep.subr.mxu0 0.0
    %2676 = vmatpush1.msra.mxu0 0.0
    %2677 = vmatprep.subr.mxu0 0.0
    %2678 = vmatpush1.msra.mxu0 0.0
    %2679 = vmatprep.subr.mxu0 0.0
    %2680 = vmatpush1.msra.mxu0 %v2655
    %2681 = vmatprep.subr.mxu0 0.0
    %2682 = vmatpush1.msra.mxu0 %v2649
    %2683 = vmatprep.subr.mxu0 0.0
    %2684 = vmatpush1.msra.mxu0 %v2648
    %2685 = vmatprep.subr.mxu0 0.0
    %2686 = vmatpush1.msra.mxu0 %v2647
    %2687 = vmatprep.subr.mxu0 0.0
    %2688 = vmatpush1.msra.mxu0 %v2646
    %2689 = vmatprep.subr.mxu0 0.0
    %2690 = vmatpush2.msra.mxu0 0.0
    %2691 = vmatprep.subr.mxu0 0.0
    %2692 = vmatpush2.msra.mxu0 0.0
    %2693 = vmatprep.subr.mxu0 0.0
    %2694 = vmatpush2.msra.mxu0 0.0
    %2695 = vmatprep.subr.mxu0 0.0
    %2696 = vmatpush2.msra.mxu0 0.0
    %2697 = vmatprep.subr.mxu0 0.0
    %2698 = vmatpush2.msra.mxu0 0.0
    %2699 = vmatprep.subr.mxu0 0.0
    %2700 = vmatpush2.msra.mxu0 0.0
    %2701 = vmatprep.subr.mxu0 0.0
    %2702 = vmatpush2.msra.mxu0 0.0
    %2703 = vmatprep.subr.mxu0 0.0
    %2704 = vmatpush2.msra.mxu0 0.0
    %2705 = vmatprep.subr.mxu0 0.0
    %2706 = vmatpush2.msra.mxu0 0.0
    %2707 = vmatprep.subr.mxu0 0.0
    %2708 = vmatpush2.msra.mxu0 0.0
    %2709 = vmatprep.subr.mxu0 0.0
    %2710 = vmatpush2.msra.mxu0 0.0
    %2711 = vmatprep.subr.mxu0 0.0
    %2712 = vmatpush2.msra.mxu0 0.0
    %2713 = vmatprep.subr.mxu0 0.0
    %2714 = vmatpush2.msra.mxu0 0.0
    %2715 = vmatprep.subr.mxu0 0.0
    %2716 = vmatpush2.msra.mxu0 0.0
    %2717 = vmatprep.subr.mxu0 0.0
    %2718 = vmatpush2.msra.mxu0 0.0
    %2719 = vmatprep.subr.mxu0 0.0
    %2720 = vmatpush2.msra.mxu0 0.0
    %2721 = vmatprep.mubr.f32.mxu0 0.0
    %2722 = vmatmul.mubr.f32.gmra.mxu0 %v2652
    %v2723 = vpop.f32.mrf.mxu0
    %v2724 = vadd.f32 0.0, %v2723
    %v2725 = vpop.f32.mrf.mxu0
    %2726 = vdwg.mxu0
    %v2727 = vadd.f32 %v2644, %v2724
    %v2728 = vld [vmem:[#allocation5 + $0x5] sm:$0x1]
    %v2729 = vld [vmem:[%s5 + $0x5e0] sm:$0xff]
    %v2730 = vld [vmem:[%s5 + $0x5e8] sm:$0xff]
    %v2731 = vld [vmem:[%s5 + $0x5f0] sm:$0xff]
    %v2732 = vld [vmem:[%s5 + $0x5f8] sm:$0xff]
    %v2733 = vld [vmem:[%s5 + $0x600] sm:$0xf]
    %v2735 = vsel %vm2083, %v2728, 0
    %v2738 = vsel %vm2329, %v2733, 0
    %2740 = vmatprep.subr.mxu0 0.0
    %2741 = vmatpush1.msra.mxu0 0.0
    %2742 = vmatprep.subr.mxu0 0.0
    %2743 = vmatpush1.msra.mxu0 0.0
    %2744 = vmatprep.subr.mxu0 0.0
    %2745 = vmatpush1.msra.mxu0 0.0
    %2746 = vmatprep.subr.mxu0 0.0
    %2747 = vmatpush1.msra.mxu0 0.0
    %2748 = vmatprep.subr.mxu0 0.0
    %2749 = vmatpush1.msra.mxu0 0.0
    %2750 = vmatprep.subr.mxu0 0.0
    %2751 = vmatpush1.msra.mxu0 0.0
    %2752 = vmatprep.subr.mxu0 0.0
    %2753 = vmatpush1.msra.mxu0 0.0
    %2754 = vmatprep.subr.mxu0 0.0
    %2755 = vmatpush1.msra.mxu0 0.0
    %2756 = vmatprep.subr.mxu0 0.0
    %2757 = vmatpush1.msra.mxu0 0.0
    %2758 = vmatprep.subr.mxu0 0.0
    %2759 = vmatpush1.msra.mxu0 0.0
    %2760 = vmatprep.subr.mxu0 0.0
    %2761 = vmatpush1.msra.mxu0 0.0
    %2762 = vmatprep.subr.mxu0 0.0
    %2763 = vmatpush1.msra.mxu0 %v2738
    %2764 = vmatprep.subr.mxu0 0.0
    %2765 = vmatpush1.msra.mxu0 %v2732
    %2766 = vmatprep.subr.mxu0 0.0
    %2767 = vmatpush1.msra.mxu0 %v2731
    %2768 = vmatprep.subr.mxu0 0.0
    %2769 = vmatpush1.msra.mxu0 %v2730
    %2770 = vmatprep.subr.mxu0 0.0
    %2771 = vmatpush1.msra.mxu0 %v2729
    %2772 = vmatprep.subr.mxu0 0.0
    %2773 = vmatpush2.msra.mxu0 0.0
    %2774 = vmatprep.subr.mxu0 0.0
    %2775 = vmatpush2.msra.mxu0 0.0
    %2776 = vmatprep.subr.mxu0 0.0
    %2777 = vmatpush2.msra.mxu0 0.0
    %2778 = vmatprep.subr.mxu0 0.0
    %2779 = vmatpush2.msra.mxu0 0.0
    %2780 = vmatprep.subr.mxu0 0.0
    %2781 = vmatpush2.msra.mxu0 0.0
    %2782 = vmatprep.subr.mxu0 0.0
    %2783 = vmatpush2.msra.mxu0 0.0
    %2784 = vmatprep.subr.mxu0 0.0
    %2785 = vmatpush2.msra.mxu0 0.0
    %2786 = vmatprep.subr.mxu0 0.0
    %2787 = vmatpush2.msra.mxu0 0.0
    %2788 = vmatprep.subr.mxu0 0.0
    %2789 = vmatpush2.msra.mxu0 0.0
    %2790 = vmatprep.subr.mxu0 0.0
    %2791 = vmatpush2.msra.mxu0 0.0
    %2792 = vmatprep.subr.mxu0 0.0
    %2793 = vmatpush2.msra.mxu0 0.0
    %2794 = vmatprep.subr.mxu0 0.0
    %2795 = vmatpush2.msra.mxu0 0.0
    %2796 = vmatprep.subr.mxu0 0.0
    %2797 = vmatpush2.msra.mxu0 0.0
    %2798 = vmatprep.subr.mxu0 0.0
    %2799 = vmatpush2.msra.mxu0 0.0
    %2800 = vmatprep.subr.mxu0 0.0
    %2801 = vmatpush2.msra.mxu0 0.0
    %2802 = vmatprep.subr.mxu0 0.0
    %2803 = vmatpush2.msra.mxu0 0.0
    %2804 = vmatprep.mubr.f32.mxu0 0.0
    %2805 = vmatmul.mubr.f32.gmra.mxu0 %v2735
    %v2806 = vpop.f32.mrf.mxu0
    %v2807 = vadd.f32 0.0, %v2806
    %v2808 = vpop.f32.mrf.mxu0
    %2809 = vdwg.mxu0
    %v2810 = vadd.f32 %v2727, %v2807
    %v2811 = vld [vmem:[#allocation5 + $0x6] sm:$0x1]
    %v2812 = vld [vmem:[%s5 + $0x608] sm:$0xff]
    %v2813 = vld [vmem:[%s5 + $0x610] sm:$0xff]
    %v2814 = vld [vmem:[%s5 + $0x618] sm:$0xff]
    %v2815 = vld [vmem:[%s5 + $0x620] sm:$0xff]
    %v2816 = vld [vmem:[%s5 + $0x628] sm:$0xf]
    %v2818 = vsel %vm2083, %v2811, 0
    %v2821 = vsel %vm2329, %v2816, 0
    %2823 = vmatprep.subr.mxu0 0.0
    %2824 = vmatpush1.msra.mxu0 0.0
    %2825 = vmatprep.subr.mxu0 0.0
    %2826 = vmatpush1.msra.mxu0 0.0
    %2827 = vmatprep.subr.mxu0 0.0
    %2828 = vmatpush1.msra.mxu0 0.0
    %2829 = vmatprep.subr.mxu0 0.0
    %2830 = vmatpush1.msra.mxu0 0.0
    %2831 = vmatprep.subr.mxu0 0.0
    %2832 = vmatpush1.msra.mxu0 0.0
    %2833 = vmatprep.subr.mxu0 0.0
    %2834 = vmatpush1.msra.mxu0 0.0
    %2835 = vmatprep.subr.mxu0 0.0
    %2836 = vmatpush1.msra.mxu0 0.0
    %2837 = vmatprep.subr.mxu0 0.0
    %2838 = vmatpush1.msra.mxu0 0.0
    %2839 = vmatprep.subr.mxu0 0.0
    %2840 = vmatpush1.msra.mxu0 0.0
    %2841 = vmatprep.subr.mxu0 0.0
    %2842 = vmatpush1.msra.mxu0 0.0
    %2843 = vmatprep.subr.mxu0 0.0
    %2844 = vmatpush1.msra.mxu0 0.0
    %2845 = vmatprep.subr.mxu0 0.0
    %2846 = vmatpush1.msra.mxu0 %v2821
    %2847 = vmatprep.subr.mxu0 0.0
    %2848 = vmatpush1.msra.mxu0 %v2815
    %2849 = vmatprep.subr.mxu0 0.0
    %2850 = vmatpush1.msra.mxu0 %v2814
    %2851 = vmatprep.subr.mxu0 0.0
    %2852 = vmatpush1.msra.mxu0 %v2813
    %2853 = vmatprep.subr.mxu0 0.0
    %2854 = vmatpush1.msra.mxu0 %v2812
    %2855 = vmatprep.subr.mxu0 0.0
    %2856 = vmatpush2.msra.mxu0 0.0
    %2857 = vmatprep.subr.mxu0 0.0
    %2858 = vmatpush2.msra.mxu0 0.0
    %2859 = vmatprep.subr.mxu0 0.0
    %2860 = vmatpush2.msra.mxu0 0.0
    %2861 = vmatprep.subr.mxu0 0.0
    %2862 = vmatpush2.msra.mxu0 0.0
    %2863 = vmatprep.subr.mxu0 0.0
    %2864 = vmatpush2.msra.mxu0 0.0
    %2865 = vmatprep.subr.mxu0 0.0
    %2866 = vmatpush2.msra.mxu0 0.0
    %2867 = vmatprep.subr.mxu0 0.0
    %2868 = vmatpush2.msra.mxu0 0.0
    %2869 = vmatprep.subr.mxu0 0.0
    %2870 = vmatpush2.msra.mxu0 0.0
    %2871 = vmatprep.subr.mxu0 0.0
    %2872 = vmatpush2.msra.mxu0 0.0
    %2873 = vmatprep.subr.mxu0 0.0
    %2874 = vmatpush2.msra.mxu0 0.0
    %2875 = vmatprep.subr.mxu0 0.0
    %2876 = vmatpush2.msra.mxu0 0.0
    %2877 = vmatprep.subr.mxu0 0.0
    %2878 = vmatpush2.msra.mxu0 0.0
    %2879 = vmatprep.subr.mxu0 0.0
    %2880 = vmatpush2.msra.mxu0 0.0
    %2881 = vmatprep.subr.mxu0 0.0
    %2882 = vmatpush2.msra.mxu0 0.0
    %2883 = vmatprep.subr.mxu0 0.0
    %2884 = vmatpush2.msra.mxu0 0.0
    %2885 = vmatprep.subr.mxu0 0.0
    %2886 = vmatpush2.msra.mxu0 0.0
    %2887 = vmatprep.mubr.f32.mxu0 0.0
    %2888 = vmatmul.mubr.f32.gmra.mxu0 %v2818
    %v2889 = vpop.f32.mrf.mxu0
    %v2890 = vadd.f32 0.0, %v2889
    %v2891 = vpop.f32.mrf.mxu0
    %2892 = vdwg.mxu0
    %v2893 = vadd.f32 %v2810, %v2890
    %v2894 = vld [vmem:[#allocation5 + $0x7] sm:$0x1]
    %v2895 = vld [vmem:[%s5 + $0x630] sm:$0xff]
    %v2896 = vld [vmem:[%s5 + $0x638] sm:$0xff]
    %v2897 = vld [vmem:[%s5 + $0x640] sm:$0xff]
    %v2898 = vld [vmem:[%s5 + $0x648] sm:$0xff]
    %v2899 = vld [vmem:[%s5 + $0x650] sm:$0xf]
    %v2901 = vsel %vm2083, %v2894, 0
    %v2904 = vsel %vm2329, %v2899, 0
    %2906 = vmatprep.subr.mxu0 0.0
    %2907 = vmatpush1.msra.mxu0 0.0
    %2908 = vmatprep.subr.mxu0 0.0
    %2909 = vmatpush1.msra.mxu0 0.0
    %2910 = vmatprep.subr.mxu0 0.0
    %2911 = vmatpush1.msra.mxu0 0.0
    %2912 = vmatprep.subr.mxu0 0.0
    %2913 = vmatpush1.msra.mxu0 0.0
    %2914 = vmatprep.subr.mxu0 0.0
    %2915 = vmatpush1.msra.mxu0 0.0
    %2916 = vmatprep.subr.mxu0 0.0
    %2917 = vmatpush1.msra.mxu0 0.0
    %2918 = vmatprep.subr.mxu0 0.0
    %2919 = vmatpush1.msra.mxu0 0.0
    %2920 = vmatprep.subr.mxu0 0.0
    %2921 = vmatpush1.msra.mxu0 0.0
    %2922 = vmatprep.subr.mxu0 0.0
    %2923 = vmatpush1.msra.mxu0 0.0
    %2924 = vmatprep.subr.mxu0 0.0
    %2925 = vmatpush1.msra.mxu0 0.0
    %2926 = vmatprep.subr.mxu0 0.0
    %2927 = vmatpush1.msra.mxu0 0.0
    %2928 = vmatprep.subr.mxu0 0.0
    %2929 = vmatpush1.msra.mxu0 %v2904
    %2930 = vmatprep.subr.mxu0 0.0
    %2931 = vmatpush1.msra.mxu0 %v2898
    %2932 = vmatprep.subr.mxu0 0.0
    %2933 = vmatpush1.msra.mxu0 %v2897
    %2934 = vmatprep.subr.mxu0 0.0
    %2935 = vmatpush1.msra.mxu0 %v2896
    %2936 = vmatprep.subr.mxu0 0.0
    %2937 = vmatpush1.msra.mxu0 %v2895
    %2938 = vmatprep.subr.mxu0 0.0
    %2939 = vmatpush2.msra.mxu0 0.0
    %2940 = vmatprep.subr.mxu0 0.0
    %2941 = vmatpush2.msra.mxu0 0.0
    %2942 = vmatprep.subr.mxu0 0.0
    %2943 = vmatpush2.msra.mxu0 0.0
    %2944 = vmatprep.subr.mxu0 0.0
    %2945 = vmatpush2.msra.mxu0 0.0
    %2946 = vmatprep.subr.mxu0 0.0
    %2947 = vmatpush2.msra.mxu0 0.0
    %2948 = vmatprep.subr.mxu0 0.0
    %2949 = vmatpush2.msra.mxu0 0.0
    %2950 = vmatprep.subr.mxu0 0.0
    %2951 = vmatpush2.msra.mxu0 0.0
    %2952 = vmatprep.subr.mxu0 0.0
    %2953 = vmatpush2.msra.mxu0 0.0
    %2954 = vmatprep.subr.mxu0 0.0
    %2955 = vmatpush2.msra.mxu0 0.0
    %2956 = vmatprep.subr.mxu0 0.0
    %2957 = vmatpush2.msra.mxu0 0.0
    %2958 = vmatprep.subr.mxu0 0.0
    %2959 = vmatpush2.msra.mxu0 0.0
    %2960 = vmatprep.subr.mxu0 0.0
    %2961 = vmatpush2.msra.mxu0 0.0
    %2962 = vmatprep.subr.mxu0 0.0
    %2963 = vmatpush2.msra.mxu0 0.0
    %2964 = vmatprep.subr.mxu0 0.0
    %2965 = vmatpush2.msra.mxu0 0.0
    %2966 = vmatprep.subr.mxu0 0.0
    %2967 = vmatpush2.msra.mxu0 0.0
    %2968 = vmatprep.subr.mxu0 0.0
    %2969 = vmatpush2.msra.mxu0 0.0
    %2970 = vmatprep.mubr.f32.mxu0 0.0
    %2971 = vmatmul.mubr.f32.gmra.mxu0 %v2901
    %v2972 = vpop.f32.mrf.mxu0
    %v2973 = vadd.f32 0.0, %v2972
    %v2974 = vpop.f32.mrf.mxu0
    %2975 = vdwg.mxu0
    %v2976 = vadd.f32 %v2893, %v2973
    %vm2977 = vcmask 581632
    %2978 = vst.msk [vmem:[#allocation6] sm:$0x1] %vm2977, %v2976
    %v2979 = vld [vmem:[#allocation6] sm:$0x1]
    %v2981 = vlaneseq
    %v2982 = vshrl.u32 %v2981, 7
    %v2983 = vsub.s32 0, %v2982
    %v2984 = vrot.slane %v2979, %v2983
    %2986 = vst.msk [vmem:[#allocation7] sm:$0xff] %vm2083, %v2984
    %v2987 = vld [vmem:[#allocation6] sm:$0x1]
    %v2989 = vlaneseq
    %v2990 = vshrl.u32 %v2989, 7
    %v2991 = vsub.s32 0, %v2990
    %v2992 = vrot.slane %v2987, %v2991
    %2993 = vrot.lane.b32.xlu0 %v2992, 92
    %v2994 = vpop.permute.xlu0 %2993
    %2996 = vst.msk [vmem:[#allocation7 + $0x8] sm:$0xff] %vm2083, %v2994
    %v2997 = vld [vmem:[%s5 + $0x850] sm:$0xff]
    %v2998 = vld [vmem:[%s5 + $0x858] sm:$0xff]
    %3000 = vset.pattern.permute.xlu0 0
    %3001 = vperm.xlu0 %3000, %v2997
    %v3002 = vpop.permute.xlu0 %3001
    %3005 = vset.pattern.permute.xlu0 0
    %3006 = vperm.xlu0 %3005, %v2998
    %v3007 = vpop.permute.xlu0 %3006
    %v3009 = vadd.f32 %v3002, 0.0
    %v3010 = vadd.f32 %v3007, 0.0
    %v3011 = vld [vmem:[%s5 + $0x7c0] sm:$0xff]
    %v3012 = vld [vmem:[%s5 + $0x7c8] sm:$0xff]
    %v3013 = vld [vmem:[#allocation7] sm:$0xff]
    %v3014 = vld [vmem:[#allocation7 + $0x8] sm:$0xff]
    %3016 = vset.pattern.permute.xlu0 0
    %3017 = vperm.xlu0 %3016, %v3011
    %v3018 = vpop.permute.xlu0 %3017
    %3021 = vset.pattern.permute.xlu0 0
    %3022 = vperm.xlu0 %3021, %v3012
    %v3023 = vpop.permute.xlu0 %3022
    %v3025 = vmul.f32 %v3018, %v3013
    %v3026 = vmul.f32 %v3023, %v3014
    %v3027 = vadd.f32 %v3009, %v3025
    %v3028 = vadd.f32 %v3010, %v3026
    %v3029 = vld [vmem:[%s5 + $0x7d0] sm:$0xff]
    %v3030 = vld [vmem:[%s5 + $0x7d8] sm:$0xff]
    %3032 = vset.pattern.permute.xlu0 0
    %3033 = vperm.xlu0 %3032, %v3029
    %v3034 = vpop.permute.xlu0 %3033
    %3037 = vset.pattern.permute.xlu0 0
    %3038 = vperm.xlu0 %3037, %v3030
    %v3039 = vpop.permute.xlu0 %3038
    %v3041 = vmul.f32 %v3034, %v3013
    %v3042 = vmul.f32 %v3039, %v3014
    %3045 = vrot.lane.b32.xlu0 %v3041, 127
    %v3046 = vpop.permute.xlu0 %3045
    %3047 = vrot.lane.b32.xlu0 %v3042, 127
    %v3048 = vpop.permute.xlu0 %3047
    %v3051 = vadd.f32 %v3027, %v3046
    %v3052 = vadd.f32 %v3028, %v3048
    %v3053 = vld [vmem:[%s5 + $0x7e0] sm:$0xff]
    %v3054 = vld [vmem:[%s5 + $0x7e8] sm:$0xff]
    %3056 = vset.pattern.permute.xlu0 0
    %3057 = vperm.xlu0 %3056, %v3053
    %v3058 = vpop.permute.xlu0 %3057
    %3061 = vset.pattern.permute.xlu0 0
    %3062 = vperm.xlu0 %3061, %v3054
    %v3063 = vpop.permute.xlu0 %3062
    %v3065 = vmul.f32 %v3058, %v3013
    %v3066 = vmul.f32 %v3063, %v3014
    %3069 = vrot.lane.b32.xlu0 %v3065, 126
    %v3070 = vpop.permute.xlu0 %3069
    %3071 = vrot.lane.b32.xlu0 %v3066, 126
    %v3072 = vpop.permute.xlu0 %3071
    %v3075 = vadd.f32 %v3051, %v3070
    %v3076 = vadd.f32 %v3052, %v3072
    %v3077 = vld [vmem:[%s5 + $0x7f0] sm:$0xff]
    %v3078 = vld [vmem:[%s5 + $0x7f8] sm:$0xff]
    %3080 = vset.pattern.permute.xlu0 0
    %3081 = vperm.xlu0 %3080, %v3077
    %v3082 = vpop.permute.xlu0 %3081
    %3085 = vset.pattern.permute.xlu0 0
    %3086 = vperm.xlu0 %3085, %v3078
    %v3087 = vpop.permute.xlu0 %3086
    %v3089 = vmul.f32 %v3082, %v3013
    %v3090 = vmul.f32 %v3087, %v3014
    %3093 = vrot.lane.b32.xlu0 %v3089, 125
    %v3094 = vpop.permute.xlu0 %3093
    %3095 = vrot.lane.b32.xlu0 %v3090, 125
    %v3096 = vpop.permute.xlu0 %3095
    %v3099 = vadd.f32 %v3075, %v3094
    %v3100 = vadd.f32 %v3076, %v3096
    %v3101 = vld [vmem:[%s5 + $0x800] sm:$0xff]
    %v3102 = vld [vmem:[%s5 + $0x808] sm:$0xff]
    %3104 = vset.pattern.permute.xlu0 0
    %3105 = vperm.xlu0 %3104, %v3101
    %v3106 = vpop.permute.xlu0 %3105
    %3109 = vset.pattern.permute.xlu0 0
    %3110 = vperm.xlu0 %3109, %v3102
    %v3111 = vpop.permute.xlu0 %3110
    %v3113 = vmul.f32 %v3106, %v3013
    %v3114 = vmul.f32 %v3111, %v3014
    %3117 = vrot.lane.b32.xlu0 %v3113, 124
    %v3118 = vpop.permute.xlu0 %3117
    %3119 = vrot.lane.b32.xlu0 %v3114, 124
    %v3120 = vpop.permute.xlu0 %3119
    %v3123 = vadd.f32 %v3099, %v3118
    %v3124 = vadd.f32 %v3100, %v3120
    %v3125 = vld [vmem:[%s5 + $0x810] sm:$0xff]
    %v3126 = vld [vmem:[%s5 + $0x818] sm:$0xff]
    %3128 = vset.pattern.permute.xlu0 0
    %3129 = vperm.xlu0 %3128, %v3125
    %v3130 = vpop.permute.xlu0 %3129
    %3133 = vset.pattern.permute.xlu0 0
    %3134 = vperm.xlu0 %3133, %v3126
    %v3135 = vpop.permute.xlu0 %3134
    %v3137 = vmul.f32 %v3130, %v3013
    %v3138 = vmul.f32 %v3135, %v3014
    %3141 = vrot.lane.b32.xlu0 %v3137, 123
    %v3142 = vpop.permute.xlu0 %3141
    %3143 = vrot.lane.b32.xlu0 %v3138, 123
    %v3144 = vpop.permute.xlu0 %3143
    %v3147 = vadd.f32 %v3123, %v3142
    %v3148 = vadd.f32 %v3124, %v3144
    %v3149 = vld [vmem:[%s5 + $0x820] sm:$0xff]
    %v3150 = vld [vmem:[%s5 + $0x828] sm:$0xff]
    %3152 = vset.pattern.permute.xlu0 0
    %3153 = vperm.xlu0 %3152, %v3149
    %v3154 = vpop.permute.xlu0 %3153
    %3157 = vset.pattern.permute.xlu0 0
    %3158 = vperm.xlu0 %3157, %v3150
    %v3159 = vpop.permute.xlu0 %3158
    %v3161 = vmul.f32 %v3154, %v3013
    %v3162 = vmul.f32 %v3159, %v3014
    %3165 = vrot.lane.b32.xlu0 %v3161, 122
    %v3166 = vpop.permute.xlu0 %3165
    %3167 = vrot.lane.b32.xlu0 %v3162, 122
    %v3168 = vpop.permute.xlu0 %3167
    %v3171 = vadd.f32 %v3147, %v3166
    %v3172 = vadd.f32 %v3148, %v3168
    %v3173 = vld [vmem:[%s5 + $0x830] sm:$0xff]
    %v3174 = vld [vmem:[%s5 + $0x838] sm:$0xff]
    %3176 = vset.pattern.permute.xlu0 0
    %3177 = vperm.xlu0 %3176, %v3173
    %v3178 = vpop.permute.xlu0 %3177
    %3181 = vset.pattern.permute.xlu0 0
    %3182 = vperm.xlu0 %3181, %v3174
    %v3183 = vpop.permute.xlu0 %3182
    %v3185 = vmul.f32 %v3178, %v3013
    %v3186 = vmul.f32 %v3183, %v3014
    %3189 = vrot.lane.b32.xlu0 %v3185, 121
    %v3190 = vpop.permute.xlu0 %3189
    %3191 = vrot.lane.b32.xlu0 %v3186, 121
    %v3192 = vpop.permute.xlu0 %3191
    %v3195 = vadd.f32 %v3171, %v3190
    %v3196 = vadd.f32 %v3172, %v3192
    %v3197 = vld [vmem:[%s5 + $0x840] sm:$0xff]
    %v3198 = vld [vmem:[%s5 + $0x848] sm:$0xff]
    %3200 = vset.pattern.permute.xlu0 0
    %3201 = vperm.xlu0 %3200, %v3197
    %v3202 = vpop.permute.xlu0 %3201
    %3205 = vset.pattern.permute.xlu0 0
    %3206 = vperm.xlu0 %3205, %v3198
    %v3207 = vpop.permute.xlu0 %3206
    %v3209 = vmul.f32 %v3202, %v3013
    %v3210 = vmul.f32 %v3207, %v3014
    %3213 = vrot.lane.b32.xlu0 %v3209, 120
    %v3214 = vpop.permute.xlu0 %3213
    %3215 = vrot.lane.b32.xlu0 %v3210, 120
    %v3216 = vpop.permute.xlu0 %3215
    %v3219 = vadd.f32 %v3195, %v3214
    %v3220 = vadd.f32 %v3196, %v3216
    %v3221 = vld [vmem:[%s5 + $0x860] sm:$0xff]
    %v3222 = vld [vmem:[%s5 + $0x868] sm:$0xff]
    %3224 = vset.pattern.permute.xlu0 0
    %3225 = vperm.xlu0 %3224, %v3221
    %v3226 = vpop.permute.xlu0 %3225
    %3229 = vset.pattern.permute.xlu0 0
    %3230 = vperm.xlu0 %3229, %v3222
    %v3231 = vpop.permute.xlu0 %3230
    %v3233 = vmul.f32 %v3226, %v3219
    %v3234 = vmul.f32 %v3231, %v3220
    %v3235 = vand.u32 2147483647, %v3233
    %vm3236 = vcmp.le.f32.partialorder %v3235, 0.7853982
    %vm3237 = vcmp.lt.s32.totalorder %v3233, 0
    %v3238 = vand.u32 %v3233, 2139095040
    %v3239 = vshrl.u32 %v3238, 23
    %v3240 = vsub.s32 %v3239, 127
    %v3241 = vand.u32 2147483647, %v3233
    %v3242 = vand.u32 %v3241, 8388607
    %v3243 = vor.u32 %v3242, 8388608
    %v3244 = vsub.s32 0, %v3243
    %v3245 = vadd.s32 %v3240, 1
    %vm3246 = vcmp.gt.s32.totalorder %v3245, 0
    %v3247 = vsel %vm3246, %v3245, 0
    %v3248 = vshrl.u32 %v3247, 5
    %v3249 = vand.u32 %v3247, 31
    %v3250 = vsub.s32 32, %v3249
    %v3251 = vshrl.u32 683565275, %v3250
    %v3252 = vshll.u32 683565275, %v3249
    %v3253 = vshrl.u32 2475754826, %v3250
    %v3254 = vor.u32 %v3252, %v3253
    %v3255 = vshll.u32 2475754826, %v3249
    %v3256 = vshrl.u32 2131351028, %v3250
    %v3257 = vor.u32 %v3255, %v3256
    %v3258 = vshll.u32 2131351028, %v3249
    %v3259 = vshrl.u32 2102212464, %v3250
    %v3260 = vor.u32 %v3258, %v3259
    %v3261 = vshll.u32 2102212464, %v3249
    %v3262 = vshrl.u32 920167782, %v3250
    %v3263 = vor.u32 %v3261, %v3262
    %v3264 = vshll.u32 920167782, %v3249
    %v3265 = vshrl.u32 1326507024, %v3250
    %v3266 = vor.u32 %v3264, %v3265
    %vm3267 = vcmp.lt.s32.totalorder %v3248, 1
    %vm3268 = vcmp.lt.s32.totalorder %v3248, 2
    %vm3269 = vcmp.lt.s32.totalorder %v3248, 3
    %vm3270 = vcmp.lt.s32.totalorder %v3248, 4
    %v3271 = vsel %vm3267, %v3251, %v3254
    %v3272 = vsel %vm3270, %v3260, 2102212464
    %v3273 = vsel %vm3269, %v3257, %v3272
    %v3274 = vsel %vm3268, %v3271, %v3273
    %v3275 = vsel %vm3267, %v3254, %v3257
    %v3276 = vsel %vm3270, %v3263, 920167782
    %v3277 = vsel %vm3269, %v3260, %v3276
    %v3278 = vsel %vm3268, %v3275, %v3277
    %v3279 = vsel %vm3267, %v3257, %v3260
    %v3280 = vsel %vm3270, %v3266, 1326507024
    %v3281 = vsel %vm3269, %v3263, %v3280
    %v3282 = vsel %vm3268, %v3279, %v3281
    %v3283 = vshll.u32 %v3243, 8
    %v3284 = vmul.u32.u64.compose %v3283, %v3282
    %v3285 = vextract.low.u32 %v3284
    %v3286 = vextract.high.u32 %v3284
    %v3287 = vmul.u32.u64.compose %v3283, %v3278
    %v3288 = vextract.low.u32 %v3287
    %v3289 = vextract.high.u32 %v3287
    %v3290 = vmul.u32 %v3283, %v3274
    %v3291 = vadd.s32 %v3286, %v3288
    %vm3292 = vc.u32 %v3286, %v3288
    %v3293 = vadd.s32 %v3289, 1
    %v3294 = vsel %vm3292, %v3293, %v3289
    %v3295 = vadd.s32 %v3290, %v3294
    %v3296 = vadd.s32 %v3295, 536870912
    %v3297 = vshrl.u32 %v3296, 30
    %v3298 = vshll.u32 %v3297, 30
    %v3299 = vsub.s32 %v3295, %v3298
    %vm3300 = vcmp.lt.s32.totalorder %v3299, 0
    %v3301 = vsub.s32 0, %v3299
    %v3302 = vsel %vm3300, %v3301, %v3299
    %v3303 = vclz %v3302
    %v3304 = vsub.s32 %v3303, 2
    %vm3305 = vcmp.gt.s32.totalorder 0, %v3304
    %v3306 = vsel %vm3305, 0, %v3304
    %v3307 = vsub.s32 32, %v3306
    %v3308 = vshll.u32 %v3299, %v3306
    %v3309 = vshrl.u32 %v3291, %v3307
    %v3310 = vor.u32 %v3308, %v3309
    %v3311 = vsub.s32 4294967266, %v3306
    %v3312 = vadd.s32 %v3311, 127
    %v3313 = vshll.u32 %v3312, 23
    %v3314 = vor.u32 4788187, %v3313
    %v3315 = vand.u32 2147483647, %v3314
    %v3317 = vcvt.s32.f32 %v3310
    %v3318 = vmul.f32 %v3317, %v3315
    %v3319 = vxor.u32 %v3318, 2147483648
    %v3320 = vsel %vm3237, %v3319, %v3318
    %v3321 = vsub.s32 4, %v3297
    %v3322 = vsel %vm3237, %v3321, %v3297
    %v3323 = vsel %vm3236, %v3233, %v3320
    %v3324 = vsel %vm3236, 0, %v3322
    %v3325 = vcosq.f32.pop %v3323
    %v3326 = vsinq.f32.pop %v3323
    %vm3327 = vweird.f32 %v3233
    %v3328 = vadd.s32 %v3324, 3
    %v3329 = vand.u32 %v3328, 3
    %vm3330 = vcmp.lt.s32.totalorder %v3329, 2
    %vm3331 = vcmp.eq.s32.totalorder %v3329, 0
    %v3332 = vxor.u32 %v3326, 2147483648
    %v3333 = vsel %vm3331, %v3325, %v3332
    %vm3334 = vcmp.eq.s32.totalorder %v3329, 2
    %v3335 = vxor.u32 %v3325, 2147483648
    %v3336 = vsel %vm3334, %v3335, %v3326
    %v3337 = vsel %vm3330, %v3333, %v3336
    %v3338 = vsel %vm3327, nan, %v3337
    %v3339 = vand.u32 2147483647, %v3234
    %vm3340 = vcmp.le.f32.partialorder %v3339, 0.7853982
    %vm3341 = vcmp.lt.s32.totalorder %v3234, 0
    %v3342 = vand.u32 %v3234, 2139095040
    %v3343 = vshrl.u32 %v3342, 23
    %v3344 = vsub.s32 %v3343, 127
    %v3345 = vand.u32 2147483647, %v3234
    %v3346 = vand.u32 %v3345, 8388607
    %v3347 = vor.u32 %v3346, 8388608
    %v3348 = vsub.s32 0, %v3347
    %v3349 = vadd.s32 %v3344, 1
    %vm3350 = vcmp.gt.s32.totalorder %v3349, 0
    %v3351 = vsel %vm3350, %v3349, 0
    %v3352 = vshrl.u32 %v3351, 5
    %v3353 = vand.u32 %v3351, 31
    %v3354 = vsub.s32 32, %v3353
    %v3355 = vshrl.u32 683565275, %v3354
    %v3356 = vshll.u32 683565275, %v3353
    %v3357 = vshrl.u32 2475754826, %v3354
    %v3358 = vor.u32 %v3356, %v3357
    %v3359 = vshll.u32 2475754826, %v3353
    %v3360 = vshrl.u32 2131351028, %v3354
    %v3361 = vor.u32 %v3359, %v3360
    %v3362 = vshll.u32 2131351028, %v3353
    %v3363 = vshrl.u32 2102212464, %v3354
    %v3364 = vor.u32 %v3362, %v3363
    %v3365 = vshll.u32 2102212464, %v3353
    %v3366 = vshrl.u32 920167782, %v3354
    %v3367 = vor.u32 %v3365, %v3366
    %v3368 = vshll.u32 920167782, %v3353
    %v3369 = vshrl.u32 1326507024, %v3354
    %v3370 = vor.u32 %v3368, %v3369
    %vm3371 = vcmp.lt.s32.totalorder %v3352, 1
    %vm3372 = vcmp.lt.s32.totalorder %v3352, 2
    %vm3373 = vcmp.lt.s32.totalorder %v3352, 3
    %vm3374 = vcmp.lt.s32.totalorder %v3352, 4
    %v3375 = vsel %vm3371, %v3355, %v3358
    %v3376 = vsel %vm3374, %v3364, 2102212464
    %v3377 = vsel %vm3373, %v3361, %v3376
    %v3378 = vsel %vm3372, %v3375, %v3377
    %v3379 = vsel %vm3371, %v3358, %v3361
    %v3380 = vsel %vm3374, %v3367, 920167782
    %v3381 = vsel %vm3373, %v3364, %v3380
    %v3382 = vsel %vm3372, %v3379, %v3381
    %v3383 = vsel %vm3371, %v3361, %v3364
    %v3384 = vsel %vm3374, %v3370, 1326507024
    %v3385 = vsel %vm3373, %v3367, %v3384
    %v3386 = vsel %vm3372, %v3383, %v3385
    %v3387 = vshll.u32 %v3347, 8
    %v3388 = vmul.u32.u64.compose %v3387, %v3386
    %v3389 = vextract.low.u32 %v3388
    %v3390 = vextract.high.u32 %v3388
    %v3391 = vmul.u32.u64.compose %v3387, %v3382
    %v3392 = vextract.low.u32 %v3391
    %v3393 = vextract.high.u32 %v3391
    %v3394 = vmul.u32 %v3387, %v3378
    %v3395 = vadd.s32 %v3390, %v3392
    %vm3396 = vc.u32 %v3390, %v3392
    %v3397 = vadd.s32 %v3393, 1
    %v3398 = vsel %vm3396, %v3397, %v3393
    %v3399 = vadd.s32 %v3394, %v3398
    %v3400 = vadd.s32 %v3399, 536870912
    %v3401 = vshrl.u32 %v3400, 30
    %v3402 = vshll.u32 %v3401, 30
    %v3403 = vsub.s32 %v3399, %v3402
    %vm3404 = vcmp.lt.s32.totalorder %v3403, 0
    %v3405 = vsub.s32 0, %v3403
    %v3406 = vsel %vm3404, %v3405, %v3403
    %v3407 = vclz %v3406
    %v3408 = vsub.s32 %v3407, 2
    %vm3409 = vcmp.gt.s32.totalorder 0, %v3408
    %v3410 = vsel %vm3409, 0, %v3408
    %v3411 = vsub.s32 32, %v3410
    %v3412 = vshll.u32 %v3403, %v3410
    %v3413 = vshrl.u32 %v3395, %v3411
    %v3414 = vor.u32 %v3412, %v3413
    %v3415 = vsub.s32 4294967266, %v3410
    %v3416 = vadd.s32 %v3415, 127
    %v3417 = vshll.u32 %v3416, 23
    %v3418 = vor.u32 4788187, %v3417
    %v3419 = vand.u32 2147483647, %v3418
    %v3421 = vcvt.s32.f32 %v3414
    %v3422 = vmul.f32 %v3421, %v3419
    %v3423 = vxor.u32 %v3422, 2147483648
    %v3424 = vsel %vm3341, %v3423, %v3422
    %v3425 = vsub.s32 4, %v3401
    %v3426 = vsel %vm3341, %v3425, %v3401
    %v3427 = vsel %vm3340, %v3234, %v3424
    %v3428 = vsel %vm3340, 0, %v3426
    %v3429 = vcosq.f32.pop %v3427
    %v3430 = vsinq.f32.pop %v3427
    %vm3431 = vweird.f32 %v3234
    %v3432 = vadd.s32 %v3428, 3
    %v3433 = vand.u32 %v3432, 3
    %vm3434 = vcmp.lt.s32.totalorder %v3433, 2
    %vm3435 = vcmp.eq.s32.totalorder %v3433, 0
    %v3436 = vxor.u32 %v3430, 2147483648
    %v3437 = vsel %vm3435, %v3429, %v3436
    %vm3438 = vcmp.eq.s32.totalorder %v3433, 2
    %v3439 = vxor.u32 %v3429, 2147483648
    %v3440 = vsel %vm3438, %v3439, %v3430
    %v3441 = vsel %vm3434, %v3437, %v3440
    %v3442 = vsel %vm3431, nan, %v3441
    %v3443 = vmul.f32 %v3338, %v3338
    %v3444 = vmul.f32 %v3442, %v3442
    %v3445 = vadd.f32 %v3221, 1e-05
    %v3446 = vadd.f32 %v3222, 1e-05
    %3448 = vset.pattern.permute.xlu0 0
    %3449 = vperm.xlu0 %3448, %v3445
    %v3450 = vpop.permute.xlu0 %3449
    %3453 = vset.pattern.permute.xlu0 0
    %3454 = vperm.xlu0 %3453, %v3446
    %v3455 = vpop.permute.xlu0 %3454
    %v3457 = vrcp.pop %v3450
    %v3458 = vmul.f32 %v3443, %v3457
    %v3459 = vrcp.pop %v3455
    %v3460 = vmul.f32 %v3444, %v3459
    %v3461 = vadd.f32 %v3219, %v3458
    %v3462 = vadd.f32 %v3220, %v3460
    %3465 = vrot.lane.b32.xlu0 %v3461, 4
    %v3466 = vpop.permute.xlu0 %3465
    %3467 = vrot.lane.b32.xlu0 %v3462, 4
    %v3468 = vpop.permute.xlu0 %3467
    %vm3471 = vcmask 261152
    %3472 = vst.msk [vmem:[#allocation7] sm:$0xff] %vm3471, %v3466
    %3473 = vst.msk [vmem:[#allocation7 + $0x8] sm:$0xff] %vm3471, %v3468
    %v3474 = vld [vmem:[%s5 + $0x880] sm:$0xff]
    %v3475 = vld [vmem:[%s5 + $0x888] sm:$0xff]
    %3477 = vset.pattern.permute.xlu0 0
    %3478 = vperm.xlu0 %3477, %v3474
    %v3479 = vpop.permute.xlu0 %3478
    %3482 = vset.pattern.permute.xlu0 0
    %3483 = vperm.xlu0 %3482, %v3475
    %v3484 = vpop.permute.xlu0 %3483
    %v3486 = vadd.f32 %v3479, 0.0
    %v3487 = vadd.f32 %v3484, 0.0
    %v3488 = vld [vmem:[%s5 + $0x658] sm:$0xff]
    %v3489 = vld [vmem:[%s5 + $0x660] sm:$0xff]
    %v3490 = vld [vmem:[#allocation7] sm:$0xff]
    %v3491 = vld [vmem:[#allocation7 + $0x8] sm:$0xff]
    %vm3492 = vcmask 130048
    %v3494 = vsel %vm3492, %v3488, 0
    %v3497 = vsel %vm3492, %v3489, 0
    %3499 = vmatprep.subr.mxu0 0.0
    %3500 = vmatpush1.msra.mxu0 0.0
    %3501 = vmatprep.subr.mxu0 0.0
    %3502 = vmatpush1.msra.mxu0 0.0
    %3503 = vmatprep.subr.mxu0 0.0
    %3504 = vmatpush1.msra.mxu0 0.0
    %3505 = vmatprep.subr.mxu0 0.0
    %3506 = vmatpush1.msra.mxu0 0.0
    %3507 = vmatprep.subr.mxu0 0.0
    %3508 = vmatpush1.msra.mxu0 0.0
    %3509 = vmatprep.subr.mxu0 0.0
    %3510 = vmatpush1.msra.mxu0 0.0
    %3511 = vmatprep.subr.mxu0 0.0
    %3512 = vmatpush1.msra.mxu0 0.0
    %3513 = vmatprep.subr.mxu0 0.0
    %3514 = vmatpush1.msra.mxu0 0.0
    %3515 = vmatprep.subr.mxu0 0.0
    %3516 = vmatpush1.msra.mxu0 0.0
    %3517 = vmatprep.subr.mxu0 0.0
    %3518 = vmatpush1.msra.mxu0 0.0
    %3519 = vmatprep.subr.mxu0 0.0
    %3520 = vmatpush1.msra.mxu0 0.0
    %3521 = vmatprep.subr.mxu0 0.0
    %3522 = vmatpush1.msra.mxu0 0.0
    %3523 = vmatprep.subr.mxu0 0.0
    %3524 = vmatpush1.msra.mxu0 0.0
    %3525 = vmatprep.subr.mxu0 0.0
    %3526 = vmatpush1.msra.mxu0 0.0
    %3527 = vmatprep.subr.mxu0 0.0
    %3528 = vmatpush1.msra.mxu0 %v3491
    %3529 = vmatprep.subr.mxu0 0.0
    %3530 = vmatpush1.msra.mxu0 %v3490
    %3531 = vmatprep.subr.mxu0 0.0
    %3532 = vmatpush2.msra.mxu0 0.0
    %3533 = vmatprep.subr.mxu0 0.0
    %3534 = vmatpush2.msra.mxu0 0.0
    %3535 = vmatprep.subr.mxu0 0.0
    %3536 = vmatpush2.msra.mxu0 0.0
    %3537 = vmatprep.subr.mxu0 0.0
    %3538 = vmatpush2.msra.mxu0 0.0
    %3539 = vmatprep.subr.mxu0 0.0
    %3540 = vmatpush2.msra.mxu0 0.0
    %3541 = vmatprep.subr.mxu0 0.0
    %3542 = vmatpush2.msra.mxu0 0.0
    %3543 = vmatprep.subr.mxu0 0.0
    %3544 = vmatpush2.msra.mxu0 0.0
    %3545 = vmatprep.subr.mxu0 0.0
    %3546 = vmatpush2.msra.mxu0 0.0
    %3547 = vmatprep.subr.mxu0 0.0
    %3548 = vmatpush2.msra.mxu0 0.0
    %3549 = vmatprep.subr.mxu0 0.0
    %3550 = vmatpush2.msra.mxu0 0.0
    %3551 = vmatprep.subr.mxu0 0.0
    %3552 = vmatpush2.msra.mxu0 0.0
    %3553 = vmatprep.subr.mxu0 0.0
    %3554 = vmatpush2.msra.mxu0 0.0
    %3555 = vmatprep.subr.mxu0 0.0
    %3556 = vmatpush2.msra.mxu0 0.0
    %3557 = vmatprep.subr.mxu0 0.0
    %3558 = vmatpush2.msra.mxu0 0.0
    %3559 = vmatprep.subr.mxu0 0.0
    %3560 = vmatpush2.msra.mxu0 0.0
    %3561 = vmatprep.subr.mxu0 0.0
    %3562 = vmatpush2.msra.mxu0 0.0
    %3563 = vmatprep.mubr.f32.mxu0 0.0
    %3564 = vmatmul.mubr.f32.gmra.mxu0 %v3494
    %v3565 = vpop.f32.mrf.mxu0
    %v3566 = vadd.f32 0.0, %v3565
    %v3567 = vpop.f32.mrf.mxu0
    %3568 = vmatprep.mubr.f32.mxu0 0.0
    %3569 = vmatmul.mubr.f32.gmra.mxu0 %v3497
    %v3570 = vpop.f32.mrf.mxu0
    %v3571 = vadd.f32 0.0, %v3570
    %v3572 = vpop.f32.mrf.mxu0
    %3573 = vdwg.mxu0
    %v3574 = vadd.f32 %v3486, %v3566
    %v3575 = vadd.f32 %v3487, %v3571
    %v3576 = vld [vmem:[%s5 + $0x668] sm:$0xff]
    %v3577 = vld [vmem:[%s5 + $0x670] sm:$0xff]
    %3580 = vrot.lane.b32.xlu0 %v3490, 127
    %v3581 = vpop.permute.xlu0 %3580
    %3582 = vrot.lane.b32.xlu0 %v3491, 127
    %v3583 = vpop.permute.xlu0 %3582
    %v3587 = vsel %vm3492, %v3576, 0
    %v3590 = vsel %vm3492, %v3577, 0
    %3592 = vmatprep.subr.mxu0 0.0
    %3593 = vmatpush1.msra.mxu0 0.0
    %3594 = vmatprep.subr.mxu0 0.0
    %3595 = vmatpush1.msra.mxu0 0.0
    %3596 = vmatprep.subr.mxu0 0.0
    %3597 = vmatpush1.msra.mxu0 0.0
    %3598 = vmatprep.subr.mxu0 0.0
    %3599 = vmatpush1.msra.mxu0 0.0
    %3600 = vmatprep.subr.mxu0 0.0
    %3601 = vmatpush1.msra.mxu0 0.0
    %3602 = vmatprep.subr.mxu0 0.0
    %3603 = vmatpush1.msra.mxu0 0.0
    %3604 = vmatprep.subr.mxu0 0.0
    %3605 = vmatpush1.msra.mxu0 0.0
    %3606 = vmatprep.subr.mxu0 0.0
    %3607 = vmatpush1.msra.mxu0 0.0
    %3608 = vmatprep.subr.mxu0 0.0
    %3609 = vmatpush1.msra.mxu0 0.0
    %3610 = vmatprep.subr.mxu0 0.0
    %3611 = vmatpush1.msra.mxu0 0.0
    %3612 = vmatprep.subr.mxu0 0.0
    %3613 = vmatpush1.msra.mxu0 0.0
    %3614 = vmatprep.subr.mxu0 0.0
    %3615 = vmatpush1.msra.mxu0 0.0
    %3616 = vmatprep.subr.mxu0 0.0
    %3617 = vmatpush1.msra.mxu0 0.0
    %3618 = vmatprep.subr.mxu0 0.0
    %3619 = vmatpush1.msra.mxu0 0.0
    %3620 = vmatprep.subr.mxu0 0.0
    %3621 = vmatpush1.msra.mxu0 %v3583
    %3622 = vmatprep.subr.mxu0 0.0
    %3623 = vmatpush1.msra.mxu0 %v3581
    %3624 = vmatprep.subr.mxu0 0.0
    %3625 = vmatpush2.msra.mxu0 0.0
    %3626 = vmatprep.subr.mxu0 0.0
    %3627 = vmatpush2.msra.mxu0 0.0
    %3628 = vmatprep.subr.mxu0 0.0
    %3629 = vmatpush2.msra.mxu0 0.0
    %3630 = vmatprep.subr.mxu0 0.0
    %3631 = vmatpush2.msra.mxu0 0.0
    %3632 = vmatprep.subr.mxu0 0.0
    %3633 = vmatpush2.msra.mxu0 0.0
    %3634 = vmatprep.subr.mxu0 0.0
    %3635 = vmatpush2.msra.mxu0 0.0
    %3636 = vmatprep.subr.mxu0 0.0
    %3637 = vmatpush2.msra.mxu0 0.0
    %3638 = vmatprep.subr.mxu0 0.0
    %3639 = vmatpush2.msra.mxu0 0.0
    %3640 = vmatprep.subr.mxu0 0.0
    %3641 = vmatpush2.msra.mxu0 0.0
    %3642 = vmatprep.subr.mxu0 0.0
    %3643 = vmatpush2.msra.mxu0 0.0
    %3644 = vmatprep.subr.mxu0 0.0
    %3645 = vmatpush2.msra.mxu0 0.0
    %3646 = vmatprep.subr.mxu0 0.0
    %3647 = vmatpush2.msra.mxu0 0.0
    %3648 = vmatprep.subr.mxu0 0.0
    %3649 = vmatpush2.msra.mxu0 0.0
    %3650 = vmatprep.subr.mxu0 0.0
    %3651 = vmatpush2.msra.mxu0 0.0
    %3652 = vmatprep.subr.mxu0 0.0
    %3653 = vmatpush2.msra.mxu0 0.0
    %3654 = vmatprep.subr.mxu0 0.0
    %3655 = vmatpush2.msra.mxu0 0.0
    %3656 = vmatprep.mubr.f32.mxu0 0.0
    %3657 = vmatmul.mubr.f32.gmra.mxu0 %v3587
    %v3658 = vpop.f32.mrf.mxu0
    %v3659 = vadd.f32 0.0, %v3658
    %v3660 = vpop.f32.mrf.mxu0
    %3661 = vmatprep.mubr.f32.mxu0 0.0
    %3662 = vmatmul.mubr.f32.gmra.mxu0 %v3590
    %v3663 = vpop.f32.mrf.mxu0
    %v3664 = vadd.f32 0.0, %v3663
    %v3665 = vpop.f32.mrf.mxu0
    %3666 = vdwg.mxu0
    %v3667 = vadd.f32 %v3574, %v3659
    %v3668 = vadd.f32 %v3575, %v3664
    %v3669 = vld [vmem:[%s5 + $0x678] sm:$0xff]
    %v3670 = vld [vmem:[%s5 + $0x680] sm:$0xff]
    %3671 = vrot.lane.b32.xlu0 %v3490, 126
    %v3672 = vpop.permute.xlu0 %3671
    %3673 = vrot.lane.b32.xlu0 %v3491, 126
    %v3674 = vpop.permute.xlu0 %3673
    %v3678 = vsel %vm3492, %v3669, 0
    %v3681 = vsel %vm3492, %v3670, 0
    %3683 = vmatprep.subr.mxu0 0.0
    %3684 = vmatpush1.msra.mxu0 0.0
    %3685 = vmatprep.subr.mxu0 0.0
    %3686 = vmatpush1.msra.mxu0 0.0
    %3687 = vmatprep.subr.mxu0 0.0
    %3688 = vmatpush1.msra.mxu0 0.0
    %3689 = vmatprep.subr.mxu0 0.0
    %3690 = vmatpush1.msra.mxu0 0.0
    %3691 = vmatprep.subr.mxu0 0.0
    %3692 = vmatpush1.msra.mxu0 0.0
    %3693 = vmatprep.subr.mxu0 0.0
    %3694 = vmatpush1.msra.mxu0 0.0
    %3695 = vmatprep.subr.mxu0 0.0
    %3696 = vmatpush1.msra.mxu0 0.0
    %3697 = vmatprep.subr.mxu0 0.0
    %3698 = vmatpush1.msra.mxu0 0.0
    %3699 = vmatprep.subr.mxu0 0.0
    %3700 = vmatpush1.msra.mxu0 0.0
    %3701 = vmatprep.subr.mxu0 0.0
    %3702 = vmatpush1.msra.mxu0 0.0
    %3703 = vmatprep.subr.mxu0 0.0
    %3704 = vmatpush1.msra.mxu0 0.0
    %3705 = vmatprep.subr.mxu0 0.0
    %3706 = vmatpush1.msra.mxu0 0.0
    %3707 = vmatprep.subr.mxu0 0.0
    %3708 = vmatpush1.msra.mxu0 0.0
    %3709 = vmatprep.subr.mxu0 0.0
    %3710 = vmatpush1.msra.mxu0 0.0
    %3711 = vmatprep.subr.mxu0 0.0
    %3712 = vmatpush1.msra.mxu0 %v3674
    %3713 = vmatprep.subr.mxu0 0.0
    %3714 = vmatpush1.msra.mxu0 %v3672
    %3715 = vmatprep.subr.mxu0 0.0
    %3716 = vmatpush2.msra.mxu0 0.0
    %3717 = vmatprep.subr.mxu0 0.0
    %3718 = vmatpush2.msra.mxu0 0.0
    %3719 = vmatprep.subr.mxu0 0.0
    %3720 = vmatpush2.msra.mxu0 0.0
    %3721 = vmatprep.subr.mxu0 0.0
    %3722 = vmatpush2.msra.mxu0 0.0
    %3723 = vmatprep.subr.mxu0 0.0
    %3724 = vmatpush2.msra.mxu0 0.0
    %3725 = vmatprep.subr.mxu0 0.0
    %3726 = vmatpush2.msra.mxu0 0.0
    %3727 = vmatprep.subr.mxu0 0.0
    %3728 = vmatpush2.msra.mxu0 0.0
    %3729 = vmatprep.subr.mxu0 0.0
    %3730 = vmatpush2.msra.mxu0 0.0
    %3731 = vmatprep.subr.mxu0 0.0
    %3732 = vmatpush2.msra.mxu0 0.0
    %3733 = vmatprep.subr.mxu0 0.0
    %3734 = vmatpush2.msra.mxu0 0.0
    %3735 = vmatprep.subr.mxu0 0.0
    %3736 = vmatpush2.msra.mxu0 0.0
    %3737 = vmatprep.subr.mxu0 0.0
    %3738 = vmatpush2.msra.mxu0 0.0
    %3739 = vmatprep.subr.mxu0 0.0
    %3740 = vmatpush2.msra.mxu0 0.0
    %3741 = vmatprep.subr.mxu0 0.0
    %3742 = vmatpush2.msra.mxu0 0.0
    %3743 = vmatprep.subr.mxu0 0.0
    %3744 = vmatpush2.msra.mxu0 0.0
    %3745 = vmatprep.subr.mxu0 0.0
    %3746 = vmatpush2.msra.mxu0 0.0
    %3747 = vmatprep.mubr.f32.mxu0 0.0
    %3748 = vmatmul.mubr.f32.gmra.mxu0 %v3678
    %v3749 = vpop.f32.mrf.mxu0
    %v3750 = vadd.f32 0.0, %v3749
    %v3751 = vpop.f32.mrf.mxu0
    %3752 = vmatprep.mubr.f32.mxu0 0.0
    %3753 = vmatmul.mubr.f32.gmra.mxu0 %v3681
    %v3754 = vpop.f32.mrf.mxu0
    %v3755 = vadd.f32 0.0, %v3754
    %v3756 = vpop.f32.mrf.mxu0
    %3757 = vdwg.mxu0
    %v3758 = vadd.f32 %v3667, %v3750
    %v3759 = vadd.f32 %v3668, %v3755
    %v3760 = vld [vmem:[%s5 + $0x688] sm:$0xff]
    %v3761 = vld [vmem:[%s5 + $0x690] sm:$0xff]
    %3762 = vrot.lane.b32.xlu0 %v3490, 125
    %v3763 = vpop.permute.xlu0 %3762
    %3764 = vrot.lane.b32.xlu0 %v3491, 125
    %v3765 = vpop.permute.xlu0 %3764
    %v3769 = vsel %vm3492, %v3760, 0
    %v3772 = vsel %vm3492, %v3761, 0
    %3774 = vmatprep.subr.mxu0 0.0
    %3775 = vmatpush1.msra.mxu0 0.0
    %3776 = vmatprep.subr.mxu0 0.0
    %3777 = vmatpush1.msra.mxu0 0.0
    %3778 = vmatprep.subr.mxu0 0.0
    %3779 = vmatpush1.msra.mxu0 0.0
    %3780 = vmatprep.subr.mxu0 0.0
    %3781 = vmatpush1.msra.mxu0 0.0
    %3782 = vmatprep.subr.mxu0 0.0
    %3783 = vmatpush1.msra.mxu0 0.0
    %3784 = vmatprep.subr.mxu0 0.0
    %3785 = vmatpush1.msra.mxu0 0.0
    %3786 = vmatprep.subr.mxu0 0.0
    %3787 = vmatpush1.msra.mxu0 0.0
    %3788 = vmatprep.subr.mxu0 0.0
    %3789 = vmatpush1.msra.mxu0 0.0
    %3790 = vmatprep.subr.mxu0 0.0
    %3791 = vmatpush1.msra.mxu0 0.0
    %3792 = vmatprep.subr.mxu0 0.0
    %3793 = vmatpush1.msra.mxu0 0.0
    %3794 = vmatprep.subr.mxu0 0.0
    %3795 = vmatpush1.msra.mxu0 0.0
    %3796 = vmatprep.subr.mxu0 0.0
    %3797 = vmatpush1.msra.mxu0 0.0
    %3798 = vmatprep.subr.mxu0 0.0
    %3799 = vmatpush1.msra.mxu0 0.0
    %3800 = vmatprep.subr.mxu0 0.0
    %3801 = vmatpush1.msra.mxu0 0.0
    %3802 = vmatprep.subr.mxu0 0.0
    %3803 = vmatpush1.msra.mxu0 %v3765
    %3804 = vmatprep.subr.mxu0 0.0
    %3805 = vmatpush1.msra.mxu0 %v3763
    %3806 = vmatprep.subr.mxu0 0.0
    %3807 = vmatpush2.msra.mxu0 0.0
    %3808 = vmatprep.subr.mxu0 0.0
    %3809 = vmatpush2.msra.mxu0 0.0
    %3810 = vmatprep.subr.mxu0 0.0
    %3811 = vmatpush2.msra.mxu0 0.0
    %3812 = vmatprep.subr.mxu0 0.0
    %3813 = vmatpush2.msra.mxu0 0.0
    %3814 = vmatprep.subr.mxu0 0.0
    %3815 = vmatpush2.msra.mxu0 0.0
    %3816 = vmatprep.subr.mxu0 0.0
    %3817 = vmatpush2.msra.mxu0 0.0
    %3818 = vmatprep.subr.mxu0 0.0
    %3819 = vmatpush2.msra.mxu0 0.0
    %3820 = vmatprep.subr.mxu0 0.0
    %3821 = vmatpush2.msra.mxu0 0.0
    %3822 = vmatprep.subr.mxu0 0.0
    %3823 = vmatpush2.msra.mxu0 0.0
    %3824 = vmatprep.subr.mxu0 0.0
    %3825 = vmatpush2.msra.mxu0 0.0
    %3826 = vmatprep.subr.mxu0 0.0
    %3827 = vmatpush2.msra.mxu0 0.0
    %3828 = vmatprep.subr.mxu0 0.0
    %3829 = vmatpush2.msra.mxu0 0.0
    %3830 = vmatprep.subr.mxu0 0.0
    %3831 = vmatpush2.msra.mxu0 0.0
    %3832 = vmatprep.subr.mxu0 0.0
    %3833 = vmatpush2.msra.mxu0 0.0
    %3834 = vmatprep.subr.mxu0 0.0
    %3835 = vmatpush2.msra.mxu0 0.0
    %3836 = vmatprep.subr.mxu0 0.0
    %3837 = vmatpush2.msra.mxu0 0.0
    %3838 = vmatprep.mubr.f32.mxu0 0.0
    %3839 = vmatmul.mubr.f32.gmra.mxu0 %v3769
    %v3840 = vpop.f32.mrf.mxu0
    %v3841 = vadd.f32 0.0, %v3840
    %v3842 = vpop.f32.mrf.mxu0
    %3843 = vmatprep.mubr.f32.mxu0 0.0
    %3844 = vmatmul.mubr.f32.gmra.mxu0 %v3772
    %v3845 = vpop.f32.mrf.mxu0
    %v3846 = vadd.f32 0.0, %v3845
    %v3847 = vpop.f32.mrf.mxu0
    %3848 = vdwg.mxu0
    %v3849 = vadd.f32 %v3758, %v3841
    %v3850 = vadd.f32 %v3759, %v3846
    %v3851 = vld [vmem:[%s5 + $0x698] sm:$0xff]
    %v3852 = vld [vmem:[%s5 + $0x6a0] sm:$0xff]
    %3853 = vrot.lane.b32.xlu0 %v3490, 124
    %v3854 = vpop.permute.xlu0 %3853
    %3855 = vrot.lane.b32.xlu0 %v3491, 124
    %v3856 = vpop.permute.xlu0 %3855
    %v3860 = vsel %vm3492, %v3851, 0
    %v3863 = vsel %vm3492, %v3852, 0
    %3865 = vmatprep.subr.mxu0 0.0
    %3866 = vmatpush1.msra.mxu0 0.0
    %3867 = vmatprep.subr.mxu0 0.0
    %3868 = vmatpush1.msra.mxu0 0.0
    %3869 = vmatprep.subr.mxu0 0.0
    %3870 = vmatpush1.msra.mxu0 0.0
    %3871 = vmatprep.subr.mxu0 0.0
    %3872 = vmatpush1.msra.mxu0 0.0
    %3873 = vmatprep.subr.mxu0 0.0
    %3874 = vmatpush1.msra.mxu0 0.0
    %3875 = vmatprep.subr.mxu0 0.0
    %3876 = vmatpush1.msra.mxu0 0.0
    %3877 = vmatprep.subr.mxu0 0.0
    %3878 = vmatpush1.msra.mxu0 0.0
    %3879 = vmatprep.subr.mxu0 0.0
    %3880 = vmatpush1.msra.mxu0 0.0
    %3881 = vmatprep.subr.mxu0 0.0
    %3882 = vmatpush1.msra.mxu0 0.0
    %3883 = vmatprep.subr.mxu0 0.0
    %3884 = vmatpush1.msra.mxu0 0.0
    %3885 = vmatprep.subr.mxu0 0.0
    %3886 = vmatpush1.msra.mxu0 0.0
    %3887 = vmatprep.subr.mxu0 0.0
    %3888 = vmatpush1.msra.mxu0 0.0
    %3889 = vmatprep.subr.mxu0 0.0
    %3890 = vmatpush1.msra.mxu0 0.0
    %3891 = vmatprep.subr.mxu0 0.0
    %3892 = vmatpush1.msra.mxu0 0.0
    %3893 = vmatprep.subr.mxu0 0.0
    %3894 = vmatpush1.msra.mxu0 %v3856
    %3895 = vmatprep.subr.mxu0 0.0
    %3896 = vmatpush1.msra.mxu0 %v3854
    %3897 = vmatprep.subr.mxu0 0.0
    %3898 = vmatpush2.msra.mxu0 0.0
    %3899 = vmatprep.subr.mxu0 0.0
    %3900 = vmatpush2.msra.mxu0 0.0
    %3901 = vmatprep.subr.mxu0 0.0
    %3902 = vmatpush2.msra.mxu0 0.0
    %3903 = vmatprep.subr.mxu0 0.0
    %3904 = vmatpush2.msra.mxu0 0.0
    %3905 = vmatprep.subr.mxu0 0.0
    %3906 = vmatpush2.msra.mxu0 0.0
    %3907 = vmatprep.subr.mxu0 0.0
    %3908 = vmatpush2.msra.mxu0 0.0
    %3909 = vmatprep.subr.mxu0 0.0
    %3910 = vmatpush2.msra.mxu0 0.0
    %3911 = vmatprep.subr.mxu0 0.0
    %3912 = vmatpush2.msra.mxu0 0.0
    %3913 = vmatprep.subr.mxu0 0.0
    %3914 = vmatpush2.msra.mxu0 0.0
    %3915 = vmatprep.subr.mxu0 0.0
    %3916 = vmatpush2.msra.mxu0 0.0
    %3917 = vmatprep.subr.mxu0 0.0
    %3918 = vmatpush2.msra.mxu0 0.0
    %3919 = vmatprep.subr.mxu0 0.0
    %3920 = vmatpush2.msra.mxu0 0.0
    %3921 = vmatprep.subr.mxu0 0.0
    %3922 = vmatpush2.msra.mxu0 0.0
    %3923 = vmatprep.subr.mxu0 0.0
    %3924 = vmatpush2.msra.mxu0 0.0
    %3925 = vmatprep.subr.mxu0 0.0
    %3926 = vmatpush2.msra.mxu0 0.0
    %3927 = vmatprep.subr.mxu0 0.0
    %3928 = vmatpush2.msra.mxu0 0.0
    %3929 = vmatprep.mubr.f32.mxu0 0.0
    %3930 = vmatmul.mubr.f32.gmra.mxu0 %v3860
    %v3931 = vpop.f32.mrf.mxu0
    %v3932 = vadd.f32 0.0, %v3931
    %v3933 = vpop.f32.mrf.mxu0
    %3934 = vmatprep.mubr.f32.mxu0 0.0
    %3935 = vmatmul.mubr.f32.gmra.mxu0 %v3863
    %v3936 = vpop.f32.mrf.mxu0
    %v3937 = vadd.f32 0.0, %v3936
    %v3938 = vpop.f32.mrf.mxu0
    %3939 = vdwg.mxu0
    %v3940 = vadd.f32 %v3849, %v3932
    %v3941 = vadd.f32 %v3850, %v3937
    %v3942 = vld [vmem:[%s5 + $0x6a8] sm:$0xff]
    %v3943 = vld [vmem:[%s5 + $0x6b0] sm:$0xff]
    %3944 = vrot.lane.b32.xlu0 %v3490, 123
    %v3945 = vpop.permute.xlu0 %3944
    %3946 = vrot.lane.b32.xlu0 %v3491, 123
    %v3947 = vpop.permute.xlu0 %3946
    %v3951 = vsel %vm3492, %v3942, 0
    %v3954 = vsel %vm3492, %v3943, 0
    %3956 = vmatprep.subr.mxu0 0.0
    %3957 = vmatpush1.msra.mxu0 0.0
    %3958 = vmatprep.subr.mxu0 0.0
    %3959 = vmatpush1.msra.mxu0 0.0
    %3960 = vmatprep.subr.mxu0 0.0
    %3961 = vmatpush1.msra.mxu0 0.0
    %3962 = vmatprep.subr.mxu0 0.0
    %3963 = vmatpush1.msra.mxu0 0.0
    %3964 = vmatprep.subr.mxu0 0.0
    %3965 = vmatpush1.msra.mxu0 0.0
    %3966 = vmatprep.subr.mxu0 0.0
    %3967 = vmatpush1.msra.mxu0 0.0
    %3968 = vmatprep.subr.mxu0 0.0
    %3969 = vmatpush1.msra.mxu0 0.0
    %3970 = vmatprep.subr.mxu0 0.0
    %3971 = vmatpush1.msra.mxu0 0.0
    %3972 = vmatprep.subr.mxu0 0.0
    %3973 = vmatpush1.msra.mxu0 0.0
    %3974 = vmatprep.subr.mxu0 0.0
    %3975 = vmatpush1.msra.mxu0 0.0
    %3976 = vmatprep.subr.mxu0 0.0
    %3977 = vmatpush1.msra.mxu0 0.0
    %3978 = vmatprep.subr.mxu0 0.0
    %3979 = vmatpush1.msra.mxu0 0.0
    %3980 = vmatprep.subr.mxu0 0.0
    %3981 = vmatpush1.msra.mxu0 0.0
    %3982 = vmatprep.subr.mxu0 0.0
    %3983 = vmatpush1.msra.mxu0 0.0
    %3984 = vmatprep.subr.mxu0 0.0
    %3985 = vmatpush1.msra.mxu0 %v3947
    %3986 = vmatprep.subr.mxu0 0.0
    %3987 = vmatpush1.msra.mxu0 %v3945
    %3988 = vmatprep.subr.mxu0 0.0
    %3989 = vmatpush2.msra.mxu0 0.0
    %3990 = vmatprep.subr.mxu0 0.0
    %3991 = vmatpush2.msra.mxu0 0.0
    %3992 = vmatprep.subr.mxu0 0.0
    %3993 = vmatpush2.msra.mxu0 0.0
    %3994 = vmatprep.subr.mxu0 0.0
    %3995 = vmatpush2.msra.mxu0 0.0
    %3996 = vmatprep.subr.mxu0 0.0
    %3997 = vmatpush2.msra.mxu0 0.0
    %3998 = vmatprep.subr.mxu0 0.0
    %3999 = vmatpush2.msra.mxu0 0.0
    %4000 = vmatprep.subr.mxu0 0.0
    %4001 = vmatpush2.msra.mxu0 0.0
    %4002 = vmatprep.subr.mxu0 0.0
    %4003 = vmatpush2.msra.mxu0 0.0
    %4004 = vmatprep.subr.mxu0 0.0
    %4005 = vmatpush2.msra.mxu0 0.0
    %4006 = vmatprep.subr.mxu0 0.0
    %4007 = vmatpush2.msra.mxu0 0.0
    %4008 = vmatprep.subr.mxu0 0.0
    %4009 = vmatpush2.msra.mxu0 0.0
    %4010 = vmatprep.subr.mxu0 0.0
    %4011 = vmatpush2.msra.mxu0 0.0
    %4012 = vmatprep.subr.mxu0 0.0
    %4013 = vmatpush2.msra.mxu0 0.0
    %4014 = vmatprep.subr.mxu0 0.0
    %4015 = vmatpush2.msra.mxu0 0.0
    %4016 = vmatprep.subr.mxu0 0.0
    %4017 = vmatpush2.msra.mxu0 0.0
    %4018 = vmatprep.subr.mxu0 0.0
    %4019 = vmatpush2.msra.mxu0 0.0
    %4020 = vmatprep.mubr.f32.mxu0 0.0
    %4021 = vmatmul.mubr.f32.gmra.mxu0 %v3951
    %v4022 = vpop.f32.mrf.mxu0
    %v4023 = vadd.f32 0.0, %v4022
    %v4024 = vpop.f32.mrf.mxu0
    %4025 = vmatprep.mubr.f32.mxu0 0.0
    %4026 = vmatmul.mubr.f32.gmra.mxu0 %v3954
    %v4027 = vpop.f32.mrf.mxu0
    %v4028 = vadd.f32 0.0, %v4027
    %v4029 = vpop.f32.mrf.mxu0
    %4030 = vdwg.mxu0
    %v4031 = vadd.f32 %v3940, %v4023
    %v4032 = vadd.f32 %v3941, %v4028
    %v4033 = vld [vmem:[%s5 + $0x6b8] sm:$0xff]
    %v4034 = vld [vmem:[%s5 + $0x6c0] sm:$0xff]
    %4035 = vrot.lane.b32.xlu0 %v3490, 122
    %v4036 = vpop.permute.xlu0 %4035
    %4037 = vrot.lane.b32.xlu0 %v3491, 122
    %v4038 = vpop.permute.xlu0 %4037
    %v4042 = vsel %vm3492, %v4033, 0
    %v4045 = vsel %vm3492, %v4034, 0
    %4047 = vmatprep.subr.mxu0 0.0
    %4048 = vmatpush1.msra.mxu0 0.0
    %4049 = vmatprep.subr.mxu0 0.0
    %4050 = vmatpush1.msra.mxu0 0.0
    %4051 = vmatprep.subr.mxu0 0.0
    %4052 = vmatpush1.msra.mxu0 0.0
    %4053 = vmatprep.subr.mxu0 0.0
    %4054 = vmatpush1.msra.mxu0 0.0
    %4055 = vmatprep.subr.mxu0 0.0
    %4056 = vmatpush1.msra.mxu0 0.0
    %4057 = vmatprep.subr.mxu0 0.0
    %4058 = vmatpush1.msra.mxu0 0.0
    %4059 = vmatprep.subr.mxu0 0.0
    %4060 = vmatpush1.msra.mxu0 0.0
    %4061 = vmatprep.subr.mxu0 0.0
    %4062 = vmatpush1.msra.mxu0 0.0
    %4063 = vmatprep.subr.mxu0 0.0
    %4064 = vmatpush1.msra.mxu0 0.0
    %4065 = vmatprep.subr.mxu0 0.0
    %4066 = vmatpush1.msra.mxu0 0.0
    %4067 = vmatprep.subr.mxu0 0.0
    %4068 = vmatpush1.msra.mxu0 0.0
    %4069 = vmatprep.subr.mxu0 0.0
    %4070 = vmatpush1.msra.mxu0 0.0
    %4071 = vmatprep.subr.mxu0 0.0
    %4072 = vmatpush1.msra.mxu0 0.0
    %4073 = vmatprep.subr.mxu0 0.0
    %4074 = vmatpush1.msra.mxu0 0.0
    %4075 = vmatprep.subr.mxu0 0.0
    %4076 = vmatpush1.msra.mxu0 %v4038
    %4077 = vmatprep.subr.mxu0 0.0
    %4078 = vmatpush1.msra.mxu0 %v4036
    %4079 = vmatprep.subr.mxu0 0.0
    %4080 = vmatpush2.msra.mxu0 0.0
    %4081 = vmatprep.subr.mxu0 0.0
    %4082 = vmatpush2.msra.mxu0 0.0
    %4083 = vmatprep.subr.mxu0 0.0
    %4084 = vmatpush2.msra.mxu0 0.0
    %4085 = vmatprep.subr.mxu0 0.0
    %4086 = vmatpush2.msra.mxu0 0.0
    %4087 = vmatprep.subr.mxu0 0.0
    %4088 = vmatpush2.msra.mxu0 0.0
    %4089 = vmatprep.subr.mxu0 0.0
    %4090 = vmatpush2.msra.mxu0 0.0
    %4091 = vmatprep.subr.mxu0 0.0
    %4092 = vmatpush2.msra.mxu0 0.0
    %4093 = vmatprep.subr.mxu0 0.0
    %4094 = vmatpush2.msra.mxu0 0.0
    %4095 = vmatprep.subr.mxu0 0.0
    %4096 = vmatpush2.msra.mxu0 0.0
    %4097 = vmatprep.subr.mxu0 0.0
    %4098 = vmatpush2.msra.mxu0 0.0
    %4099 = vmatprep.subr.mxu0 0.0
    %4100 = vmatpush2.msra.mxu0 0.0
    %4101 = vmatprep.subr.mxu0 0.0
    %4102 = vmatpush2.msra.mxu0 0.0
    %4103 = vmatprep.subr.mxu0 0.0
    %4104 = vmatpush2.msra.mxu0 0.0
    %4105 = vmatprep.subr.mxu0 0.0
    %4106 = vmatpush2.msra.mxu0 0.0
    %4107 = vmatprep.subr.mxu0 0.0
    %4108 = vmatpush2.msra.mxu0 0.0
    %4109 = vmatprep.subr.mxu0 0.0
    %4110 = vmatpush2.msra.mxu0 0.0
    %4111 = vmatprep.mubr.f32.mxu0 0.0
    %4112 = vmatmul.mubr.f32.gmra.mxu0 %v4042
    %v4113 = vpop.f32.mrf.mxu0
    %v4114 = vadd.f32 0.0, %v4113
    %v4115 = vpop.f32.mrf.mxu0
    %4116 = vmatprep.mubr.f32.mxu0 0.0
    %4117 = vmatmul.mubr.f32.gmra.mxu0 %v4045
    %v4118 = vpop.f32.mrf.mxu0
    %v4119 = vadd.f32 0.0, %v4118
    %v4120 = vpop.f32.mrf.mxu0
    %4121 = vdwg.mxu0
    %v4122 = vadd.f32 %v4031, %v4114
    %v4123 = vadd.f32 %v4032, %v4119
    %v4124 = vld [vmem:[%s5 + $0x6c8] sm:$0xff]
    %v4125 = vld [vmem:[%s5 + $0x6d0] sm:$0xff]
    %4126 = vrot.lane.b32.xlu0 %v3490, 121
    %v4127 = vpop.permute.xlu0 %4126
    %4128 = vrot.lane.b32.xlu0 %v3491, 121
    %v4129 = vpop.permute.xlu0 %4128
    %v4133 = vsel %vm3492, %v4124, 0
    %v4136 = vsel %vm3492, %v4125, 0
    %4138 = vmatprep.subr.mxu0 0.0
    %4139 = vmatpush1.msra.mxu0 0.0
    %4140 = vmatprep.subr.mxu0 0.0
    %4141 = vmatpush1.msra.mxu0 0.0
    %4142 = vmatprep.subr.mxu0 0.0
    %4143 = vmatpush1.msra.mxu0 0.0
    %4144 = vmatprep.subr.mxu0 0.0
    %4145 = vmatpush1.msra.mxu0 0.0
    %4146 = vmatprep.subr.mxu0 0.0
    %4147 = vmatpush1.msra.mxu0 0.0
    %4148 = vmatprep.subr.mxu0 0.0
    %4149 = vmatpush1.msra.mxu0 0.0
    %4150 = vmatprep.subr.mxu0 0.0
    %4151 = vmatpush1.msra.mxu0 0.0
    %4152 = vmatprep.subr.mxu0 0.0
    %4153 = vmatpush1.msra.mxu0 0.0
    %4154 = vmatprep.subr.mxu0 0.0
    %4155 = vmatpush1.msra.mxu0 0.0
    %4156 = vmatprep.subr.mxu0 0.0
    %4157 = vmatpush1.msra.mxu0 0.0
    %4158 = vmatprep.subr.mxu0 0.0
    %4159 = vmatpush1.msra.mxu0 0.0
    %4160 = vmatprep.subr.mxu0 0.0
    %4161 = vmatpush1.msra.mxu0 0.0
    %4162 = vmatprep.subr.mxu0 0.0
    %4163 = vmatpush1.msra.mxu0 0.0
    %4164 = vmatprep.subr.mxu0 0.0
    %4165 = vmatpush1.msra.mxu0 0.0
    %4166 = vmatprep.subr.mxu0 0.0
    %4167 = vmatpush1.msra.mxu0 %v4129
    %4168 = vmatprep.subr.mxu0 0.0
    %4169 = vmatpush1.msra.mxu0 %v4127
    %4170 = vmatprep.subr.mxu0 0.0
    %4171 = vmatpush2.msra.mxu0 0.0
    %4172 = vmatprep.subr.mxu0 0.0
    %4173 = vmatpush2.msra.mxu0 0.0
    %4174 = vmatprep.subr.mxu0 0.0
    %4175 = vmatpush2.msra.mxu0 0.0
    %4176 = vmatprep.subr.mxu0 0.0
    %4177 = vmatpush2.msra.mxu0 0.0
    %4178 = vmatprep.subr.mxu0 0.0
    %4179 = vmatpush2.msra.mxu0 0.0
    %4180 = vmatprep.subr.mxu0 0.0
    %4181 = vmatpush2.msra.mxu0 0.0
    %4182 = vmatprep.subr.mxu0 0.0
    %4183 = vmatpush2.msra.mxu0 0.0
    %4184 = vmatprep.subr.mxu0 0.0
    %4185 = vmatpush2.msra.mxu0 0.0
    %4186 = vmatprep.subr.mxu0 0.0
    %4187 = vmatpush2.msra.mxu0 0.0
    %4188 = vmatprep.subr.mxu0 0.0
    %4189 = vmatpush2.msra.mxu0 0.0
    %4190 = vmatprep.subr.mxu0 0.0
    %4191 = vmatpush2.msra.mxu0 0.0
    %4192 = vmatprep.subr.mxu0 0.0
    %4193 = vmatpush2.msra.mxu0 0.0
    %4194 = vmatprep.subr.mxu0 0.0
    %4195 = vmatpush2.msra.mxu0 0.0
    %4196 = vmatprep.subr.mxu0 0.0
    %4197 = vmatpush2.msra.mxu0 0.0
    %4198 = vmatprep.subr.mxu0 0.0
    %4199 = vmatpush2.msra.mxu0 0.0
    %4200 = vmatprep.subr.mxu0 0.0
    %4201 = vmatpush2.msra.mxu0 0.0
    %4202 = vmatprep.mubr.f32.mxu0 0.0
    %4203 = vmatmul.mubr.f32.gmra.mxu0 %v4133
    %v4204 = vpop.f32.mrf.mxu0
    %v4205 = vadd.f32 0.0, %v4204
    %v4206 = vpop.f32.mrf.mxu0
    %4207 = vmatprep.mubr.f32.mxu0 0.0
    %4208 = vmatmul.mubr.f32.gmra.mxu0 %v4136
    %v4209 = vpop.f32.mrf.mxu0
    %v4210 = vadd.f32 0.0, %v4209
    %v4211 = vpop.f32.mrf.mxu0
    %4212 = vdwg.mxu0
    %v4213 = vadd.f32 %v4122, %v4205
    %v4214 = vadd.f32 %v4123, %v4210
    %v4215 = vld [vmem:[%s5 + $0x6d8] sm:$0xff]
    %v4216 = vld [vmem:[%s5 + $0x6e0] sm:$0xff]
    %4217 = vrot.lane.b32.xlu0 %v3490, 120
    %v4218 = vpop.permute.xlu0 %4217
    %4219 = vrot.lane.b32.xlu0 %v3491, 120
    %v4220 = vpop.permute.xlu0 %4219
    %v4224 = vsel %vm3492, %v4215, 0
    %v4227 = vsel %vm3492, %v4216, 0
    %4229 = vmatprep.subr.mxu0 0.0
    %4230 = vmatpush1.msra.mxu0 0.0
    %4231 = vmatprep.subr.mxu0 0.0
    %4232 = vmatpush1.msra.mxu0 0.0
    %4233 = vmatprep.subr.mxu0 0.0
    %4234 = vmatpush1.msra.mxu0 0.0
    %4235 = vmatprep.subr.mxu0 0.0
    %4236 = vmatpush1.msra.mxu0 0.0
    %4237 = vmatprep.subr.mxu0 0.0
    %4238 = vmatpush1.msra.mxu0 0.0
    %4239 = vmatprep.subr.mxu0 0.0
    %4240 = vmatpush1.msra.mxu0 0.0
    %4241 = vmatprep.subr.mxu0 0.0
    %4242 = vmatpush1.msra.mxu0 0.0
    %4243 = vmatprep.subr.mxu0 0.0
    %4244 = vmatpush1.msra.mxu0 0.0
    %4245 = vmatprep.subr.mxu0 0.0
    %4246 = vmatpush1.msra.mxu0 0.0
    %4247 = vmatprep.subr.mxu0 0.0
    %4248 = vmatpush1.msra.mxu0 0.0
    %4249 = vmatprep.subr.mxu0 0.0
    %4250 = vmatpush1.msra.mxu0 0.0
    %4251 = vmatprep.subr.mxu0 0.0
    %4252 = vmatpush1.msra.mxu0 0.0
    %4253 = vmatprep.subr.mxu0 0.0
    %4254 = vmatpush1.msra.mxu0 0.0
    %4255 = vmatprep.subr.mxu0 0.0
    %4256 = vmatpush1.msra.mxu0 0.0
    %4257 = vmatprep.subr.mxu0 0.0
    %4258 = vmatpush1.msra.mxu0 %v4220
    %4259 = vmatprep.subr.mxu0 0.0
    %4260 = vmatpush1.msra.mxu0 %v4218
    %4261 = vmatprep.subr.mxu0 0.0
    %4262 = vmatpush2.msra.mxu0 0.0
    %4263 = vmatprep.subr.mxu0 0.0
    %4264 = vmatpush2.msra.mxu0 0.0
    %4265 = vmatprep.subr.mxu0 0.0
    %4266 = vmatpush2.msra.mxu0 0.0
    %4267 = vmatprep.subr.mxu0 0.0
    %4268 = vmatpush2.msra.mxu0 0.0
    %4269 = vmatprep.subr.mxu0 0.0
    %4270 = vmatpush2.msra.mxu0 0.0
    %4271 = vmatprep.subr.mxu0 0.0
    %4272 = vmatpush2.msra.mxu0 0.0
    %4273 = vmatprep.subr.mxu0 0.0
    %4274 = vmatpush2.msra.mxu0 0.0
    %4275 = vmatprep.subr.mxu0 0.0
    %4276 = vmatpush2.msra.mxu0 0.0
    %4277 = vmatprep.subr.mxu0 0.0
    %4278 = vmatpush2.msra.mxu0 0.0
    %4279 = vmatprep.subr.mxu0 0.0
    %4280 = vmatpush2.msra.mxu0 0.0
    %4281 = vmatprep.subr.mxu0 0.0
    %4282 = vmatpush2.msra.mxu0 0.0
    %4283 = vmatprep.subr.mxu0 0.0
    %4284 = vmatpush2.msra.mxu0 0.0
    %4285 = vmatprep.subr.mxu0 0.0
    %4286 = vmatpush2.msra.mxu0 0.0
    %4287 = vmatprep.subr.mxu0 0.0
    %4288 = vmatpush2.msra.mxu0 0.0
    %4289 = vmatprep.subr.mxu0 0.0
    %4290 = vmatpush2.msra.mxu0 0.0
    %4291 = vmatprep.subr.mxu0 0.0
    %4292 = vmatpush2.msra.mxu0 0.0
    %4293 = vmatprep.mubr.f32.mxu0 0.0
    %4294 = vmatmul.mubr.f32.gmra.mxu0 %v4224
    %v4295 = vpop.f32.mrf.mxu0
    %v4296 = vadd.f32 0.0, %v4295
    %v4297 = vpop.f32.mrf.mxu0
    %4298 = vmatprep.mubr.f32.mxu0 0.0
    %4299 = vmatmul.mubr.f32.gmra.mxu0 %v4227
    %v4300 = vpop.f32.mrf.mxu0
    %v4301 = vadd.f32 0.0, %v4300
    %v4302 = vpop.f32.mrf.mxu0
    %4303 = vdwg.mxu0
    %v4304 = vadd.f32 %v4213, %v4296
    %v4305 = vadd.f32 %v4214, %v4301
    %v4306 = vadd.f32 %v3219, %v4304
    %v4307 = vadd.f32 %v3220, %v4305
    %v4308 = vld [vmem:[%s5 + $0x870] sm:$0xff]
    %v4309 = vld [vmem:[%s5 + $0x878] sm:$0xff]
    %4311 = vset.pattern.permute.xlu0 0
    %4312 = vperm.xlu0 %4311, %v4308
    %v4313 = vpop.permute.xlu0 %4312
    %4316 = vset.pattern.permute.xlu0 0
    %4317 = vperm.xlu0 %4316, %v4309
    %v4318 = vpop.permute.xlu0 %4317
    %v4320 = vmul.f32 %v4313, %v4306
    %v4321 = vmul.f32 %v4318, %v4307
    %v4322 = vand.u32 2147483647, %v4320
    %vm4323 = vcmp.le.f32.partialorder %v4322, 0.7853982
    %vm4324 = vcmp.lt.s32.totalorder %v4320, 0
    %v4325 = vand.u32 %v4320, 2139095040
    %v4326 = vshrl.u32 %v4325, 23
    %v4327 = vsub.s32 %v4326, 127
    %v4328 = vand.u32 2147483647, %v4320
    %v4329 = vand.u32 %v4328, 8388607
    %v4330 = vor.u32 %v4329, 8388608
    %v4331 = vsub.s32 0, %v4330
    %v4332 = vadd.s32 %v4327, 1
    %vm4333 = vcmp.gt.s32.totalorder %v4332, 0
    %v4334 = vsel %vm4333, %v4332, 0
    %v4335 = vshrl.u32 %v4334, 5
    %v4336 = vand.u32 %v4334, 31
    %v4337 = vsub.s32 32, %v4336
    %v4338 = vshrl.u32 683565275, %v4337
    %v4339 = vshll.u32 683565275, %v4336
    %v4340 = vshrl.u32 2475754826, %v4337
    %v4341 = vor.u32 %v4339, %v4340
    %v4342 = vshll.u32 2475754826, %v4336
    %v4343 = vshrl.u32 2131351028, %v4337
    %v4344 = vor.u32 %v4342, %v4343
    %v4345 = vshll.u32 2131351028, %v4336
    %v4346 = vshrl.u32 2102212464, %v4337
    %v4347 = vor.u32 %v4345, %v4346
    %v4348 = vshll.u32 2102212464, %v4336
    %v4349 = vshrl.u32 920167782, %v4337
    %v4350 = vor.u32 %v4348, %v4349
    %v4351 = vshll.u32 920167782, %v4336
    %v4352 = vshrl.u32 1326507024, %v4337
    %v4353 = vor.u32 %v4351, %v4352
    %vm4354 = vcmp.lt.s32.totalorder %v4335, 1
    %vm4355 = vcmp.lt.s32.totalorder %v4335, 2
    %vm4356 = vcmp.lt.s32.totalorder %v4335, 3
    %vm4357 = vcmp.lt.s32.totalorder %v4335, 4
    %v4358 = vsel %vm4354, %v4338, %v4341
    %v4359 = vsel %vm4357, %v4347, 2102212464
    %v4360 = vsel %vm4356, %v4344, %v4359
    %v4361 = vsel %vm4355, %v4358, %v4360
    %v4362 = vsel %vm4354, %v4341, %v4344
    %v4363 = vsel %vm4357, %v4350, 920167782
    %v4364 = vsel %vm4356, %v4347, %v4363
    %v4365 = vsel %vm4355, %v4362, %v4364
    %v4366 = vsel %vm4354, %v4344, %v4347
    %v4367 = vsel %vm4357, %v4353, 1326507024
    %v4368 = vsel %vm4356, %v4350, %v4367
    %v4369 = vsel %vm4355, %v4366, %v4368
    %v4370 = vshll.u32 %v4330, 8
    %v4371 = vmul.u32.u64.compose %v4370, %v4369
    %v4372 = vextract.low.u32 %v4371
    %v4373 = vextract.high.u32 %v4371
    %v4374 = vmul.u32.u64.compose %v4370, %v4365
    %v4375 = vextract.low.u32 %v4374
    %v4376 = vextract.high.u32 %v4374
    %v4377 = vmul.u32 %v4370, %v4361
    %v4378 = vadd.s32 %v4373, %v4375
    %vm4379 = vc.u32 %v4373, %v4375
    %v4380 = vadd.s32 %v4376, 1
    %v4381 = vsel %vm4379, %v4380, %v4376
    %v4382 = vadd.s32 %v4377, %v4381
    %v4383 = vadd.s32 %v4382, 536870912
    %v4384 = vshrl.u32 %v4383, 30
    %v4385 = vshll.u32 %v4384, 30
    %v4386 = vsub.s32 %v4382, %v4385
    %vm4387 = vcmp.lt.s32.totalorder %v4386, 0
    %v4388 = vsub.s32 0, %v4386
    %v4389 = vsel %vm4387, %v4388, %v4386
    %v4390 = vclz %v4389
    %v4391 = vsub.s32 %v4390, 2
    %vm4392 = vcmp.gt.s32.totalorder 0, %v4391
    %v4393 = vsel %vm4392, 0, %v4391
    %v4394 = vsub.s32 32, %v4393
    %v4395 = vshll.u32 %v4386, %v4393
    %v4396 = vshrl.u32 %v4378, %v4394
    %v4397 = vor.u32 %v4395, %v4396
    %v4398 = vsub.s32 4294967266, %v4393
    %v4399 = vadd.s32 %v4398, 127
    %v4400 = vshll.u32 %v4399, 23
    %v4401 = vor.u32 4788187, %v4400
    %v4402 = vand.u32 2147483647, %v4401
    %v4404 = vcvt.s32.f32 %v4397
    %v4405 = vmul.f32 %v4404, %v4402
    %v4406 = vxor.u32 %v4405, 2147483648
    %v4407 = vsel %vm4324, %v4406, %v4405
    %v4408 = vsub.s32 4, %v4384
    %v4409 = vsel %vm4324, %v4408, %v4384
    %v4410 = vsel %vm4323, %v4320, %v4407
    %v4411 = vsel %vm4323, 0, %v4409
    %v4412 = vcosq.f32.pop %v4410
    %v4413 = vsinq.f32.pop %v4410
    %vm4414 = vweird.f32 %v4320
    %v4415 = vadd.s32 %v4411, 3
    %v4416 = vand.u32 %v4415, 3
    %vm4417 = vcmp.lt.s32.totalorder %v4416, 2
    %vm4418 = vcmp.eq.s32.totalorder %v4416, 0
    %v4419 = vxor.u32 %v4413, 2147483648
    %v4420 = vsel %vm4418, %v4412, %v4419
    %vm4421 = vcmp.eq.s32.totalorder %v4416, 2
    %v4422 = vxor.u32 %v4412, 2147483648
    %v4423 = vsel %vm4421, %v4422, %v4413
    %v4424 = vsel %vm4417, %v4420, %v4423
    %v4425 = vsel %vm4414, nan, %v4424
    %v4426 = vand.u32 2147483647, %v4321
    %vm4427 = vcmp.le.f32.partialorder %v4426, 0.7853982
    %vm4428 = vcmp.lt.s32.totalorder %v4321, 0
    %v4429 = vand.u32 %v4321, 2139095040
    %v4430 = vshrl.u32 %v4429, 23
    %v4431 = vsub.s32 %v4430, 127
    %v4432 = vand.u32 2147483647, %v4321
    %v4433 = vand.u32 %v4432, 8388607
    %v4434 = vor.u32 %v4433, 8388608
    %v4435 = vsub.s32 0, %v4434
    %v4436 = vadd.s32 %v4431, 1
    %vm4437 = vcmp.gt.s32.totalorder %v4436, 0
    %v4438 = vsel %vm4437, %v4436, 0
    %v4439 = vshrl.u32 %v4438, 5
    %v4440 = vand.u32 %v4438, 31
    %v4441 = vsub.s32 32, %v4440
    %v4442 = vshrl.u32 683565275, %v4441
    %v4443 = vshll.u32 683565275, %v4440
    %v4444 = vshrl.u32 2475754826, %v4441
    %v4445 = vor.u32 %v4443, %v4444
    %v4446 = vshll.u32 2475754826, %v4440
    %v4447 = vshrl.u32 2131351028, %v4441
    %v4448 = vor.u32 %v4446, %v4447
    %v4449 = vshll.u32 2131351028, %v4440
    %v4450 = vshrl.u32 2102212464, %v4441
    %v4451 = vor.u32 %v4449, %v4450
    %v4452 = vshll.u32 2102212464, %v4440
    %v4453 = vshrl.u32 920167782, %v4441
    %v4454 = vor.u32 %v4452, %v4453
    %v4455 = vshll.u32 920167782, %v4440
    %v4456 = vshrl.u32 1326507024, %v4441
    %v4457 = vor.u32 %v4455, %v4456
    %vm4458 = vcmp.lt.s32.totalorder %v4439, 1
    %vm4459 = vcmp.lt.s32.totalorder %v4439, 2
    %vm4460 = vcmp.lt.s32.totalorder %v4439, 3
    %vm4461 = vcmp.lt.s32.totalorder %v4439, 4
    %v4462 = vsel %vm4458, %v4442, %v4445
    %v4463 = vsel %vm4461, %v4451, 2102212464
    %v4464 = vsel %vm4460, %v4448, %v4463
    %v4465 = vsel %vm4459, %v4462, %v4464
    %v4466 = vsel %vm4458, %v4445, %v4448
    %v4467 = vsel %vm4461, %v4454, 920167782
    %v4468 = vsel %vm4460, %v4451, %v4467
    %v4469 = vsel %vm4459, %v4466, %v4468
    %v4470 = vsel %vm4458, %v4448, %v4451
    %v4471 = vsel %vm4461, %v4457, 1326507024
    %v4472 = vsel %vm4460, %v4454, %v4471
    %v4473 = vsel %vm4459, %v4470, %v4472
    %v4474 = vshll.u32 %v4434, 8
    %v4475 = vmul.u32.u64.compose %v4474, %v4473
    %v4476 = vextract.low.u32 %v4475
    %v4477 = vextract.high.u32 %v4475
    %v4478 = vmul.u32.u64.compose %v4474, %v4469
    %v4479 = vextract.low.u32 %v4478
    %v4480 = vextract.high.u32 %v4478
    %v4481 = vmul.u32 %v4474, %v4465
    %v4482 = vadd.s32 %v4477, %v4479
    %vm4483 = vc.u32 %v4477, %v4479
    %v4484 = vadd.s32 %v4480, 1
    %v4485 = vsel %vm4483, %v4484, %v4480
    %v4486 = vadd.s32 %v4481, %v4485
    %v4487 = vadd.s32 %v4486, 536870912
    %v4488 = vshrl.u32 %v4487, 30
    %v4489 = vshll.u32 %v4488, 30
    %v4490 = vsub.s32 %v4486, %v4489
    %vm4491 = vcmp.lt.s32.totalorder %v4490, 0
    %v4492 = vsub.s32 0, %v4490
    %v4493 = vsel %vm4491, %v4492, %v4490
    %v4494 = vclz %v4493
    %v4495 = vsub.s32 %v4494, 2
    %vm4496 = vcmp.gt.s32.totalorder 0, %v4495
    %v4497 = vsel %vm4496, 0, %v4495
    %v4498 = vsub.s32 32, %v4497
    %v4499 = vshll.u32 %v4490, %v4497
    %v4500 = vshrl.u32 %v4482, %v4498
    %v4501 = vor.u32 %v4499, %v4500
    %v4502 = vsub.s32 4294967266, %v4497
    %v4503 = vadd.s32 %v4502, 127
    %v4504 = vshll.u32 %v4503, 23
    %v4505 = vor.u32 4788187, %v4504
    %v4506 = vand.u32 2147483647, %v4505
    %v4508 = vcvt.s32.f32 %v4501
    %v4509 = vmul.f32 %v4508, %v4506
    %v4510 = vxor.u32 %v4509, 2147483648
    %v4511 = vsel %vm4428, %v4510, %v4509
    %v4512 = vsub.s32 4, %v4488
    %v4513 = vsel %vm4428, %v4512, %v4488
    %v4514 = vsel %vm4427, %v4321, %v4511
    %v4515 = vsel %vm4427, 0, %v4513
    %v4516 = vcosq.f32.pop %v4514
    %v4517 = vsinq.f32.pop %v4514
    %vm4518 = vweird.f32 %v4321
    %v4519 = vadd.s32 %v4515, 3
    %v4520 = vand.u32 %v4519, 3
    %vm4521 = vcmp.lt.s32.totalorder %v4520, 2
    %vm4522 = vcmp.eq.s32.totalorder %v4520, 0
    %v4523 = vxor.u32 %v4517, 2147483648
    %v4524 = vsel %vm4522, %v4516, %v4523
    %vm4525 = vcmp.eq.s32.totalorder %v4520, 2
    %v4526 = vxor.u32 %v4516, 2147483648
    %v4527 = vsel %vm4525, %v4526, %v4517
    %v4528 = vsel %vm4521, %v4524, %v4527
    %v4529 = vsel %vm4518, nan, %v4528
    %v4530 = vmul.f32 %v4425, %v4425
    %v4531 = vmul.f32 %v4529, %v4529
    %v4532 = vadd.f32 %v4308, 1e-05
    %v4533 = vadd.f32 %v4309, 1e-05
    %4535 = vset.pattern.permute.xlu0 0
    %4536 = vperm.xlu0 %4535, %v4532
    %v4537 = vpop.permute.xlu0 %4536
    %4540 = vset.pattern.permute.xlu0 0
    %4541 = vperm.xlu0 %4540, %v4533
    %v4542 = vpop.permute.xlu0 %4541
    %v4544 = vrcp.pop %v4537
    %v4545 = vmul.f32 %v4530, %v4544
    %v4546 = vrcp.pop %v4542
    %v4547 = vmul.f32 %v4531, %v4546
    %v4548 = vadd.f32 %v4306, %v4545
    %v4549 = vadd.f32 %v4307, %v4547
    %4552 = vrot.lane.b32.xlu0 %v4548, 4
    %v4553 = vpop.permute.xlu0 %4552
    %4554 = vrot.lane.b32.xlu0 %v4549, 4
    %v4555 = vpop.permute.xlu0 %4554
    %4558 = vst.msk [vmem:[#allocation7] sm:$0xff] %vm3471, %v4553
    %4559 = vst.msk [vmem:[#allocation7 + $0x8] sm:$0xff] %vm3471, %v4555
    %v4560 = vld [vmem:[%s5 + $0x890] sm:$0xff]
    %v4561 = vld [vmem:[%s5 + $0x898] sm:$0xff]
    %4563 = vset.pattern.permute.xlu0 0
    %4564 = vperm.xlu0 %4563, %v4560
    %v4565 = vpop.permute.xlu0 %4564
    %4568 = vset.pattern.permute.xlu0 0
    %4569 = vperm.xlu0 %4568, %v4561
    %v4570 = vpop.permute.xlu0 %4569
    %v4572 = vadd.f32 %v4565, 0.0
    %v4573 = vadd.f32 %v4570, 0.0
    %v4574 = vld [vmem:[%s5 + $0x6e8] sm:$0xff]
    %v4575 = vld [vmem:[%s5 + $0x6f0] sm:$0xff]
    %v4576 = vld [vmem:[#allocation7] sm:$0xff]
    %v4577 = vld [vmem:[#allocation7 + $0x8] sm:$0xff]
    %v4579 = vsel %vm3492, %v4574, 0
    %v4582 = vsel %vm3492, %v4575, 0
    %4584 = vmatprep.subr.mxu0 0.0
    %4585 = vmatpush1.msra.mxu0 0.0
    %4586 = vmatprep.subr.mxu0 0.0
    %4587 = vmatpush1.msra.mxu0 0.0
    %4588 = vmatprep.subr.mxu0 0.0
    %4589 = vmatpush1.msra.mxu0 0.0
    %4590 = vmatprep.subr.mxu0 0.0
    %4591 = vmatpush1.msra.mxu0 0.0
    %4592 = vmatprep.subr.mxu0 0.0
    %4593 = vmatpush1.msra.mxu0 0.0
    %4594 = vmatprep.subr.mxu0 0.0
    %4595 = vmatpush1.msra.mxu0 0.0
    %4596 = vmatprep.subr.mxu0 0.0
    %4597 = vmatpush1.msra.mxu0 0.0
    %4598 = vmatprep.subr.mxu0 0.0
    %4599 = vmatpush1.msra.mxu0 0.0
    %4600 = vmatprep.subr.mxu0 0.0
    %4601 = vmatpush1.msra.mxu0 0.0
    %4602 = vmatprep.subr.mxu0 0.0
    %4603 = vmatpush1.msra.mxu0 0.0
    %4604 = vmatprep.subr.mxu0 0.0
    %4605 = vmatpush1.msra.mxu0 0.0
    %4606 = vmatprep.subr.mxu0 0.0
    %4607 = vmatpush1.msra.mxu0 0.0
    %4608 = vmatprep.subr.mxu0 0.0
    %4609 = vmatpush1.msra.mxu0 0.0
    %4610 = vmatprep.subr.mxu0 0.0
    %4611 = vmatpush1.msra.mxu0 0.0
    %4612 = vmatprep.subr.mxu0 0.0
    %4613 = vmatpush1.msra.mxu0 %v4577
    %4614 = vmatprep.subr.mxu0 0.0
    %4615 = vmatpush1.msra.mxu0 %v4576
    %4616 = vmatprep.subr.mxu0 0.0
    %4617 = vmatpush2.msra.mxu0 0.0
    %4618 = vmatprep.subr.mxu0 0.0
    %4619 = vmatpush2.msra.mxu0 0.0
    %4620 = vmatprep.subr.mxu0 0.0
    %4621 = vmatpush2.msra.mxu0 0.0
    %4622 = vmatprep.subr.mxu0 0.0
    %4623 = vmatpush2.msra.mxu0 0.0
    %4624 = vmatprep.subr.mxu0 0.0
    %4625 = vmatpush2.msra.mxu0 0.0
    %4626 = vmatprep.subr.mxu0 0.0
    %4627 = vmatpush2.msra.mxu0 0.0
    %4628 = vmatprep.subr.mxu0 0.0
    %4629 = vmatpush2.msra.mxu0 0.0
    %4630 = vmatprep.subr.mxu0 0.0
    %4631 = vmatpush2.msra.mxu0 0.0
    %4632 = vmatprep.subr.mxu0 0.0
    %4633 = vmatpush2.msra.mxu0 0.0
    %4634 = vmatprep.subr.mxu0 0.0
    %4635 = vmatpush2.msra.mxu0 0.0
    %4636 = vmatprep.subr.mxu0 0.0
    %4637 = vmatpush2.msra.mxu0 0.0
    %4638 = vmatprep.subr.mxu0 0.0
    %4639 = vmatpush2.msra.mxu0 0.0
    %4640 = vmatprep.subr.mxu0 0.0
    %4641 = vmatpush2.msra.mxu0 0.0
    %4642 = vmatprep.subr.mxu0 0.0
    %4643 = vmatpush2.msra.mxu0 0.0
    %4644 = vmatprep.subr.mxu0 0.0
    %4645 = vmatpush2.msra.mxu0 0.0
    %4646 = vmatprep.subr.mxu0 0.0
    %4647 = vmatpush2.msra.mxu0 0.0
    %4648 = vmatprep.mubr.f32.mxu0 0.0
    %4649 = vmatmul.mubr.f32.gmra.mxu0 %v4579
    %v4650 = vpop.f32.mrf.mxu0
    %v4651 = vadd.f32 0.0, %v4650
    %v4652 = vpop.f32.mrf.mxu0
    %4653 = vmatprep.mubr.f32.mxu0 0.0
    %4654 = vmatmul.mubr.f32.gmra.mxu0 %v4582
    %v4655 = vpop.f32.mrf.mxu0
    %v4656 = vadd.f32 0.0, %v4655
    %v4657 = vpop.f32.mrf.mxu0
    %4658 = vdwg.mxu0
    %v4659 = vadd.f32 %v4572, %v4651
    %v4660 = vadd.f32 %v4573, %v4656
    %v4661 = vld [vmem:[%s5 + $0x6f8] sm:$0xff]
    %v4662 = vld [vmem:[%s5 + $0x700] sm:$0xff]
    %4665 = vrot.lane.b32.xlu0 %v4576, 127
    %v4666 = vpop.permute.xlu0 %4665
    %4667 = vrot.lane.b32.xlu0 %v4577, 127
    %v4668 = vpop.permute.xlu0 %4667
    %v4672 = vsel %vm3492, %v4661, 0
    %v4675 = vsel %vm3492, %v4662, 0
    %4677 = vmatprep.subr.mxu0 0.0
    %4678 = vmatpush1.msra.mxu0 0.0
    %4679 = vmatprep.subr.mxu0 0.0
    %4680 = vmatpush1.msra.mxu0 0.0
    %4681 = vmatprep.subr.mxu0 0.0
    %4682 = vmatpush1.msra.mxu0 0.0
    %4683 = vmatprep.subr.mxu0 0.0
    %4684 = vmatpush1.msra.mxu0 0.0
    %4685 = vmatprep.subr.mxu0 0.0
    %4686 = vmatpush1.msra.mxu0 0.0
    %4687 = vmatprep.subr.mxu0 0.0
    %4688 = vmatpush1.msra.mxu0 0.0
    %4689 = vmatprep.subr.mxu0 0.0
    %4690 = vmatpush1.msra.mxu0 0.0
    %4691 = vmatprep.subr.mxu0 0.0
    %4692 = vmatpush1.msra.mxu0 0.0
    %4693 = vmatprep.subr.mxu0 0.0
    %4694 = vmatpush1.msra.mxu0 0.0
    %4695 = vmatprep.subr.mxu0 0.0
    %4696 = vmatpush1.msra.mxu0 0.0
    %4697 = vmatprep.subr.mxu0 0.0
    %4698 = vmatpush1.msra.mxu0 0.0
    %4699 = vmatprep.subr.mxu0 0.0
    %4700 = vmatpush1.msra.mxu0 0.0
    %4701 = vmatprep.subr.mxu0 0.0
    %4702 = vmatpush1.msra.mxu0 0.0
    %4703 = vmatprep.subr.mxu0 0.0
    %4704 = vmatpush1.msra.mxu0 0.0
    %4705 = vmatprep.subr.mxu0 0.0
    %4706 = vmatpush1.msra.mxu0 %v4668
    %4707 = vmatprep.subr.mxu0 0.0
    %4708 = vmatpush1.msra.mxu0 %v4666
    %4709 = vmatprep.subr.mxu0 0.0
    %4710 = vmatpush2.msra.mxu0 0.0
    %4711 = vmatprep.subr.mxu0 0.0
    %4712 = vmatpush2.msra.mxu0 0.0
    %4713 = vmatprep.subr.mxu0 0.0
    %4714 = vmatpush2.msra.mxu0 0.0
    %4715 = vmatprep.subr.mxu0 0.0
    %4716 = vmatpush2.msra.mxu0 0.0
    %4717 = vmatprep.subr.mxu0 0.0
    %4718 = vmatpush2.msra.mxu0 0.0
    %4719 = vmatprep.subr.mxu0 0.0
    %4720 = vmatpush2.msra.mxu0 0.0
    %4721 = vmatprep.subr.mxu0 0.0
    %4722 = vmatpush2.msra.mxu0 0.0
    %4723 = vmatprep.subr.mxu0 0.0
    %4724 = vmatpush2.msra.mxu0 0.0
    %4725 = vmatprep.subr.mxu0 0.0
    %4726 = vmatpush2.msra.mxu0 0.0
    %4727 = vmatprep.subr.mxu0 0.0
    %4728 = vmatpush2.msra.mxu0 0.0
    %4729 = vmatprep.subr.mxu0 0.0
    %4730 = vmatpush2.msra.mxu0 0.0
    %4731 = vmatprep.subr.mxu0 0.0
    %4732 = vmatpush2.msra.mxu0 0.0
    %4733 = vmatprep.subr.mxu0 0.0
    %4734 = vmatpush2.msra.mxu0 0.0
    %4735 = vmatprep.subr.mxu0 0.0
    %4736 = vmatpush2.msra.mxu0 0.0
    %4737 = vmatprep.subr.mxu0 0.0
    %4738 = vmatpush2.msra.mxu0 0.0
    %4739 = vmatprep.subr.mxu0 0.0
    %4740 = vmatpush2.msra.mxu0 0.0
    %4741 = vmatprep.mubr.f32.mxu0 0.0
    %4742 = vmatmul.mubr.f32.gmra.mxu0 %v4672
    %v4743 = vpop.f32.mrf.mxu0
    %v4744 = vadd.f32 0.0, %v4743
    %v4745 = vpop.f32.mrf.mxu0
    %4746 = vmatprep.mubr.f32.mxu0 0.0
    %4747 = vmatmul.mubr.f32.gmra.mxu0 %v4675
    %v4748 = vpop.f32.mrf.mxu0
    %v4749 = vadd.f32 0.0, %v4748
    %v4750 = vpop.f32.mrf.mxu0
    %4751 = vdwg.mxu0
    %v4752 = vadd.f32 %v4659, %v4744
    %v4753 = vadd.f32 %v4660, %v4749
    %v4754 = vld [vmem:[%s5 + $0x708] sm:$0xff]
    %v4755 = vld [vmem:[%s5 + $0x710] sm:$0xff]
    %4756 = vrot.lane.b32.xlu0 %v4576, 126
    %v4757 = vpop.permute.xlu0 %4756
    %4758 = vrot.lane.b32.xlu0 %v4577, 126
    %v4759 = vpop.permute.xlu0 %4758
    %v4763 = vsel %vm3492, %v4754, 0
    %v4766 = vsel %vm3492, %v4755, 0
    %4768 = vmatprep.subr.mxu0 0.0
    %4769 = vmatpush1.msra.mxu0 0.0
    %4770 = vmatprep.subr.mxu0 0.0
    %4771 = vmatpush1.msra.mxu0 0.0
    %4772 = vmatprep.subr.mxu0 0.0
    %4773 = vmatpush1.msra.mxu0 0.0
    %4774 = vmatprep.subr.mxu0 0.0
    %4775 = vmatpush1.msra.mxu0 0.0
    %4776 = vmatprep.subr.mxu0 0.0
    %4777 = vmatpush1.msra.mxu0 0.0
    %4778 = vmatprep.subr.mxu0 0.0
    %4779 = vmatpush1.msra.mxu0 0.0
    %4780 = vmatprep.subr.mxu0 0.0
    %4781 = vmatpush1.msra.mxu0 0.0
    %4782 = vmatprep.subr.mxu0 0.0
    %4783 = vmatpush1.msra.mxu0 0.0
    %4784 = vmatprep.subr.mxu0 0.0
    %4785 = vmatpush1.msra.mxu0 0.0
    %4786 = vmatprep.subr.mxu0 0.0
    %4787 = vmatpush1.msra.mxu0 0.0
    %4788 = vmatprep.subr.mxu0 0.0
    %4789 = vmatpush1.msra.mxu0 0.0
    %4790 = vmatprep.subr.mxu0 0.0
    %4791 = vmatpush1.msra.mxu0 0.0
    %4792 = vmatprep.subr.mxu0 0.0
    %4793 = vmatpush1.msra.mxu0 0.0
    %4794 = vmatprep.subr.mxu0 0.0
    %4795 = vmatpush1.msra.mxu0 0.0
    %4796 = vmatprep.subr.mxu0 0.0
    %4797 = vmatpush1.msra.mxu0 %v4759
    %4798 = vmatprep.subr.mxu0 0.0
    %4799 = vmatpush1.msra.mxu0 %v4757
    %4800 = vmatprep.subr.mxu0 0.0
    %4801 = vmatpush2.msra.mxu0 0.0
    %4802 = vmatprep.subr.mxu0 0.0
    %4803 = vmatpush2.msra.mxu0 0.0
    %4804 = vmatprep.subr.mxu0 0.0
    %4805 = vmatpush2.msra.mxu0 0.0
    %4806 = vmatprep.subr.mxu0 0.0
    %4807 = vmatpush2.msra.mxu0 0.0
    %4808 = vmatprep.subr.mxu0 0.0
    %4809 = vmatpush2.msra.mxu0 0.0
    %4810 = vmatprep.subr.mxu0 0.0
    %4811 = vmatpush2.msra.mxu0 0.0
    %4812 = vmatprep.subr.mxu0 0.0
    %4813 = vmatpush2.msra.mxu0 0.0
    %4814 = vmatprep.subr.mxu0 0.0
    %4815 = vmatpush2.msra.mxu0 0.0
    %4816 = vmatprep.subr.mxu0 0.0
    %4817 = vmatpush2.msra.mxu0 0.0
    %4818 = vmatprep.subr.mxu0 0.0
    %4819 = vmatpush2.msra.mxu0 0.0
    %4820 = vmatprep.subr.mxu0 0.0
    %4821 = vmatpush2.msra.mxu0 0.0
    %4822 = vmatprep.subr.mxu0 0.0
    %4823 = vmatpush2.msra.mxu0 0.0
    %4824 = vmatprep.subr.mxu0 0.0
    %4825 = vmatpush2.msra.mxu0 0.0
    %4826 = vmatprep.subr.mxu0 0.0
    %4827 = vmatpush2.msra.mxu0 0.0
    %4828 = vmatprep.subr.mxu0 0.0
    %4829 = vmatpush2.msra.mxu0 0.0
    %4830 = vmatprep.subr.mxu0 0.0
    %4831 = vmatpush2.msra.mxu0 0.0
    %4832 = vmatprep.mubr.f32.mxu0 0.0
    %4833 = vmatmul.mubr.f32.gmra.mxu0 %v4763
    %v4834 = vpop.f32.mrf.mxu0
    %v4835 = vadd.f32 0.0, %v4834
    %v4836 = vpop.f32.mrf.mxu0
    %4837 = vmatprep.mubr.f32.mxu0 0.0
    %4838 = vmatmul.mubr.f32.gmra.mxu0 %v4766
    %v4839 = vpop.f32.mrf.mxu0
    %v4840 = vadd.f32 0.0, %v4839
    %v4841 = vpop.f32.mrf.mxu0
    %4842 = vdwg.mxu0
    %v4843 = vadd.f32 %v4752, %v4835
    %v4844 = vadd.f32 %v4753, %v4840
    %v4845 = vld [vmem:[%s5 + $0x718] sm:$0xff]
    %v4846 = vld [vmem:[%s5 + $0x720] sm:$0xff]
    %4847 = vrot.lane.b32.xlu0 %v4576, 125
    %v4848 = vpop.permute.xlu0 %4847
    %4849 = vrot.lane.b32.xlu0 %v4577, 125
    %v4850 = vpop.permute.xlu0 %4849
    %v4854 = vsel %vm3492, %v4845, 0
    %v4857 = vsel %vm3492, %v4846, 0
    %4859 = vmatprep.subr.mxu0 0.0
    %4860 = vmatpush1.msra.mxu0 0.0
    %4861 = vmatprep.subr.mxu0 0.0
    %4862 = vmatpush1.msra.mxu0 0.0
    %4863 = vmatprep.subr.mxu0 0.0
    %4864 = vmatpush1.msra.mxu0 0.0
    %4865 = vmatprep.subr.mxu0 0.0
    %4866 = vmatpush1.msra.mxu0 0.0
    %4867 = vmatprep.subr.mxu0 0.0
    %4868 = vmatpush1.msra.mxu0 0.0
    %4869 = vmatprep.subr.mxu0 0.0
    %4870 = vmatpush1.msra.mxu0 0.0
    %4871 = vmatprep.subr.mxu0 0.0
    %4872 = vmatpush1.msra.mxu0 0.0
    %4873 = vmatprep.subr.mxu0 0.0
    %4874 = vmatpush1.msra.mxu0 0.0
    %4875 = vmatprep.subr.mxu0 0.0
    %4876 = vmatpush1.msra.mxu0 0.0
    %4877 = vmatprep.subr.mxu0 0.0
    %4878 = vmatpush1.msra.mxu0 0.0
    %4879 = vmatprep.subr.mxu0 0.0
    %4880 = vmatpush1.msra.mxu0 0.0
    %4881 = vmatprep.subr.mxu0 0.0
    %4882 = vmatpush1.msra.mxu0 0.0
    %4883 = vmatprep.subr.mxu0 0.0
    %4884 = vmatpush1.msra.mxu0 0.0
    %4885 = vmatprep.subr.mxu0 0.0
    %4886 = vmatpush1.msra.mxu0 0.0
    %4887 = vmatprep.subr.mxu0 0.0
    %4888 = vmatpush1.msra.mxu0 %v4850
    %4889 = vmatprep.subr.mxu0 0.0
    %4890 = vmatpush1.msra.mxu0 %v4848
    %4891 = vmatprep.subr.mxu0 0.0
    %4892 = vmatpush2.msra.mxu0 0.0
    %4893 = vmatprep.subr.mxu0 0.0
    %4894 = vmatpush2.msra.mxu0 0.0
    %4895 = vmatprep.subr.mxu0 0.0
    %4896 = vmatpush2.msra.mxu0 0.0
    %4897 = vmatprep.subr.mxu0 0.0
    %4898 = vmatpush2.msra.mxu0 0.0
    %4899 = vmatprep.subr.mxu0 0.0
    %4900 = vmatpush2.msra.mxu0 0.0
    %4901 = vmatprep.subr.mxu0 0.0
    %4902 = vmatpush2.msra.mxu0 0.0
    %4903 = vmatprep.subr.mxu0 0.0
    %4904 = vmatpush2.msra.mxu0 0.0
    %4905 = vmatprep.subr.mxu0 0.0
    %4906 = vmatpush2.msra.mxu0 0.0
    %4907 = vmatprep.subr.mxu0 0.0
    %4908 = vmatpush2.msra.mxu0 0.0
    %4909 = vmatprep.subr.mxu0 0.0
    %4910 = vmatpush2.msra.mxu0 0.0
    %4911 = vmatprep.subr.mxu0 0.0
    %4912 = vmatpush2.msra.mxu0 0.0
    %4913 = vmatprep.subr.mxu0 0.0
    %4914 = vmatpush2.msra.mxu0 0.0
    %4915 = vmatprep.subr.mxu0 0.0
    %4916 = vmatpush2.msra.mxu0 0.0
    %4917 = vmatprep.subr.mxu0 0.0
    %4918 = vmatpush2.msra.mxu0 0.0
    %4919 = vmatprep.subr.mxu0 0.0
    %4920 = vmatpush2.msra.mxu0 0.0
    %4921 = vmatprep.subr.mxu0 0.0
    %4922 = vmatpush2.msra.mxu0 0.0
    %4923 = vmatprep.mubr.f32.mxu0 0.0
    %4924 = vmatmul.mubr.f32.gmra.mxu0 %v4854
    %v4925 = vpop.f32.mrf.mxu0
    %v4926 = vadd.f32 0.0, %v4925
    %v4927 = vpop.f32.mrf.mxu0
    %4928 = vmatprep.mubr.f32.mxu0 0.0
    %4929 = vmatmul.mubr.f32.gmra.mxu0 %v4857
    %v4930 = vpop.f32.mrf.mxu0
    %v4931 = vadd.f32 0.0, %v4930
    %v4932 = vpop.f32.mrf.mxu0
    %4933 = vdwg.mxu0
    %v4934 = vadd.f32 %v4843, %v4926
    %v4935 = vadd.f32 %v4844, %v4931
    %v4936 = vld [vmem:[%s5 + $0x728] sm:$0xff]
    %v4937 = vld [vmem:[%s5 + $0x730] sm:$0xff]
    %4938 = vrot.lane.b32.xlu0 %v4576, 124
    %v4939 = vpop.permute.xlu0 %4938
    %4940 = vrot.lane.b32.xlu0 %v4577, 124
    %v4941 = vpop.permute.xlu0 %4940
    %v4945 = vsel %vm3492, %v4936, 0
    %v4948 = vsel %vm3492, %v4937, 0
    %4950 = vmatprep.subr.mxu0 0.0
    %4951 = vmatpush1.msra.mxu0 0.0
    %4952 = vmatprep.subr.mxu0 0.0
    %4953 = vmatpush1.msra.mxu0 0.0
    %4954 = vmatprep.subr.mxu0 0.0
    %4955 = vmatpush1.msra.mxu0 0.0
    %4956 = vmatprep.subr.mxu0 0.0
    %4957 = vmatpush1.msra.mxu0 0.0
    %4958 = vmatprep.subr.mxu0 0.0
    %4959 = vmatpush1.msra.mxu0 0.0
    %4960 = vmatprep.subr.mxu0 0.0
    %4961 = vmatpush1.msra.mxu0 0.0
    %4962 = vmatprep.subr.mxu0 0.0
    %4963 = vmatpush1.msra.mxu0 0.0
    %4964 = vmatprep.subr.mxu0 0.0
    %4965 = vmatpush1.msra.mxu0 0.0
    %4966 = vmatprep.subr.mxu0 0.0
    %4967 = vmatpush1.msra.mxu0 0.0
    %4968 = vmatprep.subr.mxu0 0.0
    %4969 = vmatpush1.msra.mxu0 0.0
    %4970 = vmatprep.subr.mxu0 0.0
    %4971 = vmatpush1.msra.mxu0 0.0
    %4972 = vmatprep.subr.mxu0 0.0
    %4973 = vmatpush1.msra.mxu0 0.0
    %4974 = vmatprep.subr.mxu0 0.0
    %4975 = vmatpush1.msra.mxu0 0.0
    %4976 = vmatprep.subr.mxu0 0.0
    %4977 = vmatpush1.msra.mxu0 0.0
    %4978 = vmatprep.subr.mxu0 0.0
    %4979 = vmatpush1.msra.mxu0 %v4941
    %4980 = vmatprep.subr.mxu0 0.0
    %4981 = vmatpush1.msra.mxu0 %v4939
    %4982 = vmatprep.subr.mxu0 0.0
    %4983 = vmatpush2.msra.mxu0 0.0
    %4984 = vmatprep.subr.mxu0 0.0
    %4985 = vmatpush2.msra.mxu0 0.0
    %4986 = vmatprep.subr.mxu0 0.0
    %4987 = vmatpush2.msra.mxu0 0.0
    %4988 = vmatprep.subr.mxu0 0.0
    %4989 = vmatpush2.msra.mxu0 0.0
    %4990 = vmatprep.subr.mxu0 0.0
    %4991 = vmatpush2.msra.mxu0 0.0
    %4992 = vmatprep.subr.mxu0 0.0
    %4993 = vmatpush2.msra.mxu0 0.0
    %4994 = vmatprep.subr.mxu0 0.0
    %4995 = vmatpush2.msra.mxu0 0.0
    %4996 = vmatprep.subr.mxu0 0.0
    %4997 = vmatpush2.msra.mxu0 0.0
    %4998 = vmatprep.subr.mxu0 0.0
    %4999 = vmatpush2.msra.mxu0 0.0
    %5000 = vmatprep.subr.mxu0 0.0
    %5001 = vmatpush2.msra.mxu0 0.0
    %5002 = vmatprep.subr.mxu0 0.0
    %5003 = vmatpush2.msra.mxu0 0.0
    %5004 = vmatprep.subr.mxu0 0.0
    %5005 = vmatpush2.msra.mxu0 0.0
    %5006 = vmatprep.subr.mxu0 0.0
    %5007 = vmatpush2.msra.mxu0 0.0
    %5008 = vmatprep.subr.mxu0 0.0
    %5009 = vmatpush2.msra.mxu0 0.0
    %5010 = vmatprep.subr.mxu0 0.0
    %5011 = vmatpush2.msra.mxu0 0.0
    %5012 = vmatprep.subr.mxu0 0.0
    %5013 = vmatpush2.msra.mxu0 0.0
    %5014 = vmatprep.mubr.f32.mxu0 0.0
    %5015 = vmatmul.mubr.f32.gmra.mxu0 %v4945
    %v5016 = vpop.f32.mrf.mxu0
    %v5017 = vadd.f32 0.0, %v5016
    %v5018 = vpop.f32.mrf.mxu0
    %5019 = vmatprep.mubr.f32.mxu0 0.0
    %5020 = vmatmul.mubr.f32.gmra.mxu0 %v4948
    %v5021 = vpop.f32.mrf.mxu0
    %v5022 = vadd.f32 0.0, %v5021
    %v5023 = vpop.f32.mrf.mxu0
    %5024 = vdwg.mxu0
    %v5025 = vadd.f32 %v4934, %v5017
    %v5026 = vadd.f32 %v4935, %v5022
    %v5027 = vld [vmem:[%s5 + $0x738] sm:$0xff]
    %v5028 = vld [vmem:[%s5 + $0x740] sm:$0xff]
    %5029 = vrot.lane.b32.xlu0 %v4576, 123
    %v5030 = vpop.permute.xlu0 %5029
    %5031 = vrot.lane.b32.xlu0 %v4577, 123
    %v5032 = vpop.permute.xlu0 %5031
    %v5036 = vsel %vm3492, %v5027, 0
    %v5039 = vsel %vm3492, %v5028, 0
    %5041 = vmatprep.subr.mxu0 0.0
    %5042 = vmatpush1.msra.mxu0 0.0
    %5043 = vmatprep.subr.mxu0 0.0
    %5044 = vmatpush1.msra.mxu0 0.0
    %5045 = vmatprep.subr.mxu0 0.0
    %5046 = vmatpush1.msra.mxu0 0.0
    %5047 = vmatprep.subr.mxu0 0.0
    %5048 = vmatpush1.msra.mxu0 0.0
    %5049 = vmatprep.subr.mxu0 0.0
    %5050 = vmatpush1.msra.mxu0 0.0
    %5051 = vmatprep.subr.mxu0 0.0
    %5052 = vmatpush1.msra.mxu0 0.0
    %5053 = vmatprep.subr.mxu0 0.0
    %5054 = vmatpush1.msra.mxu0 0.0
    %5055 = vmatprep.subr.mxu0 0.0
    %5056 = vmatpush1.msra.mxu0 0.0
    %5057 = vmatprep.subr.mxu0 0.0
    %5058 = vmatpush1.msra.mxu0 0.0
    %5059 = vmatprep.subr.mxu0 0.0
    %5060 = vmatpush1.msra.mxu0 0.0
    %5061 = vmatprep.subr.mxu0 0.0
    %5062 = vmatpush1.msra.mxu0 0.0
    %5063 = vmatprep.subr.mxu0 0.0
    %5064 = vmatpush1.msra.mxu0 0.0
    %5065 = vmatprep.subr.mxu0 0.0
    %5066 = vmatpush1.msra.mxu0 0.0
    %5067 = vmatprep.subr.mxu0 0.0
    %5068 = vmatpush1.msra.mxu0 0.0
    %5069 = vmatprep.subr.mxu0 0.0
    %5070 = vmatpush1.msra.mxu0 %v5032
    %5071 = vmatprep.subr.mxu0 0.0
    %5072 = vmatpush1.msra.mxu0 %v5030
    %5073 = vmatprep.subr.mxu0 0.0
    %5074 = vmatpush2.msra.mxu0 0.0
    %5075 = vmatprep.subr.mxu0 0.0
    %5076 = vmatpush2.msra.mxu0 0.0
    %5077 = vmatprep.subr.mxu0 0.0
    %5078 = vmatpush2.msra.mxu0 0.0
    %5079 = vmatprep.subr.mxu0 0.0
    %5080 = vmatpush2.msra.mxu0 0.0
    %5081 = vmatprep.subr.mxu0 0.0
    %5082 = vmatpush2.msra.mxu0 0.0
    %5083 = vmatprep.subr.mxu0 0.0
    %5084 = vmatpush2.msra.mxu0 0.0
    %5085 = vmatprep.subr.mxu0 0.0
    %5086 = vmatpush2.msra.mxu0 0.0
    %5087 = vmatprep.subr.mxu0 0.0
    %5088 = vmatpush2.msra.mxu0 0.0
    %5089 = vmatprep.subr.mxu0 0.0
    %5090 = vmatpush2.msra.mxu0 0.0
    %5091 = vmatprep.subr.mxu0 0.0
    %5092 = vmatpush2.msra.mxu0 0.0
    %5093 = vmatprep.subr.mxu0 0.0
    %5094 = vmatpush2.msra.mxu0 0.0
    %5095 = vmatprep.subr.mxu0 0.0
    %5096 = vmatpush2.msra.mxu0 0.0
    %5097 = vmatprep.subr.mxu0 0.0
    %5098 = vmatpush2.msra.mxu0 0.0
    %5099 = vmatprep.subr.mxu0 0.0
    %5100 = vmatpush2.msra.mxu0 0.0
    %5101 = vmatprep.subr.mxu0 0.0
    %5102 = vmatpush2.msra.mxu0 0.0
    %5103 = vmatprep.subr.mxu0 0.0
    %5104 = vmatpush2.msra.mxu0 0.0
    %5105 = vmatprep.mubr.f32.mxu0 0.0
    %5106 = vmatmul.mubr.f32.gmra.mxu0 %v5036
    %v5107 = vpop.f32.mrf.mxu0
    %v5108 = vadd.f32 0.0, %v5107
    %v5109 = vpop.f32.mrf.mxu0
    %5110 = vmatprep.mubr.f32.mxu0 0.0
    %5111 = vmatmul.mubr.f32.gmra.mxu0 %v5039
    %v5112 = vpop.f32.mrf.mxu0
    %v5113 = vadd.f32 0.0, %v5112
    %v5114 = vpop.f32.mrf.mxu0
    %5115 = vdwg.mxu0
    %v5116 = vadd.f32 %v5025, %v5108
    %v5117 = vadd.f32 %v5026, %v5113
    %v5118 = vld [vmem:[%s5 + $0x748] sm:$0xff]
    %v5119 = vld [vmem:[%s5 + $0x750] sm:$0xff]
    %5120 = vrot.lane.b32.xlu0 %v4576, 122
    %v5121 = vpop.permute.xlu0 %5120
    %5122 = vrot.lane.b32.xlu0 %v4577, 122
    %v5123 = vpop.permute.xlu0 %5122
    %v5127 = vsel %vm3492, %v5118, 0
    %v5130 = vsel %vm3492, %v5119, 0
    %5132 = vmatprep.subr.mxu0 0.0
    %5133 = vmatpush1.msra.mxu0 0.0
    %5134 = vmatprep.subr.mxu0 0.0
    %5135 = vmatpush1.msra.mxu0 0.0
    %5136 = vmatprep.subr.mxu0 0.0
    %5137 = vmatpush1.msra.mxu0 0.0
    %5138 = vmatprep.subr.mxu0 0.0
    %5139 = vmatpush1.msra.mxu0 0.0
    %5140 = vmatprep.subr.mxu0 0.0
    %5141 = vmatpush1.msra.mxu0 0.0
    %5142 = vmatprep.subr.mxu0 0.0
    %5143 = vmatpush1.msra.mxu0 0.0
    %5144 = vmatprep.subr.mxu0 0.0
    %5145 = vmatpush1.msra.mxu0 0.0
    %5146 = vmatprep.subr.mxu0 0.0
    %5147 = vmatpush1.msra.mxu0 0.0
    %5148 = vmatprep.subr.mxu0 0.0
    %5149 = vmatpush1.msra.mxu0 0.0
    %5150 = vmatprep.subr.mxu0 0.0
    %5151 = vmatpush1.msra.mxu0 0.0
    %5152 = vmatprep.subr.mxu0 0.0
    %5153 = vmatpush1.msra.mxu0 0.0
    %5154 = vmatprep.subr.mxu0 0.0
    %5155 = vmatpush1.msra.mxu0 0.0
    %5156 = vmatprep.subr.mxu0 0.0
    %5157 = vmatpush1.msra.mxu0 0.0
    %5158 = vmatprep.subr.mxu0 0.0
    %5159 = vmatpush1.msra.mxu0 0.0
    %5160 = vmatprep.subr.mxu0 0.0
    %5161 = vmatpush1.msra.mxu0 %v5123
    %5162 = vmatprep.subr.mxu0 0.0
    %5163 = vmatpush1.msra.mxu0 %v5121
    %5164 = vmatprep.subr.mxu0 0.0
    %5165 = vmatpush2.msra.mxu0 0.0
    %5166 = vmatprep.subr.mxu0 0.0
    %5167 = vmatpush2.msra.mxu0 0.0
    %5168 = vmatprep.subr.mxu0 0.0
    %5169 = vmatpush2.msra.mxu0 0.0
    %5170 = vmatprep.subr.mxu0 0.0
    %5171 = vmatpush2.msra.mxu0 0.0
    %5172 = vmatprep.subr.mxu0 0.0
    %5173 = vmatpush2.msra.mxu0 0.0
    %5174 = vmatprep.subr.mxu0 0.0
    %5175 = vmatpush2.msra.mxu0 0.0
    %5176 = vmatprep.subr.mxu0 0.0
    %5177 = vmatpush2.msra.mxu0 0.0
    %5178 = vmatprep.subr.mxu0 0.0
    %5179 = vmatpush2.msra.mxu0 0.0
    %5180 = vmatprep.subr.mxu0 0.0
    %5181 = vmatpush2.msra.mxu0 0.0
    %5182 = vmatprep.subr.mxu0 0.0
    %5183 = vmatpush2.msra.mxu0 0.0
    %5184 = vmatprep.subr.mxu0 0.0
    %5185 = vmatpush2.msra.mxu0 0.0
    %5186 = vmatprep.subr.mxu0 0.0
    %5187 = vmatpush2.msra.mxu0 0.0
    %5188 = vmatprep.subr.mxu0 0.0
    %5189 = vmatpush2.msra.mxu0 0.0
    %5190 = vmatprep.subr.mxu0 0.0
    %5191 = vmatpush2.msra.mxu0 0.0
    %5192 = vmatprep.subr.mxu0 0.0
    %5193 = vmatpush2.msra.mxu0 0.0
    %5194 = vmatprep.subr.mxu0 0.0
    %5195 = vmatpush2.msra.mxu0 0.0
    %5196 = vmatprep.mubr.f32.mxu0 0.0
    %5197 = vmatmul.mubr.f32.gmra.mxu0 %v5127
    %v5198 = vpop.f32.mrf.mxu0
    %v5199 = vadd.f32 0.0, %v5198
    %v5200 = vpop.f32.mrf.mxu0
    %5201 = vmatprep.mubr.f32.mxu0 0.0
    %5202 = vmatmul.mubr.f32.gmra.mxu0 %v5130
    %v5203 = vpop.f32.mrf.mxu0
    %v5204 = vadd.f32 0.0, %v5203
    %v5205 = vpop.f32.mrf.mxu0
    %5206 = vdwg.mxu0
    %v5207 = vadd.f32 %v5116, %v5199
    %v5208 = vadd.f32 %v5117, %v5204
    %v5209 = vld [vmem:[%s5 + $0x758] sm:$0xff]
    %v5210 = vld [vmem:[%s5 + $0x760] sm:$0xff]
    %5211 = vrot.lane.b32.xlu0 %v4576, 121
    %v5212 = vpop.permute.xlu0 %5211
    %5213 = vrot.lane.b32.xlu0 %v4577, 121
    %v5214 = vpop.permute.xlu0 %5213
    %v5218 = vsel %vm3492, %v5209, 0
    %v5221 = vsel %vm3492, %v5210, 0
    %5223 = vmatprep.subr.mxu0 0.0
    %5224 = vmatpush1.msra.mxu0 0.0
    %5225 = vmatprep.subr.mxu0 0.0
    %5226 = vmatpush1.msra.mxu0 0.0
    %5227 = vmatprep.subr.mxu0 0.0
    %5228 = vmatpush1.msra.mxu0 0.0
    %5229 = vmatprep.subr.mxu0 0.0
    %5230 = vmatpush1.msra.mxu0 0.0
    %5231 = vmatprep.subr.mxu0 0.0
    %5232 = vmatpush1.msra.mxu0 0.0
    %5233 = vmatprep.subr.mxu0 0.0
    %5234 = vmatpush1.msra.mxu0 0.0
    %5235 = vmatprep.subr.mxu0 0.0
    %5236 = vmatpush1.msra.mxu0 0.0
    %5237 = vmatprep.subr.mxu0 0.0
    %5238 = vmatpush1.msra.mxu0 0.0
    %5239 = vmatprep.subr.mxu0 0.0
    %5240 = vmatpush1.msra.mxu0 0.0
    %5241 = vmatprep.subr.mxu0 0.0
    %5242 = vmatpush1.msra.mxu0 0.0
    %5243 = vmatprep.subr.mxu0 0.0
    %5244 = vmatpush1.msra.mxu0 0.0
    %5245 = vmatprep.subr.mxu0 0.0
    %5246 = vmatpush1.msra.mxu0 0.0
    %5247 = vmatprep.subr.mxu0 0.0
    %5248 = vmatpush1.msra.mxu0 0.0
    %5249 = vmatprep.subr.mxu0 0.0
    %5250 = vmatpush1.msra.mxu0 0.0
    %5251 = vmatprep.subr.mxu0 0.0
    %5252 = vmatpush1.msra.mxu0 %v5214
    %5253 = vmatprep.subr.mxu0 0.0
    %5254 = vmatpush1.msra.mxu0 %v5212
    %5255 = vmatprep.subr.mxu0 0.0
    %5256 = vmatpush2.msra.mxu0 0.0
    %5257 = vmatprep.subr.mxu0 0.0
    %5258 = vmatpush2.msra.mxu0 0.0
    %5259 = vmatprep.subr.mxu0 0.0
    %5260 = vmatpush2.msra.mxu0 0.0
    %5261 = vmatprep.subr.mxu0 0.0
    %5262 = vmatpush2.msra.mxu0 0.0
    %5263 = vmatprep.subr.mxu0 0.0
    %5264 = vmatpush2.msra.mxu0 0.0
    %5265 = vmatprep.subr.mxu0 0.0
    %5266 = vmatpush2.msra.mxu0 0.0
    %5267 = vmatprep.subr.mxu0 0.0
    %5268 = vmatpush2.msra.mxu0 0.0
    %5269 = vmatprep.subr.mxu0 0.0
    %5270 = vmatpush2.msra.mxu0 0.0
    %5271 = vmatprep.subr.mxu0 0.0
    %5272 = vmatpush2.msra.mxu0 0.0
    %5273 = vmatprep.subr.mxu0 0.0
    %5274 = vmatpush2.msra.mxu0 0.0
    %5275 = vmatprep.subr.mxu0 0.0
    %5276 = vmatpush2.msra.mxu0 0.0
    %5277 = vmatprep.subr.mxu0 0.0
    %5278 = vmatpush2.msra.mxu0 0.0
    %5279 = vmatprep.subr.mxu0 0.0
    %5280 = vmatpush2.msra.mxu0 0.0
    %5281 = vmatprep.subr.mxu0 0.0
    %5282 = vmatpush2.msra.mxu0 0.0
    %5283 = vmatprep.subr.mxu0 0.0
    %5284 = vmatpush2.msra.mxu0 0.0
    %5285 = vmatprep.subr.mxu0 0.0
    %5286 = vmatpush2.msra.mxu0 0.0
    %5287 = vmatprep.mubr.f32.mxu0 0.0
    %5288 = vmatmul.mubr.f32.gmra.mxu0 %v5218
    %v5289 = vpop.f32.mrf.mxu0
    %v5290 = vadd.f32 0.0, %v5289
    %v5291 = vpop.f32.mrf.mxu0
    %5292 = vmatprep.mubr.f32.mxu0 0.0
    %5293 = vmatmul.mubr.f32.gmra.mxu0 %v5221
    %v5294 = vpop.f32.mrf.mxu0
    %v5295 = vadd.f32 0.0, %v5294
    %v5296 = vpop.f32.mrf.mxu0
    %5297 = vdwg.mxu0
    %v5298 = vadd.f32 %v5207, %v5290
    %v5299 = vadd.f32 %v5208, %v5295
    %v5300 = vld [vmem:[%s5 + $0x768] sm:$0xff]
    %v5301 = vld [vmem:[%s5 + $0x770] sm:$0xff]
    %5302 = vrot.lane.b32.xlu0 %v4576, 120
    %v5303 = vpop.permute.xlu0 %5302
    %5304 = vrot.lane.b32.xlu0 %v4577, 120
    %v5305 = vpop.permute.xlu0 %5304
    %v5309 = vsel %vm3492, %v5300, 0
    %v5312 = vsel %vm3492, %v5301, 0
    %5314 = vmatprep.subr.mxu0 0.0
    %5315 = vmatpush1.msra.mxu0 0.0
    %5316 = vmatprep.subr.mxu0 0.0
    %5317 = vmatpush1.msra.mxu0 0.0
    %5318 = vmatprep.subr.mxu0 0.0
    %5319 = vmatpush1.msra.mxu0 0.0
    %5320 = vmatprep.subr.mxu0 0.0
    %5321 = vmatpush1.msra.mxu0 0.0
    %5322 = vmatprep.subr.mxu0 0.0
    %5323 = vmatpush1.msra.mxu0 0.0
    %5324 = vmatprep.subr.mxu0 0.0
    %5325 = vmatpush1.msra.mxu0 0.0
    %5326 = vmatprep.subr.mxu0 0.0
    %5327 = vmatpush1.msra.mxu0 0.0
    %5328 = vmatprep.subr.mxu0 0.0
    %5329 = vmatpush1.msra.mxu0 0.0
    %5330 = vmatprep.subr.mxu0 0.0
    %5331 = vmatpush1.msra.mxu0 0.0
    %5332 = vmatprep.subr.mxu0 0.0
    %5333 = vmatpush1.msra.mxu0 0.0
    %5334 = vmatprep.subr.mxu0 0.0
    %5335 = vmatpush1.msra.mxu0 0.0
    %5336 = vmatprep.subr.mxu0 0.0
    %5337 = vmatpush1.msra.mxu0 0.0
    %5338 = vmatprep.subr.mxu0 0.0
    %5339 = vmatpush1.msra.mxu0 0.0
    %5340 = vmatprep.subr.mxu0 0.0
    %5341 = vmatpush1.msra.mxu0 0.0
    %5342 = vmatprep.subr.mxu0 0.0
    %5343 = vmatpush1.msra.mxu0 %v5305
    %5344 = vmatprep.subr.mxu0 0.0
    %5345 = vmatpush1.msra.mxu0 %v5303
    %5346 = vmatprep.subr.mxu0 0.0
    %5347 = vmatpush2.msra.mxu0 0.0
    %5348 = vmatprep.subr.mxu0 0.0
    %5349 = vmatpush2.msra.mxu0 0.0
    %5350 = vmatprep.subr.mxu0 0.0
    %5351 = vmatpush2.msra.mxu0 0.0
    %5352 = vmatprep.subr.mxu0 0.0
    %5353 = vmatpush2.msra.mxu0 0.0
    %5354 = vmatprep.subr.mxu0 0.0
    %5355 = vmatpush2.msra.mxu0 0.0
    %5356 = vmatprep.subr.mxu0 0.0
    %5357 = vmatpush2.msra.mxu0 0.0
    %5358 = vmatprep.subr.mxu0 0.0
    %5359 = vmatpush2.msra.mxu0 0.0
    %5360 = vmatprep.subr.mxu0 0.0
    %5361 = vmatpush2.msra.mxu0 0.0
    %5362 = vmatprep.subr.mxu0 0.0
    %5363 = vmatpush2.msra.mxu0 0.0
    %5364 = vmatprep.subr.mxu0 0.0
    %5365 = vmatpush2.msra.mxu0 0.0
    %5366 = vmatprep.subr.mxu0 0.0
    %5367 = vmatpush2.msra.mxu0 0.0
    %5368 = vmatprep.subr.mxu0 0.0
    %5369 = vmatpush2.msra.mxu0 0.0
    %5370 = vmatprep.subr.mxu0 0.0
    %5371 = vmatpush2.msra.mxu0 0.0
    %5372 = vmatprep.subr.mxu0 0.0
    %5373 = vmatpush2.msra.mxu0 0.0
    %5374 = vmatprep.subr.mxu0 0.0
    %5375 = vmatpush2.msra.mxu0 0.0
    %5376 = vmatprep.subr.mxu0 0.0
    %5377 = vmatpush2.msra.mxu0 0.0
    %5378 = vmatprep.mubr.f32.mxu0 0.0
    %5379 = vmatmul.mubr.f32.gmra.mxu0 %v5309
    %v5380 = vpop.f32.mrf.mxu0
    %v5381 = vadd.f32 0.0, %v5380
    %v5382 = vpop.f32.mrf.mxu0
    %5383 = vmatprep.mubr.f32.mxu0 0.0
    %5384 = vmatmul.mubr.f32.gmra.mxu0 %v5312
    %v5385 = vpop.f32.mrf.mxu0
    %v5386 = vadd.f32 0.0, %v5385
    %v5387 = vpop.f32.mrf.mxu0
    %5388 = vdwg.mxu0
    %v5389 = vadd.f32 %v5298, %v5381
    %v5390 = vadd.f32 %v5299, %v5386
    %v5391 = vadd.f32 %v4306, %v5389
    %v5392 = vadd.f32 %v4307, %v5390
    %5395 = vrot.lane.b32.xlu0 %v5391, 4
    %v5396 = vpop.permute.xlu0 %5395
    %5397 = vrot.lane.b32.xlu0 %v5392, 4
    %v5398 = vpop.permute.xlu0 %5397
    %5401 = vst.msk [vmem:[#allocation7] sm:$0xff] %vm3471, %v5396
    %5402 = vst.msk [vmem:[#allocation7 + $0x8] sm:$0xff] %vm3471, %v5398
    %v5403 = vld [vmem:[%s5 + $0x8a0] sm:$0x3]
    %5405 = vset.pattern.permute.xlu0 0
    %5406 = vperm.xlu0 %5405, %v5403
    %v5407 = vpop.permute.xlu0 %5406
    %v5409 = vadd.f32 %v5407, 0.0
    %v5410 = vld [vmem:[%s5 + $0x778] sm:$0x3]
    %v5411 = vld [vmem:[#allocation7] sm:$0xff]
    %v5412 = vld [vmem:[#allocation7 + $0x8] sm:$0xff]
    %v5414 = vsel %vm3492, %v5410, 0
    %5416 = vmatprep.subr.mxu0 0.0
    %5417 = vmatpush1.msra.mxu0 0.0
    %5418 = vmatprep.subr.mxu0 0.0
    %5419 = vmatpush1.msra.mxu0 0.0
    %5420 = vmatprep.subr.mxu0 0.0
    %5421 = vmatpush1.msra.mxu0 0.0
    %5422 = vmatprep.subr.mxu0 0.0
    %5423 = vmatpush1.msra.mxu0 0.0
    %5424 = vmatprep.subr.mxu0 0.0
    %5425 = vmatpush1.msra.mxu0 0.0
    %5426 = vmatprep.subr.mxu0 0.0
    %5427 = vmatpush1.msra.mxu0 0.0
    %5428 = vmatprep.subr.mxu0 0.0
    %5429 = vmatpush1.msra.mxu0 0.0
    %5430 = vmatprep.subr.mxu0 0.0
    %5431 = vmatpush1.msra.mxu0 0.0
    %5432 = vmatprep.subr.mxu0 0.0
    %5433 = vmatpush1.msra.mxu0 0.0
    %5434 = vmatprep.subr.mxu0 0.0
    %5435 = vmatpush1.msra.mxu0 0.0
    %5436 = vmatprep.subr.mxu0 0.0
    %5437 = vmatpush1.msra.mxu0 0.0
    %5438 = vmatprep.subr.mxu0 0.0
    %5439 = vmatpush1.msra.mxu0 0.0
    %5440 = vmatprep.subr.mxu0 0.0
    %5441 = vmatpush1.msra.mxu0 0.0
    %5442 = vmatprep.subr.mxu0 0.0
    %5443 = vmatpush1.msra.mxu0 0.0
    %5444 = vmatprep.subr.mxu0 0.0
    %5445 = vmatpush1.msra.mxu0 %v5412
    %5446 = vmatprep.subr.mxu0 0.0
    %5447 = vmatpush1.msra.mxu0 %v5411
    %5448 = vmatprep.subr.mxu0 0.0
    %5449 = vmatpush2.msra.mxu0 0.0
    %5450 = vmatprep.subr.mxu0 0.0
    %5451 = vmatpush2.msra.mxu0 0.0
    %5452 = vmatprep.subr.mxu0 0.0
    %5453 = vmatpush2.msra.mxu0 0.0
    %5454 = vmatprep.subr.mxu0 0.0
    %5455 = vmatpush2.msra.mxu0 0.0
    %5456 = vmatprep.subr.mxu0 0.0
    %5457 = vmatpush2.msra.mxu0 0.0
    %5458 = vmatprep.subr.mxu0 0.0
    %5459 = vmatpush2.msra.mxu0 0.0
    %5460 = vmatprep.subr.mxu0 0.0
    %5461 = vmatpush2.msra.mxu0 0.0
    %5462 = vmatprep.subr.mxu0 0.0
    %5463 = vmatpush2.msra.mxu0 0.0
    %5464 = vmatprep.subr.mxu0 0.0
    %5465 = vmatpush2.msra.mxu0 0.0
    %5466 = vmatprep.subr.mxu0 0.0
    %5467 = vmatpush2.msra.mxu0 0.0
    %5468 = vmatprep.subr.mxu0 0.0
    %5469 = vmatpush2.msra.mxu0 0.0
    %5470 = vmatprep.subr.mxu0 0.0
    %5471 = vmatpush2.msra.mxu0 0.0
    %5472 = vmatprep.subr.mxu0 0.0
    %5473 = vmatpush2.msra.mxu0 0.0
    %5474 = vmatprep.subr.mxu0 0.0
    %5475 = vmatpush2.msra.mxu0 0.0
    %5476 = vmatprep.subr.mxu0 0.0
    %5477 = vmatpush2.msra.mxu0 0.0
    %5478 = vmatprep.subr.mxu0 0.0
    %5479 = vmatpush2.msra.mxu0 0.0
    %5480 = vmatprep.mubr.f32.mxu0 0.0
    %5481 = vmatmul.mubr.f32.gmra.mxu0 %v5414
    %v5482 = vpop.f32.mrf.mxu0
    %v5483 = vadd.f32 0.0, %v5482
    %v5484 = vpop.f32.mrf.mxu0
    %5485 = vdwg.mxu0
    %v5486 = vadd.f32 %v5409, %v5483
    %v5487 = vld [vmem:[%s5 + $0x780] sm:$0x3]
    %5490 = vrot.lane.b32.xlu0 %v5411, 127
    %v5491 = vpop.permute.xlu0 %5490
    %5492 = vrot.lane.b32.xlu0 %v5412, 127
    %v5493 = vpop.permute.xlu0 %5492
    %v5497 = vsel %vm3492, %v5487, 0
    %5499 = vmatprep.subr.mxu0 0.0
    %5500 = vmatpush1.msra.mxu0 0.0
    %5501 = vmatprep.subr.mxu0 0.0
    %5502 = vmatpush1.msra.mxu0 0.0
    %5503 = vmatprep.subr.mxu0 0.0
    %5504 = vmatpush1.msra.mxu0 0.0
    %5505 = vmatprep.subr.mxu0 0.0
    %5506 = vmatpush1.msra.mxu0 0.0
    %5507 = vmatprep.subr.mxu0 0.0
    %5508 = vmatpush1.msra.mxu0 0.0
    %5509 = vmatprep.subr.mxu0 0.0
    %5510 = vmatpush1.msra.mxu0 0.0
    %5511 = vmatprep.subr.mxu0 0.0
    %5512 = vmatpush1.msra.mxu0 0.0
    %5513 = vmatprep.subr.mxu0 0.0
    %5514 = vmatpush1.msra.mxu0 0.0
    %5515 = vmatprep.subr.mxu0 0.0
    %5516 = vmatpush1.msra.mxu0 0.0
    %5517 = vmatprep.subr.mxu0 0.0
    %5518 = vmatpush1.msra.mxu0 0.0
    %5519 = vmatprep.subr.mxu0 0.0
    %5520 = vmatpush1.msra.mxu0 0.0
    %5521 = vmatprep.subr.mxu0 0.0
    %5522 = vmatpush1.msra.mxu0 0.0
    %5523 = vmatprep.subr.mxu0 0.0
    %5524 = vmatpush1.msra.mxu0 0.0
    %5525 = vmatprep.subr.mxu0 0.0
    %5526 = vmatpush1.msra.mxu0 0.0
    %5527 = vmatprep.subr.mxu0 0.0
    %5528 = vmatpush1.msra.mxu0 %v5493
    %5529 = vmatprep.subr.mxu0 0.0
    %5530 = vmatpush1.msra.mxu0 %v5491
    %5531 = vmatprep.subr.mxu0 0.0
    %5532 = vmatpush2.msra.mxu0 0.0
    %5533 = vmatprep.subr.mxu0 0.0
    %5534 = vmatpush2.msra.mxu0 0.0
    %5535 = vmatprep.subr.mxu0 0.0
    %5536 = vmatpush2.msra.mxu0 0.0
    %5537 = vmatprep.subr.mxu0 0.0
    %5538 = vmatpush2.msra.mxu0 0.0
    %5539 = vmatprep.subr.mxu0 0.0
    %5540 = vmatpush2.msra.mxu0 0.0
    %5541 = vmatprep.subr.mxu0 0.0
    %5542 = vmatpush2.msra.mxu0 0.0
    %5543 = vmatprep.subr.mxu0 0.0
    %5544 = vmatpush2.msra.mxu0 0.0
    %5545 = vmatprep.subr.mxu0 0.0
    %5546 = vmatpush2.msra.mxu0 0.0
    %5547 = vmatprep.subr.mxu0 0.0
    %5548 = vmatpush2.msra.mxu0 0.0
    %5549 = vmatprep.subr.mxu0 0.0
    %5550 = vmatpush2.msra.mxu0 0.0
    %5551 = vmatprep.subr.mxu0 0.0
    %5552 = vmatpush2.msra.mxu0 0.0
    %5553 = vmatprep.subr.mxu0 0.0
    %5554 = vmatpush2.msra.mxu0 0.0
    %5555 = vmatprep.subr.mxu0 0.0
    %5556 = vmatpush2.msra.mxu0 0.0
    %5557 = vmatprep.subr.mxu0 0.0
    %5558 = vmatpush2.msra.mxu0 0.0
    %5559 = vmatprep.subr.mxu0 0.0
    %5560 = vmatpush2.msra.mxu0 0.0
    %5561 = vmatprep.subr.mxu0 0.0
    %5562 = vmatpush2.msra.mxu0 0.0
    %5563 = vmatprep.mubr.f32.mxu0 0.0
    %5564 = vmatmul.mubr.f32.gmra.mxu0 %v5497
    %v5565 = vpop.f32.mrf.mxu0
    %v5566 = vadd.f32 0.0, %v5565
    %v5567 = vpop.f32.mrf.mxu0
    %5568 = vdwg.mxu0
    %v5569 = vadd.f32 %v5486, %v5566
    %v5570 = vld [vmem:[%s5 + $0x788] sm:$0x3]
    %5571 = vrot.lane.b32.xlu0 %v5411, 126
    %v5572 = vpop.permute.xlu0 %5571
    %5573 = vrot.lane.b32.xlu0 %v5412, 126
    %v5574 = vpop.permute.xlu0 %5573
    %v5578 = vsel %vm3492, %v5570, 0
    %5580 = vmatprep.subr.mxu0 0.0
    %5581 = vmatpush1.msra.mxu0 0.0
    %5582 = vmatprep.subr.mxu0 0.0
    %5583 = vmatpush1.msra.mxu0 0.0
    %5584 = vmatprep.subr.mxu0 0.0
    %5585 = vmatpush1.msra.mxu0 0.0
    %5586 = vmatprep.subr.mxu0 0.0
    %5587 = vmatpush1.msra.mxu0 0.0
    %5588 = vmatprep.subr.mxu0 0.0
    %5589 = vmatpush1.msra.mxu0 0.0
    %5590 = vmatprep.subr.mxu0 0.0
    %5591 = vmatpush1.msra.mxu0 0.0
    %5592 = vmatprep.subr.mxu0 0.0
    %5593 = vmatpush1.msra.mxu0 0.0
    %5594 = vmatprep.subr.mxu0 0.0
    %5595 = vmatpush1.msra.mxu0 0.0
    %5596 = vmatprep.subr.mxu0 0.0
    %5597 = vmatpush1.msra.mxu0 0.0
    %5598 = vmatprep.subr.mxu0 0.0
    %5599 = vmatpush1.msra.mxu0 0.0
    %5600 = vmatprep.subr.mxu0 0.0
    %5601 = vmatpush1.msra.mxu0 0.0
    %5602 = vmatprep.subr.mxu0 0.0
    %5603 = vmatpush1.msra.mxu0 0.0
    %5604 = vmatprep.subr.mxu0 0.0
    %5605 = vmatpush1.msra.mxu0 0.0
    %5606 = vmatprep.subr.mxu0 0.0
    %5607 = vmatpush1.msra.mxu0 0.0
    %5608 = vmatprep.subr.mxu0 0.0
    %5609 = vmatpush1.msra.mxu0 %v5574
    %5610 = vmatprep.subr.mxu0 0.0
    %5611 = vmatpush1.msra.mxu0 %v5572
    %5612 = vmatprep.subr.mxu0 0.0
    %5613 = vmatpush2.msra.mxu0 0.0
    %5614 = vmatprep.subr.mxu0 0.0
    %5615 = vmatpush2.msra.mxu0 0.0
    %5616 = vmatprep.subr.mxu0 0.0
    %5617 = vmatpush2.msra.mxu0 0.0
    %5618 = vmatprep.subr.mxu0 0.0
    %5619 = vmatpush2.msra.mxu0 0.0
    %5620 = vmatprep.subr.mxu0 0.0
    %5621 = vmatpush2.msra.mxu0 0.0
    %5622 = vmatprep.subr.mxu0 0.0
    %5623 = vmatpush2.msra.mxu0 0.0
    %5624 = vmatprep.subr.mxu0 0.0
    %5625 = vmatpush2.msra.mxu0 0.0
    %5626 = vmatprep.subr.mxu0 0.0
    %5627 = vmatpush2.msra.mxu0 0.0
    %5628 = vmatprep.subr.mxu0 0.0
    %5629 = vmatpush2.msra.mxu0 0.0
    %5630 = vmatprep.subr.mxu0 0.0
    %5631 = vmatpush2.msra.mxu0 0.0
    %5632 = vmatprep.subr.mxu0 0.0
    %5633 = vmatpush2.msra.mxu0 0.0
    %5634 = vmatprep.subr.mxu0 0.0
    %5635 = vmatpush2.msra.mxu0 0.0
    %5636 = vmatprep.subr.mxu0 0.0
    %5637 = vmatpush2.msra.mxu0 0.0
    %5638 = vmatprep.subr.mxu0 0.0
    %5639 = vmatpush2.msra.mxu0 0.0
    %5640 = vmatprep.subr.mxu0 0.0
    %5641 = vmatpush2.msra.mxu0 0.0
    %5642 = vmatprep.subr.mxu0 0.0
    %5643 = vmatpush2.msra.mxu0 0.0
    %5644 = vmatprep.mubr.f32.mxu0 0.0
    %5645 = vmatmul.mubr.f32.gmra.mxu0 %v5578
    %v5646 = vpop.f32.mrf.mxu0
    %v5647 = vadd.f32 0.0, %v5646
    %v5648 = vpop.f32.mrf.mxu0
    %5649 = vdwg.mxu0
    %v5650 = vadd.f32 %v5569, %v5647
    %v5651 = vld [vmem:[%s5 + $0x790] sm:$0x3]
    %5652 = vrot.lane.b32.xlu0 %v5411, 125
    %v5653 = vpop.permute.xlu0 %5652
    %5654 = vrot.lane.b32.xlu0 %v5412, 125
    %v5655 = vpop.permute.xlu0 %5654
    %v5659 = vsel %vm3492, %v5651, 0
    %5661 = vmatprep.subr.mxu0 0.0
    %5662 = vmatpush1.msra.mxu0 0.0
    %5663 = vmatprep.subr.mxu0 0.0
    %5664 = vmatpush1.msra.mxu0 0.0
    %5665 = vmatprep.subr.mxu0 0.0
    %5666 = vmatpush1.msra.mxu0 0.0
    %5667 = vmatprep.subr.mxu0 0.0
    %5668 = vmatpush1.msra.mxu0 0.0
    %5669 = vmatprep.subr.mxu0 0.0
    %5670 = vmatpush1.msra.mxu0 0.0
    %5671 = vmatprep.subr.mxu0 0.0
    %5672 = vmatpush1.msra.mxu0 0.0
    %5673 = vmatprep.subr.mxu0 0.0
    %5674 = vmatpush1.msra.mxu0 0.0
    %5675 = vmatprep.subr.mxu0 0.0
    %5676 = vmatpush1.msra.mxu0 0.0
    %5677 = vmatprep.subr.mxu0 0.0
    %5678 = vmatpush1.msra.mxu0 0.0
    %5679 = vmatprep.subr.mxu0 0.0
    %5680 = vmatpush1.msra.mxu0 0.0
    %5681 = vmatprep.subr.mxu0 0.0
    %5682 = vmatpush1.msra.mxu0 0.0
    %5683 = vmatprep.subr.mxu0 0.0
    %5684 = vmatpush1.msra.mxu0 0.0
    %5685 = vmatprep.subr.mxu0 0.0
    %5686 = vmatpush1.msra.mxu0 0.0
    %5687 = vmatprep.subr.mxu0 0.0
    %5688 = vmatpush1.msra.mxu0 0.0
    %5689 = vmatprep.subr.mxu0 0.0
    %5690 = vmatpush1.msra.mxu0 %v5655
    %5691 = vmatprep.subr.mxu0 0.0
    %5692 = vmatpush1.msra.mxu0 %v5653
    %5693 = vmatprep.subr.mxu0 0.0
    %5694 = vmatpush2.msra.mxu0 0.0
    %5695 = vmatprep.subr.mxu0 0.0
    %5696 = vmatpush2.msra.mxu0 0.0
    %5697 = vmatprep.subr.mxu0 0.0
    %5698 = vmatpush2.msra.mxu0 0.0
    %5699 = vmatprep.subr.mxu0 0.0
    %5700 = vmatpush2.msra.mxu0 0.0
    %5701 = vmatprep.subr.mxu0 0.0
    %5702 = vmatpush2.msra.mxu0 0.0
    %5703 = vmatprep.subr.mxu0 0.0
    %5704 = vmatpush2.msra.mxu0 0.0
    %5705 = vmatprep.subr.mxu0 0.0
    %5706 = vmatpush2.msra.mxu0 0.0
    %5707 = vmatprep.subr.mxu0 0.0
    %5708 = vmatpush2.msra.mxu0 0.0
    %5709 = vmatprep.subr.mxu0 0.0
    %5710 = vmatpush2.msra.mxu0 0.0
    %5711 = vmatprep.subr.mxu0 0.0
    %5712 = vmatpush2.msra.mxu0 0.0
    %5713 = vmatprep.subr.mxu0 0.0
    %5714 = vmatpush2.msra.mxu0 0.0
    %5715 = vmatprep.subr.mxu0 0.0
    %5716 = vmatpush2.msra.mxu0 0.0
    %5717 = vmatprep.subr.mxu0 0.0
    %5718 = vmatpush2.msra.mxu0 0.0
    %5719 = vmatprep.subr.mxu0 0.0
    %5720 = vmatpush2.msra.mxu0 0.0
    %5721 = vmatprep.subr.mxu0 0.0
    %5722 = vmatpush2.msra.mxu0 0.0
    %5723 = vmatprep.subr.mxu0 0.0
    %5724 = vmatpush2.msra.mxu0 0.0
    %5725 = vmatprep.mubr.f32.mxu0 0.0
    %5726 = vmatmul.mubr.f32.gmra.mxu0 %v5659
    %v5727 = vpop.f32.mrf.mxu0
    %v5728 = vadd.f32 0.0, %v5727
    %v5729 = vpop.f32.mrf.mxu0
    %5730 = vdwg.mxu0
    %v5731 = vadd.f32 %v5650, %v5728
    %v5732 = vld [vmem:[%s5 + $0x798] sm:$0x3]
    %5733 = vrot.lane.b32.xlu0 %v5411, 124
    %v5734 = vpop.permute.xlu0 %5733
    %5735 = vrot.lane.b32.xlu0 %v5412, 124
    %v5736 = vpop.permute.xlu0 %5735
    %v5740 = vsel %vm3492, %v5732, 0
    %5742 = vmatprep.subr.mxu0 0.0
    %5743 = vmatpush1.msra.mxu0 0.0
    %5744 = vmatprep.subr.mxu0 0.0
    %5745 = vmatpush1.msra.mxu0 0.0
    %5746 = vmatprep.subr.mxu0 0.0
    %5747 = vmatpush1.msra.mxu0 0.0
    %5748 = vmatprep.subr.mxu0 0.0
    %5749 = vmatpush1.msra.mxu0 0.0
    %5750 = vmatprep.subr.mxu0 0.0
    %5751 = vmatpush1.msra.mxu0 0.0
    %5752 = vmatprep.subr.mxu0 0.0
    %5753 = vmatpush1.msra.mxu0 0.0
    %5754 = vmatprep.subr.mxu0 0.0
    %5755 = vmatpush1.msra.mxu0 0.0
    %5756 = vmatprep.subr.mxu0 0.0
    %5757 = vmatpush1.msra.mxu0 0.0
    %5758 = vmatprep.subr.mxu0 0.0
    %5759 = vmatpush1.msra.mxu0 0.0
    %5760 = vmatprep.subr.mxu0 0.0
    %5761 = vmatpush1.msra.mxu0 0.0
    %5762 = vmatprep.subr.mxu0 0.0
    %5763 = vmatpush1.msra.mxu0 0.0
    %5764 = vmatprep.subr.mxu0 0.0
    %5765 = vmatpush1.msra.mxu0 0.0
    %5766 = vmatprep.subr.mxu0 0.0
    %5767 = vmatpush1.msra.mxu0 0.0
    %5768 = vmatprep.subr.mxu0 0.0
    %5769 = vmatpush1.msra.mxu0 0.0
    %5770 = vmatprep.subr.mxu0 0.0
    %5771 = vmatpush1.msra.mxu0 %v5736
    %5772 = vmatprep.subr.mxu0 0.0
    %5773 = vmatpush1.msra.mxu0 %v5734
    %5774 = vmatprep.subr.mxu0 0.0
    %5775 = vmatpush2.msra.mxu0 0.0
    %5776 = vmatprep.subr.mxu0 0.0
    %5777 = vmatpush2.msra.mxu0 0.0
    %5778 = vmatprep.subr.mxu0 0.0
    %5779 = vmatpush2.msra.mxu0 0.0
    %5780 = vmatprep.subr.mxu0 0.0
    %5781 = vmatpush2.msra.mxu0 0.0
    %5782 = vmatprep.subr.mxu0 0.0
    %5783 = vmatpush2.msra.mxu0 0.0
    %5784 = vmatprep.subr.mxu0 0.0
    %5785 = vmatpush2.msra.mxu0 0.0
    %5786 = vmatprep.subr.mxu0 0.0
    %5787 = vmatpush2.msra.mxu0 0.0
    %5788 = vmatprep.subr.mxu0 0.0
    %5789 = vmatpush2.msra.mxu0 0.0
    %5790 = vmatprep.subr.mxu0 0.0
    %5791 = vmatpush2.msra.mxu0 0.0
    %5792 = vmatprep.subr.mxu0 0.0
    %5793 = vmatpush2.msra.mxu0 0.0
    %5794 = vmatprep.subr.mxu0 0.0
    %5795 = vmatpush2.msra.mxu0 0.0
    %5796 = vmatprep.subr.mxu0 0.0
    %5797 = vmatpush2.msra.mxu0 0.0
    %5798 = vmatprep.subr.mxu0 0.0
    %5799 = vmatpush2.msra.mxu0 0.0
    %5800 = vmatprep.subr.mxu0 0.0
    %5801 = vmatpush2.msra.mxu0 0.0
    %5802 = vmatprep.subr.mxu0 0.0
    %5803 = vmatpush2.msra.mxu0 0.0
    %5804 = vmatprep.subr.mxu0 0.0
    %5805 = vmatpush2.msra.mxu0 0.0
    %5806 = vmatprep.mubr.f32.mxu0 0.0
    %5807 = vmatmul.mubr.f32.gmra.mxu0 %v5740
    %v5808 = vpop.f32.mrf.mxu0
    %v5809 = vadd.f32 0.0, %v5808
    %v5810 = vpop.f32.mrf.mxu0
    %5811 = vdwg.mxu0
    %v5812 = vadd.f32 %v5731, %v5809
    %v5813 = vld [vmem:[%s5 + $0x7a0] sm:$0x3]
    %5814 = vrot.lane.b32.xlu0 %v5411, 123
    %v5815 = vpop.permute.xlu0 %5814
    %5816 = vrot.lane.b32.xlu0 %v5412, 123
    %v5817 = vpop.permute.xlu0 %5816
    %v5821 = vsel %vm3492, %v5813, 0
    %5823 = vmatprep.subr.mxu0 0.0
    %5824 = vmatpush1.msra.mxu0 0.0
    %5825 = vmatprep.subr.mxu0 0.0
    %5826 = vmatpush1.msra.mxu0 0.0
    %5827 = vmatprep.subr.mxu0 0.0
    %5828 = vmatpush1.msra.mxu0 0.0
    %5829 = vmatprep.subr.mxu0 0.0
    %5830 = vmatpush1.msra.mxu0 0.0
    %5831 = vmatprep.subr.mxu0 0.0
    %5832 = vmatpush1.msra.mxu0 0.0
    %5833 = vmatprep.subr.mxu0 0.0
    %5834 = vmatpush1.msra.mxu0 0.0
    %5835 = vmatprep.subr.mxu0 0.0
    %5836 = vmatpush1.msra.mxu0 0.0
    %5837 = vmatprep.subr.mxu0 0.0
    %5838 = vmatpush1.msra.mxu0 0.0
    %5839 = vmatprep.subr.mxu0 0.0
    %5840 = vmatpush1.msra.mxu0 0.0
    %5841 = vmatprep.subr.mxu0 0.0
    %5842 = vmatpush1.msra.mxu0 0.0
    %5843 = vmatprep.subr.mxu0 0.0
    %5844 = vmatpush1.msra.mxu0 0.0
    %5845 = vmatprep.subr.mxu0 0.0
    %5846 = vmatpush1.msra.mxu0 0.0
    %5847 = vmatprep.subr.mxu0 0.0
    %5848 = vmatpush1.msra.mxu0 0.0
    %5849 = vmatprep.subr.mxu0 0.0
    %5850 = vmatpush1.msra.mxu0 0.0
    %5851 = vmatprep.subr.mxu0 0.0
    %5852 = vmatpush1.msra.mxu0 %v5817
    %5853 = vmatprep.subr.mxu0 0.0
    %5854 = vmatpush1.msra.mxu0 %v5815
    %5855 = vmatprep.subr.mxu0 0.0
    %5856 = vmatpush2.msra.mxu0 0.0
    %5857 = vmatprep.subr.mxu0 0.0
    %5858 = vmatpush2.msra.mxu0 0.0
    %5859 = vmatprep.subr.mxu0 0.0
    %5860 = vmatpush2.msra.mxu0 0.0
    %5861 = vmatprep.subr.mxu0 0.0
    %5862 = vmatpush2.msra.mxu0 0.0
    %5863 = vmatprep.subr.mxu0 0.0
    %5864 = vmatpush2.msra.mxu0 0.0
    %5865 = vmatprep.subr.mxu0 0.0
    %5866 = vmatpush2.msra.mxu0 0.0
    %5867 = vmatprep.subr.mxu0 0.0
    %5868 = vmatpush2.msra.mxu0 0.0
    %5869 = vmatprep.subr.mxu0 0.0
    %5870 = vmatpush2.msra.mxu0 0.0
    %5871 = vmatprep.subr.mxu0 0.0
    %5872 = vmatpush2.msra.mxu0 0.0
    %5873 = vmatprep.subr.mxu0 0.0
    %5874 = vmatpush2.msra.mxu0 0.0
    %5875 = vmatprep.subr.mxu0 0.0
    %5876 = vmatpush2.msra.mxu0 0.0
    %5877 = vmatprep.subr.mxu0 0.0
    %5878 = vmatpush2.msra.mxu0 0.0
    %5879 = vmatprep.subr.mxu0 0.0
    %5880 = vmatpush2.msra.mxu0 0.0
    %5881 = vmatprep.subr.mxu0 0.0
    %5882 = vmatpush2.msra.mxu0 0.0
    %5883 = vmatprep.subr.mxu0 0.0
    %5884 = vmatpush2.msra.mxu0 0.0
    %5885 = vmatprep.subr.mxu0 0.0
    %5886 = vmatpush2.msra.mxu0 0.0
    %5887 = vmatprep.mubr.f32.mxu0 0.0
    %5888 = vmatmul.mubr.f32.gmra.mxu0 %v5821
    %v5889 = vpop.f32.mrf.mxu0
    %v5890 = vadd.f32 0.0, %v5889
    %v5891 = vpop.f32.mrf.mxu0
    %5892 = vdwg.mxu0
    %v5893 = vadd.f32 %v5812, %v5890
    %v5894 = vld [vmem:[%s5 + $0x7a8] sm:$0x3]
    %5895 = vrot.lane.b32.xlu0 %v5411, 122
    %v5896 = vpop.permute.xlu0 %5895
    %5897 = vrot.lane.b32.xlu0 %v5412, 122
    %v5898 = vpop.permute.xlu0 %5897
    %v5902 = vsel %vm3492, %v5894, 0
    %5904 = vmatprep.subr.mxu0 0.0
    %5905 = vmatpush1.msra.mxu0 0.0
    %5906 = vmatprep.subr.mxu0 0.0
    %5907 = vmatpush1.msra.mxu0 0.0
    %5908 = vmatprep.subr.mxu0 0.0
    %5909 = vmatpush1.msra.mxu0 0.0
    %5910 = vmatprep.subr.mxu0 0.0
    %5911 = vmatpush1.msra.mxu0 0.0
    %5912 = vmatprep.subr.mxu0 0.0
    %5913 = vmatpush1.msra.mxu0 0.0
    %5914 = vmatprep.subr.mxu0 0.0
    %5915 = vmatpush1.msra.mxu0 0.0
    %5916 = vmatprep.subr.mxu0 0.0
    %5917 = vmatpush1.msra.mxu0 0.0
    %5918 = vmatprep.subr.mxu0 0.0
    %5919 = vmatpush1.msra.mxu0 0.0
    %5920 = vmatprep.subr.mxu0 0.0
    %5921 = vmatpush1.msra.mxu0 0.0
    %5922 = vmatprep.subr.mxu0 0.0
    %5923 = vmatpush1.msra.mxu0 0.0
    %5924 = vmatprep.subr.mxu0 0.0
    %5925 = vmatpush1.msra.mxu0 0.0
    %5926 = vmatprep.subr.mxu0 0.0
    %5927 = vmatpush1.msra.mxu0 0.0
    %5928 = vmatprep.subr.mxu0 0.0
    %5929 = vmatpush1.msra.mxu0 0.0
    %5930 = vmatprep.subr.mxu0 0.0
    %5931 = vmatpush1.msra.mxu0 0.0
    %5932 = vmatprep.subr.mxu0 0.0
    %5933 = vmatpush1.msra.mxu0 %v5898
    %5934 = vmatprep.subr.mxu0 0.0
    %5935 = vmatpush1.msra.mxu0 %v5896
    %5936 = vmatprep.subr.mxu0 0.0
    %5937 = vmatpush2.msra.mxu0 0.0
    %5938 = vmatprep.subr.mxu0 0.0
    %5939 = vmatpush2.msra.mxu0 0.0
    %5940 = vmatprep.subr.mxu0 0.0
    %5941 = vmatpush2.msra.mxu0 0.0
    %5942 = vmatprep.subr.mxu0 0.0
    %5943 = vmatpush2.msra.mxu0 0.0
    %5944 = vmatprep.subr.mxu0 0.0
    %5945 = vmatpush2.msra.mxu0 0.0
    %5946 = vmatprep.subr.mxu0 0.0
    %5947 = vmatpush2.msra.mxu0 0.0
    %5948 = vmatprep.subr.mxu0 0.0
    %5949 = vmatpush2.msra.mxu0 0.0
    %5950 = vmatprep.subr.mxu0 0.0
    %5951 = vmatpush2.msra.mxu0 0.0
    %5952 = vmatprep.subr.mxu0 0.0
    %5953 = vmatpush2.msra.mxu0 0.0
    %5954 = vmatprep.subr.mxu0 0.0
    %5955 = vmatpush2.msra.mxu0 0.0
    %5956 = vmatprep.subr.mxu0 0.0
    %5957 = vmatpush2.msra.mxu0 0.0
    %5958 = vmatprep.subr.mxu0 0.0
    %5959 = vmatpush2.msra.mxu0 0.0
    %5960 = vmatprep.subr.mxu0 0.0
    %5961 = vmatpush2.msra.mxu0 0.0
    %5962 = vmatprep.subr.mxu0 0.0
    %5963 = vmatpush2.msra.mxu0 0.0
    %5964 = vmatprep.subr.mxu0 0.0
    %5965 = vmatpush2.msra.mxu0 0.0
    %5966 = vmatprep.subr.mxu0 0.0
    %5967 = vmatpush2.msra.mxu0 0.0
    %5968 = vmatprep.mubr.f32.mxu0 0.0
    %5969 = vmatmul.mubr.f32.gmra.mxu0 %v5902
    %v5970 = vpop.f32.mrf.mxu0
    %v5971 = vadd.f32 0.0, %v5970
    %v5972 = vpop.f32.mrf.mxu0
    %5973 = vdwg.mxu0
    %v5974 = vadd.f32 %v5893, %v5971
    %v5975 = vld [vmem:[%s5 + $0x7b0] sm:$0x3]
    %5976 = vrot.lane.b32.xlu0 %v5411, 121
    %v5977 = vpop.permute.xlu0 %5976
    %5978 = vrot.lane.b32.xlu0 %v5412, 121
    %v5979 = vpop.permute.xlu0 %5978
    %v5983 = vsel %vm3492, %v5975, 0
    %5985 = vmatprep.subr.mxu0 0.0
    %5986 = vmatpush1.msra.mxu0 0.0
    %5987 = vmatprep.subr.mxu0 0.0
    %5988 = vmatpush1.msra.mxu0 0.0
    %5989 = vmatprep.subr.mxu0 0.0
    %5990 = vmatpush1.msra.mxu0 0.0
    %5991 = vmatprep.subr.mxu0 0.0
    %5992 = vmatpush1.msra.mxu0 0.0
    %5993 = vmatprep.subr.mxu0 0.0
    %5994 = vmatpush1.msra.mxu0 0.0
    %5995 = vmatprep.subr.mxu0 0.0
    %5996 = vmatpush1.msra.mxu0 0.0
    %5997 = vmatprep.subr.mxu0 0.0
    %5998 = vmatpush1.msra.mxu0 0.0
    %5999 = vmatprep.subr.mxu0 0.0
    %6000 = vmatpush1.msra.mxu0 0.0
    %6001 = vmatprep.subr.mxu0 0.0
    %6002 = vmatpush1.msra.mxu0 0.0
    %6003 = vmatprep.subr.mxu0 0.0
    %6004 = vmatpush1.msra.mxu0 0.0
    %6005 = vmatprep.subr.mxu0 0.0
    %6006 = vmatpush1.msra.mxu0 0.0
    %6007 = vmatprep.subr.mxu0 0.0
    %6008 = vmatpush1.msra.mxu0 0.0
    %6009 = vmatprep.subr.mxu0 0.0
    %6010 = vmatpush1.msra.mxu0 0.0
    %6011 = vmatprep.subr.mxu0 0.0
    %6012 = vmatpush1.msra.mxu0 0.0
    %6013 = vmatprep.subr.mxu0 0.0
    %6014 = vmatpush1.msra.mxu0 %v5979
    %6015 = vmatprep.subr.mxu0 0.0
    %6016 = vmatpush1.msra.mxu0 %v5977
    %6017 = vmatprep.subr.mxu0 0.0
    %6018 = vmatpush2.msra.mxu0 0.0
    %6019 = vmatprep.subr.mxu0 0.0
    %6020 = vmatpush2.msra.mxu0 0.0
    %6021 = vmatprep.subr.mxu0 0.0
    %6022 = vmatpush2.msra.mxu0 0.0
    %6023 = vmatprep.subr.mxu0 0.0
    %6024 = vmatpush2.msra.mxu0 0.0
    %6025 = vmatprep.subr.mxu0 0.0
    %6026 = vmatpush2.msra.mxu0 0.0
    %6027 = vmatprep.subr.mxu0 0.0
    %6028 = vmatpush2.msra.mxu0 0.0
    %6029 = vmatprep.subr.mxu0 0.0
    %6030 = vmatpush2.msra.mxu0 0.0
    %6031 = vmatprep.subr.mxu0 0.0
    %6032 = vmatpush2.msra.mxu0 0.0
    %6033 = vmatprep.subr.mxu0 0.0
    %6034 = vmatpush2.msra.mxu0 0.0
    %6035 = vmatprep.subr.mxu0 0.0
    %6036 = vmatpush2.msra.mxu0 0.0
    %6037 = vmatprep.subr.mxu0 0.0
    %6038 = vmatpush2.msra.mxu0 0.0
    %6039 = vmatprep.subr.mxu0 0.0
    %6040 = vmatpush2.msra.mxu0 0.0
    %6041 = vmatprep.subr.mxu0 0.0
    %6042 = vmatpush2.msra.mxu0 0.0
    %6043 = vmatprep.subr.mxu0 0.0
    %6044 = vmatpush2.msra.mxu0 0.0
    %6045 = vmatprep.subr.mxu0 0.0
    %6046 = vmatpush2.msra.mxu0 0.0
    %6047 = vmatprep.subr.mxu0 0.0
    %6048 = vmatpush2.msra.mxu0 0.0
    %6049 = vmatprep.mubr.f32.mxu0 0.0
    %6050 = vmatmul.mubr.f32.gmra.mxu0 %v5983
    %v6051 = vpop.f32.mrf.mxu0
    %v6052 = vadd.f32 0.0, %v6051
    %v6053 = vpop.f32.mrf.mxu0
    %6054 = vdwg.mxu0
    %v6055 = vadd.f32 %v5974, %v6052
    %v6056 = vld [vmem:[%s5 + $0x7b8] sm:$0x3]
    %6057 = vrot.lane.b32.xlu0 %v5411, 120
    %v6058 = vpop.permute.xlu0 %6057
    %6059 = vrot.lane.b32.xlu0 %v5412, 120
    %v6060 = vpop.permute.xlu0 %6059
    %v6064 = vsel %vm3492, %v6056, 0
    %6066 = vmatprep.subr.mxu0 0.0
    %6067 = vmatpush1.msra.mxu0 0.0
    %6068 = vmatprep.subr.mxu0 0.0
    %6069 = vmatpush1.msra.mxu0 0.0
    %6070 = vmatprep.subr.mxu0 0.0
    %6071 = vmatpush1.msra.mxu0 0.0
    %6072 = vmatprep.subr.mxu0 0.0
    %6073 = vmatpush1.msra.mxu0 0.0
    %6074 = vmatprep.subr.mxu0 0.0
    %6075 = vmatpush1.msra.mxu0 0.0
    %6076 = vmatprep.subr.mxu0 0.0
    %6077 = vmatpush1.msra.mxu0 0.0
    %6078 = vmatprep.subr.mxu0 0.0
    %6079 = vmatpush1.msra.mxu0 0.0
    %6080 = vmatprep.subr.mxu0 0.0
    %6081 = vmatpush1.msra.mxu0 0.0
    %6082 = vmatprep.subr.mxu0 0.0
    %6083 = vmatpush1.msra.mxu0 0.0
    %6084 = vmatprep.subr.mxu0 0.0
    %6085 = vmatpush1.msra.mxu0 0.0
    %6086 = vmatprep.subr.mxu0 0.0
    %6087 = vmatpush1.msra.mxu0 0.0
    %6088 = vmatprep.subr.mxu0 0.0
    %6089 = vmatpush1.msra.mxu0 0.0
    %6090 = vmatprep.subr.mxu0 0.0
    %6091 = vmatpush1.msra.mxu0 0.0
    %6092 = vmatprep.subr.mxu0 0.0
    %6093 = vmatpush1.msra.mxu0 0.0
    %6094 = vmatprep.subr.mxu0 0.0
    %6095 = vmatpush1.msra.mxu0 %v6060
    %6096 = vmatprep.subr.mxu0 0.0
    %6097 = vmatpush1.msra.mxu0 %v6058
    %6098 = vmatprep.subr.mxu0 0.0
    %6099 = vmatpush2.msra.mxu0 0.0
    %6100 = vmatprep.subr.mxu0 0.0
    %6101 = vmatpush2.msra.mxu0 0.0
    %6102 = vmatprep.subr.mxu0 0.0
    %6103 = vmatpush2.msra.mxu0 0.0
    %6104 = vmatprep.subr.mxu0 0.0
    %6105 = vmatpush2.msra.mxu0 0.0
    %6106 = vmatprep.subr.mxu0 0.0
    %6107 = vmatpush2.msra.mxu0 0.0
    %6108 = vmatprep.subr.mxu0 0.0
    %6109 = vmatpush2.msra.mxu0 0.0
    %6110 = vmatprep.subr.mxu0 0.0
    %6111 = vmatpush2.msra.mxu0 0.0
    %6112 = vmatprep.subr.mxu0 0.0
    %6113 = vmatpush2.msra.mxu0 0.0
    %6114 = vmatprep.subr.mxu0 0.0
    %6115 = vmatpush2.msra.mxu0 0.0
    %6116 = vmatprep.subr.mxu0 0.0
    %6117 = vmatpush2.msra.mxu0 0.0
    %6118 = vmatprep.subr.mxu0 0.0
    %6119 = vmatpush2.msra.mxu0 0.0
    %6120 = vmatprep.subr.mxu0 0.0
    %6121 = vmatpush2.msra.mxu0 0.0
    %6122 = vmatprep.subr.mxu0 0.0
    %6123 = vmatpush2.msra.mxu0 0.0
    %6124 = vmatprep.subr.mxu0 0.0
    %6125 = vmatpush2.msra.mxu0 0.0
    %6126 = vmatprep.subr.mxu0 0.0
    %6127 = vmatpush2.msra.mxu0 0.0
    %6128 = vmatprep.subr.mxu0 0.0
    %6129 = vmatpush2.msra.mxu0 0.0
    %6130 = vmatprep.mubr.f32.mxu0 0.0
    %6131 = vmatmul.mubr.f32.gmra.mxu0 %v6064
    %v6132 = vpop.f32.mrf.mxu0
    %v6133 = vadd.f32 0.0, %v6132
    %v6134 = vpop.f32.mrf.mxu0
    %6135 = vdwg.mxu0
    %v6136 = vadd.f32 %v6055, %v6133
    %v6137 = vtanh.pop %v6136
    %vm6138 = vcmask 222208
    %6139 = vst.msk [vmem:[#allocation8] sm:$0x3] %vm6138, %v6137
    // Predicated region
    $region26: #{synthesizer_forward.1} parent=1 // pred_check
      _
    $region27: #{synthesizer_forward.1} parent=1 // pred_check_branch
      %6141 = sbr.rel (0) target = $region29
    $region28: #{synthesizer_forward.1} parent=1 // pred_region
      %s6143 = ssub.s32 32, 32
      %6144 = vsyncadd [#allocation9], %s6143
      %s6146 = sshll.u32 [#allocation8], 4
      %s6147 = int_to_ptr.vmem [resolvable:$true] %s6146
      %6149 = dma.vmem_to_hbm [thread:$0]  %s6147, 32, %s6, [#allocation9]
    $region29: #{synthesizer_forward.1} parent=1 // pred_fallthru
      _
    // Predicated region
    $region30: #{synthesizer_forward.1} parent=1 // pred_check
      _
    $region31: #{synthesizer_forward.1} parent=1 // pred_check_branch
      %6151 = sbr.rel (0) target = $region33
    $region32: #{synthesizer_forward.1} parent=1 // pred_region
      %6152 = dma.done [#allocation9], 32
    $region33: #{synthesizer_forward.1} parent=1 // pred_fallthru
      _
    %6153 = vsyncpa [#allocation9], 1

</llo_original>
